<compile_context>
chip_gen: v6e
topology: v6e:2x2x1
jax: 0.10.0
libtpu: 0.0.40
codegen_flags: <defaults>
</compile_context>

<pallas_src>
import functools

import jax
import jax.numpy as jnp
from jax.experimental import pallas as pl
from jax.experimental.pallas import tpu as pltpu


def _round_up(n, m):
    return ((n + m - 1) // m) * m


# ----------------------------------------------------------------------------
# Fused kernel factory.
# Kernel inputs (all full-array blocks, grid=(1,)):
#   x_bt  : (B, T, C)      batch-major, time x channel (attention matmul)
#   x_tb  : (T*Bp, C)      time-major rows (row = t*Bp + b), zero-padded to Bp
#   w1    : (Ha, T), b1: (Ha, 1), w2: (Ha, 1), b2: (1, 1)   attention params
#   per (layer, dir): wih_t (I, 4H), bias (1, 4H), whh_g (4, H, H)
# Output: (B, H * num_dir)  == x_out[-1, :, :]
# ----------------------------------------------------------------------------
def _make_header_decoder_kernel(B, Bp, C, T, H, num_layers, num_dir):
    f32 = jnp.float32
    n_cells = num_layers * num_dir

    def kernel(*refs):
        x_bt_ref, x_tb_ref, w1_ref, b1_ref, w2_ref, b2_ref = refs[:6]
        lstm_refs = refs[6:6 + 3 * n_cells]
        out_ref = refs[6 + 3 * n_cells]

        w1 = w1_ref[...].astype(f32)              # (Ha, T)
        b1 = b1_ref[...].astype(f32)              # (Ha, 1)
        w2 = w2_ref[...].astype(f32)              # (Ha, 1)
        b2 = b2_ref[...].astype(f32)              # (1, 1)

        # ---- input attention: Linear(T->Ha) -> tanh -> Linear(Ha->1),
        #      softmax over the channel axis (dim=1 in PyTorch).  B is tiny, so
        #      the per-batch loop is fully unrolled at trace time.
        alphas = []
        for b in range(B):
            xb = x_bt_ref[b].astype(f32)                                      # (T, C)
            hT = jnp.tanh(jnp.dot(w1, xb, preferred_element_type=f32) + b1)   # (Ha, C)
            # second Linear as VPU mul + sublane reduce (no N=1 MXU matmul)
            e = jnp.sum(hT * w2, axis=0, keepdims=True) + b2                  # (1, C)
            e = e - jnp.max(e, axis=-1, keepdims=True)
            p = jnp.exp(e)
            alphas.append(p / jnp.sum(p, axis=-1, keepdims=True))             # (1, C)
        if Bp > B:
            alphas.append(jnp.zeros((Bp - B, C), f32))
        alpha_pad = jnp.concatenate(alphas, axis=0)                           # (Bp, C)
        # replicate alpha per timestep to match x_tb's (t*Bp + b) row ordering;
        # each copy is an aligned 8-sublane block, so this is cheap vreg stacking.
        alpha_rep = jnp.concatenate([alpha_pad] * T, axis=0)                  # (T*Bp, C)
        seq_flat = x_tb_ref[...].astype(f32) * alpha_rep  # x_hat.permute(2,0,1) flat

        def gate_tables(seq2d, wih_t_ref, bias_ref):
            # One matmul for the whole sequence (bias folded in), then split
            # into per-gate tables ONCE (lane slices outside the time loop).
            g = jnp.dot(seq2d, wih_t_ref[...].astype(f32),
                        preferred_element_type=f32) + bias_ref[...].astype(f32)
            return [g[:, k * H:(k + 1) * H] for k in range(4)]               # 4 x (T*Bp, H)

        def run_direction(tabs, whh_g_ref, reverse):
            wk = [whh_g_ref[k].astype(f32) for k in range(4)]                # 4 x (H, H)
            h = jnp.zeros((Bp, H), f32)
            c = jnp.zeros((Bp, H), f32)
            outs = [None] * T
            steps = range(T - 1, -1, -1) if reverse else range(T)
            for t in steps:                       # fully unrolled: T small & static
                r = t * Bp                        # 8-aligned sublane offset
                zi = tabs[0][r:r + Bp] + jnp.dot(h, wk[0], preferred_element_type=f32)
                zf = tabs[1][r:r + Bp] + jnp.dot(h, wk[1], preferred_element_type=f32)
                zg = tabs[2][r:r + Bp] + jnp.dot(h, wk[2], preferred_element_type=f32)
                zo = tabs[3][r:r + Bp] + jnp.dot(h, wk[3], preferred_element_type=f32)
                i_g = jax.nn.sigmoid(zi)
                f_g = jax.nn.sigmoid(zf)
                g_g = jnp.tanh(zg)
                o_g = jax.nn.sigmoid(zo)
                c = f_g * c + i_g * g_g
                h = o_g * jnp.tanh(c)
                outs[t] = h                       # indexed by the real time step
            return outs

        # ---- stacked (optionally bidirectional) LSTM, all state in vregs ----
        # TODO(synk): inter-layer dropout of nn.LSTM is train-only; eval forward
        # has none, so it is intentionally not modeled here.
        cell = 0
        layer_seq = seq_flat                      # (T*Bp, X), rows ordered t*Bp + b
        dir_outs = None
        for l in range(num_layers):
            dir_outs = []
            for d in range(num_dir):
                wih_t_ref, bias_ref, whh_g_ref = lstm_refs[3 * cell:3 * cell + 3]
                cell += 1
                tabs = gate_tables(layer_seq, wih_t_ref, bias_ref)
                dir_outs.append(run_direction(tabs, whh_g_ref, reverse=(d == 1)))
            if l + 1 < num_layers:
                if num_dir == 1:
                    per_t = dir_outs[0]
                else:
                    per_t = [jnp.concatenate([dir_outs[0][t], dir_outs[1][t]], axis=-1)
                             for t in range(T)]
                layer_seq = jnp.concatenate(per_t, axis=0)    # (T*Bp, H*num_dir)

        # x_out[-1, :, :]  (for the backward direction this is its first step,
        # matching PyTorch's bidirectional output at the last time index).
        if num_dir == 1:
            final = dir_outs[0][T - 1][:B]
        else:
            final = jnp.concatenate([dir_outs[0][T - 1][:B],
                                     dir_outs[1][T - 1][:B]], axis=-1)
        out_ref[...] = final.astype(out_ref.dtype)

    return kernel


# ----------------------------------------------------------------------------
# Wrapper: host-side layout prep (tiny, fused by XLA) + single pallas_call.
# ----------------------------------------------------------------------------
def header_decoder_forward(x, params, *, num_layers, num_dir):
    B, C, T = x.shape
    H = params["lstm"][0][0]["whh_g"].shape[-1]
    Bp = _round_up(B, 8)                          # sublane-pad the batch

    x_bt = jnp.transpose(x, (0, 2, 1))            # (B, T, C)
    x_tbc = jnp.transpose(x, (2, 0, 1))           # (T, B, C)
    if Bp > B:
        x_tbc = jnp.concatenate(
            [x_tbc, jnp.zeros((T, Bp - B, C), x.dtype)], axis=1)
    x_tb = x_tbc.reshape(T * Bp, C)               # (T*Bp, C), row = t*Bp + b

    args = [x_bt, x_tb, params["attn_w1"], params["attn_b1"],
            params["attn_w2"], params["attn_b2"]]
    for l in range(num_layers):
        for d in range(num_dir):
            w = params["lstm"][l][d]
            args += [w["wih_t"], w["bias"], w["whh_g"]]

    def _full_spec(a):
        nd = a.ndim
        return pl.BlockSpec(a.shape, lambda i, _n=nd: (0,) * _n)

    kernel = _make_header_decoder_kernel(B, Bp, C, T, H, num_layers, num_dir)
    return pl.pallas_call(
        kernel,
        out_shape=jax.ShapeDtypeStruct((B, H * num_dir), x.dtype),
        grid=(1,),
        in_specs=[_full_spec(a) for a in args],
        out_specs=pl.BlockSpec((B, H * num_dir), lambda i: (0, 0)),
        compiler_params=pltpu.CompilerParams(dimension_semantics=("arbitrary",)),
    )(*args)


# ----------------------------------------------------------------------------
# Deterministic parameter init (shapes follow the nn.Module __init__).
#   nn.Linear(T, Ha):  W1 (Ha, T), b1 (Ha,)    -> stored (Ha, T), (Ha, 1)
#   nn.Linear(Ha, 1):  W2 (1, Ha), b2 (1,)     -> stored (Ha, 1), (1, 1)
#   nn.LSTM:  W_ih (4H, I), W_hh (4H, H), b_ih/b_hh (4H,)
#     -> wih_t (I, 4H), bias (1, 4H) = b_ih + b_hh,
#        whh_g (4, H, H) with whh_g[k] = W_hh[k*H:(k+1)*H, :].T  (gate order i,f,g,o)
# ----------------------------------------------------------------------------
def init_params(key, *, T, C, Ha, H, num_layers, num_dir):
    scale = 0.1
    k_a1, k_a1b, k_a2, k_a2b, k_lstm = jax.random.split(key, 5)
    params = {
        "attn_w1": scale * jax.random.normal(k_a1, (Ha, T), jnp.float32),
        "attn_b1": scale * jax.random.normal(k_a1b, (Ha, 1), jnp.float32),
        "attn_w2": scale * jax.random.normal(k_a2, (Ha, 1), jnp.float32),
        "attn_b2": scale * jax.random.normal(k_a2b, (1, 1), jnp.float32),
        "lstm": [],
    }
    for l in range(num_layers):
        I = C if l == 0 else H * num_dir
        dirs = []
        for d in range(num_dir):
            kk = jax.random.fold_in(k_lstm, l * 2 + d)
            k1, k2, k3, k4 = jax.random.split(kk, 4)
            wih = scale * jax.random.normal(k1, (4 * H, I), jnp.float32)
            whh = scale * jax.random.normal(k2, (4 * H, H), jnp.float32)
            b_ih = scale * jax.random.normal(k3, (4 * H,), jnp.float32)
            b_hh = scale * jax.random.normal(k4, (4 * H,), jnp.float32)
            dirs.append({
                "wih_t": wih.T,                                           # (I, 4H)
                "bias": (b_ih + b_hh).reshape(1, 4 * H),                  # (1, 4H)
                "whh_g": jnp.transpose(whh.reshape(4, H, H), (0, 2, 1)),  # (4, H, H)
            })
        params["lstm"].append(dirs)
    return params


# ----------------------------------------------------------------------------
# Pure-JAX reference (same math) to sanity-check the Pallas path.
# ----------------------------------------------------------------------------
def reference_forward(x, params, *, num_layers, num_dir):
    hp = jax.lax.Precision.HIGHEST
    B, C, T = x.shape
    H = params["lstm"][0][0]["whh_g"].shape[-1]

    w1 = params["attn_w1"]
    b1 = params["attn_b1"][:, 0]
    w2 = params["attn_w2"][:, 0]
    b2 = params["attn_b2"][0, 0]
    h = jnp.tanh(jnp.einsum("bct,at->bca", x, w1, precision=hp) + b1)
    e = jnp.einsum("bca,a->bc", h, w2, precision=hp) + b2
    alpha = jax.nn.softmax(e, axis=1)[..., None]                # (B, C, 1)
    seq = jnp.transpose(x * alpha, (2, 0, 1))                   # (T, B, C)

    def run_dir(s, w):
        wih_t, bias = w["wih_t"], w["bias"][0]
        whh_t = jnp.concatenate([w["whh_g"][k] for k in range(4)], axis=-1)  # (H, 4H)

        def step(carry, x_t):
            h_prev, c_prev = carry
            gates = (jnp.dot(x_t, wih_t, precision=hp)
                     + jnp.dot(h_prev, whh_t, precision=hp) + bias)
            i_g = jax.nn.sigmoid(gates[:, 0:H])
            f_g = jax.nn.sigmoid(gates[:, H:2 * H])
            g_g = jnp.tanh(gates[:, 2 * H:3 * H])
            o_g = jax.nn.sigmoid(gates[:, 3 * H:4 * H])
            c_new = f_g * c_prev + i_g * g_g
            h_new = o_g * jnp.tanh(c_new)
            return (h_new, c_new), h_new

        init = (jnp.zeros((B, H), jnp.float32), jnp.zeros((B, H), jnp.float32))
        _, hs = jax.lax.scan(step, init, s)
        return hs

    layer_in = seq
    for l in range(num_layers):
        outs = []
        for d in range(num_dir):
            s = layer_in if d == 0 else layer_in[::-1]
            hs = run_dir(s, params["lstm"][l][d])
            if d == 1:
                hs = hs[::-1]
            outs.append(hs)
        layer_in = outs[0] if num_dir == 1 else jnp.concatenate(outs, axis=-1)
    return layer_in[-1]


if __name__ == "__main__":
    # Config consistent with the module:
    #   common.history_seq_len = 16, in_attn_hidden_size = 32,
    #   de.lstm_hidden_size = 32, de.lstm_num_layer = 1, de.bidirectional = False
    B, C, T = 2, 4, 16          # lstm_input_size is hard-coded to 4 in the module
    Ha, H = 32, 32
    num_layers, num_dir = 1, 1

    key = jax.random.PRNGKey(0)
    k_x, k_p = jax.random.split(key)
    x = jax.random.normal(k_x, (B, C, T), jnp.float32)
    params = init_params(k_p, T=T, C=C, Ha=Ha, H=H,
                         num_layers=num_layers, num_dir=num_dir)

    fwd = jax.jit(functools.partial(header_decoder_forward,
                                    num_layers=num_layers, num_dir=num_dir))
    out = jax.block_until_ready(fwd(x, params))

    ref = jax.block_until_ready(
        reference_forward(x, params, num_layers=num_layers, num_dir=num_dir))

    assert out.shape == (B, H * num_dir)
    assert jnp.allclose(out, ref, atol=1e-2, rtol=1e-2), (out, ref)

    print("KERNEL_OK")
</pallas_src>

<mosaic_0001>
module attributes {stable_mosaic.version = 11 : i64} {
  func.func @kernel(%arg0: i32, %arg1: memref<2x16x4xf32, #tpu.memory_space<vmem>>, %arg2: memref<128x4xf32, #tpu.memory_space<vmem>>, %arg3: memref<32x16xf32, #tpu.memory_space<vmem>>, %arg4: memref<32x1xf32, #tpu.memory_space<vmem>>, %arg5: memref<32x1xf32, #tpu.memory_space<vmem>>, %arg6: memref<1x1xf32, #tpu.memory_space<vmem>>, %arg7: memref<4x128xf32, #tpu.memory_space<vmem>>, %arg8: memref<1x128xf32, #tpu.memory_space<vmem>>, %arg9: memref<4x32x32xf32, #tpu.memory_space<vmem>>, %arg10: memref<2x32xf32, #tpu.memory_space<vmem>>) attributes {dimension_semantics = [#tpu.dimension_semantics<arbitrary>], iteration_bounds = array<i64: 1>, scalar_prefetch = 0 : i64, scratch_operands = 0 : i64, tpu.core_type = #tpu.core_type<tc>, window_params = [{pipeline_mode = #tpu.pipeline_mode<synchronous>, transform_indices = @transform_0, window_bounds = array<i64: 2, 16, 4>}, {pipeline_mode = #tpu.pipeline_mode<synchronous>, transform_indices = @transform_1, window_bounds = array<i64: 128, 4>}, {pipeline_mode = #tpu.pipeline_mode<synchronous>, transform_indices = @transform_2, window_bounds = array<i64: 32, 16>}, {pipeline_mode = #tpu.pipeline_mode<synchronous>, transform_indices = @transform_3, window_bounds = array<i64: 32, 1>}, {pipeline_mode = #tpu.pipeline_mode<synchronous>, transform_indices = @transform_4, window_bounds = array<i64: 32, 1>}, {pipeline_mode = #tpu.pipeline_mode<synchronous>, transform_indices = @transform_5, window_bounds = array<i64: 1, 1>}, {pipeline_mode = #tpu.pipeline_mode<synchronous>, transform_indices = @transform_6, window_bounds = array<i64: 4, 128>}, {pipeline_mode = #tpu.pipeline_mode<synchronous>, transform_indices = @transform_7, window_bounds = array<i64: 1, 128>}, {pipeline_mode = #tpu.pipeline_mode<synchronous>, transform_indices = @transform_8, window_bounds = array<i64: 4, 32, 32>}, {pipeline_mode = #tpu.pipeline_mode<synchronous>, transform_indices = @transform_9, window_bounds = array<i64: 2, 32>}]} {
    %c0 = arith.constant 0 : index
    %c0_0 = arith.constant 0 : index
    %0 = vector.load %arg3[%c0, %c0_0] : memref<32x16xf32, #tpu.memory_space<vmem>>, vector<32x16xf32>
    %c0_1 = arith.constant 0 : index
    %c0_2 = arith.constant 0 : index
    %1 = vector.load %arg4[%c0_1, %c0_2] : memref<32x1xf32, #tpu.memory_space<vmem>>, vector<32x1xf32>
    %c0_3 = arith.constant 0 : index
    %c0_4 = arith.constant 0 : index
    %2 = vector.load %arg5[%c0_3, %c0_4] : memref<32x1xf32, #tpu.memory_space<vmem>>, vector<32x1xf32>
    %c0_5 = arith.constant 0 : index
    %c0_6 = arith.constant 0 : index
    %3 = vector.load %arg6[%c0_5, %c0_6] : memref<1x1xf32, #tpu.memory_space<vmem>>, vector<1x1xf32>
    %c0_7 = arith.constant 0 : index
    %c0_8 = arith.constant 0 : index
    %c0_9 = arith.constant 0 : index
    %4 = vector.load %arg1[%c0_7, %c0_8, %c0_9] : memref<2x16x4xf32, #tpu.memory_space<vmem>>, vector<1x16x4xf32>
    %5 = vector.shape_cast %4 : vector<1x16x4xf32> to vector<16x4xf32>
    %cst = arith.constant dense<0.000000e+00> : vector<32x4xf32>
    %6 = tpu.matmul %0, %5, %cst {dimension_numbers = #tpu.dot_dimension_numbers<[1], [0], [0], [1], [0, 0, 1, 1], [], []>} : vector<32x16xf32>, vector<16x4xf32>, vector<32x4xf32> -> vector<32x4xf32>
    %7 = vector.broadcast %1 : vector<32x1xf32> to vector<32x4xf32>
    %8 = arith.addf %6, %7 : vector<32x4xf32>
    %9 = math.tanh %8 : vector<32x4xf32>
    %10 = vector.broadcast %2 : vector<32x1xf32> to vector<32x4xf32>
    %11 = arith.mulf %9, %10 : vector<32x4xf32>
    %cst_10 = arith.constant dense<0.000000e+00> : vector<4xf32>
    %12 = vector.multi_reduction <add>, %11, %cst_10 [0] : vector<32x4xf32> to vector<4xf32>
    %13 = vector.shape_cast %12 : vector<4xf32> to vector<1x4xf32>
    %14 = vector.broadcast %3 : vector<1x1xf32> to vector<1x4xf32>
    %15 = arith.addf %13, %14 : vector<1x4xf32>
    %cst_11 = arith.constant dense<0xFF800000> : vector<1xf32>
    %16 = vector.multi_reduction <maximumf>, %15, %cst_11 [1] : vector<1x4xf32> to vector<1xf32>
    %17 = vector.shape_cast %16 : vector<1xf32> to vector<1x1xf32>
    %18 = vector.broadcast %17 : vector<1x1xf32> to vector<1x4xf32>
    %19 = arith.subf %15, %18 : vector<1x4xf32>
    %20 = math.exp %19 : vector<1x4xf32>
    %cst_12 = arith.constant dense<0.000000e+00> : vector<1xf32>
    %21 = vector.multi_reduction <add>, %20, %cst_12 [1] : vector<1x4xf32> to vector<1xf32>
    %22 = vector.shape_cast %21 : vector<1xf32> to vector<1x1xf32>
    %23 = vector.broadcast %22 : vector<1x1xf32> to vector<1x4xf32>
    %24 = arith.divf %20, %23 : vector<1x4xf32>
    %c1 = arith.constant 1 : index
    %c0_13 = arith.constant 0 : index
    %c0_14 = arith.constant 0 : index
    %25 = vector.load %arg1[%c1, %c0_13, %c0_14] : memref<2x16x4xf32, #tpu.memory_space<vmem>>, vector<1x16x4xf32>
    %26 = vector.shape_cast %25 : vector<1x16x4xf32> to vector<16x4xf32>
    %cst_15 = arith.constant dense<0.000000e+00> : vector<32x4xf32>
    %27 = tpu.matmul %0, %26, %cst_15 {dimension_numbers = #tpu.dot_dimension_numbers<[1], [0], [0], [1], [0, 0, 1, 1], [], []>} : vector<32x16xf32>, vector<16x4xf32>, vector<32x4xf32> -> vector<32x4xf32>
    %28 = vector.broadcast %1 : vector<32x1xf32> to vector<32x4xf32>
    %29 = arith.addf %27, %28 : vector<32x4xf32>
    %30 = math.tanh %29 : vector<32x4xf32>
    %31 = vector.broadcast %2 : vector<32x1xf32> to vector<32x4xf32>
    %32 = arith.mulf %30, %31 : vector<32x4xf32>
    %cst_16 = arith.constant dense<0.000000e+00> : vector<4xf32>
    %33 = vector.multi_reduction <add>, %32, %cst_16 [0] : vector<32x4xf32> to vector<4xf32>
    %34 = vector.shape_cast %33 : vector<4xf32> to vector<1x4xf32>
    %35 = vector.broadcast %3 : vector<1x1xf32> to vector<1x4xf32>
    %36 = arith.addf %34, %35 : vector<1x4xf32>
    %cst_17 = arith.constant dense<0xFF800000> : vector<1xf32>
    %37 = vector.multi_reduction <maximumf>, %36, %cst_17 [1] : vector<1x4xf32> to vector<1xf32>
    %38 = vector.shape_cast %37 : vector<1xf32> to vector<1x1xf32>
    %39 = vector.broadcast %38 : vector<1x1xf32> to vector<1x4xf32>
    %40 = arith.subf %36, %39 : vector<1x4xf32>
    %41 = math.exp %40 : vector<1x4xf32>
    %cst_18 = arith.constant dense<0.000000e+00> : vector<1xf32>
    %42 = vector.multi_reduction <add>, %41, %cst_18 [1] : vector<1x4xf32> to vector<1xf32>
    %43 = vector.shape_cast %42 : vector<1xf32> to vector<1x1xf32>
    %44 = vector.broadcast %43 : vector<1x1xf32> to vector<1x4xf32>
    %45 = arith.divf %41, %44 : vector<1x4xf32>
    %cst_19 = arith.constant 0.000000e+00 : f32
    %46 = vector.broadcast %cst_19 : f32 to vector<6x4xf32>
    %47 = tpu.concatenate %24, %45, %46 in 0 : vector<1x4xf32>, vector<1x4xf32>, vector<6x4xf32> -> vector<8x4xf32>
    %48 = tpu.concatenate %47, %47, %47, %47, %47, %47, %47, %47, %47, %47, %47, %47, %47, %47, %47, %47 in 0 : vector<8x4xf32>, vector<8x4xf32>, vector<8x4xf32>, vector<8x4xf32>, vector<8x4xf32>, vector<8x4xf32>, vector<8x4xf32>, vector<8x4xf32>, vector<8x4xf32>, vector<8x4xf32>, vector<8x4xf32>, vector<8x4xf32>, vector<8x4xf32>, vector<8x4xf32>, vector<8x4xf32>, vector<8x4xf32> -> vector<128x4xf32>
    %c0_20 = arith.constant 0 : index
    %c0_21 = arith.constant 0 : index
    %49 = vector.load %arg2[%c0_20, %c0_21] : memref<128x4xf32, #tpu.memory_space<vmem>>, vector<128x4xf32>
    %50 = arith.mulf %49, %48 : vector<128x4xf32>
    %c0_22 = arith.constant 0 : index
    %c0_23 = arith.constant 0 : index
    %51 = vector.load %arg7[%c0_22, %c0_23] : memref<4x128xf32, #tpu.memory_space<vmem>>, vector<4x128xf32>
    %cst_24 = arith.constant dense<0.000000e+00> : vector<128x128xf32>
    %52 = tpu.matmul %50, %51, %cst_24 {dimension_numbers = #tpu.dot_dimension_numbers<[1], [0], [0], [1], [0, 0, 1, 1], [], []>} : vector<128x4xf32>, vector<4x128xf32>, vector<128x128xf32> -> vector<128x128xf32>
    %c0_25 = arith.constant 0 : index
    %c0_26 = arith.constant 0 : index
    %53 = vector.load %arg8[%c0_25, %c0_26] : memref<1x128xf32, #tpu.memory_space<vmem>>, vector<1x128xf32>
    %54 = vector.broadcast %53 : vector<1x128xf32> to vector<128x128xf32>
    %55 = arith.addf %52, %54 : vector<128x128xf32>
    %56 = vector.extract_strided_slice %55 {offsets = [0, 0], sizes = [128, 32], strides = [1, 1]} : vector<128x128xf32> to vector<128x32xf32>
    %57 = vector.extract_strided_slice %55 {offsets = [0, 32], sizes = [128, 32], strides = [1, 1]} : vector<128x128xf32> to vector<128x32xf32>
    %58 = vector.extract_strided_slice %55 {offsets = [0, 64], sizes = [128, 32], strides = [1, 1]} : vector<128x128xf32> to vector<128x32xf32>
    %59 = vector.extract_strided_slice %55 {offsets = [0, 96], sizes = [128, 32], strides = [1, 1]} : vector<128x128xf32> to vector<128x32xf32>
    %c0_27 = arith.constant 0 : index
    %c0_28 = arith.constant 0 : index
    %c0_29 = arith.constant 0 : index
    %60 = vector.load %arg9[%c0_27, %c0_28, %c0_29] : memref<4x32x32xf32, #tpu.memory_space<vmem>>, vector<1x32x32xf32>
    %61 = vector.shape_cast %60 : vector<1x32x32xf32> to vector<32x32xf32>
    %c1_30 = arith.constant 1 : index
    %c0_31 = arith.constant 0 : index
    %c0_32 = arith.constant 0 : index
    %62 = vector.load %arg9[%c1_30, %c0_31, %c0_32] : memref<4x32x32xf32, #tpu.memory_space<vmem>>, vector<1x32x32xf32>
    %63 = vector.shape_cast %62 : vector<1x32x32xf32> to vector<32x32xf32>
    %c2 = arith.constant 2 : index
    %c0_33 = arith.constant 0 : index
    %c0_34 = arith.constant 0 : index
    %64 = vector.load %arg9[%c2, %c0_33, %c0_34] : memref<4x32x32xf32, #tpu.memory_space<vmem>>, vector<1x32x32xf32>
    %65 = vector.shape_cast %64 : vector<1x32x32xf32> to vector<32x32xf32>
    %c3 = arith.constant 3 : index
    %c0_35 = arith.constant 0 : index
    %c0_36 = arith.constant 0 : index
    %66 = vector.load %arg9[%c3, %c0_35, %c0_36] : memref<4x32x32xf32, #tpu.memory_space<vmem>>, vector<1x32x32xf32>
    %67 = vector.shape_cast %66 : vector<1x32x32xf32> to vector<32x32xf32>
    %cst_37 = arith.constant 0.000000e+00 : f32
    %68 = vector.broadcast %cst_37 : f32 to vector<8x32xf32>
    %cst_38 = arith.constant 0.000000e+00 : f32
    %69 = vector.broadcast %cst_38 : f32 to vector<8x32xf32>
    %70 = vector.extract_strided_slice %56 {offsets = [0, 0], sizes = [8, 32], strides = [1, 1]} : vector<128x32xf32> to vector<8x32xf32>
    %cst_39 = arith.constant dense<0.000000e+00> : vector<8x32xf32>
    %71 = tpu.matmul %68, %61, %cst_39 {dimension_numbers = #tpu.dot_dimension_numbers<[1], [0], [0], [1], [0, 0, 1, 1], [], []>} : vector<8x32xf32>, vector<32x32xf32>, vector<8x32xf32> -> vector<8x32xf32>
    %72 = arith.addf %70, %71 : vector<8x32xf32>
    %73 = vector.extract_strided_slice %57 {offsets = [0, 0], sizes = [8, 32], strides = [1, 1]} : vector<128x32xf32> to vector<8x32xf32>
    %cst_40 = arith.constant dense<0.000000e+00> : vector<8x32xf32>
    %74 = tpu.matmul %68, %63, %cst_40 {dimension_numbers = #tpu.dot_dimension_numbers<[1], [0], [0], [1], [0, 0, 1, 1], [], []>} : vector<8x32xf32>, vector<32x32xf32>, vector<8x32xf32> -> vector<8x32xf32>
    %75 = arith.addf %73, %74 : vector<8x32xf32>
    %76 = vector.extract_strided_slice %58 {offsets = [0, 0], sizes = [8, 32], strides = [1, 1]} : vector<128x32xf32> to vector<8x32xf32>
    %cst_41 = arith.constant dense<0.000000e+00> : vector<8x32xf32>
    %77 = tpu.matmul %68, %65, %cst_41 {dimension_numbers = #tpu.dot_dimension_numbers<[1], [0], [0], [1], [0, 0, 1, 1], [], []>} : vector<8x32xf32>, vector<32x32xf32>, vector<8x32xf32> -> vector<8x32xf32>
    %78 = arith.addf %76, %77 : vector<8x32xf32>
    %79 = vector.extract_strided_slice %59 {offsets = [0, 0], sizes = [8, 32], strides = [1, 1]} : vector<128x32xf32> to vector<8x32xf32>
    %cst_42 = arith.constant dense<0.000000e+00> : vector<8x32xf32>
    %80 = tpu.matmul %68, %67, %cst_42 {dimension_numbers = #tpu.dot_dimension_numbers<[1], [0], [0], [1], [0, 0, 1, 1], [], []>} : vector<8x32xf32>, vector<32x32xf32>, vector<8x32xf32> -> vector<8x32xf32>
    %81 = arith.addf %79, %80 : vector<8x32xf32>
    %82 = arith.negf %72 : vector<8x32xf32>
    %83 = math.exp %82 : vector<8x32xf32>
    %cst_43 = arith.constant 1.000000e+00 : f32
    %84 = vector.broadcast %cst_43 : f32 to vector<8x32xf32>
    %85 = arith.addf %84, %83 : vector<8x32xf32>
    %86 = arith.divf %84, %85 : vector<8x32xf32>
    %87 = arith.negf %75 : vector<8x32xf32>
    %88 = math.exp %87 : vector<8x32xf32>
    %cst_44 = arith.constant 1.000000e+00 : f32
    %89 = vector.broadcast %cst_44 : f32 to vector<8x32xf32>
    %90 = arith.addf %89, %88 : vector<8x32xf32>
    %91 = arith.divf %89, %90 : vector<8x32xf32>
    %92 = math.tanh %78 : vector<8x32xf32>
    %93 = arith.negf %81 : vector<8x32xf32>
    %94 = math.exp %93 : vector<8x32xf32>
    %cst_45 = arith.constant 1.000000e+00 : f32
    %95 = vector.broadcast %cst_45 : f32 to vector<8x32xf32>
    %96 = arith.addf %95, %94 : vector<8x32xf32>
    %97 = arith.divf %95, %96 : vector<8x32xf32>
    %98 = arith.mulf %91, %69 : vector<8x32xf32>
    %99 = arith.mulf %86, %92 : vector<8x32xf32>
    %100 = arith.addf %98, %99 : vector<8x32xf32>
    %101 = math.tanh %100 : vector<8x32xf32>
    %102 = arith.mulf %97, %101 : vector<8x32xf32>
    %103 = vector.extract_strided_slice %56 {offsets = [8, 0], sizes = [8, 32], strides = [1, 1]} : vector<128x32xf32> to vector<8x32xf32>
    %cst_46 = arith.constant dense<0.000000e+00> : vector<8x32xf32>
    %104 = tpu.matmul %102, %61, %cst_46 {dimension_numbers = #tpu.dot_dimension_numbers<[1], [0], [0], [1], [0, 0, 1, 1], [], []>} : vector<8x32xf32>, vector<32x32xf32>, vector<8x32xf32> -> vector<8x32xf32>
    %105 = arith.addf %103, %104 : vector<8x32xf32>
    %106 = vector.extract_strided_slice %57 {offsets = [8, 0], sizes = [8, 32], strides = [1, 1]} : vector<128x32xf32> to vector<8x32xf32>
    %cst_47 = arith.constant dense<0.000000e+00> : vector<8x32xf32>
    %107 = tpu.matmul %102, %63, %cst_47 {dimension_numbers = #tpu.dot_dimension_numbers<[1], [0], [0], [1], [0, 0, 1, 1], [], []>} : vector<8x32xf32>, vector<32x32xf32>, vector<8x32xf32> -> vector<8x32xf32>
    %108 = arith.addf %106, %107 : vector<8x32xf32>
    %109 = vector.extract_strided_slice %58 {offsets = [8, 0], sizes = [8, 32], strides = [1, 1]} : vector<128x32xf32> to vector<8x32xf32>
    %cst_48 = arith.constant dense<0.000000e+00> : vector<8x32xf32>
    %110 = tpu.matmul %102, %65, %cst_48 {dimension_numbers = #tpu.dot_dimension_numbers<[1], [0], [0], [1], [0, 0, 1, 1], [], []>} : vector<8x32xf32>, vector<32x32xf32>, vector<8x32xf32> -> vector<8x32xf32>
    %111 = arith.addf %109, %110 : vector<8x32xf32>
    %112 = vector.extract_strided_slice %59 {offsets = [8, 0], sizes = [8, 32], strides = [1, 1]} : vector<128x32xf32> to vector<8x32xf32>
    %cst_49 = arith.constant dense<0.000000e+00> : vector<8x32xf32>
    %113 = tpu.matmul %102, %67, %cst_49 {dimension_numbers = #tpu.dot_dimension_numbers<[1], [0], [0], [1], [0, 0, 1, 1], [], []>} : vector<8x32xf32>, vector<32x32xf32>, vector<8x32xf32> -> vector<8x32xf32>
    %114 = arith.addf %112, %113 : vector<8x32xf32>
    %115 = arith.negf %105 : vector<8x32xf32>
    %116 = math.exp %115 : vector<8x32xf32>
    %cst_50 = arith.constant 1.000000e+00 : f32
    %117 = vector.broadcast %cst_50 : f32 to vector<8x32xf32>
    %118 = arith.addf %117, %116 : vector<8x32xf32>
    %119 = arith.divf %117, %118 : vector<8x32xf32>
    %120 = arith.negf %108 : vector<8x32xf32>
    %121 = math.exp %120 : vector<8x32xf32>
    %cst_51 = arith.constant 1.000000e+00 : f32
    %122 = vector.broadcast %cst_51 : f32 to vector<8x32xf32>
    %123 = arith.addf %122, %121 : vector<8x32xf32>
    %124 = arith.divf %122, %123 : vector<8x32xf32>
    %125 = math.tanh %111 : vector<8x32xf32>
    %126 = arith.negf %114 : vector<8x32xf32>
    %127 = math.exp %126 : vector<8x32xf32>
    %cst_52 = arith.constant 1.000000e+00 : f32
    %128 = vector.broadcast %cst_52 : f32 to vector<8x32xf32>
    %129 = arith.addf %128, %127 : vector<8x32xf32>
    %130 = arith.divf %128, %129 : vector<8x32xf32>
    %131 = arith.mulf %124, %100 : vector<8x32xf32>
    %132 = arith.mulf %119, %125 : vector<8x32xf32>
    %133 = arith.addf %131, %132 : vector<8x32xf32>
    %134 = math.tanh %133 : vector<8x32xf32>
    %135 = arith.mulf %130, %134 : vector<8x32xf32>
    %136 = vector.extract_strided_slice %56 {offsets = [16, 0], sizes = [8, 32], strides = [1, 1]} : vector<128x32xf32> to vector<8x32xf32>
    %cst_53 = arith.constant dense<0.000000e+00> : vector<8x32xf32>
    %137 = tpu.matmul %135, %61, %cst_53 {dimension_numbers = #tpu.dot_dimension_numbers<[1], [0], [0], [1], [0, 0, 1, 1], [], []>} : vector<8x32xf32>, vector<32x32xf32>, vector<8x32xf32> -> vector<8x32xf32>
    %138 = arith.addf %136, %137 : vector<8x32xf32>
    %139 = vector.extract_strided_slice %57 {offsets = [16, 0], sizes = [8, 32], strides = [1, 1]} : vector<128x32xf32> to vector<8x32xf32>
    %cst_54 = arith.constant dense<0.000000e+00> : vector<8x32xf32>
    %140 = tpu.matmul %135, %63, %cst_54 {dimension_numbers = #tpu.dot_dimension_numbers<[1], [0], [0], [1], [0, 0, 1, 1], [], []>} : vector<8x32xf32>, vector<32x32xf32>, vector<8x32xf32> -> vector<8x32xf32>
    %141 = arith.addf %139, %140 : vector<8x32xf32>
    %142 = vector.extract_strided_slice %58 {offsets = [16, 0], sizes = [8, 32], strides = [1, 1]} : vector<128x32xf32> to vector<8x32xf32>
    %cst_55 = arith.constant dense<0.000000e+00> : vector<8x32xf32>
    %143 = tpu.matmul %135, %65, %cst_55 {dimension_numbers = #tpu.dot_dimension_numbers<[1], [0], [0], [1], [0, 0, 1, 1], [], []>} : vector<8x32xf32>, vector<32x32xf32>, vector<8x32xf32> -> vector<8x32xf32>
    %144 = arith.addf %142, %143 : vector<8x32xf32>
    %145 = vector.extract_strided_slice %59 {offsets = [16, 0], sizes = [8, 32], strides = [1, 1]} : vector<128x32xf32> to vector<8x32xf32>
    %cst_56 = arith.constant dense<0.000000e+00> : vector<8x32xf32>
    %146 = tpu.matmul %135, %67, %cst_56 {dimension_numbers = #tpu.dot_dimension_numbers<[1], [0], [0], [1], [0, 0, 1, 1], [], []>} : vector<8x32xf32>, vector<32x32xf32>, vector<8x32xf32> -> vector<8x32xf32>
    %147 = arith.addf %145, %146 : vector<8x32xf32>
    %148 = arith.negf %138 : vector<8x32xf32>
    %149 = math.exp %148 : vector<8x32xf32>
    %cst_57 = arith.constant 1.000000e+00 : f32
    %150 = vector.broadcast %cst_57 : f32 to vector<8x32xf32>
    %151 = arith.addf %150, %149 : vector<8x32xf32>
    %152 = arith.divf %150, %151 : vector<8x32xf32>
    %153 = arith.negf %141 : vector<8x32xf32>
    %154 = math.exp %153 : vector<8x32xf32>
    %cst_58 = arith.constant 1.000000e+00 : f32
    %155 = vector.broadcast %cst_58 : f32 to vector<8x32xf32>
    %156 = arith.addf %155, %154 : vector<8x32xf32>
    %157 = arith.divf %155, %156 : vector<8x32xf32>
    %158 = math.tanh %144 : vector<8x32xf32>
    %159 = arith.negf %147 : vector<8x32xf32>
    %160 = math.exp %159 : vector<8x32xf32>
    %cst_59 = arith.constant 1.000000e+00 : f32
    %161 = vector.broadcast %cst_59 : f32 to vector<8x32xf32>
    %162 = arith.addf %161, %160 : vector<8x32xf32>
    %163 = arith.divf %161, %162 : vector<8x32xf32>
    %164 = arith.mulf %157, %133 : vector<8x32xf32>
    %165 = arith.mulf %152, %158 : vector<8x32xf32>
    %166 = arith.addf %164, %165 : vector<8x32xf32>
    %167 = math.tanh %166 : vector<8x32xf32>
    %168 = arith.mulf %163, %167 : vector<8x32xf32>
    %169 = vector.extract_strided_slice %56 {offsets = [24, 0], sizes = [8, 32], strides = [1, 1]} : vector<128x32xf32> to vector<8x32xf32>
    %cst_60 = arith.constant dense<0.000000e+00> : vector<8x32xf32>
    %170 = tpu.matmul %168, %61, %cst_60 {dimension_numbers = #tpu.dot_dimension_numbers<[1], [0], [0], [1], [0, 0, 1, 1], [], []>} : vector<8x32xf32>, vector<32x32xf32>, vector<8x32xf32> -> vector<8x32xf32>
    %171 = arith.addf %169, %170 : vector<8x32xf32>
    %172 = vector.extract_strided_slice %57 {offsets = [24, 0], sizes = [8, 32], strides = [1, 1]} : vector<128x32xf32> to vector<8x32xf32>
    %cst_61 = arith.constant dense<0.000000e+00> : vector<8x32xf32>
    %173 = tpu.matmul %168, %63, %cst_61 {dimension_numbers = #tpu.dot_dimension_numbers<[1], [0], [0], [1], [0, 0, 1, 1], [], []>} : vector<8x32xf32>, vector<32x32xf32>, vector<8x32xf32> -> vector<8x32xf32>
    %174 = arith.addf %172, %173 : vector<8x32xf32>
    %175 = vector.extract_strided_slice %58 {offsets = [24, 0], sizes = [8, 32], strides = [1, 1]} : vector<128x32xf32> to vector<8x32xf32>
    %cst_62 = arith.constant dense<0.000000e+00> : vector<8x32xf32>
    %176 = tpu.matmul %168, %65, %cst_62 {dimension_numbers = #tpu.dot_dimension_numbers<[1], [0], [0], [1], [0, 0, 1, 1], [], []>} : vector<8x32xf32>, vector<32x32xf32>, vector<8x32xf32> -> vector<8x32xf32>
    %177 = arith.addf %175, %176 : vector<8x32xf32>
    %178 = vector.extract_strided_slice %59 {offsets = [24, 0], sizes = [8, 32], strides = [1, 1]} : vector<128x32xf32> to vector<8x32xf32>
    %cst_63 = arith.constant dense<0.000000e+00> : vector<8x32xf32>
    %179 = tpu.matmul %168, %67, %cst_63 {dimension_numbers = #tpu.dot_dimension_numbers<[1], [0], [0], [1], [0, 0, 1, 1], [], []>} : vector<8x32xf32>, vector<32x32xf32>, vector<8x32xf32> -> vector<8x32xf32>
    %180 = arith.addf %178, %179 : vector<8x32xf32>
    %181 = arith.negf %171 : vector<8x32xf32>
    %182 = math.exp %181 : vector<8x32xf32>
    %cst_64 = arith.constant 1.000000e+00 : f32
    %183 = vector.broadcast %cst_64 : f32 to vector<8x32xf32>
    %184 = arith.addf %183, %182 : vector<8x32xf32>
    %185 = arith.divf %183, %184 : vector<8x32xf32>
    %186 = arith.negf %174 : vector<8x32xf32>
    %187 = math.exp %186 : vector<8x32xf32>
    %cst_65 = arith.constant 1.000000e+00 : f32
    %188 = vector.broadcast %cst_65 : f32 to vector<8x32xf32>
    %189 = arith.addf %188, %187 : vector<8x32xf32>
    %190 = arith.divf %188, %189 : vector<8x32xf32>
    %191 = math.tanh %177 : vector<8x32xf32>
    %192 = arith.negf %180 : vector<8x32xf32>
    %193 = math.exp %192 : vector<8x32xf32>
    %cst_66 = arith.constant 1.000000e+00 : f32
    %194 = vector.broadcast %cst_66 : f32 to vector<8x32xf32>
    %195 = arith.addf %194, %193 : vector<8x32xf32>
    %196 = arith.divf %194, %195 : vector<8x32xf32>
    %197 = arith.mulf %190, %166 : vector<8x32xf32>
    %198 = arith.mulf %185, %191 : vector<8x32xf32>
    %199 = arith.addf %197, %198 : vector<8x32xf32>
    %200 = math.tanh %199 : vector<8x32xf32>
    %201 = arith.mulf %196, %200 : vector<8x32xf32>
    %202 = vector.extract_strided_slice %56 {offsets = [32, 0], sizes = [8, 32], strides = [1, 1]} : vector<128x32xf32> to vector<8x32xf32>
    %cst_67 = arith.constant dense<0.000000e+00> : vector<8x32xf32>
    %203 = tpu.matmul %201, %61, %cst_67 {dimension_numbers = #tpu.dot_dimension_numbers<[1], [0], [0], [1], [0, 0, 1, 1], [], []>} : vector<8x32xf32>, vector<32x32xf32>, vector<8x32xf32> -> vector<8x32xf32>
    %204 = arith.addf %202, %203 : vector<8x32xf32>
    %205 = vector.extract_strided_slice %57 {offsets = [32, 0], sizes = [8, 32], strides = [1, 1]} : vector<128x32xf32> to vector<8x32xf32>
    %cst_68 = arith.constant dense<0.000000e+00> : vector<8x32xf32>
    %206 = tpu.matmul %201, %63, %cst_68 {dimension_numbers = #tpu.dot_dimension_numbers<[1], [0], [0], [1], [0, 0, 1, 1], [], []>} : vector<8x32xf32>, vector<32x32xf32>, vector<8x32xf32> -> vector<8x32xf32>
    %207 = arith.addf %205, %206 : vector<8x32xf32>
    %208 = vector.extract_strided_slice %58 {offsets = [32, 0], sizes = [8, 32], strides = [1, 1]} : vector<128x32xf32> to vector<8x32xf32>
    %cst_69 = arith.constant dense<0.000000e+00> : vector<8x32xf32>
    %209 = tpu.matmul %201, %65, %cst_69 {dimension_numbers = #tpu.dot_dimension_numbers<[1], [0], [0], [1], [0, 0, 1, 1], [], []>} : vector<8x32xf32>, vector<32x32xf32>, vector<8x32xf32> -> vector<8x32xf32>
    %210 = arith.addf %208, %209 : vector<8x32xf32>
    %211 = vector.extract_strided_slice %59 {offsets = [32, 0], sizes = [8, 32], strides = [1, 1]} : vector<128x32xf32> to vector<8x32xf32>
    %cst_70 = arith.constant dense<0.000000e+00> : vector<8x32xf32>
    %212 = tpu.matmul %201, %67, %cst_70 {dimension_numbers = #tpu.dot_dimension_numbers<[1], [0], [0], [1], [0, 0, 1, 1], [], []>} : vector<8x32xf32>, vector<32x32xf32>, vector<8x32xf32> -> vector<8x32xf32>
    %213 = arith.addf %211, %212 : vector<8x32xf32>
    %214 = arith.negf %204 : vector<8x32xf32>
    %215 = math.exp %214 : vector<8x32xf32>
    %cst_71 = arith.constant 1.000000e+00 : f32
    %216 = vector.broadcast %cst_71 : f32 to vector<8x32xf32>
    %217 = arith.addf %216, %215 : vector<8x32xf32>
    %218 = arith.divf %216, %217 : vector<8x32xf32>
    %219 = arith.negf %207 : vector<8x32xf32>
    %220 = math.exp %219 : vector<8x32xf32>
    %cst_72 = arith.constant 1.000000e+00 : f32
    %221 = vector.broadcast %cst_72 : f32 to vector<8x32xf32>
    %222 = arith.addf %221, %220 : vector<8x32xf32>
    %223 = arith.divf %221, %222 : vector<8x32xf32>
    %224 = math.tanh %210 : vector<8x32xf32>
    %225 = arith.negf %213 : vector<8x32xf32>
    %226 = math.exp %225 : vector<8x32xf32>
    %cst_73 = arith.constant 1.000000e+00 : f32
    %227 = vector.broadcast %cst_73 : f32 to vector<8x32xf32>
    %228 = arith.addf %227, %226 : vector<8x32xf32>
    %229 = arith.divf %227, %228 : vector<8x32xf32>
    %230 = arith.mulf %223, %199 : vector<8x32xf32>
    %231 = arith.mulf %218, %224 : vector<8x32xf32>
    %232 = arith.addf %230, %231 : vector<8x32xf32>
    %233 = math.tanh %232 : vector<8x32xf32>
    %234 = arith.mulf %229, %233 : vector<8x32xf32>
    %235 = vector.extract_strided_slice %56 {offsets = [40, 0], sizes = [8, 32], strides = [1, 1]} : vector<128x32xf32> to vector<8x32xf32>
    %cst_74 = arith.constant dense<0.000000e+00> : vector<8x32xf32>
    %236 = tpu.matmul %234, %61, %cst_74 {dimension_numbers = #tpu.dot_dimension_numbers<[1], [0], [0], [1], [0, 0, 1, 1], [], []>} : vector<8x32xf32>, vector<32x32xf32>, vector<8x32xf32> -> vector<8x32xf32>
    %237 = arith.addf %235, %236 : vector<8x32xf32>
    %238 = vector.extract_strided_slice %57 {offsets = [40, 0], sizes = [8, 32], strides = [1, 1]} : vector<128x32xf32> to vector<8x32xf32>
    %cst_75 = arith.constant dense<0.000000e+00> : vector<8x32xf32>
    %239 = tpu.matmul %234, %63, %cst_75 {dimension_numbers = #tpu.dot_dimension_numbers<[1], [0], [0], [1], [0, 0, 1, 1], [], []>} : vector<8x32xf32>, vector<32x32xf32>, vector<8x32xf32> -> vector<8x32xf32>
    %240 = arith.addf %238, %239 : vector<8x32xf32>
    %241 = vector.extract_strided_slice %58 {offsets = [40, 0], sizes = [8, 32], strides = [1, 1]} : vector<128x32xf32> to vector<8x32xf32>
    %cst_76 = arith.constant dense<0.000000e+00> : vector<8x32xf32>
    %242 = tpu.matmul %234, %65, %cst_76 {dimension_numbers = #tpu.dot_dimension_numbers<[1], [0], [0], [1], [0, 0, 1, 1], [], []>} : vector<8x32xf32>, vector<32x32xf32>, vector<8x32xf32> -> vector<8x32xf32>
    %243 = arith.addf %241, %242 : vector<8x32xf32>
    %244 = vector.extract_strided_slice %59 {offsets = [40, 0], sizes = [8, 32], strides = [1, 1]} : vector<128x32xf32> to vector<8x32xf32>
    %cst_77 = arith.constant dense<0.000000e+00> : vector<8x32xf32>
    %245 = tpu.matmul %234, %67, %cst_77 {dimension_numbers = #tpu.dot_dimension_numbers<[1], [0], [0], [1], [0, 0, 1, 1], [], []>} : vector<8x32xf32>, vector<32x32xf32>, vector<8x32xf32> -> vector<8x32xf32>
    %246 = arith.addf %244, %245 : vector<8x32xf32>
    %247 = arith.negf %237 : vector<8x32xf32>
    %248 = math.exp %247 : vector<8x32xf32>
    %cst_78 = arith.constant 1.000000e+00 : f32
    %249 = vector.broadcast %cst_78 : f32 to vector<8x32xf32>
    %250 = arith.addf %249, %248 : vector<8x32xf32>
    %251 = arith.divf %249, %250 : vector<8x32xf32>
    %252 = arith.negf %240 : vector<8x32xf32>
    %253 = math.exp %252 : vector<8x32xf32>
    %cst_79 = arith.constant 1.000000e+00 : f32
    %254 = vector.broadcast %cst_79 : f32 to vector<8x32xf32>
    %255 = arith.addf %254, %253 : vector<8x32xf32>
    %256 = arith.divf %254, %255 : vector<8x32xf32>
    %257 = math.tanh %243 : vector<8x32xf32>
    %258 = arith.negf %246 : vector<8x32xf32>
    %259 = math.exp %258 : vector<8x32xf32>
    %cst_80 = arith.constant 1.000000e+00 : f32
    %260 = vector.broadcast %cst_80 : f32 to vector<8x32xf32>
    %261 = arith.addf %260, %259 : vector<8x32xf32>
    %262 = arith.divf %260, %261 : vector<8x32xf32>
    %263 = arith.mulf %256, %232 : vector<8x32xf32>
    %264 = arith.mulf %251, %257 : vector<8x32xf32>
    %265 = arith.addf %263, %264 : vector<8x32xf32>
    %266 = math.tanh %265 : vector<8x32xf32>
    %267 = arith.mulf %262, %266 : vector<8x32xf32>
    %268 = vector.extract_strided_slice %56 {offsets = [48, 0], sizes = [8, 32], strides = [1, 1]} : vector<128x32xf32> to vector<8x32xf32>
    %cst_81 = arith.constant dense<0.000000e+00> : vector<8x32xf32>
    %269 = tpu.matmul %267, %61, %cst_81 {dimension_numbers = #tpu.dot_dimension_numbers<[1], [0], [0], [1], [0, 0, 1, 1], [], []>} : vector<8x32xf32>, vector<32x32xf32>, vector<8x32xf32> -> vector<8x32xf32>
    %270 = arith.addf %268, %269 : vector<8x32xf32>
    %271 = vector.extract_strided_slice %57 {offsets = [48, 0], sizes = [8, 32], strides = [1, 1]} : vector<128x32xf32> to vector<8x32xf32>
    %cst_82 = arith.constant dense<0.000000e+00> : vector<8x32xf32>
    %272 = tpu.matmul %267, %63, %cst_82 {dimension_numbers = #tpu.dot_dimension_numbers<[1], [0], [0], [1], [0, 0, 1, 1], [], []>} : vector<8x32xf32>, vector<32x32xf32>, vector<8x32xf32> -> vector<8x32xf32>
    %273 = arith.addf %271, %272 : vector<8x32xf32>
    %274 = vector.extract_strided_slice %58 {offsets = [48, 0], sizes = [8, 32], strides = [1, 1]} : vector<128x32xf32> to vector<8x32xf32>
    %cst_83 = arith.constant dense<0.000000e+00> : vector<8x32xf32>
    %275 = tpu.matmul %267, %65, %cst_83 {dimension_numbers = #tpu.dot_dimension_numbers<[1], [0], [0], [1], [0, 0, 1, 1], [], []>} : vector<8x32xf32>, vector<32x32xf32>, vector<8x32xf32> -> vector<8x32xf32>
    %276 = arith.addf %274, %275 : vector<8x32xf32>
    %277 = vector.extract_strided_slice %59 {offsets = [48, 0], sizes = [8, 32], strides = [1, 1]} : vector<128x32xf32> to vector<8x32xf32>
    %cst_84 = arith.constant dense<0.000000e+00> : vector<8x32xf32>
    %278 = tpu.matmul %267, %67, %cst_84 {dimension_numbers = #tpu.dot_dimension_numbers<[1], [0], [0], [1], [0, 0, 1, 1], [], []>} : vector<8x32xf32>, vector<32x32xf32>, vector<8x32xf32> -> vector<8x32xf32>
    %279 = arith.addf %277, %278 : vector<8x32xf32>
    %280 = arith.negf %270 : vector<8x32xf32>
    %281 = math.exp %280 : vector<8x32xf32>
    %cst_85 = arith.constant 1.000000e+00 : f32
    %282 = vector.broadcast %cst_85 : f32 to vector<8x32xf32>
    %283 = arith.addf %282, %281 : vector<8x32xf32>
    %284 = arith.divf %282, %283 : vector<8x32xf32>
    %285 = arith.negf %273 : vector<8x32xf32>
    %286 = math.exp %285 : vector<8x32xf32>
    %cst_86 = arith.constant 1.000000e+00 : f32
    %287 = vector.broadcast %cst_86 : f32 to vector<8x32xf32>
    %288 = arith.addf %287, %286 : vector<8x32xf32>
    %289 = arith.divf %287, %288 : vector<8x32xf32>
    %290 = math.tanh %276 : vector<8x32xf32>
    %291 = arith.negf %279 : vector<8x32xf32>
    %292 = math.exp %291 : vector<8x32xf32>
    %cst_87 = arith.constant 1.000000e+00 : f32
    %293 = vector.broadcast %cst_87 : f32 to vector<8x32xf32>
    %294 = arith.addf %293, %292 : vector<8x32xf32>
    %295 = arith.divf %293, %294 : vector<8x32xf32>
    %296 = arith.mulf %289, %265 : vector<8x32xf32>
    %297 = arith.mulf %284, %290 : vector<8x32xf32>
    %298 = arith.addf %296, %297 : vector<8x32xf32>
    %299 = math.tanh %298 : vector<8x32xf32>
    %300 = arith.mulf %295, %299 : vector<8x32xf32>
    %301 = vector.extract_strided_slice %56 {offsets = [56, 0], sizes = [8, 32], strides = [1, 1]} : vector<128x32xf32> to vector<8x32xf32>
    %cst_88 = arith.constant dense<0.000000e+00> : vector<8x32xf32>
    %302 = tpu.matmul %300, %61, %cst_88 {dimension_numbers = #tpu.dot_dimension_numbers<[1], [0], [0], [1], [0, 0, 1, 1], [], []>} : vector<8x32xf32>, vector<32x32xf32>, vector<8x32xf32> -> vector<8x32xf32>
    %303 = arith.addf %301, %302 : vector<8x32xf32>
    %304 = vector.extract_strided_slice %57 {offsets = [56, 0], sizes = [8, 32], strides = [1, 1]} : vector<128x32xf32> to vector<8x32xf32>
    %cst_89 = arith.constant dense<0.000000e+00> : vector<8x32xf32>
    %305 = tpu.matmul %300, %63, %cst_89 {dimension_numbers = #tpu.dot_dimension_numbers<[1], [0], [0], [1], [0, 0, 1, 1], [], []>} : vector<8x32xf32>, vector<32x32xf32>, vector<8x32xf32> -> vector<8x32xf32>
    %306 = arith.addf %304, %305 : vector<8x32xf32>
    %307 = vector.extract_strided_slice %58 {offsets = [56, 0], sizes = [8, 32], strides = [1, 1]} : vector<128x32xf32> to vector<8x32xf32>
    %cst_90 = arith.constant dense<0.000000e+00> : vector<8x32xf32>
    %308 = tpu.matmul %300, %65, %cst_90 {dimension_numbers = #tpu.dot_dimension_numbers<[1], [0], [0], [1], [0, 0, 1, 1], [], []>} : vector<8x32xf32>, vector<32x32xf32>, vector<8x32xf32> -> vector<8x32xf32>
    %309 = arith.addf %307, %308 : vector<8x32xf32>
    %310 = vector.extract_strided_slice %59 {offsets = [56, 0], sizes = [8, 32], strides = [1, 1]} : vector<128x32xf32> to vector<8x32xf32>
    %cst_91 = arith.constant dense<0.000000e+00> : vector<8x32xf32>
    %311 = tpu.matmul %300, %67, %cst_91 {dimension_numbers = #tpu.dot_dimension_numbers<[1], [0], [0], [1], [0, 0, 1, 1], [], []>} : vector<8x32xf32>, vector<32x32xf32>, vector<8x32xf32> -> vector<8x32xf32>
    %312 = arith.addf %310, %311 : vector<8x32xf32>
    %313 = arith.negf %303 : vector<8x32xf32>
    %314 = math.exp %313 : vector<8x32xf32>
    %cst_92 = arith.constant 1.000000e+00 : f32
    %315 = vector.broadcast %cst_92 : f32 to vector<8x32xf32>
    %316 = arith.addf %315, %314 : vector<8x32xf32>
    %317 = arith.divf %315, %316 : vector<8x32xf32>
    %318 = arith.negf %306 : vector<8x32xf32>
    %319 = math.exp %318 : vector<8x32xf32>
    %cst_93 = arith.constant 1.000000e+00 : f32
    %320 = vector.broadcast %cst_93 : f32 to vector<8x32xf32>
    %321 = arith.addf %320, %319 : vector<8x32xf32>
    %322 = arith.divf %320, %321 : vector<8x32xf32>
    %323 = math.tanh %309 : vector<8x32xf32>
    %324 = arith.negf %312 : vector<8x32xf32>
    %325 = math.exp %324 : vector<8x32xf32>
    %cst_94 = arith.constant 1.000000e+00 : f32
    %326 = vector.broadcast %cst_94 : f32 to vector<8x32xf32>
    %327 = arith.addf %326, %325 : vector<8x32xf32>
    %328 = arith.divf %326, %327 : vector<8x32xf32>
    %329 = arith.mulf %322, %298 : vector<8x32xf32>
    %330 = arith.mulf %317, %323 : vector<8x32xf32>
    %331 = arith.addf %329, %330 : vector<8x32xf32>
    %332 = math.tanh %331 : vector<8x32xf32>
    %333 = arith.mulf %328, %332 : vector<8x32xf32>
    %334 = vector.extract_strided_slice %56 {offsets = [64, 0], sizes = [8, 32], strides = [1, 1]} : vector<128x32xf32> to vector<8x32xf32>
    %cst_95 = arith.constant dense<0.000000e+00> : vector<8x32xf32>
    %335 = tpu.matmul %333, %61, %cst_95 {dimension_numbers = #tpu.dot_dimension_numbers<[1], [0], [0], [1], [0, 0, 1, 1], [], []>} : vector<8x32xf32>, vector<32x32xf32>, vector<8x32xf32> -> vector<8x32xf32>
    %336 = arith.addf %334, %335 : vector<8x32xf32>
    %337 = vector.extract_strided_slice %57 {offsets = [64, 0], sizes = [8, 32], strides = [1, 1]} : vector<128x32xf32> to vector<8x32xf32>
    %cst_96 = arith.constant dense<0.000000e+00> : vector<8x32xf32>
    %338 = tpu.matmul %333, %63, %cst_96 {dimension_numbers = #tpu.dot_dimension_numbers<[1], [0], [0], [1], [0, 0, 1, 1], [], []>} : vector<8x32xf32>, vector<32x32xf32>, vector<8x32xf32> -> vector<8x32xf32>
    %339 = arith.addf %337, %338 : vector<8x32xf32>
    %340 = vector.extract_strided_slice %58 {offsets = [64, 0], sizes = [8, 32], strides = [1, 1]} : vector<128x32xf32> to vector<8x32xf32>
    %cst_97 = arith.constant dense<0.000000e+00> : vector<8x32xf32>
    %341 = tpu.matmul %333, %65, %cst_97 {dimension_numbers = #tpu.dot_dimension_numbers<[1], [0], [0], [1], [0, 0, 1, 1], [], []>} : vector<8x32xf32>, vector<32x32xf32>, vector<8x32xf32> -> vector<8x32xf32>
    %342 = arith.addf %340, %341 : vector<8x32xf32>
    %343 = vector.extract_strided_slice %59 {offsets = [64, 0], sizes = [8, 32], strides = [1, 1]} : vector<128x32xf32> to vector<8x32xf32>
    %cst_98 = arith.constant dense<0.000000e+00> : vector<8x32xf32>
    %344 = tpu.matmul %333, %67, %cst_98 {dimension_numbers = #tpu.dot_dimension_numbers<[1], [0], [0], [1], [0, 0, 1, 1], [], []>} : vector<8x32xf32>, vector<32x32xf32>, vector<8x32xf32> -> vector<8x32xf32>
    %345 = arith.addf %343, %344 : vector<8x32xf32>
    %346 = arith.negf %336 : vector<8x32xf32>
    %347 = math.exp %346 : vector<8x32xf32>
    %cst_99 = arith.constant 1.000000e+00 : f32
    %348 = vector.broadcast %cst_99 : f32 to vector<8x32xf32>
    %349 = arith.addf %348, %347 : vector<8x32xf32>
    %350 = arith.divf %348, %349 : vector<8x32xf32>
    %351 = arith.negf %339 : vector<8x32xf32>
    %352 = math.exp %351 : vector<8x32xf32>
    %cst_100 = arith.constant 1.000000e+00 : f32
    %353 = vector.broadcast %cst_100 : f32 to vector<8x32xf32>
    %354 = arith.addf %353, %352 : vector<8x32xf32>
    %355 = arith.divf %353, %354 : vector<8x32xf32>
    %356 = math.tanh %342 : vector<8x32xf32>
    %357 = arith.negf %345 : vector<8x32xf32>
    %358 = math.exp %357 : vector<8x32xf32>
    %cst_101 = arith.constant 1.000000e+00 : f32
    %359 = vector.broadcast %cst_101 : f32 to vector<8x32xf32>
    %360 = arith.addf %359, %358 : vector<8x32xf32>
    %361 = arith.divf %359, %360 : vector<8x32xf32>
    %362 = arith.mulf %355, %331 : vector<8x32xf32>
    %363 = arith.mulf %350, %356 : vector<8x32xf32>
    %364 = arith.addf %362, %363 : vector<8x32xf32>
    %365 = math.tanh %364 : vector<8x32xf32>
    %366 = arith.mulf %361, %365 : vector<8x32xf32>
    %367 = vector.extract_strided_slice %56 {offsets = [72, 0], sizes = [8, 32], strides = [1, 1]} : vector<128x32xf32> to vector<8x32xf32>
    %cst_102 = arith.constant dense<0.000000e+00> : vector<8x32xf32>
    %368 = tpu.matmul %366, %61, %cst_102 {dimension_numbers = #tpu.dot_dimension_numbers<[1], [0], [0], [1], [0, 0, 1, 1], [], []>} : vector<8x32xf32>, vector<32x32xf32>, vector<8x32xf32> -> vector<8x32xf32>
    %369 = arith.addf %367, %368 : vector<8x32xf32>
    %370 = vector.extract_strided_slice %57 {offsets = [72, 0], sizes = [8, 32], strides = [1, 1]} : vector<128x32xf32> to vector<8x32xf32>
    %cst_103 = arith.constant dense<0.000000e+00> : vector<8x32xf32>
    %371 = tpu.matmul %366, %63, %cst_103 {dimension_numbers = #tpu.dot_dimension_numbers<[1], [0], [0], [1], [0, 0, 1, 1], [], []>} : vector<8x32xf32>, vector<32x32xf32>, vector<8x32xf32> -> vector<8x32xf32>
    %372 = arith.addf %370, %371 : vector<8x32xf32>
    %373 = vector.extract_strided_slice %58 {offsets = [72, 0], sizes = [8, 32], strides = [1, 1]} : vector<128x32xf32> to vector<8x32xf32>
    %cst_104 = arith.constant dense<0.000000e+00> : vector<8x32xf32>
    %374 = tpu.matmul %366, %65, %cst_104 {dimension_numbers = #tpu.dot_dimension_numbers<[1], [0], [0], [1], [0, 0, 1, 1], [], []>} : vector<8x32xf32>, vector<32x32xf32>, vector<8x32xf32> -> vector<8x32xf32>
    %375 = arith.addf %373, %374 : vector<8x32xf32>
    %376 = vector.extract_strided_slice %59 {offsets = [72, 0], sizes = [8, 32], strides = [1, 1]} : vector<128x32xf32> to vector<8x32xf32>
    %cst_105 = arith.constant dense<0.000000e+00> : vector<8x32xf32>
    %377 = tpu.matmul %366, %67, %cst_105 {dimension_numbers = #tpu.dot_dimension_numbers<[1], [0], [0], [1], [0, 0, 1, 1], [], []>} : vector<8x32xf32>, vector<32x32xf32>, vector<8x32xf32> -> vector<8x32xf32>
    %378 = arith.addf %376, %377 : vector<8x32xf32>
    %379 = arith.negf %369 : vector<8x32xf32>
    %380 = math.exp %379 : vector<8x32xf32>
    %cst_106 = arith.constant 1.000000e+00 : f32
    %381 = vector.broadcast %cst_106 : f32 to vector<8x32xf32>
    %382 = arith.addf %381, %380 : vector<8x32xf32>
    %383 = arith.divf %381, %382 : vector<8x32xf32>
    %384 = arith.negf %372 : vector<8x32xf32>
    %385 = math.exp %384 : vector<8x32xf32>
    %cst_107 = arith.constant 1.000000e+00 : f32
    %386 = vector.broadcast %cst_107 : f32 to vector<8x32xf32>
    %387 = arith.addf %386, %385 : vector<8x32xf32>
    %388 = arith.divf %386, %387 : vector<8x32xf32>
    %389 = math.tanh %375 : vector<8x32xf32>
    %390 = arith.negf %378 : vector<8x32xf32>
    %391 = math.exp %390 : vector<8x32xf32>
    %cst_108 = arith.constant 1.000000e+00 : f32
    %392 = vector.broadcast %cst_108 : f32 to vector<8x32xf32>
    %393 = arith.addf %392, %391 : vector<8x32xf32>
    %394 = arith.divf %392, %393 : vector<8x32xf32>
    %395 = arith.mulf %388, %364 : vector<8x32xf32>
    %396 = arith.mulf %383, %389 : vector<8x32xf32>
    %397 = arith.addf %395, %396 : vector<8x32xf32>
    %398 = math.tanh %397 : vector<8x32xf32>
    %399 = arith.mulf %394, %398 : vector<8x32xf32>
    %400 = vector.extract_strided_slice %56 {offsets = [80, 0], sizes = [8, 32], strides = [1, 1]} : vector<128x32xf32> to vector<8x32xf32>
    %cst_109 = arith.constant dense<0.000000e+00> : vector<8x32xf32>
    %401 = tpu.matmul %399, %61, %cst_109 {dimension_numbers = #tpu.dot_dimension_numbers<[1], [0], [0], [1], [0, 0, 1, 1], [], []>} : vector<8x32xf32>, vector<32x32xf32>, vector<8x32xf32> -> vector<8x32xf32>
    %402 = arith.addf %400, %401 : vector<8x32xf32>
    %403 = vector.extract_strided_slice %57 {offsets = [80, 0], sizes = [8, 32], strides = [1, 1]} : vector<128x32xf32> to vector<8x32xf32>
    %cst_110 = arith.constant dense<0.000000e+00> : vector<8x32xf32>
    %404 = tpu.matmul %399, %63, %cst_110 {dimension_numbers = #tpu.dot_dimension_numbers<[1], [0], [0], [1], [0, 0, 1, 1], [], []>} : vector<8x32xf32>, vector<32x32xf32>, vector<8x32xf32> -> vector<8x32xf32>
    %405 = arith.addf %403, %404 : vector<8x32xf32>
    %406 = vector.extract_strided_slice %58 {offsets = [80, 0], sizes = [8, 32], strides = [1, 1]} : vector<128x32xf32> to vector<8x32xf32>
    %cst_111 = arith.constant dense<0.000000e+00> : vector<8x32xf32>
    %407 = tpu.matmul %399, %65, %cst_111 {dimension_numbers = #tpu.dot_dimension_numbers<[1], [0], [0], [1], [0, 0, 1, 1], [], []>} : vector<8x32xf32>, vector<32x32xf32>, vector<8x32xf32> -> vector<8x32xf32>
    %408 = arith.addf %406, %407 : vector<8x32xf32>
    %409 = vector.extract_strided_slice %59 {offsets = [80, 0], sizes = [8, 32], strides = [1, 1]} : vector<128x32xf32> to vector<8x32xf32>
    %cst_112 = arith.constant dense<0.000000e+00> : vector<8x32xf32>
    %410 = tpu.matmul %399, %67, %cst_112 {dimension_numbers = #tpu.dot_dimension_numbers<[1], [0], [0], [1], [0, 0, 1, 1], [], []>} : vector<8x32xf32>, vector<32x32xf32>, vector<8x32xf32> -> vector<8x32xf32>
    %411 = arith.addf %409, %410 : vector<8x32xf32>
    %412 = arith.negf %402 : vector<8x32xf32>
    %413 = math.exp %412 : vector<8x32xf32>
    %cst_113 = arith.constant 1.000000e+00 : f32
    %414 = vector.broadcast %cst_113 : f32 to vector<8x32xf32>
    %415 = arith.addf %414, %413 : vector<8x32xf32>
    %416 = arith.divf %414, %415 : vector<8x32xf32>
    %417 = arith.negf %405 : vector<8x32xf32>
    %418 = math.exp %417 : vector<8x32xf32>
    %cst_114 = arith.constant 1.000000e+00 : f32
    %419 = vector.broadcast %cst_114 : f32 to vector<8x32xf32>
    %420 = arith.addf %419, %418 : vector<8x32xf32>
    %421 = arith.divf %419, %420 : vector<8x32xf32>
    %422 = math.tanh %408 : vector<8x32xf32>
    %423 = arith.negf %411 : vector<8x32xf32>
    %424 = math.exp %423 : vector<8x32xf32>
    %cst_115 = arith.constant 1.000000e+00 : f32
    %425 = vector.broadcast %cst_115 : f32 to vector<8x32xf32>
    %426 = arith.addf %425, %424 : vector<8x32xf32>
    %427 = arith.divf %425, %426 : vector<8x32xf32>
    %428 = arith.mulf %421, %397 : vector<8x32xf32>
    %429 = arith.mulf %416, %422 : vector<8x32xf32>
    %430 = arith.addf %428, %429 : vector<8x32xf32>
    %431 = math.tanh %430 : vector<8x32xf32>
    %432 = arith.mulf %427, %431 : vector<8x32xf32>
    %433 = vector.extract_strided_slice %56 {offsets = [88, 0], sizes = [8, 32], strides = [1, 1]} : vector<128x32xf32> to vector<8x32xf32>
    %cst_116 = arith.constant dense<0.000000e+00> : vector<8x32xf32>
    %434 = tpu.matmul %432, %61, %cst_116 {dimension_numbers = #tpu.dot_dimension_numbers<[1], [0], [0], [1], [0, 0, 1, 1], [], []>} : vector<8x32xf32>, vector<32x32xf32>, vector<8x32xf32> -> vector<8x32xf32>
    %435 = arith.addf %433, %434 : vector<8x32xf32>
    %436 = vector.extract_strided_slice %57 {offsets = [88, 0], sizes = [8, 32], strides = [1, 1]} : vector<128x32xf32> to vector<8x32xf32>
    %cst_117 = arith.constant dense<0.000000e+00> : vector<8x32xf32>
    %437 = tpu.matmul %432, %63, %cst_117 {dimension_numbers = #tpu.dot_dimension_numbers<[1], [0], [0], [1], [0, 0, 1, 1], [], []>} : vector<8x32xf32>, vector<32x32xf32>, vector<8x32xf32> -> vector<8x32xf32>
    %438 = arith.addf %436, %437 : vector<8x32xf32>
    %439 = vector.extract_strided_slice %58 {offsets = [88, 0], sizes = [8, 32], strides = [1, 1]} : vector<128x32xf32> to vector<8x32xf32>
    %cst_118 = arith.constant dense<0.000000e+00> : vector<8x32xf32>
    %440 = tpu.matmul %432, %65, %cst_118 {dimension_numbers = #tpu.dot_dimension_numbers<[1], [0], [0], [1], [0, 0, 1, 1], [], []>} : vector<8x32xf32>, vector<32x32xf32>, vector<8x32xf32> -> vector<8x32xf32>
    %441 = arith.addf %439, %440 : vector<8x32xf32>
    %442 = vector.extract_strided_slice %59 {offsets = [88, 0], sizes = [8, 32], strides = [1, 1]} : vector<128x32xf32> to vector<8x32xf32>
    %cst_119 = arith.constant dense<0.000000e+00> : vector<8x32xf32>
    %443 = tpu.matmul %432, %67, %cst_119 {dimension_numbers = #tpu.dot_dimension_numbers<[1], [0], [0], [1], [0, 0, 1, 1], [], []>} : vector<8x32xf32>, vector<32x32xf32>, vector<8x32xf32> -> vector<8x32xf32>
    %444 = arith.addf %442, %443 : vector<8x32xf32>
    %445 = arith.negf %435 : vector<8x32xf32>
    %446 = math.exp %445 : vector<8x32xf32>
    %cst_120 = arith.constant 1.000000e+00 : f32
    %447 = vector.broadcast %cst_120 : f32 to vector<8x32xf32>
    %448 = arith.addf %447, %446 : vector<8x32xf32>
    %449 = arith.divf %447, %448 : vector<8x32xf32>
    %450 = arith.negf %438 : vector<8x32xf32>
    %451 = math.exp %450 : vector<8x32xf32>
    %cst_121 = arith.constant 1.000000e+00 : f32
    %452 = vector.broadcast %cst_121 : f32 to vector<8x32xf32>
    %453 = arith.addf %452, %451 : vector<8x32xf32>
    %454 = arith.divf %452, %453 : vector<8x32xf32>
    %455 = math.tanh %441 : vector<8x32xf32>
    %456 = arith.negf %444 : vector<8x32xf32>
    %457 = math.exp %456 : vector<8x32xf32>
    %cst_122 = arith.constant 1.000000e+00 : f32
    %458 = vector.broadcast %cst_122 : f32 to vector<8x32xf32>
    %459 = arith.addf %458, %457 : vector<8x32xf32>
    %460 = arith.divf %458, %459 : vector<8x32xf32>
    %461 = arith.mulf %454, %430 : vector<8x32xf32>
    %462 = arith.mulf %449, %455 : vector<8x32xf32>
    %463 = arith.addf %461, %462 : vector<8x32xf32>
    %464 = math.tanh %463 : vector<8x32xf32>
    %465 = arith.mulf %460, %464 : vector<8x32xf32>
    %466 = vector.extract_strided_slice %56 {offsets = [96, 0], sizes = [8, 32], strides = [1, 1]} : vector<128x32xf32> to vector<8x32xf32>
    %cst_123 = arith.constant dense<0.000000e+00> : vector<8x32xf32>
    %467 = tpu.matmul %465, %61, %cst_123 {dimension_numbers = #tpu.dot_dimension_numbers<[1], [0], [0], [1], [0, 0, 1, 1], [], []>} : vector<8x32xf32>, vector<32x32xf32>, vector<8x32xf32> -> vector<8x32xf32>
    %468 = arith.addf %466, %467 : vector<8x32xf32>
    %469 = vector.extract_strided_slice %57 {offsets = [96, 0], sizes = [8, 32], strides = [1, 1]} : vector<128x32xf32> to vector<8x32xf32>
    %cst_124 = arith.constant dense<0.000000e+00> : vector<8x32xf32>
    %470 = tpu.matmul %465, %63, %cst_124 {dimension_numbers = #tpu.dot_dimension_numbers<[1], [0], [0], [1], [0, 0, 1, 1], [], []>} : vector<8x32xf32>, vector<32x32xf32>, vector<8x32xf32> -> vector<8x32xf32>
    %471 = arith.addf %469, %470 : vector<8x32xf32>
    %472 = vector.extract_strided_slice %58 {offsets = [96, 0], sizes = [8, 32], strides = [1, 1]} : vector<128x32xf32> to vector<8x32xf32>
    %cst_125 = arith.constant dense<0.000000e+00> : vector<8x32xf32>
    %473 = tpu.matmul %465, %65, %cst_125 {dimension_numbers = #tpu.dot_dimension_numbers<[1], [0], [0], [1], [0, 0, 1, 1], [], []>} : vector<8x32xf32>, vector<32x32xf32>, vector<8x32xf32> -> vector<8x32xf32>
    %474 = arith.addf %472, %473 : vector<8x32xf32>
    %475 = vector.extract_strided_slice %59 {offsets = [96, 0], sizes = [8, 32], strides = [1, 1]} : vector<128x32xf32> to vector<8x32xf32>
    %cst_126 = arith.constant dense<0.000000e+00> : vector<8x32xf32>
    %476 = tpu.matmul %465, %67, %cst_126 {dimension_numbers = #tpu.dot_dimension_numbers<[1], [0], [0], [1], [0, 0, 1, 1], [], []>} : vector<8x32xf32>, vector<32x32xf32>, vector<8x32xf32> -> vector<8x32xf32>
    %477 = arith.addf %475, %476 : vector<8x32xf32>
    %478 = arith.negf %468 : vector<8x32xf32>
    %479 = math.exp %478 : vector<8x32xf32>
    %cst_127 = arith.constant 1.000000e+00 : f32
    %480 = vector.broadcast %cst_127 : f32 to vector<8x32xf32>
    %481 = arith.addf %480, %479 : vector<8x32xf32>
    %482 = arith.divf %480, %481 : vector<8x32xf32>
    %483 = arith.negf %471 : vector<8x32xf32>
    %484 = math.exp %483 : vector<8x32xf32>
    %cst_128 = arith.constant 1.000000e+00 : f32
    %485 = vector.broadcast %cst_128 : f32 to vector<8x32xf32>
    %486 = arith.addf %485, %484 : vector<8x32xf32>
    %487 = arith.divf %485, %486 : vector<8x32xf32>
    %488 = math.tanh %474 : vector<8x32xf32>
    %489 = arith.negf %477 : vector<8x32xf32>
    %490 = math.exp %489 : vector<8x32xf32>
    %cst_129 = arith.constant 1.000000e+00 : f32
    %491 = vector.broadcast %cst_129 : f32 to vector<8x32xf32>
    %492 = arith.addf %491, %490 : vector<8x32xf32>
    %493 = arith.divf %491, %492 : vector<8x32xf32>
    %494 = arith.mulf %487, %463 : vector<8x32xf32>
    %495 = arith.mulf %482, %488 : vector<8x32xf32>
    %496 = arith.addf %494, %495 : vector<8x32xf32>
    %497 = math.tanh %496 : vector<8x32xf32>
    %498 = arith.mulf %493, %497 : vector<8x32xf32>
    %499 = vector.extract_strided_slice %56 {offsets = [104, 0], sizes = [8, 32], strides = [1, 1]} : vector<128x32xf32> to vector<8x32xf32>
    %cst_130 = arith.constant dense<0.000000e+00> : vector<8x32xf32>
    %500 = tpu.matmul %498, %61, %cst_130 {dimension_numbers = #tpu.dot_dimension_numbers<[1], [0], [0], [1], [0, 0, 1, 1], [], []>} : vector<8x32xf32>, vector<32x32xf32>, vector<8x32xf32> -> vector<8x32xf32>
    %501 = arith.addf %499, %500 : vector<8x32xf32>
    %502 = vector.extract_strided_slice %57 {offsets = [104, 0], sizes = [8, 32], strides = [1, 1]} : vector<128x32xf32> to vector<8x32xf32>
    %cst_131 = arith.constant dense<0.000000e+00> : vector<8x32xf32>
    %503 = tpu.matmul %498, %63, %cst_131 {dimension_numbers = #tpu.dot_dimension_numbers<[1], [0], [0], [1], [0, 0, 1, 1], [], []>} : vector<8x32xf32>, vector<32x32xf32>, vector<8x32xf32> -> vector<8x32xf32>
    %504 = arith.addf %502, %503 : vector<8x32xf32>
    %505 = vector.extract_strided_slice %58 {offsets = [104, 0], sizes = [8, 32], strides = [1, 1]} : vector<128x32xf32> to vector<8x32xf32>
    %cst_132 = arith.constant dense<0.000000e+00> : vector<8x32xf32>
    %506 = tpu.matmul %498, %65, %cst_132 {dimension_numbers = #tpu.dot_dimension_numbers<[1], [0], [0], [1], [0, 0, 1, 1], [], []>} : vector<8x32xf32>, vector<32x32xf32>, vector<8x32xf32> -> vector<8x32xf32>
    %507 = arith.addf %505, %506 : vector<8x32xf32>
    %508 = vector.extract_strided_slice %59 {offsets = [104, 0], sizes = [8, 32], strides = [1, 1]} : vector<128x32xf32> to vector<8x32xf32>
    %cst_133 = arith.constant dense<0.000000e+00> : vector<8x32xf32>
    %509 = tpu.matmul %498, %67, %cst_133 {dimension_numbers = #tpu.dot_dimension_numbers<[1], [0], [0], [1], [0, 0, 1, 1], [], []>} : vector<8x32xf32>, vector<32x32xf32>, vector<8x32xf32> -> vector<8x32xf32>
    %510 = arith.addf %508, %509 : vector<8x32xf32>
    %511 = arith.negf %501 : vector<8x32xf32>
    %512 = math.exp %511 : vector<8x32xf32>
    %cst_134 = arith.constant 1.000000e+00 : f32
    %513 = vector.broadcast %cst_134 : f32 to vector<8x32xf32>
    %514 = arith.addf %513, %512 : vector<8x32xf32>
    %515 = arith.divf %513, %514 : vector<8x32xf32>
    %516 = arith.negf %504 : vector<8x32xf32>
    %517 = math.exp %516 : vector<8x32xf32>
    %cst_135 = arith.constant 1.000000e+00 : f32
    %518 = vector.broadcast %cst_135 : f32 to vector<8x32xf32>
    %519 = arith.addf %518, %517 : vector<8x32xf32>
    %520 = arith.divf %518, %519 : vector<8x32xf32>
    %521 = math.tanh %507 : vector<8x32xf32>
    %522 = arith.negf %510 : vector<8x32xf32>
    %523 = math.exp %522 : vector<8x32xf32>
    %cst_136 = arith.constant 1.000000e+00 : f32
    %524 = vector.broadcast %cst_136 : f32 to vector<8x32xf32>
    %525 = arith.addf %524, %523 : vector<8x32xf32>
    %526 = arith.divf %524, %525 : vector<8x32xf32>
    %527 = arith.mulf %520, %496 : vector<8x32xf32>
    %528 = arith.mulf %515, %521 : vector<8x32xf32>
    %529 = arith.addf %527, %528 : vector<8x32xf32>
    %530 = math.tanh %529 : vector<8x32xf32>
    %531 = arith.mulf %526, %530 : vector<8x32xf32>
    %532 = vector.extract_strided_slice %56 {offsets = [112, 0], sizes = [8, 32], strides = [1, 1]} : vector<128x32xf32> to vector<8x32xf32>
    %cst_137 = arith.constant dense<0.000000e+00> : vector<8x32xf32>
    %533 = tpu.matmul %531, %61, %cst_137 {dimension_numbers = #tpu.dot_dimension_numbers<[1], [0], [0], [1], [0, 0, 1, 1], [], []>} : vector<8x32xf32>, vector<32x32xf32>, vector<8x32xf32> -> vector<8x32xf32>
    %534 = arith.addf %532, %533 : vector<8x32xf32>
    %535 = vector.extract_strided_slice %57 {offsets = [112, 0], sizes = [8, 32], strides = [1, 1]} : vector<128x32xf32> to vector<8x32xf32>
    %cst_138 = arith.constant dense<0.000000e+00> : vector<8x32xf32>
    %536 = tpu.matmul %531, %63, %cst_138 {dimension_numbers = #tpu.dot_dimension_numbers<[1], [0], [0], [1], [0, 0, 1, 1], [], []>} : vector<8x32xf32>, vector<32x32xf32>, vector<8x32xf32> -> vector<8x32xf32>
    %537 = arith.addf %535, %536 : vector<8x32xf32>
    %538 = vector.extract_strided_slice %58 {offsets = [112, 0], sizes = [8, 32], strides = [1, 1]} : vector<128x32xf32> to vector<8x32xf32>
    %cst_139 = arith.constant dense<0.000000e+00> : vector<8x32xf32>
    %539 = tpu.matmul %531, %65, %cst_139 {dimension_numbers = #tpu.dot_dimension_numbers<[1], [0], [0], [1], [0, 0, 1, 1], [], []>} : vector<8x32xf32>, vector<32x32xf32>, vector<8x32xf32> -> vector<8x32xf32>
    %540 = arith.addf %538, %539 : vector<8x32xf32>
    %541 = vector.extract_strided_slice %59 {offsets = [112, 0], sizes = [8, 32], strides = [1, 1]} : vector<128x32xf32> to vector<8x32xf32>
    %cst_140 = arith.constant dense<0.000000e+00> : vector<8x32xf32>
    %542 = tpu.matmul %531, %67, %cst_140 {dimension_numbers = #tpu.dot_dimension_numbers<[1], [0], [0], [1], [0, 0, 1, 1], [], []>} : vector<8x32xf32>, vector<32x32xf32>, vector<8x32xf32> -> vector<8x32xf32>
    %543 = arith.addf %541, %542 : vector<8x32xf32>
    %544 = arith.negf %534 : vector<8x32xf32>
    %545 = math.exp %544 : vector<8x32xf32>
    %cst_141 = arith.constant 1.000000e+00 : f32
    %546 = vector.broadcast %cst_141 : f32 to vector<8x32xf32>
    %547 = arith.addf %546, %545 : vector<8x32xf32>
    %548 = arith.divf %546, %547 : vector<8x32xf32>
    %549 = arith.negf %537 : vector<8x32xf32>
    %550 = math.exp %549 : vector<8x32xf32>
    %cst_142 = arith.constant 1.000000e+00 : f32
    %551 = vector.broadcast %cst_142 : f32 to vector<8x32xf32>
    %552 = arith.addf %551, %550 : vector<8x32xf32>
    %553 = arith.divf %551, %552 : vector<8x32xf32>
    %554 = math.tanh %540 : vector<8x32xf32>
    %555 = arith.negf %543 : vector<8x32xf32>
    %556 = math.exp %555 : vector<8x32xf32>
    %cst_143 = arith.constant 1.000000e+00 : f32
    %557 = vector.broadcast %cst_143 : f32 to vector<8x32xf32>
    %558 = arith.addf %557, %556 : vector<8x32xf32>
    %559 = arith.divf %557, %558 : vector<8x32xf32>
    %560 = arith.mulf %553, %529 : vector<8x32xf32>
    %561 = arith.mulf %548, %554 : vector<8x32xf32>
    %562 = arith.addf %560, %561 : vector<8x32xf32>
    %563 = math.tanh %562 : vector<8x32xf32>
    %564 = arith.mulf %559, %563 : vector<8x32xf32>
    %565 = vector.extract_strided_slice %56 {offsets = [120, 0], sizes = [8, 32], strides = [1, 1]} : vector<128x32xf32> to vector<8x32xf32>
    %cst_144 = arith.constant dense<0.000000e+00> : vector<8x32xf32>
    %566 = tpu.matmul %564, %61, %cst_144 {dimension_numbers = #tpu.dot_dimension_numbers<[1], [0], [0], [1], [0, 0, 1, 1], [], []>} : vector<8x32xf32>, vector<32x32xf32>, vector<8x32xf32> -> vector<8x32xf32>
    %567 = arith.addf %565, %566 : vector<8x32xf32>
    %568 = vector.extract_strided_slice %57 {offsets = [120, 0], sizes = [8, 32], strides = [1, 1]} : vector<128x32xf32> to vector<8x32xf32>
    %cst_145 = arith.constant dense<0.000000e+00> : vector<8x32xf32>
    %569 = tpu.matmul %564, %63, %cst_145 {dimension_numbers = #tpu.dot_dimension_numbers<[1], [0], [0], [1], [0, 0, 1, 1], [], []>} : vector<8x32xf32>, vector<32x32xf32>, vector<8x32xf32> -> vector<8x32xf32>
    %570 = arith.addf %568, %569 : vector<8x32xf32>
    %571 = vector.extract_strided_slice %58 {offsets = [120, 0], sizes = [8, 32], strides = [1, 1]} : vector<128x32xf32> to vector<8x32xf32>
    %cst_146 = arith.constant dense<0.000000e+00> : vector<8x32xf32>
    %572 = tpu.matmul %564, %65, %cst_146 {dimension_numbers = #tpu.dot_dimension_numbers<[1], [0], [0], [1], [0, 0, 1, 1], [], []>} : vector<8x32xf32>, vector<32x32xf32>, vector<8x32xf32> -> vector<8x32xf32>
    %573 = arith.addf %571, %572 : vector<8x32xf32>
    %574 = vector.extract_strided_slice %59 {offsets = [120, 0], sizes = [8, 32], strides = [1, 1]} : vector<128x32xf32> to vector<8x32xf32>
    %cst_147 = arith.constant dense<0.000000e+00> : vector<8x32xf32>
    %575 = tpu.matmul %564, %67, %cst_147 {dimension_numbers = #tpu.dot_dimension_numbers<[1], [0], [0], [1], [0, 0, 1, 1], [], []>} : vector<8x32xf32>, vector<32x32xf32>, vector<8x32xf32> -> vector<8x32xf32>
    %576 = arith.addf %574, %575 : vector<8x32xf32>
    %577 = arith.negf %567 : vector<8x32xf32>
    %578 = math.exp %577 : vector<8x32xf32>
    %cst_148 = arith.constant 1.000000e+00 : f32
    %579 = vector.broadcast %cst_148 : f32 to vector<8x32xf32>
    %580 = arith.addf %579, %578 : vector<8x32xf32>
    %581 = arith.divf %579, %580 : vector<8x32xf32>
    %582 = arith.negf %570 : vector<8x32xf32>
    %583 = math.exp %582 : vector<8x32xf32>
    %cst_149 = arith.constant 1.000000e+00 : f32
    %584 = vector.broadcast %cst_149 : f32 to vector<8x32xf32>
    %585 = arith.addf %584, %583 : vector<8x32xf32>
    %586 = arith.divf %584, %585 : vector<8x32xf32>
    %587 = math.tanh %573 : vector<8x32xf32>
    %588 = arith.negf %576 : vector<8x32xf32>
    %589 = math.exp %588 : vector<8x32xf32>
    %cst_150 = arith.constant 1.000000e+00 : f32
    %590 = vector.broadcast %cst_150 : f32 to vector<8x32xf32>
    %591 = arith.addf %590, %589 : vector<8x32xf32>
    %592 = arith.divf %590, %591 : vector<8x32xf32>
    %593 = arith.mulf %586, %562 : vector<8x32xf32>
    %594 = arith.mulf %581, %587 : vector<8x32xf32>
    %595 = arith.addf %593, %594 : vector<8x32xf32>
    %596 = math.tanh %595 : vector<8x32xf32>
    %597 = arith.mulf %592, %596 : vector<8x32xf32>
    %598 = vector.extract_strided_slice %597 {offsets = [0, 0], sizes = [2, 32], strides = [1, 1]} : vector<8x32xf32> to vector<2x32xf32>
    %c0_151 = arith.constant 0 : index
    %c0_152 = arith.constant 0 : index
    %599 = vector.load %arg10[%c0_151, %c0_152] : memref<2x32xf32, #tpu.memory_space<vmem>>, vector<2x32xf32>
    tpu.vector_store %arg10[%c0_151, %c0_152], %598 {strides = array<i32>} : memref<2x32xf32, #tpu.memory_space<vmem>>, vector<2x32xf32>,
    return
  }
  func.func @transform_0(%arg0: i32) -> (i32, i32, i32) {
    %c0_i32 = arith.constant 0 : i32
    %c0_i32_0 = arith.constant 0 : i32
    %c0_i32_1 = arith.constant 0 : i32
    %c0_i32_2 = arith.constant 0 : i32
    return %c0_i32, %c0_i32_0, %c0_i32_1 : i32, i32, i32
  }
  func.func @transform_1(%arg0: i32) -> (i32, i32) {
    %c0_i32 = arith.constant 0 : i32
    %c0_i32_0 = arith.constant 0 : i32
    %c0_i32_1 = arith.constant 0 : i32
    return %c0_i32, %c0_i32_0 : i32, i32
  }
  func.func @transform_2(%arg0: i32) -> (i32, i32) {
    %c0_i32 = arith.constant 0 : i32
    %c0_i32_0 = arith.constant 0 : i32
    %c0_i32_1 = arith.constant 0 : i32
    return %c0_i32, %c0_i32_0 : i32, i32
  }
  func.func @transform_3(%arg0: i32) -> (i32, i32) {
    %c0_i32 = arith.constant 0 : i32
    %c0_i32_0 = arith.constant 0 : i32
    %c0_i32_1 = arith.constant 0 : i32
    return %c0_i32, %c0_i32_0 : i32, i32
  }
  func.func @transform_4(%arg0: i32) -> (i32, i32) {
    %c0_i32 = arith.constant 0 : i32
    %c0_i32_0 = arith.constant 0 : i32
    %c0_i32_1 = arith.constant 0 : i32
    return %c0_i32, %c0_i32_0 : i32, i32
  }
  func.func @transform_5(%arg0: i32) -> (i32, i32) {
    %c0_i32 = arith.constant 0 : i32
    %c0_i32_0 = arith.constant 0 : i32
    %c0_i32_1 = arith.constant 0 : i32
    return %c0_i32, %c0_i32_0 : i32, i32
  }
  func.func @transform_6(%arg0: i32) -> (i32, i32) {
    %c0_i32 = arith.constant 0 : i32
    %c0_i32_0 = arith.constant 0 : i32
    %c0_i32_1 = arith.constant 0 : i32
    return %c0_i32, %c0_i32_0 : i32, i32
  }
  func.func @transform_7(%arg0: i32) -> (i32, i32) {
    %c0_i32 = arith.constant 0 : i32
    %c0_i32_0 = arith.constant 0 : i32
    %c0_i32_1 = arith.constant 0 : i32
    return %c0_i32, %c0_i32_0 : i32, i32
  }
  func.func @transform_8(%arg0: i32) -> (i32, i32, i32) {
    %c0_i32 = arith.constant 0 : i32
    %c0_i32_0 = arith.constant 0 : i32
    %c0_i32_1 = arith.constant 0 : i32
    %c0_i32_2 = arith.constant 0 : i32
    return %c0_i32, %c0_i32_0, %c0_i32_1 : i32, i32, i32
  }
  func.func @transform_9(%arg0: i32) -> (i32, i32) {
    %c0_i32 = arith.constant 0 : i32
    %c0_i32_0 = arith.constant 0 : i32
    %c0_i32_1 = arith.constant 0 : i32
    return %c0_i32, %c0_i32_0 : i32, i32
  }
}

</mosaic_0001>

<llo_original>
// kernel: header_decoder_forward.1
$region0: #{header_decoder_forward.1}
  #allocation0 [shape = 'u32[]', space=smem, size = 0x4, offset = 0x4, fixed_abs, tag = 'smem constant byte address 0x4 - core index']
  #allocation1 [shape = 'u32[144,128]{1,0:T(1,128)}', space=vmem, size = 0x12000, scoped, tag = 'internal scratch']
  #allocation2 [shape = 'f32[1,1]{1,0:T(1,128)S(1)}', space=vmem, size = 0x200, scoped, tag = 'scoped memory for header_decoder_forward.1']
  %s0 = inlined_call_operand.vmem [shape: f32[2,16,4], index: 0, kind: input, shape index: {}]
  %s1 = inlined_call_operand.vmem [shape: f32[128,4], index: 1, kind: input, shape index: {}]
  %s2 = inlined_call_operand.vmem [shape: f32[32,16], index: 2, kind: input, shape index: {}]
  %s3 = inlined_call_operand.vmem [shape: f32[32,1], index: 3, kind: input, shape index: {}]
  %s4 = inlined_call_operand.vmem [shape: f32[32,1], index: 4, kind: input, shape index: {}]
  %s5 = inlined_call_operand.<no memory space> [shape: f32[1,1], index: 5, kind: input, shape index: {}]
  %s6 = inlined_call_operand.vmem [shape: f32[4,128], index: 6, kind: input, shape index: {}]
  %s7 = inlined_call_operand.vmem [shape: f32[1,128], index: 7, kind: input, shape index: {}]
  %s8 = inlined_call_operand.vmem [shape: f32[4,32,32], index: 8, kind: input, shape index: {}]
  %s9 = inlined_call_operand.hbm [shape: f32[2,32], index: 9, kind: output, shape index: {}]
  %s10 = sld [smem:[#allocation0]]
  $region46: #{header_decoder_forward.1} parent=0
    _
  %s12 = ssub.s32 1, %s10
  %s13 = scalar_select 0, %s12, %s10
  %v14 = vstv %s5
  %15 = vst [vmem:[#allocation2] sm:$0x1] %v14
  $region1: #{header_decoder_forward.1} parent=0
    #allocation3 [shape = 'u8[1024]{0}', space=vmem, size = 0x400, scoped, tag = 'output window, operand 0, single buffered']
    #allocation4 [shape = 's32[1]{0}', space=sflag, size = 0x4, scoped, tag = 'scoped memory for header_decoder_forward.1']
    %16 = vsyncpa [#allocation4], 0
    // Predicated region
    $region2: #{header_decoder_forward.1} parent=1 // pred_check
      _
    $region3: #{header_decoder_forward.1} parent=1 // pred_check_branch
      %18 = sbr.rel (0) target = $region5
    $region4: #{header_decoder_forward.1} parent=1 // pred_region
      _
    $region5: #{header_decoder_forward.1} parent=1 // pred_fallthru
      _
    // Predicated region
    $region6: #{header_decoder_forward.1} parent=1 // pred_check
      _
    $region7: #{header_decoder_forward.1} parent=1 // pred_check_branch
      %20 = sbr.rel (0) target = $region9
    $region8: #{header_decoder_forward.1} parent=1 // pred_region
      _
    $region9: #{header_decoder_forward.1} parent=1 // pred_fallthru
      _
    // Predicated region
    $region10: #{header_decoder_forward.1} parent=1 // pred_check
      _
    $region11: #{header_decoder_forward.1} parent=1 // pred_check_branch
      %22 = sbr.rel (0) target = $region13
    $region12: #{header_decoder_forward.1} parent=1 // pred_region
      _
    $region13: #{header_decoder_forward.1} parent=1 // pred_fallthru
      _
    // Predicated region
    $region14: #{header_decoder_forward.1} parent=1 // pred_check
      _
    $region15: #{header_decoder_forward.1} parent=1 // pred_check_branch
      %24 = sbr.rel (0) target = $region17
    $region16: #{header_decoder_forward.1} parent=1 // pred_region
      _
    $region17: #{header_decoder_forward.1} parent=1 // pred_fallthru
      _
    // Predicated region
    $region18: #{header_decoder_forward.1} parent=1 // pred_check
      _
    $region19: #{header_decoder_forward.1} parent=1 // pred_check_branch
      %26 = sbr.rel (0) target = $region21
    $region20: #{header_decoder_forward.1} parent=1 // pred_region
      _
    $region21: #{header_decoder_forward.1} parent=1 // pred_fallthru
      _
    // Predicated region
    $region22: #{header_decoder_forward.1} parent=1 // pred_check
      _
    $region23: #{header_decoder_forward.1} parent=1 // pred_check_branch
      %28 = sbr.rel (0) target = $region25
    $region24: #{header_decoder_forward.1} parent=1 // pred_region
      _
    $region25: #{header_decoder_forward.1} parent=1 // pred_fallthru
      _
    // Predicated region
    $region26: #{header_decoder_forward.1} parent=1 // pred_check
      _
    $region27: #{header_decoder_forward.1} parent=1 // pred_check_branch
      %30 = sbr.rel (0) target = $region29
    $region28: #{header_decoder_forward.1} parent=1 // pred_region
      _
    $region29: #{header_decoder_forward.1} parent=1 // pred_fallthru
      _
    // Predicated region
    $region30: #{header_decoder_forward.1} parent=1 // pred_check
      _
    $region31: #{header_decoder_forward.1} parent=1 // pred_check_branch
      %32 = sbr.rel (0) target = $region33
    $region32: #{header_decoder_forward.1} parent=1 // pred_region
      _
    $region33: #{header_decoder_forward.1} parent=1 // pred_fallthru
      _
    // Predicated region
    $region34: #{header_decoder_forward.1} parent=1 // pred_check
      _
    $region35: #{header_decoder_forward.1} parent=1 // pred_check_branch
      %34 = sbr.rel (0) target = $region37
    $region36: #{header_decoder_forward.1} parent=1 // pred_region
      _
    $region37: #{header_decoder_forward.1} parent=1 // pred_fallthru
      _
    %v35 = vld [vmem:[%s2] sm:$0xff]
    %v36 = vld [vmem:[%s2 + $0x8] sm:$0xff]
    %v37 = vld [vmem:[%s2 + $0x10] sm:$0xff]
    %v38 = vld [vmem:[%s2 + $0x18] sm:$0xff]
    %v39 = vld [vmem:[%s3] sm:$0xff]
    %v40 = vld [vmem:[%s3 + $0x8] sm:$0xff]
    %v41 = vld [vmem:[%s3 + $0x10] sm:$0xff]
    %v42 = vld [vmem:[%s3 + $0x18] sm:$0xff]
    %v43 = vld [vmem:[%s4] sm:$0xff]
    %v44 = vld [vmem:[%s4 + $0x8] sm:$0xff]
    %v45 = vld [vmem:[%s4 + $0x10] sm:$0xff]
    %v46 = vld [vmem:[%s4 + $0x18] sm:$0xff]
    %v47 = vld [vmem:[#allocation2] sm:$0x1]
    %v48 = vld [vmem:[%s0] sm:$0xff]
    %v49 = vld [vmem:[%s0 + $0x8] sm:$0xff]
    %51 = vset.pattern.permute.xlu0 0
    %52 = vperm.xlu0 %51, %v39
    %v53 = vpop.permute.xlu0 %52
    %56 = vset.pattern.permute.xlu0 0
    %57 = vperm.xlu0 %56, %v40
    %v58 = vpop.permute.xlu0 %57
    %61 = vset.pattern.permute.xlu0 0
    %62 = vperm.xlu0 %61, %v41
    %v63 = vpop.permute.xlu0 %62
    %66 = vset.pattern.permute.xlu0 0
    %67 = vperm.xlu0 %66, %v42
    %v68 = vpop.permute.xlu0 %67
    %vm70 = vcmask 130048
    %v72 = vsel %vm70, %v35, 0
    %v75 = vsel %vm70, %v36, 0
    %v78 = vsel %vm70, %v37, 0
    %v81 = vsel %vm70, %v38, 0
    %83 = vmatprep.subr.mxu0 0.0
    %84 = vmatpush1.msra.mxu0 0.0
    %85 = vmatprep.subr.mxu0 0.0
    %86 = vmatpush1.msra.mxu0 0.0
    %87 = vmatprep.subr.mxu0 0.0
    %88 = vmatpush1.msra.mxu0 0.0
    %89 = vmatprep.subr.mxu0 0.0
    %90 = vmatpush1.msra.mxu0 0.0
    %91 = vmatprep.subr.mxu0 0.0
    %92 = vmatpush1.msra.mxu0 0.0
    %93 = vmatprep.subr.mxu0 0.0
    %94 = vmatpush1.msra.mxu0 0.0
    %95 = vmatprep.subr.mxu0 0.0
    %96 = vmatpush1.msra.mxu0 0.0
    %97 = vmatprep.subr.mxu0 0.0
    %98 = vmatpush1.msra.mxu0 0.0
    %99 = vmatprep.subr.mxu0 0.0
    %100 = vmatpush1.msra.mxu0 0.0
    %101 = vmatprep.subr.mxu0 0.0
    %102 = vmatpush1.msra.mxu0 0.0
    %103 = vmatprep.subr.mxu0 0.0
    %104 = vmatpush1.msra.mxu0 0.0
    %105 = vmatprep.subr.mxu0 0.0
    %106 = vmatpush1.msra.mxu0 0.0
    %107 = vmatprep.subr.mxu0 0.0
    %108 = vmatpush1.msra.mxu0 0.0
    %109 = vmatprep.subr.mxu0 0.0
    %110 = vmatpush1.msra.mxu0 0.0
    %111 = vmatprep.subr.mxu0 0.0
    %112 = vmatpush1.msra.mxu0 %v49
    %113 = vmatprep.subr.mxu0 0.0
    %114 = vmatpush1.msra.mxu0 %v48
    %115 = vmatprep.subr.mxu0 0.0
    %116 = vmatpush2.msra.mxu0 0.0
    %117 = vmatprep.subr.mxu0 0.0
    %118 = vmatpush2.msra.mxu0 0.0
    %119 = vmatprep.subr.mxu0 0.0
    %120 = vmatpush2.msra.mxu0 0.0
    %121 = vmatprep.subr.mxu0 0.0
    %122 = vmatpush2.msra.mxu0 0.0
    %123 = vmatprep.subr.mxu0 0.0
    %124 = vmatpush2.msra.mxu0 0.0
    %125 = vmatprep.subr.mxu0 0.0
    %126 = vmatpush2.msra.mxu0 0.0
    %127 = vmatprep.subr.mxu0 0.0
    %128 = vmatpush2.msra.mxu0 0.0
    %129 = vmatprep.subr.mxu0 0.0
    %130 = vmatpush2.msra.mxu0 0.0
    %131 = vmatprep.subr.mxu0 0.0
    %132 = vmatpush2.msra.mxu0 0.0
    %133 = vmatprep.subr.mxu0 0.0
    %134 = vmatpush2.msra.mxu0 0.0
    %135 = vmatprep.subr.mxu0 0.0
    %136 = vmatpush2.msra.mxu0 0.0
    %137 = vmatprep.subr.mxu0 0.0
    %138 = vmatpush2.msra.mxu0 0.0
    %139 = vmatprep.subr.mxu0 0.0
    %140 = vmatpush2.msra.mxu0 0.0
    %141 = vmatprep.subr.mxu0 0.0
    %142 = vmatpush2.msra.mxu0 0.0
    %143 = vmatprep.subr.mxu0 0.0
    %144 = vmatpush2.msra.mxu0 0.0
    %145 = vmatprep.subr.mxu0 0.0
    %146 = vmatpush2.msra.mxu0 0.0
    %147 = vmatprep.mubr.f32.mxu0 0.0
    %148 = vmatmul.mubr.f32.gmra.mxu0 %v72
    %v149 = vpop.f32.mrf.mxu0
    %v150 = vadd.f32 %v53, %v149
    %v151 = vpop.f32.mrf.mxu0
    %152 = vmatprep.mubr.f32.mxu0 0.0
    %153 = vmatmul.mubr.f32.gmra.mxu0 %v75
    %v154 = vpop.f32.mrf.mxu0
    %v155 = vadd.f32 %v58, %v154
    %v156 = vpop.f32.mrf.mxu0
    %157 = vmatprep.mubr.f32.mxu0 0.0
    %158 = vmatmul.mubr.f32.gmra.mxu0 %v78
    %v159 = vpop.f32.mrf.mxu0
    %v160 = vadd.f32 %v63, %v159
    %v161 = vpop.f32.mrf.mxu0
    %162 = vmatprep.mubr.f32.mxu0 0.0
    %163 = vmatmul.mubr.f32.gmra.mxu0 %v81
    %v164 = vpop.f32.mrf.mxu0
    %v165 = vadd.f32 %v68, %v164
    %v166 = vpop.f32.mrf.mxu0
    %167 = vdwg.mxu0
    %v168 = vtanh.pop %v150
    %v169 = vtanh.pop %v155
    %v170 = vtanh.pop %v160
    %v171 = vtanh.pop %v165
    %173 = vset.pattern.permute.xlu0 0
    %174 = vperm.xlu0 %173, %v43
    %v175 = vpop.permute.xlu0 %174
    %178 = vset.pattern.permute.xlu0 0
    %179 = vperm.xlu0 %178, %v44
    %v180 = vpop.permute.xlu0 %179
    %183 = vset.pattern.permute.xlu0 0
    %184 = vperm.xlu0 %183, %v45
    %v185 = vpop.permute.xlu0 %184
    %188 = vset.pattern.permute.xlu0 0
    %189 = vperm.xlu0 %188, %v46
    %v190 = vpop.permute.xlu0 %189
    %v192 = vmul.f32 %v168, %v175
    %v193 = vmul.f32 %v169, %v180
    %v194 = vmul.f32 %v170, %v185
    %v195 = vmul.f32 %v171, %v190
    %vm196 = vcmask 31744
    %v197 = vsel %vm196, %v192, 0.0
    %v198 = vsel %vm196, %v193, 0.0
    %v199 = vadd.f32 %v197, %v198
    %v200 = vsel %vm196, %v194, 0.0
    %v201 = vadd.f32 %v199, %v200
    %v202 = vsel %vm196, %v195, 0.0
    %v203 = vadd.f32 %v201, %v202
    %v204 = vrot.slane %v203, 4
    %v205 = vadd.f32 %v203, %v204
    %v206 = vrot.slane %v205, 2
    %v207 = vadd.f32 %v205, %v206
    %v208 = vrot.slane %v207, 1
    %v209 = vadd.f32 %v207, %v208
    %211 = vset.pattern.permute.xlu0 0
    %212 = vperm.xlu0 %211, %v47
    %v213 = vpop.permute.xlu0 %212
    %v215 = vlaneseq
    %v216 = vshrl.u32 %v215, 7
    %v217 = vsub.s32 0, %v216
    %v218 = vrot.slane %v213, %v217
    %v219 = vadd.f32 %v209, %v218
    %v220 = vsel %vm196, %v219, -inf
    %221 = vmax.xlane.f32.xlu0 %v220
    %v222 = vpop.xlane.xlu0 %221
    %v223 = vsub.f32 %v219, %v222
    %v224 = vmul.f32 %v223, 1.442695
    %v225 = vpow.pop %v224
    %v226 = vsel %vm196, %v225, 0.0
    %227 = vadd.xlane.f32.xlu0 %v226
    %v228 = vpop.xlane.xlu0 %227
    %v229 = vrcp.pop %v228
    %v230 = vmul.f32 %v225, %v229
    %s231 = scalar_lea.vmem %s0, 16
    %v232 = vld [vmem:[%s231] sm:$0xff]
    %v233 = vld [vmem:[%s231 + $0x8] sm:$0xff]
    %234 = vmatprep.subr.mxu0 0.0
    %235 = vmatpush1.msra.mxu0 0.0
    %236 = vmatprep.subr.mxu0 0.0
    %237 = vmatpush1.msra.mxu0 0.0
    %238 = vmatprep.subr.mxu0 0.0
    %239 = vmatpush1.msra.mxu0 0.0
    %240 = vmatprep.subr.mxu0 0.0
    %241 = vmatpush1.msra.mxu0 0.0
    %242 = vmatprep.subr.mxu0 0.0
    %243 = vmatpush1.msra.mxu0 0.0
    %244 = vmatprep.subr.mxu0 0.0
    %245 = vmatpush1.msra.mxu0 0.0
    %246 = vmatprep.subr.mxu0 0.0
    %247 = vmatpush1.msra.mxu0 0.0
    %248 = vmatprep.subr.mxu0 0.0
    %249 = vmatpush1.msra.mxu0 0.0
    %250 = vmatprep.subr.mxu0 0.0
    %251 = vmatpush1.msra.mxu0 0.0
    %252 = vmatprep.subr.mxu0 0.0
    %253 = vmatpush1.msra.mxu0 0.0
    %254 = vmatprep.subr.mxu0 0.0
    %255 = vmatpush1.msra.mxu0 0.0
    %256 = vmatprep.subr.mxu0 0.0
    %257 = vmatpush1.msra.mxu0 0.0
    %258 = vmatprep.subr.mxu0 0.0
    %259 = vmatpush1.msra.mxu0 0.0
    %260 = vmatprep.subr.mxu0 0.0
    %261 = vmatpush1.msra.mxu0 0.0
    %262 = vmatprep.subr.mxu0 0.0
    %263 = vmatpush1.msra.mxu0 %v233
    %264 = vmatprep.subr.mxu0 0.0
    %265 = vmatpush1.msra.mxu0 %v232
    %266 = vmatprep.subr.mxu0 0.0
    %267 = vmatpush2.msra.mxu0 0.0
    %268 = vmatprep.subr.mxu0 0.0
    %269 = vmatpush2.msra.mxu0 0.0
    %270 = vmatprep.subr.mxu0 0.0
    %271 = vmatpush2.msra.mxu0 0.0
    %272 = vmatprep.subr.mxu0 0.0
    %273 = vmatpush2.msra.mxu0 0.0
    %274 = vmatprep.subr.mxu0 0.0
    %275 = vmatpush2.msra.mxu0 0.0
    %276 = vmatprep.subr.mxu0 0.0
    %277 = vmatpush2.msra.mxu0 0.0
    %278 = vmatprep.subr.mxu0 0.0
    %279 = vmatpush2.msra.mxu0 0.0
    %280 = vmatprep.subr.mxu0 0.0
    %281 = vmatpush2.msra.mxu0 0.0
    %282 = vmatprep.subr.mxu0 0.0
    %283 = vmatpush2.msra.mxu0 0.0
    %284 = vmatprep.subr.mxu0 0.0
    %285 = vmatpush2.msra.mxu0 0.0
    %286 = vmatprep.subr.mxu0 0.0
    %287 = vmatpush2.msra.mxu0 0.0
    %288 = vmatprep.subr.mxu0 0.0
    %289 = vmatpush2.msra.mxu0 0.0
    %290 = vmatprep.subr.mxu0 0.0
    %291 = vmatpush2.msra.mxu0 0.0
    %292 = vmatprep.subr.mxu0 0.0
    %293 = vmatpush2.msra.mxu0 0.0
    %294 = vmatprep.subr.mxu0 0.0
    %295 = vmatpush2.msra.mxu0 0.0
    %296 = vmatprep.subr.mxu0 0.0
    %297 = vmatpush2.msra.mxu0 0.0
    %298 = vmatprep.mubr.f32.mxu0 0.0
    %299 = vmatmul.mubr.f32.gmra.mxu0 %v72
    %v300 = vpop.f32.mrf.mxu0
    %v301 = vadd.f32 %v53, %v300
    %v302 = vpop.f32.mrf.mxu0
    %303 = vmatprep.mubr.f32.mxu0 0.0
    %304 = vmatmul.mubr.f32.gmra.mxu0 %v75
    %v305 = vpop.f32.mrf.mxu0
    %v306 = vadd.f32 %v58, %v305
    %v307 = vpop.f32.mrf.mxu0
    %308 = vmatprep.mubr.f32.mxu0 0.0
    %309 = vmatmul.mubr.f32.gmra.mxu0 %v78
    %v310 = vpop.f32.mrf.mxu0
    %v311 = vadd.f32 %v63, %v310
    %v312 = vpop.f32.mrf.mxu0
    %313 = vmatprep.mubr.f32.mxu0 0.0
    %314 = vmatmul.mubr.f32.gmra.mxu0 %v81
    %v315 = vpop.f32.mrf.mxu0
    %v316 = vadd.f32 %v68, %v315
    %v317 = vpop.f32.mrf.mxu0
    %318 = vdwg.mxu0
    %v319 = vtanh.pop %v301
    %v320 = vtanh.pop %v306
    %v321 = vtanh.pop %v311
    %v322 = vtanh.pop %v316
    %v323 = vmul.f32 %v319, %v175
    %v324 = vmul.f32 %v320, %v180
    %v325 = vmul.f32 %v321, %v185
    %v326 = vmul.f32 %v322, %v190
    %v327 = vsel %vm196, %v323, 0.0
    %v328 = vsel %vm196, %v324, 0.0
    %v329 = vadd.f32 %v327, %v328
    %v330 = vsel %vm196, %v325, 0.0
    %v331 = vadd.f32 %v329, %v330
    %v332 = vsel %vm196, %v326, 0.0
    %v333 = vadd.f32 %v331, %v332
    %v334 = vrot.slane %v333, 4
    %v335 = vadd.f32 %v333, %v334
    %v336 = vrot.slane %v335, 2
    %v337 = vadd.f32 %v335, %v336
    %v338 = vrot.slane %v337, 1
    %v339 = vadd.f32 %v337, %v338
    %v340 = vadd.f32 %v339, %v218
    %v341 = vsel %vm196, %v340, -inf
    %342 = vmax.xlane.f32.xlu0 %v341
    %v343 = vpop.xlane.xlu0 %342
    %v344 = vsub.f32 %v340, %v343
    %v345 = vmul.f32 %v344, 1.442695
    %v346 = vpow.pop %v345
    %v347 = vsel %vm196, %v346, 0.0
    %348 = vadd.xlane.f32.xlu0 %v347
    %v349 = vpop.xlane.xlu0 %348
    %v350 = vrcp.pop %v349
    %v351 = vmul.f32 %v346, %v350
    %vm352 = vcmask 1040384
    %v353 = vsel %vm352, %v230, %v351
    %vm354 = vcmask 1041408
    %v355 = vsel %vm354, %v353, 0.0
    %v356 = vld [vmem:[%s1] sm:$0xff]
    %v357 = vld [vmem:[%s1 + $0x8] sm:$0xff]
    %v358 = vld [vmem:[%s1 + $0x10] sm:$0xff]
    %v359 = vld [vmem:[%s1 + $0x18] sm:$0xff]
    %v360 = vld [vmem:[%s1 + $0x20] sm:$0xff]
    %v361 = vld [vmem:[%s1 + $0x28] sm:$0xff]
    %v362 = vld [vmem:[%s1 + $0x30] sm:$0xff]
    %v363 = vld [vmem:[%s1 + $0x38] sm:$0xff]
    %v364 = vld [vmem:[%s1 + $0x40] sm:$0xff]
    %v365 = vld [vmem:[%s1 + $0x48] sm:$0xff]
    %v366 = vld [vmem:[%s1 + $0x50] sm:$0xff]
    %v367 = vld [vmem:[%s1 + $0x58] sm:$0xff]
    %v368 = vld [vmem:[%s1 + $0x60] sm:$0xff]
    %v369 = vld [vmem:[%s1 + $0x68] sm:$0xff]
    %v370 = vld [vmem:[%s1 + $0x70] sm:$0xff]
    %v371 = vld [vmem:[%s1 + $0x78] sm:$0xff]
    %v372 = vmul.f32 %v356, %v355
    %v373 = vmul.f32 %v357, %v355
    %v374 = vmul.f32 %v358, %v355
    %v375 = vmul.f32 %v359, %v355
    %v376 = vmul.f32 %v360, %v355
    %v377 = vmul.f32 %v361, %v355
    %v378 = vmul.f32 %v362, %v355
    %v379 = vmul.f32 %v363, %v355
    %v380 = vmul.f32 %v364, %v355
    %v381 = vmul.f32 %v365, %v355
    %v382 = vmul.f32 %v366, %v355
    %v383 = vmul.f32 %v367, %v355
    %v384 = vmul.f32 %v368, %v355
    %v385 = vmul.f32 %v369, %v355
    %v386 = vmul.f32 %v370, %v355
    %v387 = vmul.f32 %v371, %v355
    %v388 = vld [vmem:[%s6] sm:$0xf]
    %v389 = vld [vmem:[%s7] sm:$0x1]
    %v391 = vlaneseq
    %v392 = vshrl.u32 %v391, 7
    %v393 = vsub.s32 0, %v392
    %v394 = vrot.slane %v389, %v393
    %v397 = vsel %vm196, %v372, 0
    %v400 = vsel %vm196, %v373, 0
    %v403 = vsel %vm196, %v374, 0
    %v406 = vsel %vm196, %v375, 0
    %v409 = vsel %vm196, %v376, 0
    %v412 = vsel %vm196, %v377, 0
    %v415 = vsel %vm196, %v378, 0
    %v418 = vsel %vm196, %v379, 0
    %v421 = vsel %vm196, %v380, 0
    %v424 = vsel %vm196, %v381, 0
    %v427 = vsel %vm196, %v382, 0
    %v430 = vsel %vm196, %v383, 0
    %v433 = vsel %vm196, %v384, 0
    %v436 = vsel %vm196, %v385, 0
    %v439 = vsel %vm196, %v386, 0
    %v442 = vsel %vm196, %v387, 0
    %vm444 = vcmask 1043456
    %v446 = vsel %vm444, %v388, 0
    %448 = vmatprep.subr.mxu0 0.0
    %449 = vmatpush1.msra.mxu0 0.0
    %450 = vmatprep.subr.mxu0 0.0
    %451 = vmatpush1.msra.mxu0 0.0
    %452 = vmatprep.subr.mxu0 0.0
    %453 = vmatpush1.msra.mxu0 0.0
    %454 = vmatprep.subr.mxu0 0.0
    %455 = vmatpush1.msra.mxu0 0.0
    %456 = vmatprep.subr.mxu0 0.0
    %457 = vmatpush1.msra.mxu0 0.0
    %458 = vmatprep.subr.mxu0 0.0
    %459 = vmatpush1.msra.mxu0 0.0
    %460 = vmatprep.subr.mxu0 0.0
    %461 = vmatpush1.msra.mxu0 0.0
    %462 = vmatprep.subr.mxu0 0.0
    %463 = vmatpush1.msra.mxu0 0.0
    %464 = vmatprep.subr.mxu0 0.0
    %465 = vmatpush1.msra.mxu0 0.0
    %466 = vmatprep.subr.mxu0 0.0
    %467 = vmatpush1.msra.mxu0 0.0
    %468 = vmatprep.subr.mxu0 0.0
    %469 = vmatpush1.msra.mxu0 0.0
    %470 = vmatprep.subr.mxu0 0.0
    %471 = vmatpush1.msra.mxu0 0.0
    %472 = vmatprep.subr.mxu0 0.0
    %473 = vmatpush1.msra.mxu0 0.0
    %474 = vmatprep.subr.mxu0 0.0
    %475 = vmatpush1.msra.mxu0 0.0
    %476 = vmatprep.subr.mxu0 0.0
    %477 = vmatpush1.msra.mxu0 0.0
    %478 = vmatprep.subr.mxu0 0.0
    %479 = vmatpush1.msra.mxu0 %v446
    %480 = vmatprep.subr.mxu0 0.0
    %481 = vmatpush2.msra.mxu0 0.0
    %482 = vmatprep.subr.mxu0 0.0
    %483 = vmatpush2.msra.mxu0 0.0
    %484 = vmatprep.subr.mxu0 0.0
    %485 = vmatpush2.msra.mxu0 0.0
    %486 = vmatprep.subr.mxu0 0.0
    %487 = vmatpush2.msra.mxu0 0.0
    %488 = vmatprep.subr.mxu0 0.0
    %489 = vmatpush2.msra.mxu0 0.0
    %490 = vmatprep.subr.mxu0 0.0
    %491 = vmatpush2.msra.mxu0 0.0
    %492 = vmatprep.subr.mxu0 0.0
    %493 = vmatpush2.msra.mxu0 0.0
    %494 = vmatprep.subr.mxu0 0.0
    %495 = vmatpush2.msra.mxu0 0.0
    %496 = vmatprep.subr.mxu0 0.0
    %497 = vmatpush2.msra.mxu0 0.0
    %498 = vmatprep.subr.mxu0 0.0
    %499 = vmatpush2.msra.mxu0 0.0
    %500 = vmatprep.subr.mxu0 0.0
    %501 = vmatpush2.msra.mxu0 0.0
    %502 = vmatprep.subr.mxu0 0.0
    %503 = vmatpush2.msra.mxu0 0.0
    %504 = vmatprep.subr.mxu0 0.0
    %505 = vmatpush2.msra.mxu0 0.0
    %506 = vmatprep.subr.mxu0 0.0
    %507 = vmatpush2.msra.mxu0 0.0
    %508 = vmatprep.subr.mxu0 0.0
    %509 = vmatpush2.msra.mxu0 0.0
    %510 = vmatprep.subr.mxu0 0.0
    %511 = vmatpush2.msra.mxu0 0.0
    %512 = vmatprep.mubr.f32.mxu0 0.0
    %513 = vmatmul.mubr.f32.gmra.mxu0 %v397
    %v514 = vpop.f32.mrf.mxu0
    %v515 = vadd.f32 %v394, %v514
    %v516 = vpop.f32.mrf.mxu0
    %517 = vmatprep.mubr.f32.mxu0 0.0
    %518 = vmatmul.mubr.f32.gmra.mxu0 %v400
    %v519 = vpop.f32.mrf.mxu0
    %v520 = vadd.f32 %v394, %v519
    %v521 = vpop.f32.mrf.mxu0
    %522 = vmatprep.mubr.f32.mxu0 0.0
    %523 = vmatmul.mubr.f32.gmra.mxu0 %v403
    %v524 = vpop.f32.mrf.mxu0
    %v525 = vadd.f32 %v394, %v524
    %v526 = vpop.f32.mrf.mxu0
    %527 = vmatprep.mubr.f32.mxu0 0.0
    %528 = vmatmul.mubr.f32.gmra.mxu0 %v406
    %v529 = vpop.f32.mrf.mxu0
    %v530 = vadd.f32 %v394, %v529
    %v531 = vpop.f32.mrf.mxu0
    %532 = vmatprep.mubr.f32.mxu0 0.0
    %533 = vmatmul.mubr.f32.gmra.mxu0 %v409
    %v534 = vpop.f32.mrf.mxu0
    %v535 = vadd.f32 %v394, %v534
    %v536 = vpop.f32.mrf.mxu0
    %537 = vmatprep.mubr.f32.mxu0 0.0
    %538 = vmatmul.mubr.f32.gmra.mxu0 %v412
    %v539 = vpop.f32.mrf.mxu0
    %v540 = vadd.f32 %v394, %v539
    %v541 = vpop.f32.mrf.mxu0
    %542 = vmatprep.mubr.f32.mxu0 0.0
    %543 = vmatmul.mubr.f32.gmra.mxu0 %v415
    %v544 = vpop.f32.mrf.mxu0
    %v545 = vadd.f32 %v394, %v544
    %v546 = vpop.f32.mrf.mxu0
    %547 = vmatprep.mubr.f32.mxu0 0.0
    %548 = vmatmul.mubr.f32.gmra.mxu0 %v418
    %v549 = vpop.f32.mrf.mxu0
    %v550 = vadd.f32 %v394, %v549
    %v551 = vpop.f32.mrf.mxu0
    %552 = vmatprep.mubr.f32.mxu0 0.0
    %553 = vmatmul.mubr.f32.gmra.mxu0 %v421
    %v554 = vpop.f32.mrf.mxu0
    %v555 = vadd.f32 %v394, %v554
    %v556 = vpop.f32.mrf.mxu0
    %557 = vmatprep.mubr.f32.mxu0 0.0
    %558 = vmatmul.mubr.f32.gmra.mxu0 %v424
    %v559 = vpop.f32.mrf.mxu0
    %v560 = vadd.f32 %v394, %v559
    %v561 = vpop.f32.mrf.mxu0
    %562 = vmatprep.mubr.f32.mxu0 0.0
    %563 = vmatmul.mubr.f32.gmra.mxu0 %v427
    %v564 = vpop.f32.mrf.mxu0
    %v565 = vadd.f32 %v394, %v564
    %v566 = vpop.f32.mrf.mxu0
    %567 = vmatprep.mubr.f32.mxu0 0.0
    %568 = vmatmul.mubr.f32.gmra.mxu0 %v430
    %v569 = vpop.f32.mrf.mxu0
    %v570 = vadd.f32 %v394, %v569
    %v571 = vpop.f32.mrf.mxu0
    %572 = vmatprep.mubr.f32.mxu0 0.0
    %573 = vmatmul.mubr.f32.gmra.mxu0 %v433
    %v574 = vpop.f32.mrf.mxu0
    %v575 = vadd.f32 %v394, %v574
    %v576 = vpop.f32.mrf.mxu0
    %577 = vmatprep.mubr.f32.mxu0 0.0
    %578 = vmatmul.mubr.f32.gmra.mxu0 %v436
    %v579 = vpop.f32.mrf.mxu0
    %v580 = vadd.f32 %v394, %v579
    %v581 = vpop.f32.mrf.mxu0
    %582 = vmatprep.mubr.f32.mxu0 0.0
    %583 = vmatmul.mubr.f32.gmra.mxu0 %v439
    %v584 = vpop.f32.mrf.mxu0
    %v585 = vadd.f32 %v394, %v584
    %v586 = vpop.f32.mrf.mxu0
    %587 = vmatprep.mubr.f32.mxu0 0.0
    %588 = vmatmul.mubr.f32.gmra.mxu0 %v442
    %v589 = vpop.f32.mrf.mxu0
    %v590 = vadd.f32 %v394, %v589
    %v591 = vpop.f32.mrf.mxu0
    %592 = vdwg.mxu0
    %v593 = vld [vmem:[%s8] sm:$0xff]
    %v594 = vld [vmem:[%s8 + $0x8] sm:$0xff]
    %v595 = vld [vmem:[%s8 + $0x10] sm:$0xff]
    %v596 = vld [vmem:[%s8 + $0x18] sm:$0xff]
    %s597 = scalar_lea.vmem %s8, 32
    %v598 = vld [vmem:[%s597] sm:$0xff]
    %v599 = vld [vmem:[%s597 + $0x8] sm:$0xff]
    %v600 = vld [vmem:[%s597 + $0x10] sm:$0xff]
    %v601 = vld [vmem:[%s597 + $0x18] sm:$0xff]
    %s602 = scalar_lea.vmem %s8, 64
    %v603 = vld [vmem:[%s602] sm:$0xff]
    %v604 = vld [vmem:[%s602 + $0x8] sm:$0xff]
    %v605 = vld [vmem:[%s602 + $0x10] sm:$0xff]
    %v606 = vld [vmem:[%s602 + $0x18] sm:$0xff]
    %s607 = scalar_lea.vmem %s8, 96
    %v608 = vld [vmem:[%s607] sm:$0xff]
    %v609 = vld [vmem:[%s607 + $0x8] sm:$0xff]
    %v610 = vld [vmem:[%s607 + $0x10] sm:$0xff]
    %v611 = vld [vmem:[%s607 + $0x18] sm:$0xff]
    %vm612 = vcmask 261120
    %v614 = vsel %vm612, 0.0, 0
    %616 = vmatprep.subr.mxu0 0.0
    %617 = vmatpush1.msra.mxu0 0.0
    %618 = vmatprep.subr.mxu0 0.0
    %619 = vmatpush1.msra.mxu0 0.0
    %620 = vmatprep.subr.mxu0 0.0
    %621 = vmatpush1.msra.mxu0 0.0
    %622 = vmatprep.subr.mxu0 0.0
    %623 = vmatpush1.msra.mxu0 0.0
    %624 = vmatprep.subr.mxu0 0.0
    %625 = vmatpush1.msra.mxu0 0.0
    %626 = vmatprep.subr.mxu0 0.0
    %627 = vmatpush1.msra.mxu0 0.0
    %628 = vmatprep.subr.mxu0 0.0
    %629 = vmatpush1.msra.mxu0 0.0
    %630 = vmatprep.subr.mxu0 0.0
    %631 = vmatpush1.msra.mxu0 0.0
    %632 = vmatprep.subr.mxu0 0.0
    %633 = vmatpush1.msra.mxu0 0.0
    %634 = vmatprep.subr.mxu0 0.0
    %635 = vmatpush1.msra.mxu0 0.0
    %636 = vmatprep.subr.mxu0 0.0
    %637 = vmatpush1.msra.mxu0 0.0
    %638 = vmatprep.subr.mxu0 0.0
    %639 = vmatpush1.msra.mxu0 0.0
    %640 = vmatprep.subr.mxu0 0.0
    %641 = vmatpush1.msra.mxu0 %v596
    %642 = vmatprep.subr.mxu0 0.0
    %643 = vmatpush1.msra.mxu0 %v595
    %644 = vmatprep.subr.mxu0 0.0
    %645 = vmatpush1.msra.mxu0 %v594
    %646 = vmatprep.subr.mxu0 0.0
    %647 = vmatpush1.msra.mxu0 %v593
    %648 = vmatprep.subr.mxu0 0.0
    %649 = vmatpush2.msra.mxu0 0.0
    %650 = vmatprep.subr.mxu0 0.0
    %651 = vmatpush2.msra.mxu0 0.0
    %652 = vmatprep.subr.mxu0 0.0
    %653 = vmatpush2.msra.mxu0 0.0
    %654 = vmatprep.subr.mxu0 0.0
    %655 = vmatpush2.msra.mxu0 0.0
    %656 = vmatprep.subr.mxu0 0.0
    %657 = vmatpush2.msra.mxu0 0.0
    %658 = vmatprep.subr.mxu0 0.0
    %659 = vmatpush2.msra.mxu0 0.0
    %660 = vmatprep.subr.mxu0 0.0
    %661 = vmatpush2.msra.mxu0 0.0
    %662 = vmatprep.subr.mxu0 0.0
    %663 = vmatpush2.msra.mxu0 0.0
    %664 = vmatprep.subr.mxu0 0.0
    %665 = vmatpush2.msra.mxu0 0.0
    %666 = vmatprep.subr.mxu0 0.0
    %667 = vmatpush2.msra.mxu0 0.0
    %668 = vmatprep.subr.mxu0 0.0
    %669 = vmatpush2.msra.mxu0 0.0
    %670 = vmatprep.subr.mxu0 0.0
    %671 = vmatpush2.msra.mxu0 0.0
    %672 = vmatprep.subr.mxu0 0.0
    %673 = vmatpush2.msra.mxu0 0.0
    %674 = vmatprep.subr.mxu0 0.0
    %675 = vmatpush2.msra.mxu0 0.0
    %676 = vmatprep.subr.mxu0 0.0
    %677 = vmatpush2.msra.mxu0 0.0
    %678 = vmatprep.subr.mxu0 0.0
    %679 = vmatpush2.msra.mxu0 0.0
    %680 = vmatprep.mubr.f32.mxu0 0.0
    %681 = vmatmul.mubr.f32.gmra.mxu0 %v614
    %v682 = vpop.f32.mrf.mxu0
    %v683 = vadd.f32 0.0, %v682
    %v684 = vpop.f32.mrf.mxu0
    %685 = vdwg.mxu0
    %v686 = vadd.f32 %v515, %v683
    %687 = vmatprep.subr.mxu0 0.0
    %688 = vmatpush1.msra.mxu0 0.0
    %689 = vmatprep.subr.mxu0 0.0
    %690 = vmatpush1.msra.mxu0 0.0
    %691 = vmatprep.subr.mxu0 0.0
    %692 = vmatpush1.msra.mxu0 0.0
    %693 = vmatprep.subr.mxu0 0.0
    %694 = vmatpush1.msra.mxu0 0.0
    %695 = vmatprep.subr.mxu0 0.0
    %696 = vmatpush1.msra.mxu0 0.0
    %697 = vmatprep.subr.mxu0 0.0
    %698 = vmatpush1.msra.mxu0 0.0
    %699 = vmatprep.subr.mxu0 0.0
    %700 = vmatpush1.msra.mxu0 0.0
    %701 = vmatprep.subr.mxu0 0.0
    %702 = vmatpush1.msra.mxu0 0.0
    %703 = vmatprep.subr.mxu0 0.0
    %704 = vmatpush1.msra.mxu0 0.0
    %705 = vmatprep.subr.mxu0 0.0
    %706 = vmatpush1.msra.mxu0 0.0
    %707 = vmatprep.subr.mxu0 0.0
    %708 = vmatpush1.msra.mxu0 0.0
    %709 = vmatprep.subr.mxu0 0.0
    %710 = vmatpush1.msra.mxu0 0.0
    %711 = vmatprep.subr.mxu0 0.0
    %712 = vmatpush1.msra.mxu0 %v601
    %713 = vmatprep.subr.mxu0 0.0
    %714 = vmatpush1.msra.mxu0 %v600
    %715 = vmatprep.subr.mxu0 0.0
    %716 = vmatpush1.msra.mxu0 %v599
    %717 = vmatprep.subr.mxu0 0.0
    %718 = vmatpush1.msra.mxu0 %v598
    %719 = vmatprep.subr.mxu0 0.0
    %720 = vmatpush2.msra.mxu0 0.0
    %721 = vmatprep.subr.mxu0 0.0
    %722 = vmatpush2.msra.mxu0 0.0
    %723 = vmatprep.subr.mxu0 0.0
    %724 = vmatpush2.msra.mxu0 0.0
    %725 = vmatprep.subr.mxu0 0.0
    %726 = vmatpush2.msra.mxu0 0.0
    %727 = vmatprep.subr.mxu0 0.0
    %728 = vmatpush2.msra.mxu0 0.0
    %729 = vmatprep.subr.mxu0 0.0
    %730 = vmatpush2.msra.mxu0 0.0
    %731 = vmatprep.subr.mxu0 0.0
    %732 = vmatpush2.msra.mxu0 0.0
    %733 = vmatprep.subr.mxu0 0.0
    %734 = vmatpush2.msra.mxu0 0.0
    %735 = vmatprep.subr.mxu0 0.0
    %736 = vmatpush2.msra.mxu0 0.0
    %737 = vmatprep.subr.mxu0 0.0
    %738 = vmatpush2.msra.mxu0 0.0
    %739 = vmatprep.subr.mxu0 0.0
    %740 = vmatpush2.msra.mxu0 0.0
    %741 = vmatprep.subr.mxu0 0.0
    %742 = vmatpush2.msra.mxu0 0.0
    %743 = vmatprep.subr.mxu0 0.0
    %744 = vmatpush2.msra.mxu0 0.0
    %745 = vmatprep.subr.mxu0 0.0
    %746 = vmatpush2.msra.mxu0 0.0
    %747 = vmatprep.subr.mxu0 0.0
    %748 = vmatpush2.msra.mxu0 0.0
    %749 = vmatprep.subr.mxu0 0.0
    %750 = vmatpush2.msra.mxu0 0.0
    %751 = vmatprep.mubr.f32.mxu0 0.0
    %752 = vmatmul.mubr.f32.gmra.mxu0 %v614
    %v753 = vpop.f32.mrf.mxu0
    %v754 = vadd.f32 0.0, %v753
    %v755 = vpop.f32.mrf.mxu0
    %756 = vdwg.mxu0
    %758 = vrot.lane.b32.xlu0 %v754, 32
    %v759 = vpop.permute.xlu0 %758
    %v761 = vadd.f32 %v515, %v759
    %762 = vmatprep.subr.mxu0 0.0
    %763 = vmatpush1.msra.mxu0 0.0
    %764 = vmatprep.subr.mxu0 0.0
    %765 = vmatpush1.msra.mxu0 0.0
    %766 = vmatprep.subr.mxu0 0.0
    %767 = vmatpush1.msra.mxu0 0.0
    %768 = vmatprep.subr.mxu0 0.0
    %769 = vmatpush1.msra.mxu0 0.0
    %770 = vmatprep.subr.mxu0 0.0
    %771 = vmatpush1.msra.mxu0 0.0
    %772 = vmatprep.subr.mxu0 0.0
    %773 = vmatpush1.msra.mxu0 0.0
    %774 = vmatprep.subr.mxu0 0.0
    %775 = vmatpush1.msra.mxu0 0.0
    %776 = vmatprep.subr.mxu0 0.0
    %777 = vmatpush1.msra.mxu0 0.0
    %778 = vmatprep.subr.mxu0 0.0
    %779 = vmatpush1.msra.mxu0 0.0
    %780 = vmatprep.subr.mxu0 0.0
    %781 = vmatpush1.msra.mxu0 0.0
    %782 = vmatprep.subr.mxu0 0.0
    %783 = vmatpush1.msra.mxu0 0.0
    %784 = vmatprep.subr.mxu0 0.0
    %785 = vmatpush1.msra.mxu0 0.0
    %786 = vmatprep.subr.mxu0 0.0
    %787 = vmatpush1.msra.mxu0 %v606
    %788 = vmatprep.subr.mxu0 0.0
    %789 = vmatpush1.msra.mxu0 %v605
    %790 = vmatprep.subr.mxu0 0.0
    %791 = vmatpush1.msra.mxu0 %v604
    %792 = vmatprep.subr.mxu0 0.0
    %793 = vmatpush1.msra.mxu0 %v603
    %794 = vmatprep.subr.mxu0 0.0
    %795 = vmatpush2.msra.mxu0 0.0
    %796 = vmatprep.subr.mxu0 0.0
    %797 = vmatpush2.msra.mxu0 0.0
    %798 = vmatprep.subr.mxu0 0.0
    %799 = vmatpush2.msra.mxu0 0.0
    %800 = vmatprep.subr.mxu0 0.0
    %801 = vmatpush2.msra.mxu0 0.0
    %802 = vmatprep.subr.mxu0 0.0
    %803 = vmatpush2.msra.mxu0 0.0
    %804 = vmatprep.subr.mxu0 0.0
    %805 = vmatpush2.msra.mxu0 0.0
    %806 = vmatprep.subr.mxu0 0.0
    %807 = vmatpush2.msra.mxu0 0.0
    %808 = vmatprep.subr.mxu0 0.0
    %809 = vmatpush2.msra.mxu0 0.0
    %810 = vmatprep.subr.mxu0 0.0
    %811 = vmatpush2.msra.mxu0 0.0
    %812 = vmatprep.subr.mxu0 0.0
    %813 = vmatpush2.msra.mxu0 0.0
    %814 = vmatprep.subr.mxu0 0.0
    %815 = vmatpush2.msra.mxu0 0.0
    %816 = vmatprep.subr.mxu0 0.0
    %817 = vmatpush2.msra.mxu0 0.0
    %818 = vmatprep.subr.mxu0 0.0
    %819 = vmatpush2.msra.mxu0 0.0
    %820 = vmatprep.subr.mxu0 0.0
    %821 = vmatpush2.msra.mxu0 0.0
    %822 = vmatprep.subr.mxu0 0.0
    %823 = vmatpush2.msra.mxu0 0.0
    %824 = vmatprep.subr.mxu0 0.0
    %825 = vmatpush2.msra.mxu0 0.0
    %826 = vmatprep.mubr.f32.mxu0 0.0
    %827 = vmatmul.mubr.f32.gmra.mxu0 %v614
    %v828 = vpop.f32.mrf.mxu0
    %v829 = vadd.f32 0.0, %v828
    %v830 = vpop.f32.mrf.mxu0
    %831 = vdwg.mxu0
    %833 = vrot.lane.b32.xlu0 %v829, 64
    %v834 = vpop.permute.xlu0 %833
    %v836 = vadd.f32 %v515, %v834
    %837 = vmatprep.subr.mxu0 0.0
    %838 = vmatpush1.msra.mxu0 0.0
    %839 = vmatprep.subr.mxu0 0.0
    %840 = vmatpush1.msra.mxu0 0.0
    %841 = vmatprep.subr.mxu0 0.0
    %842 = vmatpush1.msra.mxu0 0.0
    %843 = vmatprep.subr.mxu0 0.0
    %844 = vmatpush1.msra.mxu0 0.0
    %845 = vmatprep.subr.mxu0 0.0
    %846 = vmatpush1.msra.mxu0 0.0
    %847 = vmatprep.subr.mxu0 0.0
    %848 = vmatpush1.msra.mxu0 0.0
    %849 = vmatprep.subr.mxu0 0.0
    %850 = vmatpush1.msra.mxu0 0.0
    %851 = vmatprep.subr.mxu0 0.0
    %852 = vmatpush1.msra.mxu0 0.0
    %853 = vmatprep.subr.mxu0 0.0
    %854 = vmatpush1.msra.mxu0 0.0
    %855 = vmatprep.subr.mxu0 0.0
    %856 = vmatpush1.msra.mxu0 0.0
    %857 = vmatprep.subr.mxu0 0.0
    %858 = vmatpush1.msra.mxu0 0.0
    %859 = vmatprep.subr.mxu0 0.0
    %860 = vmatpush1.msra.mxu0 0.0
    %861 = vmatprep.subr.mxu0 0.0
    %862 = vmatpush1.msra.mxu0 %v611
    %863 = vmatprep.subr.mxu0 0.0
    %864 = vmatpush1.msra.mxu0 %v610
    %865 = vmatprep.subr.mxu0 0.0
    %866 = vmatpush1.msra.mxu0 %v609
    %867 = vmatprep.subr.mxu0 0.0
    %868 = vmatpush1.msra.mxu0 %v608
    %869 = vmatprep.subr.mxu0 0.0
    %870 = vmatpush2.msra.mxu0 0.0
    %871 = vmatprep.subr.mxu0 0.0
    %872 = vmatpush2.msra.mxu0 0.0
    %873 = vmatprep.subr.mxu0 0.0
    %874 = vmatpush2.msra.mxu0 0.0
    %875 = vmatprep.subr.mxu0 0.0
    %876 = vmatpush2.msra.mxu0 0.0
    %877 = vmatprep.subr.mxu0 0.0
    %878 = vmatpush2.msra.mxu0 0.0
    %879 = vmatprep.subr.mxu0 0.0
    %880 = vmatpush2.msra.mxu0 0.0
    %881 = vmatprep.subr.mxu0 0.0
    %882 = vmatpush2.msra.mxu0 0.0
    %883 = vmatprep.subr.mxu0 0.0
    %884 = vmatpush2.msra.mxu0 0.0
    %885 = vmatprep.subr.mxu0 0.0
    %886 = vmatpush2.msra.mxu0 0.0
    %887 = vmatprep.subr.mxu0 0.0
    %888 = vmatpush2.msra.mxu0 0.0
    %889 = vmatprep.subr.mxu0 0.0
    %890 = vmatpush2.msra.mxu0 0.0
    %891 = vmatprep.subr.mxu0 0.0
    %892 = vmatpush2.msra.mxu0 0.0
    %893 = vmatprep.subr.mxu0 0.0
    %894 = vmatpush2.msra.mxu0 0.0
    %895 = vmatprep.subr.mxu0 0.0
    %896 = vmatpush2.msra.mxu0 0.0
    %897 = vmatprep.subr.mxu0 0.0
    %898 = vmatpush2.msra.mxu0 0.0
    %899 = vmatprep.subr.mxu0 0.0
    %900 = vmatpush2.msra.mxu0 0.0
    %901 = vmatprep.mubr.f32.mxu0 0.0
    %902 = vmatmul.mubr.f32.gmra.mxu0 %v614
    %v903 = vpop.f32.mrf.mxu0
    %v904 = vadd.f32 0.0, %v903
    %v905 = vpop.f32.mrf.mxu0
    %906 = vdwg.mxu0
    %908 = vrot.lane.b32.xlu0 %v904, 96
    %v909 = vpop.permute.xlu0 %908
    %v911 = vadd.f32 %v515, %v909
    %v912 = vxor.u32 %v686, 2147483648
    %v913 = vmul.f32 %v912, 1.442695
    %v914 = vpow.pop %v913
    %v915 = vadd.f32 %v914, 1.0
    %v916 = vrcp.pop %v915
    %v917 = vmul.f32 1.0, %v916
    %v918 = vxor.u32 %v761, 2147483648
    %v919 = vmul.f32 %v918, 1.442695
    %v920 = vpow.pop %v919
    %v921 = vadd.f32 %v920, 1.0
    %v922 = vrcp.pop %v921
    %v923 = vmul.f32 1.0, %v922
    %v924 = vtanh.pop %v836
    %v925 = vxor.u32 %v911, 2147483648
    %v926 = vmul.f32 %v925, 1.442695
    %v927 = vpow.pop %v926
    %v928 = vadd.f32 %v927, 1.0
    %v929 = vrcp.pop %v928
    %v930 = vmul.f32 1.0, %v929
    %v931 = vmul.f32 %v923, 0.0
    %933 = vrot.lane.b32.xlu0 %v924, 64
    %v934 = vpop.permute.xlu0 %933
    %v936 = vmul.f32 %v917, %v934
    %938 = vrot.lane.b32.xlu0 %v936, 32
    %v939 = vpop.permute.xlu0 %938
    %v941 = vadd.f32 %v931, %v939
    %v942 = vtanh.pop %v941
    %944 = vrot.lane.b32.xlu0 %v942, 64
    %v945 = vpop.permute.xlu0 %944
    %v947 = vmul.f32 %v930, %v945
    %949 = vrot.lane.b32.xlu0 %v947, 32
    %v950 = vpop.permute.xlu0 %949
    %v951 = vsel %vm612, %v950, 0
    %953 = vmatprep.subr.mxu0 0.0
    %954 = vmatpush1.msra.mxu0 0.0
    %955 = vmatprep.subr.mxu0 0.0
    %956 = vmatpush1.msra.mxu0 0.0
    %957 = vmatprep.subr.mxu0 0.0
    %958 = vmatpush1.msra.mxu0 0.0
    %959 = vmatprep.subr.mxu0 0.0
    %960 = vmatpush1.msra.mxu0 0.0
    %961 = vmatprep.subr.mxu0 0.0
    %962 = vmatpush1.msra.mxu0 0.0
    %963 = vmatprep.subr.mxu0 0.0
    %964 = vmatpush1.msra.mxu0 0.0
    %965 = vmatprep.subr.mxu0 0.0
    %966 = vmatpush1.msra.mxu0 0.0
    %967 = vmatprep.subr.mxu0 0.0
    %968 = vmatpush1.msra.mxu0 0.0
    %969 = vmatprep.subr.mxu0 0.0
    %970 = vmatpush1.msra.mxu0 0.0
    %971 = vmatprep.subr.mxu0 0.0
    %972 = vmatpush1.msra.mxu0 0.0
    %973 = vmatprep.subr.mxu0 0.0
    %974 = vmatpush1.msra.mxu0 0.0
    %975 = vmatprep.subr.mxu0 0.0
    %976 = vmatpush1.msra.mxu0 0.0
    %977 = vmatprep.subr.mxu0 0.0
    %978 = vmatpush1.msra.mxu0 %v596
    %979 = vmatprep.subr.mxu0 0.0
    %980 = vmatpush1.msra.mxu0 %v595
    %981 = vmatprep.subr.mxu0 0.0
    %982 = vmatpush1.msra.mxu0 %v594
    %983 = vmatprep.subr.mxu0 0.0
    %984 = vmatpush1.msra.mxu0 %v593
    %985 = vmatprep.subr.mxu0 0.0
    %986 = vmatpush2.msra.mxu0 0.0
    %987 = vmatprep.subr.mxu0 0.0
    %988 = vmatpush2.msra.mxu0 0.0
    %989 = vmatprep.subr.mxu0 0.0
    %990 = vmatpush2.msra.mxu0 0.0
    %991 = vmatprep.subr.mxu0 0.0
    %992 = vmatpush2.msra.mxu0 0.0
    %993 = vmatprep.subr.mxu0 0.0
    %994 = vmatpush2.msra.mxu0 0.0
    %995 = vmatprep.subr.mxu0 0.0
    %996 = vmatpush2.msra.mxu0 0.0
    %997 = vmatprep.subr.mxu0 0.0
    %998 = vmatpush2.msra.mxu0 0.0
    %999 = vmatprep.subr.mxu0 0.0
    %1000 = vmatpush2.msra.mxu0 0.0
    %1001 = vmatprep.subr.mxu0 0.0
    %1002 = vmatpush2.msra.mxu0 0.0
    %1003 = vmatprep.subr.mxu0 0.0
    %1004 = vmatpush2.msra.mxu0 0.0
    %1005 = vmatprep.subr.mxu0 0.0
    %1006 = vmatpush2.msra.mxu0 0.0
    %1007 = vmatprep.subr.mxu0 0.0
    %1008 = vmatpush2.msra.mxu0 0.0
    %1009 = vmatprep.subr.mxu0 0.0
    %1010 = vmatpush2.msra.mxu0 0.0
    %1011 = vmatprep.subr.mxu0 0.0
    %1012 = vmatpush2.msra.mxu0 0.0
    %1013 = vmatprep.subr.mxu0 0.0
    %1014 = vmatpush2.msra.mxu0 0.0
    %1015 = vmatprep.subr.mxu0 0.0
    %1016 = vmatpush2.msra.mxu0 0.0
    %1017 = vmatprep.mubr.f32.mxu0 0.0
    %1018 = vmatmul.mubr.f32.gmra.mxu0 %v951
    %v1019 = vpop.f32.mrf.mxu0
    %v1020 = vadd.f32 0.0, %v1019
    %v1021 = vpop.f32.mrf.mxu0
    %1022 = vdwg.mxu0
    %v1023 = vadd.f32 %v520, %v1020
    %1024 = vmatprep.subr.mxu0 0.0
    %1025 = vmatpush1.msra.mxu0 0.0
    %1026 = vmatprep.subr.mxu0 0.0
    %1027 = vmatpush1.msra.mxu0 0.0
    %1028 = vmatprep.subr.mxu0 0.0
    %1029 = vmatpush1.msra.mxu0 0.0
    %1030 = vmatprep.subr.mxu0 0.0
    %1031 = vmatpush1.msra.mxu0 0.0
    %1032 = vmatprep.subr.mxu0 0.0
    %1033 = vmatpush1.msra.mxu0 0.0
    %1034 = vmatprep.subr.mxu0 0.0
    %1035 = vmatpush1.msra.mxu0 0.0
    %1036 = vmatprep.subr.mxu0 0.0
    %1037 = vmatpush1.msra.mxu0 0.0
    %1038 = vmatprep.subr.mxu0 0.0
    %1039 = vmatpush1.msra.mxu0 0.0
    %1040 = vmatprep.subr.mxu0 0.0
    %1041 = vmatpush1.msra.mxu0 0.0
    %1042 = vmatprep.subr.mxu0 0.0
    %1043 = vmatpush1.msra.mxu0 0.0
    %1044 = vmatprep.subr.mxu0 0.0
    %1045 = vmatpush1.msra.mxu0 0.0
    %1046 = vmatprep.subr.mxu0 0.0
    %1047 = vmatpush1.msra.mxu0 0.0
    %1048 = vmatprep.subr.mxu0 0.0
    %1049 = vmatpush1.msra.mxu0 %v601
    %1050 = vmatprep.subr.mxu0 0.0
    %1051 = vmatpush1.msra.mxu0 %v600
    %1052 = vmatprep.subr.mxu0 0.0
    %1053 = vmatpush1.msra.mxu0 %v599
    %1054 = vmatprep.subr.mxu0 0.0
    %1055 = vmatpush1.msra.mxu0 %v598
    %1056 = vmatprep.subr.mxu0 0.0
    %1057 = vmatpush2.msra.mxu0 0.0
    %1058 = vmatprep.subr.mxu0 0.0
    %1059 = vmatpush2.msra.mxu0 0.0
    %1060 = vmatprep.subr.mxu0 0.0
    %1061 = vmatpush2.msra.mxu0 0.0
    %1062 = vmatprep.subr.mxu0 0.0
    %1063 = vmatpush2.msra.mxu0 0.0
    %1064 = vmatprep.subr.mxu0 0.0
    %1065 = vmatpush2.msra.mxu0 0.0
    %1066 = vmatprep.subr.mxu0 0.0
    %1067 = vmatpush2.msra.mxu0 0.0
    %1068 = vmatprep.subr.mxu0 0.0
    %1069 = vmatpush2.msra.mxu0 0.0
    %1070 = vmatprep.subr.mxu0 0.0
    %1071 = vmatpush2.msra.mxu0 0.0
    %1072 = vmatprep.subr.mxu0 0.0
    %1073 = vmatpush2.msra.mxu0 0.0
    %1074 = vmatprep.subr.mxu0 0.0
    %1075 = vmatpush2.msra.mxu0 0.0
    %1076 = vmatprep.subr.mxu0 0.0
    %1077 = vmatpush2.msra.mxu0 0.0
    %1078 = vmatprep.subr.mxu0 0.0
    %1079 = vmatpush2.msra.mxu0 0.0
    %1080 = vmatprep.subr.mxu0 0.0
    %1081 = vmatpush2.msra.mxu0 0.0
    %1082 = vmatprep.subr.mxu0 0.0
    %1083 = vmatpush2.msra.mxu0 0.0
    %1084 = vmatprep.subr.mxu0 0.0
    %1085 = vmatpush2.msra.mxu0 0.0
    %1086 = vmatprep.subr.mxu0 0.0
    %1087 = vmatpush2.msra.mxu0 0.0
    %1088 = vmatprep.mubr.f32.mxu0 0.0
    %1089 = vmatmul.mubr.f32.gmra.mxu0 %v951
    %v1090 = vpop.f32.mrf.mxu0
    %v1091 = vadd.f32 0.0, %v1090
    %v1092 = vpop.f32.mrf.mxu0
    %1093 = vdwg.mxu0
    %1095 = vrot.lane.b32.xlu0 %v1091, 32
    %v1096 = vpop.permute.xlu0 %1095
    %v1098 = vadd.f32 %v520, %v1096
    %1099 = vmatprep.subr.mxu0 0.0
    %1100 = vmatpush1.msra.mxu0 0.0
    %1101 = vmatprep.subr.mxu0 0.0
    %1102 = vmatpush1.msra.mxu0 0.0
    %1103 = vmatprep.subr.mxu0 0.0
    %1104 = vmatpush1.msra.mxu0 0.0
    %1105 = vmatprep.subr.mxu0 0.0
    %1106 = vmatpush1.msra.mxu0 0.0
    %1107 = vmatprep.subr.mxu0 0.0
    %1108 = vmatpush1.msra.mxu0 0.0
    %1109 = vmatprep.subr.mxu0 0.0
    %1110 = vmatpush1.msra.mxu0 0.0
    %1111 = vmatprep.subr.mxu0 0.0
    %1112 = vmatpush1.msra.mxu0 0.0
    %1113 = vmatprep.subr.mxu0 0.0
    %1114 = vmatpush1.msra.mxu0 0.0
    %1115 = vmatprep.subr.mxu0 0.0
    %1116 = vmatpush1.msra.mxu0 0.0
    %1117 = vmatprep.subr.mxu0 0.0
    %1118 = vmatpush1.msra.mxu0 0.0
    %1119 = vmatprep.subr.mxu0 0.0
    %1120 = vmatpush1.msra.mxu0 0.0
    %1121 = vmatprep.subr.mxu0 0.0
    %1122 = vmatpush1.msra.mxu0 0.0
    %1123 = vmatprep.subr.mxu0 0.0
    %1124 = vmatpush1.msra.mxu0 %v606
    %1125 = vmatprep.subr.mxu0 0.0
    %1126 = vmatpush1.msra.mxu0 %v605
    %1127 = vmatprep.subr.mxu0 0.0
    %1128 = vmatpush1.msra.mxu0 %v604
    %1129 = vmatprep.subr.mxu0 0.0
    %1130 = vmatpush1.msra.mxu0 %v603
    %1131 = vmatprep.subr.mxu0 0.0
    %1132 = vmatpush2.msra.mxu0 0.0
    %1133 = vmatprep.subr.mxu0 0.0
    %1134 = vmatpush2.msra.mxu0 0.0
    %1135 = vmatprep.subr.mxu0 0.0
    %1136 = vmatpush2.msra.mxu0 0.0
    %1137 = vmatprep.subr.mxu0 0.0
    %1138 = vmatpush2.msra.mxu0 0.0
    %1139 = vmatprep.subr.mxu0 0.0
    %1140 = vmatpush2.msra.mxu0 0.0
    %1141 = vmatprep.subr.mxu0 0.0
    %1142 = vmatpush2.msra.mxu0 0.0
    %1143 = vmatprep.subr.mxu0 0.0
    %1144 = vmatpush2.msra.mxu0 0.0
    %1145 = vmatprep.subr.mxu0 0.0
    %1146 = vmatpush2.msra.mxu0 0.0
    %1147 = vmatprep.subr.mxu0 0.0
    %1148 = vmatpush2.msra.mxu0 0.0
    %1149 = vmatprep.subr.mxu0 0.0
    %1150 = vmatpush2.msra.mxu0 0.0
    %1151 = vmatprep.subr.mxu0 0.0
    %1152 = vmatpush2.msra.mxu0 0.0
    %1153 = vmatprep.subr.mxu0 0.0
    %1154 = vmatpush2.msra.mxu0 0.0
    %1155 = vmatprep.subr.mxu0 0.0
    %1156 = vmatpush2.msra.mxu0 0.0
    %1157 = vmatprep.subr.mxu0 0.0
    %1158 = vmatpush2.msra.mxu0 0.0
    %1159 = vmatprep.subr.mxu0 0.0
    %1160 = vmatpush2.msra.mxu0 0.0
    %1161 = vmatprep.subr.mxu0 0.0
    %1162 = vmatpush2.msra.mxu0 0.0
    %1163 = vmatprep.mubr.f32.mxu0 0.0
    %1164 = vmatmul.mubr.f32.gmra.mxu0 %v951
    %v1165 = vpop.f32.mrf.mxu0
    %v1166 = vadd.f32 0.0, %v1165
    %v1167 = vpop.f32.mrf.mxu0
    %1168 = vdwg.mxu0
    %1170 = vrot.lane.b32.xlu0 %v1166, 64
    %v1171 = vpop.permute.xlu0 %1170
    %v1173 = vadd.f32 %v520, %v1171
    %1174 = vmatprep.subr.mxu0 0.0
    %1175 = vmatpush1.msra.mxu0 0.0
    %1176 = vmatprep.subr.mxu0 0.0
    %1177 = vmatpush1.msra.mxu0 0.0
    %1178 = vmatprep.subr.mxu0 0.0
    %1179 = vmatpush1.msra.mxu0 0.0
    %1180 = vmatprep.subr.mxu0 0.0
    %1181 = vmatpush1.msra.mxu0 0.0
    %1182 = vmatprep.subr.mxu0 0.0
    %1183 = vmatpush1.msra.mxu0 0.0
    %1184 = vmatprep.subr.mxu0 0.0
    %1185 = vmatpush1.msra.mxu0 0.0
    %1186 = vmatprep.subr.mxu0 0.0
    %1187 = vmatpush1.msra.mxu0 0.0
    %1188 = vmatprep.subr.mxu0 0.0
    %1189 = vmatpush1.msra.mxu0 0.0
    %1190 = vmatprep.subr.mxu0 0.0
    %1191 = vmatpush1.msra.mxu0 0.0
    %1192 = vmatprep.subr.mxu0 0.0
    %1193 = vmatpush1.msra.mxu0 0.0
    %1194 = vmatprep.subr.mxu0 0.0
    %1195 = vmatpush1.msra.mxu0 0.0
    %1196 = vmatprep.subr.mxu0 0.0
    %1197 = vmatpush1.msra.mxu0 0.0
    %1198 = vmatprep.subr.mxu0 0.0
    %1199 = vmatpush1.msra.mxu0 %v611
    %1200 = vmatprep.subr.mxu0 0.0
    %1201 = vmatpush1.msra.mxu0 %v610
    %1202 = vmatprep.subr.mxu0 0.0
    %1203 = vmatpush1.msra.mxu0 %v609
    %1204 = vmatprep.subr.mxu0 0.0
    %1205 = vmatpush1.msra.mxu0 %v608
    %1206 = vmatprep.subr.mxu0 0.0
    %1207 = vmatpush2.msra.mxu0 0.0
    %1208 = vmatprep.subr.mxu0 0.0
    %1209 = vmatpush2.msra.mxu0 0.0
    %1210 = vmatprep.subr.mxu0 0.0
    %1211 = vmatpush2.msra.mxu0 0.0
    %1212 = vmatprep.subr.mxu0 0.0
    %1213 = vmatpush2.msra.mxu0 0.0
    %1214 = vmatprep.subr.mxu0 0.0
    %1215 = vmatpush2.msra.mxu0 0.0
    %1216 = vmatprep.subr.mxu0 0.0
    %1217 = vmatpush2.msra.mxu0 0.0
    %1218 = vmatprep.subr.mxu0 0.0
    %1219 = vmatpush2.msra.mxu0 0.0
    %1220 = vmatprep.subr.mxu0 0.0
    %1221 = vmatpush2.msra.mxu0 0.0
    %1222 = vmatprep.subr.mxu0 0.0
    %1223 = vmatpush2.msra.mxu0 0.0
    %1224 = vmatprep.subr.mxu0 0.0
    %1225 = vmatpush2.msra.mxu0 0.0
    %1226 = vmatprep.subr.mxu0 0.0
    %1227 = vmatpush2.msra.mxu0 0.0
    %1228 = vmatprep.subr.mxu0 0.0
    %1229 = vmatpush2.msra.mxu0 0.0
    %1230 = vmatprep.subr.mxu0 0.0
    %1231 = vmatpush2.msra.mxu0 0.0
    %1232 = vmatprep.subr.mxu0 0.0
    %1233 = vmatpush2.msra.mxu0 0.0
    %1234 = vmatprep.subr.mxu0 0.0
    %1235 = vmatpush2.msra.mxu0 0.0
    %1236 = vmatprep.subr.mxu0 0.0
    %1237 = vmatpush2.msra.mxu0 0.0
    %1238 = vmatprep.mubr.f32.mxu0 0.0
    %1239 = vmatmul.mubr.f32.gmra.mxu0 %v951
    %v1240 = vpop.f32.mrf.mxu0
    %v1241 = vadd.f32 0.0, %v1240
    %v1242 = vpop.f32.mrf.mxu0
    %1243 = vdwg.mxu0
    %1245 = vrot.lane.b32.xlu0 %v1241, 96
    %v1246 = vpop.permute.xlu0 %1245
    %v1248 = vadd.f32 %v520, %v1246
    %v1249 = vxor.u32 %v1023, 2147483648
    %v1250 = vmul.f32 %v1249, 1.442695
    %v1251 = vpow.pop %v1250
    %v1252 = vadd.f32 %v1251, 1.0
    %v1253 = vrcp.pop %v1252
    %v1254 = vmul.f32 1.0, %v1253
    %v1255 = vxor.u32 %v1098, 2147483648
    %v1256 = vmul.f32 %v1255, 1.442695
    %v1257 = vpow.pop %v1256
    %v1258 = vadd.f32 %v1257, 1.0
    %v1259 = vrcp.pop %v1258
    %v1260 = vmul.f32 1.0, %v1259
    %v1261 = vtanh.pop %v1173
    %v1262 = vxor.u32 %v1248, 2147483648
    %v1263 = vmul.f32 %v1262, 1.442695
    %v1264 = vpow.pop %v1263
    %v1265 = vadd.f32 %v1264, 1.0
    %v1266 = vrcp.pop %v1265
    %v1267 = vmul.f32 1.0, %v1266
    %v1268 = vmul.f32 %v1260, %v941
    %1270 = vrot.lane.b32.xlu0 %v1261, 64
    %v1271 = vpop.permute.xlu0 %1270
    %v1273 = vmul.f32 %v1254, %v1271
    %1275 = vrot.lane.b32.xlu0 %v1273, 32
    %v1276 = vpop.permute.xlu0 %1275
    %v1278 = vadd.f32 %v1268, %v1276
    %v1279 = vtanh.pop %v1278
    %1281 = vrot.lane.b32.xlu0 %v1279, 64
    %v1282 = vpop.permute.xlu0 %1281
    %v1284 = vmul.f32 %v1267, %v1282
    %1286 = vrot.lane.b32.xlu0 %v1284, 32
    %v1287 = vpop.permute.xlu0 %1286
    %v1288 = vsel %vm612, %v1287, 0
    %1290 = vmatprep.subr.mxu0 0.0
    %1291 = vmatpush1.msra.mxu0 0.0
    %1292 = vmatprep.subr.mxu0 0.0
    %1293 = vmatpush1.msra.mxu0 0.0
    %1294 = vmatprep.subr.mxu0 0.0
    %1295 = vmatpush1.msra.mxu0 0.0
    %1296 = vmatprep.subr.mxu0 0.0
    %1297 = vmatpush1.msra.mxu0 0.0
    %1298 = vmatprep.subr.mxu0 0.0
    %1299 = vmatpush1.msra.mxu0 0.0
    %1300 = vmatprep.subr.mxu0 0.0
    %1301 = vmatpush1.msra.mxu0 0.0
    %1302 = vmatprep.subr.mxu0 0.0
    %1303 = vmatpush1.msra.mxu0 0.0
    %1304 = vmatprep.subr.mxu0 0.0
    %1305 = vmatpush1.msra.mxu0 0.0
    %1306 = vmatprep.subr.mxu0 0.0
    %1307 = vmatpush1.msra.mxu0 0.0
    %1308 = vmatprep.subr.mxu0 0.0
    %1309 = vmatpush1.msra.mxu0 0.0
    %1310 = vmatprep.subr.mxu0 0.0
    %1311 = vmatpush1.msra.mxu0 0.0
    %1312 = vmatprep.subr.mxu0 0.0
    %1313 = vmatpush1.msra.mxu0 0.0
    %1314 = vmatprep.subr.mxu0 0.0
    %1315 = vmatpush1.msra.mxu0 %v596
    %1316 = vmatprep.subr.mxu0 0.0
    %1317 = vmatpush1.msra.mxu0 %v595
    %1318 = vmatprep.subr.mxu0 0.0
    %1319 = vmatpush1.msra.mxu0 %v594
    %1320 = vmatprep.subr.mxu0 0.0
    %1321 = vmatpush1.msra.mxu0 %v593
    %1322 = vmatprep.subr.mxu0 0.0
    %1323 = vmatpush2.msra.mxu0 0.0
    %1324 = vmatprep.subr.mxu0 0.0
    %1325 = vmatpush2.msra.mxu0 0.0
    %1326 = vmatprep.subr.mxu0 0.0
    %1327 = vmatpush2.msra.mxu0 0.0
    %1328 = vmatprep.subr.mxu0 0.0
    %1329 = vmatpush2.msra.mxu0 0.0
    %1330 = vmatprep.subr.mxu0 0.0
    %1331 = vmatpush2.msra.mxu0 0.0
    %1332 = vmatprep.subr.mxu0 0.0
    %1333 = vmatpush2.msra.mxu0 0.0
    %1334 = vmatprep.subr.mxu0 0.0
    %1335 = vmatpush2.msra.mxu0 0.0
    %1336 = vmatprep.subr.mxu0 0.0
    %1337 = vmatpush2.msra.mxu0 0.0
    %1338 = vmatprep.subr.mxu0 0.0
    %1339 = vmatpush2.msra.mxu0 0.0
    %1340 = vmatprep.subr.mxu0 0.0
    %1341 = vmatpush2.msra.mxu0 0.0
    %1342 = vmatprep.subr.mxu0 0.0
    %1343 = vmatpush2.msra.mxu0 0.0
    %1344 = vmatprep.subr.mxu0 0.0
    %1345 = vmatpush2.msra.mxu0 0.0
    %1346 = vmatprep.subr.mxu0 0.0
    %1347 = vmatpush2.msra.mxu0 0.0
    %1348 = vmatprep.subr.mxu0 0.0
    %1349 = vmatpush2.msra.mxu0 0.0
    %1350 = vmatprep.subr.mxu0 0.0
    %1351 = vmatpush2.msra.mxu0 0.0
    %1352 = vmatprep.subr.mxu0 0.0
    %1353 = vmatpush2.msra.mxu0 0.0
    %1354 = vmatprep.mubr.f32.mxu0 0.0
    %1355 = vmatmul.mubr.f32.gmra.mxu0 %v1288
    %v1356 = vpop.f32.mrf.mxu0
    %v1357 = vadd.f32 0.0, %v1356
    %v1358 = vpop.f32.mrf.mxu0
    %1359 = vdwg.mxu0
    %v1360 = vadd.f32 %v525, %v1357
    %1361 = vmatprep.subr.mxu0 0.0
    %1362 = vmatpush1.msra.mxu0 0.0
    %1363 = vmatprep.subr.mxu0 0.0
    %1364 = vmatpush1.msra.mxu0 0.0
    %1365 = vmatprep.subr.mxu0 0.0
    %1366 = vmatpush1.msra.mxu0 0.0
    %1367 = vmatprep.subr.mxu0 0.0
    %1368 = vmatpush1.msra.mxu0 0.0
    %1369 = vmatprep.subr.mxu0 0.0
    %1370 = vmatpush1.msra.mxu0 0.0
    %1371 = vmatprep.subr.mxu0 0.0
    %1372 = vmatpush1.msra.mxu0 0.0
    %1373 = vmatprep.subr.mxu0 0.0
    %1374 = vmatpush1.msra.mxu0 0.0
    %1375 = vmatprep.subr.mxu0 0.0
    %1376 = vmatpush1.msra.mxu0 0.0
    %1377 = vmatprep.subr.mxu0 0.0
    %1378 = vmatpush1.msra.mxu0 0.0
    %1379 = vmatprep.subr.mxu0 0.0
    %1380 = vmatpush1.msra.mxu0 0.0
    %1381 = vmatprep.subr.mxu0 0.0
    %1382 = vmatpush1.msra.mxu0 0.0
    %1383 = vmatprep.subr.mxu0 0.0
    %1384 = vmatpush1.msra.mxu0 0.0
    %1385 = vmatprep.subr.mxu0 0.0
    %1386 = vmatpush1.msra.mxu0 %v601
    %1387 = vmatprep.subr.mxu0 0.0
    %1388 = vmatpush1.msra.mxu0 %v600
    %1389 = vmatprep.subr.mxu0 0.0
    %1390 = vmatpush1.msra.mxu0 %v599
    %1391 = vmatprep.subr.mxu0 0.0
    %1392 = vmatpush1.msra.mxu0 %v598
    %1393 = vmatprep.subr.mxu0 0.0
    %1394 = vmatpush2.msra.mxu0 0.0
    %1395 = vmatprep.subr.mxu0 0.0
    %1396 = vmatpush2.msra.mxu0 0.0
    %1397 = vmatprep.subr.mxu0 0.0
    %1398 = vmatpush2.msra.mxu0 0.0
    %1399 = vmatprep.subr.mxu0 0.0
    %1400 = vmatpush2.msra.mxu0 0.0
    %1401 = vmatprep.subr.mxu0 0.0
    %1402 = vmatpush2.msra.mxu0 0.0
    %1403 = vmatprep.subr.mxu0 0.0
    %1404 = vmatpush2.msra.mxu0 0.0
    %1405 = vmatprep.subr.mxu0 0.0
    %1406 = vmatpush2.msra.mxu0 0.0
    %1407 = vmatprep.subr.mxu0 0.0
    %1408 = vmatpush2.msra.mxu0 0.0
    %1409 = vmatprep.subr.mxu0 0.0
    %1410 = vmatpush2.msra.mxu0 0.0
    %1411 = vmatprep.subr.mxu0 0.0
    %1412 = vmatpush2.msra.mxu0 0.0
    %1413 = vmatprep.subr.mxu0 0.0
    %1414 = vmatpush2.msra.mxu0 0.0
    %1415 = vmatprep.subr.mxu0 0.0
    %1416 = vmatpush2.msra.mxu0 0.0
    %1417 = vmatprep.subr.mxu0 0.0
    %1418 = vmatpush2.msra.mxu0 0.0
    %1419 = vmatprep.subr.mxu0 0.0
    %1420 = vmatpush2.msra.mxu0 0.0
    %1421 = vmatprep.subr.mxu0 0.0
    %1422 = vmatpush2.msra.mxu0 0.0
    %1423 = vmatprep.subr.mxu0 0.0
    %1424 = vmatpush2.msra.mxu0 0.0
    %1425 = vmatprep.mubr.f32.mxu0 0.0
    %1426 = vmatmul.mubr.f32.gmra.mxu0 %v1288
    %v1427 = vpop.f32.mrf.mxu0
    %v1428 = vadd.f32 0.0, %v1427
    %v1429 = vpop.f32.mrf.mxu0
    %1430 = vdwg.mxu0
    %1432 = vrot.lane.b32.xlu0 %v1428, 32
    %v1433 = vpop.permute.xlu0 %1432
    %v1435 = vadd.f32 %v525, %v1433
    %1436 = vmatprep.subr.mxu0 0.0
    %1437 = vmatpush1.msra.mxu0 0.0
    %1438 = vmatprep.subr.mxu0 0.0
    %1439 = vmatpush1.msra.mxu0 0.0
    %1440 = vmatprep.subr.mxu0 0.0
    %1441 = vmatpush1.msra.mxu0 0.0
    %1442 = vmatprep.subr.mxu0 0.0
    %1443 = vmatpush1.msra.mxu0 0.0
    %1444 = vmatprep.subr.mxu0 0.0
    %1445 = vmatpush1.msra.mxu0 0.0
    %1446 = vmatprep.subr.mxu0 0.0
    %1447 = vmatpush1.msra.mxu0 0.0
    %1448 = vmatprep.subr.mxu0 0.0
    %1449 = vmatpush1.msra.mxu0 0.0
    %1450 = vmatprep.subr.mxu0 0.0
    %1451 = vmatpush1.msra.mxu0 0.0
    %1452 = vmatprep.subr.mxu0 0.0
    %1453 = vmatpush1.msra.mxu0 0.0
    %1454 = vmatprep.subr.mxu0 0.0
    %1455 = vmatpush1.msra.mxu0 0.0
    %1456 = vmatprep.subr.mxu0 0.0
    %1457 = vmatpush1.msra.mxu0 0.0
    %1458 = vmatprep.subr.mxu0 0.0
    %1459 = vmatpush1.msra.mxu0 0.0
    %1460 = vmatprep.subr.mxu0 0.0
    %1461 = vmatpush1.msra.mxu0 %v606
    %1462 = vmatprep.subr.mxu0 0.0
    %1463 = vmatpush1.msra.mxu0 %v605
    %1464 = vmatprep.subr.mxu0 0.0
    %1465 = vmatpush1.msra.mxu0 %v604
    %1466 = vmatprep.subr.mxu0 0.0
    %1467 = vmatpush1.msra.mxu0 %v603
    %1468 = vmatprep.subr.mxu0 0.0
    %1469 = vmatpush2.msra.mxu0 0.0
    %1470 = vmatprep.subr.mxu0 0.0
    %1471 = vmatpush2.msra.mxu0 0.0
    %1472 = vmatprep.subr.mxu0 0.0
    %1473 = vmatpush2.msra.mxu0 0.0
    %1474 = vmatprep.subr.mxu0 0.0
    %1475 = vmatpush2.msra.mxu0 0.0
    %1476 = vmatprep.subr.mxu0 0.0
    %1477 = vmatpush2.msra.mxu0 0.0
    %1478 = vmatprep.subr.mxu0 0.0
    %1479 = vmatpush2.msra.mxu0 0.0
    %1480 = vmatprep.subr.mxu0 0.0
    %1481 = vmatpush2.msra.mxu0 0.0
    %1482 = vmatprep.subr.mxu0 0.0
    %1483 = vmatpush2.msra.mxu0 0.0
    %1484 = vmatprep.subr.mxu0 0.0
    %1485 = vmatpush2.msra.mxu0 0.0
    %1486 = vmatprep.subr.mxu0 0.0
    %1487 = vmatpush2.msra.mxu0 0.0
    %1488 = vmatprep.subr.mxu0 0.0
    %1489 = vmatpush2.msra.mxu0 0.0
    %1490 = vmatprep.subr.mxu0 0.0
    %1491 = vmatpush2.msra.mxu0 0.0
    %1492 = vmatprep.subr.mxu0 0.0
    %1493 = vmatpush2.msra.mxu0 0.0
    %1494 = vmatprep.subr.mxu0 0.0
    %1495 = vmatpush2.msra.mxu0 0.0
    %1496 = vmatprep.subr.mxu0 0.0
    %1497 = vmatpush2.msra.mxu0 0.0
    %1498 = vmatprep.subr.mxu0 0.0
    %1499 = vmatpush2.msra.mxu0 0.0
    %1500 = vmatprep.mubr.f32.mxu0 0.0
    %1501 = vmatmul.mubr.f32.gmra.mxu0 %v1288
    %v1502 = vpop.f32.mrf.mxu0
    %v1503 = vadd.f32 0.0, %v1502
    %v1504 = vpop.f32.mrf.mxu0
    %1505 = vdwg.mxu0
    %1507 = vrot.lane.b32.xlu0 %v1503, 64
    %v1508 = vpop.permute.xlu0 %1507
    %v1510 = vadd.f32 %v525, %v1508
    %1511 = vmatprep.subr.mxu0 0.0
    %1512 = vmatpush1.msra.mxu0 0.0
    %1513 = vmatprep.subr.mxu0 0.0
    %1514 = vmatpush1.msra.mxu0 0.0
    %1515 = vmatprep.subr.mxu0 0.0
    %1516 = vmatpush1.msra.mxu0 0.0
    %1517 = vmatprep.subr.mxu0 0.0
    %1518 = vmatpush1.msra.mxu0 0.0
    %1519 = vmatprep.subr.mxu0 0.0
    %1520 = vmatpush1.msra.mxu0 0.0
    %1521 = vmatprep.subr.mxu0 0.0
    %1522 = vmatpush1.msra.mxu0 0.0
    %1523 = vmatprep.subr.mxu0 0.0
    %1524 = vmatpush1.msra.mxu0 0.0
    %1525 = vmatprep.subr.mxu0 0.0
    %1526 = vmatpush1.msra.mxu0 0.0
    %1527 = vmatprep.subr.mxu0 0.0
    %1528 = vmatpush1.msra.mxu0 0.0
    %1529 = vmatprep.subr.mxu0 0.0
    %1530 = vmatpush1.msra.mxu0 0.0
    %1531 = vmatprep.subr.mxu0 0.0
    %1532 = vmatpush1.msra.mxu0 0.0
    %1533 = vmatprep.subr.mxu0 0.0
    %1534 = vmatpush1.msra.mxu0 0.0
    %1535 = vmatprep.subr.mxu0 0.0
    %1536 = vmatpush1.msra.mxu0 %v611
    %1537 = vmatprep.subr.mxu0 0.0
    %1538 = vmatpush1.msra.mxu0 %v610
    %1539 = vmatprep.subr.mxu0 0.0
    %1540 = vmatpush1.msra.mxu0 %v609
    %1541 = vmatprep.subr.mxu0 0.0
    %1542 = vmatpush1.msra.mxu0 %v608
    %1543 = vmatprep.subr.mxu0 0.0
    %1544 = vmatpush2.msra.mxu0 0.0
    %1545 = vmatprep.subr.mxu0 0.0
    %1546 = vmatpush2.msra.mxu0 0.0
    %1547 = vmatprep.subr.mxu0 0.0
    %1548 = vmatpush2.msra.mxu0 0.0
    %1549 = vmatprep.subr.mxu0 0.0
    %1550 = vmatpush2.msra.mxu0 0.0
    %1551 = vmatprep.subr.mxu0 0.0
    %1552 = vmatpush2.msra.mxu0 0.0
    %1553 = vmatprep.subr.mxu0 0.0
    %1554 = vmatpush2.msra.mxu0 0.0
    %1555 = vmatprep.subr.mxu0 0.0
    %1556 = vmatpush2.msra.mxu0 0.0
    %1557 = vmatprep.subr.mxu0 0.0
    %1558 = vmatpush2.msra.mxu0 0.0
    %1559 = vmatprep.subr.mxu0 0.0
    %1560 = vmatpush2.msra.mxu0 0.0
    %1561 = vmatprep.subr.mxu0 0.0
    %1562 = vmatpush2.msra.mxu0 0.0
    %1563 = vmatprep.subr.mxu0 0.0
    %1564 = vmatpush2.msra.mxu0 0.0
    %1565 = vmatprep.subr.mxu0 0.0
    %1566 = vmatpush2.msra.mxu0 0.0
    %1567 = vmatprep.subr.mxu0 0.0
    %1568 = vmatpush2.msra.mxu0 0.0
    %1569 = vmatprep.subr.mxu0 0.0
    %1570 = vmatpush2.msra.mxu0 0.0
    %1571 = vmatprep.subr.mxu0 0.0
    %1572 = vmatpush2.msra.mxu0 0.0
    %1573 = vmatprep.subr.mxu0 0.0
    %1574 = vmatpush2.msra.mxu0 0.0
    %1575 = vmatprep.mubr.f32.mxu0 0.0
    %1576 = vmatmul.mubr.f32.gmra.mxu0 %v1288
    %v1577 = vpop.f32.mrf.mxu0
    %v1578 = vadd.f32 0.0, %v1577
    %v1579 = vpop.f32.mrf.mxu0
    %1580 = vdwg.mxu0
    %1582 = vrot.lane.b32.xlu0 %v1578, 96
    %v1583 = vpop.permute.xlu0 %1582
    %v1585 = vadd.f32 %v525, %v1583
    %v1586 = vxor.u32 %v1360, 2147483648
    %v1587 = vmul.f32 %v1586, 1.442695
    %v1588 = vpow.pop %v1587
    %v1589 = vadd.f32 %v1588, 1.0
    %v1590 = vrcp.pop %v1589
    %v1591 = vmul.f32 1.0, %v1590
    %v1592 = vxor.u32 %v1435, 2147483648
    %v1593 = vmul.f32 %v1592, 1.442695
    %v1594 = vpow.pop %v1593
    %v1595 = vadd.f32 %v1594, 1.0
    %v1596 = vrcp.pop %v1595
    %v1597 = vmul.f32 1.0, %v1596
    %v1598 = vtanh.pop %v1510
    %v1599 = vxor.u32 %v1585, 2147483648
    %v1600 = vmul.f32 %v1599, 1.442695
    %v1601 = vpow.pop %v1600
    %v1602 = vadd.f32 %v1601, 1.0
    %v1603 = vrcp.pop %v1602
    %v1604 = vmul.f32 1.0, %v1603
    %v1605 = vmul.f32 %v1597, %v1278
    %1607 = vrot.lane.b32.xlu0 %v1598, 64
    %v1608 = vpop.permute.xlu0 %1607
    %v1610 = vmul.f32 %v1591, %v1608
    %1612 = vrot.lane.b32.xlu0 %v1610, 32
    %v1613 = vpop.permute.xlu0 %1612
    %v1615 = vadd.f32 %v1605, %v1613
    %v1616 = vtanh.pop %v1615
    %1618 = vrot.lane.b32.xlu0 %v1616, 64
    %v1619 = vpop.permute.xlu0 %1618
    %v1621 = vmul.f32 %v1604, %v1619
    %1623 = vrot.lane.b32.xlu0 %v1621, 32
    %v1624 = vpop.permute.xlu0 %1623
    %v1625 = vsel %vm612, %v1624, 0
    %1627 = vmatprep.subr.mxu0 0.0
    %1628 = vmatpush1.msra.mxu0 0.0
    %1629 = vmatprep.subr.mxu0 0.0
    %1630 = vmatpush1.msra.mxu0 0.0
    %1631 = vmatprep.subr.mxu0 0.0
    %1632 = vmatpush1.msra.mxu0 0.0
    %1633 = vmatprep.subr.mxu0 0.0
    %1634 = vmatpush1.msra.mxu0 0.0
    %1635 = vmatprep.subr.mxu0 0.0
    %1636 = vmatpush1.msra.mxu0 0.0
    %1637 = vmatprep.subr.mxu0 0.0
    %1638 = vmatpush1.msra.mxu0 0.0
    %1639 = vmatprep.subr.mxu0 0.0
    %1640 = vmatpush1.msra.mxu0 0.0
    %1641 = vmatprep.subr.mxu0 0.0
    %1642 = vmatpush1.msra.mxu0 0.0
    %1643 = vmatprep.subr.mxu0 0.0
    %1644 = vmatpush1.msra.mxu0 0.0
    %1645 = vmatprep.subr.mxu0 0.0
    %1646 = vmatpush1.msra.mxu0 0.0
    %1647 = vmatprep.subr.mxu0 0.0
    %1648 = vmatpush1.msra.mxu0 0.0
    %1649 = vmatprep.subr.mxu0 0.0
    %1650 = vmatpush1.msra.mxu0 0.0
    %1651 = vmatprep.subr.mxu0 0.0
    %1652 = vmatpush1.msra.mxu0 %v596
    %1653 = vmatprep.subr.mxu0 0.0
    %1654 = vmatpush1.msra.mxu0 %v595
    %1655 = vmatprep.subr.mxu0 0.0
    %1656 = vmatpush1.msra.mxu0 %v594
    %1657 = vmatprep.subr.mxu0 0.0
    %1658 = vmatpush1.msra.mxu0 %v593
    %1659 = vmatprep.subr.mxu0 0.0
    %1660 = vmatpush2.msra.mxu0 0.0
    %1661 = vmatprep.subr.mxu0 0.0
    %1662 = vmatpush2.msra.mxu0 0.0
    %1663 = vmatprep.subr.mxu0 0.0
    %1664 = vmatpush2.msra.mxu0 0.0
    %1665 = vmatprep.subr.mxu0 0.0
    %1666 = vmatpush2.msra.mxu0 0.0
    %1667 = vmatprep.subr.mxu0 0.0
    %1668 = vmatpush2.msra.mxu0 0.0
    %1669 = vmatprep.subr.mxu0 0.0
    %1670 = vmatpush2.msra.mxu0 0.0
    %1671 = vmatprep.subr.mxu0 0.0
    %1672 = vmatpush2.msra.mxu0 0.0
    %1673 = vmatprep.subr.mxu0 0.0
    %1674 = vmatpush2.msra.mxu0 0.0
    %1675 = vmatprep.subr.mxu0 0.0
    %1676 = vmatpush2.msra.mxu0 0.0
    %1677 = vmatprep.subr.mxu0 0.0
    %1678 = vmatpush2.msra.mxu0 0.0
    %1679 = vmatprep.subr.mxu0 0.0
    %1680 = vmatpush2.msra.mxu0 0.0
    %1681 = vmatprep.subr.mxu0 0.0
    %1682 = vmatpush2.msra.mxu0 0.0
    %1683 = vmatprep.subr.mxu0 0.0
    %1684 = vmatpush2.msra.mxu0 0.0
    %1685 = vmatprep.subr.mxu0 0.0
    %1686 = vmatpush2.msra.mxu0 0.0
    %1687 = vmatprep.subr.mxu0 0.0
    %1688 = vmatpush2.msra.mxu0 0.0
    %1689 = vmatprep.subr.mxu0 0.0
    %1690 = vmatpush2.msra.mxu0 0.0
    %1691 = vmatprep.mubr.f32.mxu0 0.0
    %1692 = vmatmul.mubr.f32.gmra.mxu0 %v1625
    %v1693 = vpop.f32.mrf.mxu0
    %v1694 = vadd.f32 0.0, %v1693
    %v1695 = vpop.f32.mrf.mxu0
    %1696 = vdwg.mxu0
    %v1697 = vadd.f32 %v530, %v1694
    %1698 = vmatprep.subr.mxu0 0.0
    %1699 = vmatpush1.msra.mxu0 0.0
    %1700 = vmatprep.subr.mxu0 0.0
    %1701 = vmatpush1.msra.mxu0 0.0
    %1702 = vmatprep.subr.mxu0 0.0
    %1703 = vmatpush1.msra.mxu0 0.0
    %1704 = vmatprep.subr.mxu0 0.0
    %1705 = vmatpush1.msra.mxu0 0.0
    %1706 = vmatprep.subr.mxu0 0.0
    %1707 = vmatpush1.msra.mxu0 0.0
    %1708 = vmatprep.subr.mxu0 0.0
    %1709 = vmatpush1.msra.mxu0 0.0
    %1710 = vmatprep.subr.mxu0 0.0
    %1711 = vmatpush1.msra.mxu0 0.0
    %1712 = vmatprep.subr.mxu0 0.0
    %1713 = vmatpush1.msra.mxu0 0.0
    %1714 = vmatprep.subr.mxu0 0.0
    %1715 = vmatpush1.msra.mxu0 0.0
    %1716 = vmatprep.subr.mxu0 0.0
    %1717 = vmatpush1.msra.mxu0 0.0
    %1718 = vmatprep.subr.mxu0 0.0
    %1719 = vmatpush1.msra.mxu0 0.0
    %1720 = vmatprep.subr.mxu0 0.0
    %1721 = vmatpush1.msra.mxu0 0.0
    %1722 = vmatprep.subr.mxu0 0.0
    %1723 = vmatpush1.msra.mxu0 %v601
    %1724 = vmatprep.subr.mxu0 0.0
    %1725 = vmatpush1.msra.mxu0 %v600
    %1726 = vmatprep.subr.mxu0 0.0
    %1727 = vmatpush1.msra.mxu0 %v599
    %1728 = vmatprep.subr.mxu0 0.0
    %1729 = vmatpush1.msra.mxu0 %v598
    %1730 = vmatprep.subr.mxu0 0.0
    %1731 = vmatpush2.msra.mxu0 0.0
    %1732 = vmatprep.subr.mxu0 0.0
    %1733 = vmatpush2.msra.mxu0 0.0
    %1734 = vmatprep.subr.mxu0 0.0
    %1735 = vmatpush2.msra.mxu0 0.0
    %1736 = vmatprep.subr.mxu0 0.0
    %1737 = vmatpush2.msra.mxu0 0.0
    %1738 = vmatprep.subr.mxu0 0.0
    %1739 = vmatpush2.msra.mxu0 0.0
    %1740 = vmatprep.subr.mxu0 0.0
    %1741 = vmatpush2.msra.mxu0 0.0
    %1742 = vmatprep.subr.mxu0 0.0
    %1743 = vmatpush2.msra.mxu0 0.0
    %1744 = vmatprep.subr.mxu0 0.0
    %1745 = vmatpush2.msra.mxu0 0.0
    %1746 = vmatprep.subr.mxu0 0.0
    %1747 = vmatpush2.msra.mxu0 0.0
    %1748 = vmatprep.subr.mxu0 0.0
    %1749 = vmatpush2.msra.mxu0 0.0
    %1750 = vmatprep.subr.mxu0 0.0
    %1751 = vmatpush2.msra.mxu0 0.0
    %1752 = vmatprep.subr.mxu0 0.0
    %1753 = vmatpush2.msra.mxu0 0.0
    %1754 = vmatprep.subr.mxu0 0.0
    %1755 = vmatpush2.msra.mxu0 0.0
    %1756 = vmatprep.subr.mxu0 0.0
    %1757 = vmatpush2.msra.mxu0 0.0
    %1758 = vmatprep.subr.mxu0 0.0
    %1759 = vmatpush2.msra.mxu0 0.0
    %1760 = vmatprep.subr.mxu0 0.0
    %1761 = vmatpush2.msra.mxu0 0.0
    %1762 = vmatprep.mubr.f32.mxu0 0.0
    %1763 = vmatmul.mubr.f32.gmra.mxu0 %v1625
    %v1764 = vpop.f32.mrf.mxu0
    %v1765 = vadd.f32 0.0, %v1764
    %v1766 = vpop.f32.mrf.mxu0
    %1767 = vdwg.mxu0
    %1769 = vrot.lane.b32.xlu0 %v1765, 32
    %v1770 = vpop.permute.xlu0 %1769
    %v1772 = vadd.f32 %v530, %v1770
    %1773 = vmatprep.subr.mxu0 0.0
    %1774 = vmatpush1.msra.mxu0 0.0
    %1775 = vmatprep.subr.mxu0 0.0
    %1776 = vmatpush1.msra.mxu0 0.0
    %1777 = vmatprep.subr.mxu0 0.0
    %1778 = vmatpush1.msra.mxu0 0.0
    %1779 = vmatprep.subr.mxu0 0.0
    %1780 = vmatpush1.msra.mxu0 0.0
    %1781 = vmatprep.subr.mxu0 0.0
    %1782 = vmatpush1.msra.mxu0 0.0
    %1783 = vmatprep.subr.mxu0 0.0
    %1784 = vmatpush1.msra.mxu0 0.0
    %1785 = vmatprep.subr.mxu0 0.0
    %1786 = vmatpush1.msra.mxu0 0.0
    %1787 = vmatprep.subr.mxu0 0.0
    %1788 = vmatpush1.msra.mxu0 0.0
    %1789 = vmatprep.subr.mxu0 0.0
    %1790 = vmatpush1.msra.mxu0 0.0
    %1791 = vmatprep.subr.mxu0 0.0
    %1792 = vmatpush1.msra.mxu0 0.0
    %1793 = vmatprep.subr.mxu0 0.0
    %1794 = vmatpush1.msra.mxu0 0.0
    %1795 = vmatprep.subr.mxu0 0.0
    %1796 = vmatpush1.msra.mxu0 0.0
    %1797 = vmatprep.subr.mxu0 0.0
    %1798 = vmatpush1.msra.mxu0 %v606
    %1799 = vmatprep.subr.mxu0 0.0
    %1800 = vmatpush1.msra.mxu0 %v605
    %1801 = vmatprep.subr.mxu0 0.0
    %1802 = vmatpush1.msra.mxu0 %v604
    %1803 = vmatprep.subr.mxu0 0.0
    %1804 = vmatpush1.msra.mxu0 %v603
    %1805 = vmatprep.subr.mxu0 0.0
    %1806 = vmatpush2.msra.mxu0 0.0
    %1807 = vmatprep.subr.mxu0 0.0
    %1808 = vmatpush2.msra.mxu0 0.0
    %1809 = vmatprep.subr.mxu0 0.0
    %1810 = vmatpush2.msra.mxu0 0.0
    %1811 = vmatprep.subr.mxu0 0.0
    %1812 = vmatpush2.msra.mxu0 0.0
    %1813 = vmatprep.subr.mxu0 0.0
    %1814 = vmatpush2.msra.mxu0 0.0
    %1815 = vmatprep.subr.mxu0 0.0
    %1816 = vmatpush2.msra.mxu0 0.0
    %1817 = vmatprep.subr.mxu0 0.0
    %1818 = vmatpush2.msra.mxu0 0.0
    %1819 = vmatprep.subr.mxu0 0.0
    %1820 = vmatpush2.msra.mxu0 0.0
    %1821 = vmatprep.subr.mxu0 0.0
    %1822 = vmatpush2.msra.mxu0 0.0
    %1823 = vmatprep.subr.mxu0 0.0
    %1824 = vmatpush2.msra.mxu0 0.0
    %1825 = vmatprep.subr.mxu0 0.0
    %1826 = vmatpush2.msra.mxu0 0.0
    %1827 = vmatprep.subr.mxu0 0.0
    %1828 = vmatpush2.msra.mxu0 0.0
    %1829 = vmatprep.subr.mxu0 0.0
    %1830 = vmatpush2.msra.mxu0 0.0
    %1831 = vmatprep.subr.mxu0 0.0
    %1832 = vmatpush2.msra.mxu0 0.0
    %1833 = vmatprep.subr.mxu0 0.0
    %1834 = vmatpush2.msra.mxu0 0.0
    %1835 = vmatprep.subr.mxu0 0.0
    %1836 = vmatpush2.msra.mxu0 0.0
    %1837 = vmatprep.mubr.f32.mxu0 0.0
    %1838 = vmatmul.mubr.f32.gmra.mxu0 %v1625
    %v1839 = vpop.f32.mrf.mxu0
    %v1840 = vadd.f32 0.0, %v1839
    %v1841 = vpop.f32.mrf.mxu0
    %1842 = vdwg.mxu0
    %1844 = vrot.lane.b32.xlu0 %v1840, 64
    %v1845 = vpop.permute.xlu0 %1844
    %v1847 = vadd.f32 %v530, %v1845
    %1848 = vmatprep.subr.mxu0 0.0
    %1849 = vmatpush1.msra.mxu0 0.0
    %1850 = vmatprep.subr.mxu0 0.0
    %1851 = vmatpush1.msra.mxu0 0.0
    %1852 = vmatprep.subr.mxu0 0.0
    %1853 = vmatpush1.msra.mxu0 0.0
    %1854 = vmatprep.subr.mxu0 0.0
    %1855 = vmatpush1.msra.mxu0 0.0
    %1856 = vmatprep.subr.mxu0 0.0
    %1857 = vmatpush1.msra.mxu0 0.0
    %1858 = vmatprep.subr.mxu0 0.0
    %1859 = vmatpush1.msra.mxu0 0.0
    %1860 = vmatprep.subr.mxu0 0.0
    %1861 = vmatpush1.msra.mxu0 0.0
    %1862 = vmatprep.subr.mxu0 0.0
    %1863 = vmatpush1.msra.mxu0 0.0
    %1864 = vmatprep.subr.mxu0 0.0
    %1865 = vmatpush1.msra.mxu0 0.0
    %1866 = vmatprep.subr.mxu0 0.0
    %1867 = vmatpush1.msra.mxu0 0.0
    %1868 = vmatprep.subr.mxu0 0.0
    %1869 = vmatpush1.msra.mxu0 0.0
    %1870 = vmatprep.subr.mxu0 0.0
    %1871 = vmatpush1.msra.mxu0 0.0
    %1872 = vmatprep.subr.mxu0 0.0
    %1873 = vmatpush1.msra.mxu0 %v611
    %1874 = vmatprep.subr.mxu0 0.0
    %1875 = vmatpush1.msra.mxu0 %v610
    %1876 = vmatprep.subr.mxu0 0.0
    %1877 = vmatpush1.msra.mxu0 %v609
    %1878 = vmatprep.subr.mxu0 0.0
    %1879 = vmatpush1.msra.mxu0 %v608
    %1880 = vmatprep.subr.mxu0 0.0
    %1881 = vmatpush2.msra.mxu0 0.0
    %1882 = vmatprep.subr.mxu0 0.0
    %1883 = vmatpush2.msra.mxu0 0.0
    %1884 = vmatprep.subr.mxu0 0.0
    %1885 = vmatpush2.msra.mxu0 0.0
    %1886 = vmatprep.subr.mxu0 0.0
    %1887 = vmatpush2.msra.mxu0 0.0
    %1888 = vmatprep.subr.mxu0 0.0
    %1889 = vmatpush2.msra.mxu0 0.0
    %1890 = vmatprep.subr.mxu0 0.0
    %1891 = vmatpush2.msra.mxu0 0.0
    %1892 = vmatprep.subr.mxu0 0.0
    %1893 = vmatpush2.msra.mxu0 0.0
    %1894 = vmatprep.subr.mxu0 0.0
    %1895 = vmatpush2.msra.mxu0 0.0
    %1896 = vmatprep.subr.mxu0 0.0
    %1897 = vmatpush2.msra.mxu0 0.0
    %1898 = vmatprep.subr.mxu0 0.0
    %1899 = vmatpush2.msra.mxu0 0.0
    %1900 = vmatprep.subr.mxu0 0.0
    %1901 = vmatpush2.msra.mxu0 0.0
    %1902 = vmatprep.subr.mxu0 0.0
    %1903 = vmatpush2.msra.mxu0 0.0
    %1904 = vmatprep.subr.mxu0 0.0
    %1905 = vmatpush2.msra.mxu0 0.0
    %1906 = vmatprep.subr.mxu0 0.0
    %1907 = vmatpush2.msra.mxu0 0.0
    %1908 = vmatprep.subr.mxu0 0.0
    %1909 = vmatpush2.msra.mxu0 0.0
    %1910 = vmatprep.subr.mxu0 0.0
    %1911 = vmatpush2.msra.mxu0 0.0
    %1912 = vmatprep.mubr.f32.mxu0 0.0
    %1913 = vmatmul.mubr.f32.gmra.mxu0 %v1625
    %v1914 = vpop.f32.mrf.mxu0
    %v1915 = vadd.f32 0.0, %v1914
    %v1916 = vpop.f32.mrf.mxu0
    %1917 = vdwg.mxu0
    %1919 = vrot.lane.b32.xlu0 %v1915, 96
    %v1920 = vpop.permute.xlu0 %1919
    %v1922 = vadd.f32 %v530, %v1920
    %v1923 = vxor.u32 %v1697, 2147483648
    %v1924 = vmul.f32 %v1923, 1.442695
    %v1925 = vpow.pop %v1924
    %v1926 = vadd.f32 %v1925, 1.0
    %v1927 = vrcp.pop %v1926
    %v1928 = vmul.f32 1.0, %v1927
    %v1929 = vxor.u32 %v1772, 2147483648
    %v1930 = vmul.f32 %v1929, 1.442695
    %v1931 = vpow.pop %v1930
    %v1932 = vadd.f32 %v1931, 1.0
    %v1933 = vrcp.pop %v1932
    %v1934 = vmul.f32 1.0, %v1933
    %v1935 = vtanh.pop %v1847
    %v1936 = vxor.u32 %v1922, 2147483648
    %v1937 = vmul.f32 %v1936, 1.442695
    %v1938 = vpow.pop %v1937
    %v1939 = vadd.f32 %v1938, 1.0
    %v1940 = vrcp.pop %v1939
    %v1941 = vmul.f32 1.0, %v1940
    %v1942 = vmul.f32 %v1934, %v1615
    %1944 = vrot.lane.b32.xlu0 %v1935, 64
    %v1945 = vpop.permute.xlu0 %1944
    %v1947 = vmul.f32 %v1928, %v1945
    %1949 = vrot.lane.b32.xlu0 %v1947, 32
    %v1950 = vpop.permute.xlu0 %1949
    %v1952 = vadd.f32 %v1942, %v1950
    %v1953 = vtanh.pop %v1952
    %1955 = vrot.lane.b32.xlu0 %v1953, 64
    %v1956 = vpop.permute.xlu0 %1955
    %v1958 = vmul.f32 %v1941, %v1956
    %1960 = vrot.lane.b32.xlu0 %v1958, 32
    %v1961 = vpop.permute.xlu0 %1960
    %v1962 = vsel %vm612, %v1961, 0
    %1964 = vmatprep.subr.mxu0 0.0
    %1965 = vmatpush1.msra.mxu0 0.0
    %1966 = vmatprep.subr.mxu0 0.0
    %1967 = vmatpush1.msra.mxu0 0.0
    %1968 = vmatprep.subr.mxu0 0.0
    %1969 = vmatpush1.msra.mxu0 0.0
    %1970 = vmatprep.subr.mxu0 0.0
    %1971 = vmatpush1.msra.mxu0 0.0
    %1972 = vmatprep.subr.mxu0 0.0
    %1973 = vmatpush1.msra.mxu0 0.0
    %1974 = vmatprep.subr.mxu0 0.0
    %1975 = vmatpush1.msra.mxu0 0.0
    %1976 = vmatprep.subr.mxu0 0.0
    %1977 = vmatpush1.msra.mxu0 0.0
    %1978 = vmatprep.subr.mxu0 0.0
    %1979 = vmatpush1.msra.mxu0 0.0
    %1980 = vmatprep.subr.mxu0 0.0
    %1981 = vmatpush1.msra.mxu0 0.0
    %1982 = vmatprep.subr.mxu0 0.0
    %1983 = vmatpush1.msra.mxu0 0.0
    %1984 = vmatprep.subr.mxu0 0.0
    %1985 = vmatpush1.msra.mxu0 0.0
    %1986 = vmatprep.subr.mxu0 0.0
    %1987 = vmatpush1.msra.mxu0 0.0
    %1988 = vmatprep.subr.mxu0 0.0
    %1989 = vmatpush1.msra.mxu0 %v596
    %1990 = vmatprep.subr.mxu0 0.0
    %1991 = vmatpush1.msra.mxu0 %v595
    %1992 = vmatprep.subr.mxu0 0.0
    %1993 = vmatpush1.msra.mxu0 %v594
    %1994 = vmatprep.subr.mxu0 0.0
    %1995 = vmatpush1.msra.mxu0 %v593
    %1996 = vmatprep.subr.mxu0 0.0
    %1997 = vmatpush2.msra.mxu0 0.0
    %1998 = vmatprep.subr.mxu0 0.0
    %1999 = vmatpush2.msra.mxu0 0.0
    %2000 = vmatprep.subr.mxu0 0.0
    %2001 = vmatpush2.msra.mxu0 0.0
    %2002 = vmatprep.subr.mxu0 0.0
    %2003 = vmatpush2.msra.mxu0 0.0
    %2004 = vmatprep.subr.mxu0 0.0
    %2005 = vmatpush2.msra.mxu0 0.0
    %2006 = vmatprep.subr.mxu0 0.0
    %2007 = vmatpush2.msra.mxu0 0.0
    %2008 = vmatprep.subr.mxu0 0.0
    %2009 = vmatpush2.msra.mxu0 0.0
    %2010 = vmatprep.subr.mxu0 0.0
    %2011 = vmatpush2.msra.mxu0 0.0
    %2012 = vmatprep.subr.mxu0 0.0
    %2013 = vmatpush2.msra.mxu0 0.0
    %2014 = vmatprep.subr.mxu0 0.0
    %2015 = vmatpush2.msra.mxu0 0.0
    %2016 = vmatprep.subr.mxu0 0.0
    %2017 = vmatpush2.msra.mxu0 0.0
    %2018 = vmatprep.subr.mxu0 0.0
    %2019 = vmatpush2.msra.mxu0 0.0
    %2020 = vmatprep.subr.mxu0 0.0
    %2021 = vmatpush2.msra.mxu0 0.0
    %2022 = vmatprep.subr.mxu0 0.0
    %2023 = vmatpush2.msra.mxu0 0.0
    %2024 = vmatprep.subr.mxu0 0.0
    %2025 = vmatpush2.msra.mxu0 0.0
    %2026 = vmatprep.subr.mxu0 0.0
    %2027 = vmatpush2.msra.mxu0 0.0
    %2028 = vmatprep.mubr.f32.mxu0 0.0
    %2029 = vmatmul.mubr.f32.gmra.mxu0 %v1962
    %v2030 = vpop.f32.mrf.mxu0
    %v2031 = vadd.f32 0.0, %v2030
    %v2032 = vpop.f32.mrf.mxu0
    %2033 = vdwg.mxu0
    %v2034 = vadd.f32 %v535, %v2031
    %2035 = vmatprep.subr.mxu0 0.0
    %2036 = vmatpush1.msra.mxu0 0.0
    %2037 = vmatprep.subr.mxu0 0.0
    %2038 = vmatpush1.msra.mxu0 0.0
    %2039 = vmatprep.subr.mxu0 0.0
    %2040 = vmatpush1.msra.mxu0 0.0
    %2041 = vmatprep.subr.mxu0 0.0
    %2042 = vmatpush1.msra.mxu0 0.0
    %2043 = vmatprep.subr.mxu0 0.0
    %2044 = vmatpush1.msra.mxu0 0.0
    %2045 = vmatprep.subr.mxu0 0.0
    %2046 = vmatpush1.msra.mxu0 0.0
    %2047 = vmatprep.subr.mxu0 0.0
    %2048 = vmatpush1.msra.mxu0 0.0
    %2049 = vmatprep.subr.mxu0 0.0
    %2050 = vmatpush1.msra.mxu0 0.0
    %2051 = vmatprep.subr.mxu0 0.0
    %2052 = vmatpush1.msra.mxu0 0.0
    %2053 = vmatprep.subr.mxu0 0.0
    %2054 = vmatpush1.msra.mxu0 0.0
    %2055 = vmatprep.subr.mxu0 0.0
    %2056 = vmatpush1.msra.mxu0 0.0
    %2057 = vmatprep.subr.mxu0 0.0
    %2058 = vmatpush1.msra.mxu0 0.0
    %2059 = vmatprep.subr.mxu0 0.0
    %2060 = vmatpush1.msra.mxu0 %v601
    %2061 = vmatprep.subr.mxu0 0.0
    %2062 = vmatpush1.msra.mxu0 %v600
    %2063 = vmatprep.subr.mxu0 0.0
    %2064 = vmatpush1.msra.mxu0 %v599
    %2065 = vmatprep.subr.mxu0 0.0
    %2066 = vmatpush1.msra.mxu0 %v598
    %2067 = vmatprep.subr.mxu0 0.0
    %2068 = vmatpush2.msra.mxu0 0.0
    %2069 = vmatprep.subr.mxu0 0.0
    %2070 = vmatpush2.msra.mxu0 0.0
    %2071 = vmatprep.subr.mxu0 0.0
    %2072 = vmatpush2.msra.mxu0 0.0
    %2073 = vmatprep.subr.mxu0 0.0
    %2074 = vmatpush2.msra.mxu0 0.0
    %2075 = vmatprep.subr.mxu0 0.0
    %2076 = vmatpush2.msra.mxu0 0.0
    %2077 = vmatprep.subr.mxu0 0.0
    %2078 = vmatpush2.msra.mxu0 0.0
    %2079 = vmatprep.subr.mxu0 0.0
    %2080 = vmatpush2.msra.mxu0 0.0
    %2081 = vmatprep.subr.mxu0 0.0
    %2082 = vmatpush2.msra.mxu0 0.0
    %2083 = vmatprep.subr.mxu0 0.0
    %2084 = vmatpush2.msra.mxu0 0.0
    %2085 = vmatprep.subr.mxu0 0.0
    %2086 = vmatpush2.msra.mxu0 0.0
    %2087 = vmatprep.subr.mxu0 0.0
    %2088 = vmatpush2.msra.mxu0 0.0
    %2089 = vmatprep.subr.mxu0 0.0
    %2090 = vmatpush2.msra.mxu0 0.0
    %2091 = vmatprep.subr.mxu0 0.0
    %2092 = vmatpush2.msra.mxu0 0.0
    %2093 = vmatprep.subr.mxu0 0.0
    %2094 = vmatpush2.msra.mxu0 0.0
    %2095 = vmatprep.subr.mxu0 0.0
    %2096 = vmatpush2.msra.mxu0 0.0
    %2097 = vmatprep.subr.mxu0 0.0
    %2098 = vmatpush2.msra.mxu0 0.0
    %2099 = vmatprep.mubr.f32.mxu0 0.0
    %2100 = vmatmul.mubr.f32.gmra.mxu0 %v1962
    %v2101 = vpop.f32.mrf.mxu0
    %v2102 = vadd.f32 0.0, %v2101
    %v2103 = vpop.f32.mrf.mxu0
    %2104 = vdwg.mxu0
    %2106 = vrot.lane.b32.xlu0 %v2102, 32
    %v2107 = vpop.permute.xlu0 %2106
    %v2109 = vadd.f32 %v535, %v2107
    %2110 = vmatprep.subr.mxu0 0.0
    %2111 = vmatpush1.msra.mxu0 0.0
    %2112 = vmatprep.subr.mxu0 0.0
    %2113 = vmatpush1.msra.mxu0 0.0
    %2114 = vmatprep.subr.mxu0 0.0
    %2115 = vmatpush1.msra.mxu0 0.0
    %2116 = vmatprep.subr.mxu0 0.0
    %2117 = vmatpush1.msra.mxu0 0.0
    %2118 = vmatprep.subr.mxu0 0.0
    %2119 = vmatpush1.msra.mxu0 0.0
    %2120 = vmatprep.subr.mxu0 0.0
    %2121 = vmatpush1.msra.mxu0 0.0
    %2122 = vmatprep.subr.mxu0 0.0
    %2123 = vmatpush1.msra.mxu0 0.0
    %2124 = vmatprep.subr.mxu0 0.0
    %2125 = vmatpush1.msra.mxu0 0.0
    %2126 = vmatprep.subr.mxu0 0.0
    %2127 = vmatpush1.msra.mxu0 0.0
    %2128 = vmatprep.subr.mxu0 0.0
    %2129 = vmatpush1.msra.mxu0 0.0
    %2130 = vmatprep.subr.mxu0 0.0
    %2131 = vmatpush1.msra.mxu0 0.0
    %2132 = vmatprep.subr.mxu0 0.0
    %2133 = vmatpush1.msra.mxu0 0.0
    %2134 = vmatprep.subr.mxu0 0.0
    %2135 = vmatpush1.msra.mxu0 %v606
    %2136 = vmatprep.subr.mxu0 0.0
    %2137 = vmatpush1.msra.mxu0 %v605
    %2138 = vmatprep.subr.mxu0 0.0
    %2139 = vmatpush1.msra.mxu0 %v604
    %2140 = vmatprep.subr.mxu0 0.0
    %2141 = vmatpush1.msra.mxu0 %v603
    %2142 = vmatprep.subr.mxu0 0.0
    %2143 = vmatpush2.msra.mxu0 0.0
    %2144 = vmatprep.subr.mxu0 0.0
    %2145 = vmatpush2.msra.mxu0 0.0
    %2146 = vmatprep.subr.mxu0 0.0
    %2147 = vmatpush2.msra.mxu0 0.0
    %2148 = vmatprep.subr.mxu0 0.0
    %2149 = vmatpush2.msra.mxu0 0.0
    %2150 = vmatprep.subr.mxu0 0.0
    %2151 = vmatpush2.msra.mxu0 0.0
    %2152 = vmatprep.subr.mxu0 0.0
    %2153 = vmatpush2.msra.mxu0 0.0
    %2154 = vmatprep.subr.mxu0 0.0
    %2155 = vmatpush2.msra.mxu0 0.0
    %2156 = vmatprep.subr.mxu0 0.0
    %2157 = vmatpush2.msra.mxu0 0.0
    %2158 = vmatprep.subr.mxu0 0.0
    %2159 = vmatpush2.msra.mxu0 0.0
    %2160 = vmatprep.subr.mxu0 0.0
    %2161 = vmatpush2.msra.mxu0 0.0
    %2162 = vmatprep.subr.mxu0 0.0
    %2163 = vmatpush2.msra.mxu0 0.0
    %2164 = vmatprep.subr.mxu0 0.0
    %2165 = vmatpush2.msra.mxu0 0.0
    %2166 = vmatprep.subr.mxu0 0.0
    %2167 = vmatpush2.msra.mxu0 0.0
    %2168 = vmatprep.subr.mxu0 0.0
    %2169 = vmatpush2.msra.mxu0 0.0
    %2170 = vmatprep.subr.mxu0 0.0
    %2171 = vmatpush2.msra.mxu0 0.0
    %2172 = vmatprep.subr.mxu0 0.0
    %2173 = vmatpush2.msra.mxu0 0.0
    %2174 = vmatprep.mubr.f32.mxu0 0.0
    %2175 = vmatmul.mubr.f32.gmra.mxu0 %v1962
    %v2176 = vpop.f32.mrf.mxu0
    %v2177 = vadd.f32 0.0, %v2176
    %v2178 = vpop.f32.mrf.mxu0
    %2179 = vdwg.mxu0
    %2181 = vrot.lane.b32.xlu0 %v2177, 64
    %v2182 = vpop.permute.xlu0 %2181
    %v2184 = vadd.f32 %v535, %v2182
    %2185 = vmatprep.subr.mxu0 0.0
    %2186 = vmatpush1.msra.mxu0 0.0
    %2187 = vmatprep.subr.mxu0 0.0
    %2188 = vmatpush1.msra.mxu0 0.0
    %2189 = vmatprep.subr.mxu0 0.0
    %2190 = vmatpush1.msra.mxu0 0.0
    %2191 = vmatprep.subr.mxu0 0.0
    %2192 = vmatpush1.msra.mxu0 0.0
    %2193 = vmatprep.subr.mxu0 0.0
    %2194 = vmatpush1.msra.mxu0 0.0
    %2195 = vmatprep.subr.mxu0 0.0
    %2196 = vmatpush1.msra.mxu0 0.0
    %2197 = vmatprep.subr.mxu0 0.0
    %2198 = vmatpush1.msra.mxu0 0.0
    %2199 = vmatprep.subr.mxu0 0.0
    %2200 = vmatpush1.msra.mxu0 0.0
    %2201 = vmatprep.subr.mxu0 0.0
    %2202 = vmatpush1.msra.mxu0 0.0
    %2203 = vmatprep.subr.mxu0 0.0
    %2204 = vmatpush1.msra.mxu0 0.0
    %2205 = vmatprep.subr.mxu0 0.0
    %2206 = vmatpush1.msra.mxu0 0.0
    %2207 = vmatprep.subr.mxu0 0.0
    %2208 = vmatpush1.msra.mxu0 0.0
    %2209 = vmatprep.subr.mxu0 0.0
    %2210 = vmatpush1.msra.mxu0 %v611
    %2211 = vmatprep.subr.mxu0 0.0
    %2212 = vmatpush1.msra.mxu0 %v610
    %2213 = vmatprep.subr.mxu0 0.0
    %2214 = vmatpush1.msra.mxu0 %v609
    %2215 = vmatprep.subr.mxu0 0.0
    %2216 = vmatpush1.msra.mxu0 %v608
    %2217 = vmatprep.subr.mxu0 0.0
    %2218 = vmatpush2.msra.mxu0 0.0
    %2219 = vmatprep.subr.mxu0 0.0
    %2220 = vmatpush2.msra.mxu0 0.0
    %2221 = vmatprep.subr.mxu0 0.0
    %2222 = vmatpush2.msra.mxu0 0.0
    %2223 = vmatprep.subr.mxu0 0.0
    %2224 = vmatpush2.msra.mxu0 0.0
    %2225 = vmatprep.subr.mxu0 0.0
    %2226 = vmatpush2.msra.mxu0 0.0
    %2227 = vmatprep.subr.mxu0 0.0
    %2228 = vmatpush2.msra.mxu0 0.0
    %2229 = vmatprep.subr.mxu0 0.0
    %2230 = vmatpush2.msra.mxu0 0.0
    %2231 = vmatprep.subr.mxu0 0.0
    %2232 = vmatpush2.msra.mxu0 0.0
    %2233 = vmatprep.subr.mxu0 0.0
    %2234 = vmatpush2.msra.mxu0 0.0
    %2235 = vmatprep.subr.mxu0 0.0
    %2236 = vmatpush2.msra.mxu0 0.0
    %2237 = vmatprep.subr.mxu0 0.0
    %2238 = vmatpush2.msra.mxu0 0.0
    %2239 = vmatprep.subr.mxu0 0.0
    %2240 = vmatpush2.msra.mxu0 0.0
    %2241 = vmatprep.subr.mxu0 0.0
    %2242 = vmatpush2.msra.mxu0 0.0
    %2243 = vmatprep.subr.mxu0 0.0
    %2244 = vmatpush2.msra.mxu0 0.0
    %2245 = vmatprep.subr.mxu0 0.0
    %2246 = vmatpush2.msra.mxu0 0.0
    %2247 = vmatprep.subr.mxu0 0.0
    %2248 = vmatpush2.msra.mxu0 0.0
    %2249 = vmatprep.mubr.f32.mxu0 0.0
    %2250 = vmatmul.mubr.f32.gmra.mxu0 %v1962
    %v2251 = vpop.f32.mrf.mxu0
    %v2252 = vadd.f32 0.0, %v2251
    %v2253 = vpop.f32.mrf.mxu0
    %2254 = vdwg.mxu0
    %2256 = vrot.lane.b32.xlu0 %v2252, 96
    %v2257 = vpop.permute.xlu0 %2256
    %v2259 = vadd.f32 %v535, %v2257
    %v2260 = vxor.u32 %v2034, 2147483648
    %v2261 = vmul.f32 %v2260, 1.442695
    %v2262 = vpow.pop %v2261
    %v2263 = vadd.f32 %v2262, 1.0
    %v2264 = vrcp.pop %v2263
    %v2265 = vmul.f32 1.0, %v2264
    %v2266 = vxor.u32 %v2109, 2147483648
    %v2267 = vmul.f32 %v2266, 1.442695
    %v2268 = vpow.pop %v2267
    %v2269 = vadd.f32 %v2268, 1.0
    %v2270 = vrcp.pop %v2269
    %v2271 = vmul.f32 1.0, %v2270
    %v2272 = vtanh.pop %v2184
    %v2273 = vxor.u32 %v2259, 2147483648
    %v2274 = vmul.f32 %v2273, 1.442695
    %v2275 = vpow.pop %v2274
    %v2276 = vadd.f32 %v2275, 1.0
    %v2277 = vrcp.pop %v2276
    %v2278 = vmul.f32 1.0, %v2277
    %v2279 = vmul.f32 %v2271, %v1952
    %2281 = vrot.lane.b32.xlu0 %v2272, 64
    %v2282 = vpop.permute.xlu0 %2281
    %v2284 = vmul.f32 %v2265, %v2282
    %2286 = vrot.lane.b32.xlu0 %v2284, 32
    %v2287 = vpop.permute.xlu0 %2286
    %v2289 = vadd.f32 %v2279, %v2287
    %v2290 = vtanh.pop %v2289
    %2292 = vrot.lane.b32.xlu0 %v2290, 64
    %v2293 = vpop.permute.xlu0 %2292
    %v2295 = vmul.f32 %v2278, %v2293
    %2297 = vrot.lane.b32.xlu0 %v2295, 32
    %v2298 = vpop.permute.xlu0 %2297
    %v2299 = vsel %vm612, %v2298, 0
    %2301 = vmatprep.subr.mxu0 0.0
    %2302 = vmatpush1.msra.mxu0 0.0
    %2303 = vmatprep.subr.mxu0 0.0
    %2304 = vmatpush1.msra.mxu0 0.0
    %2305 = vmatprep.subr.mxu0 0.0
    %2306 = vmatpush1.msra.mxu0 0.0
    %2307 = vmatprep.subr.mxu0 0.0
    %2308 = vmatpush1.msra.mxu0 0.0
    %2309 = vmatprep.subr.mxu0 0.0
    %2310 = vmatpush1.msra.mxu0 0.0
    %2311 = vmatprep.subr.mxu0 0.0
    %2312 = vmatpush1.msra.mxu0 0.0
    %2313 = vmatprep.subr.mxu0 0.0
    %2314 = vmatpush1.msra.mxu0 0.0
    %2315 = vmatprep.subr.mxu0 0.0
    %2316 = vmatpush1.msra.mxu0 0.0
    %2317 = vmatprep.subr.mxu0 0.0
    %2318 = vmatpush1.msra.mxu0 0.0
    %2319 = vmatprep.subr.mxu0 0.0
    %2320 = vmatpush1.msra.mxu0 0.0
    %2321 = vmatprep.subr.mxu0 0.0
    %2322 = vmatpush1.msra.mxu0 0.0
    %2323 = vmatprep.subr.mxu0 0.0
    %2324 = vmatpush1.msra.mxu0 0.0
    %2325 = vmatprep.subr.mxu0 0.0
    %2326 = vmatpush1.msra.mxu0 %v596
    %2327 = vmatprep.subr.mxu0 0.0
    %2328 = vmatpush1.msra.mxu0 %v595
    %2329 = vmatprep.subr.mxu0 0.0
    %2330 = vmatpush1.msra.mxu0 %v594
    %2331 = vmatprep.subr.mxu0 0.0
    %2332 = vmatpush1.msra.mxu0 %v593
    %2333 = vmatprep.subr.mxu0 0.0
    %2334 = vmatpush2.msra.mxu0 0.0
    %2335 = vmatprep.subr.mxu0 0.0
    %2336 = vmatpush2.msra.mxu0 0.0
    %2337 = vmatprep.subr.mxu0 0.0
    %2338 = vmatpush2.msra.mxu0 0.0
    %2339 = vmatprep.subr.mxu0 0.0
    %2340 = vmatpush2.msra.mxu0 0.0
    %2341 = vmatprep.subr.mxu0 0.0
    %2342 = vmatpush2.msra.mxu0 0.0
    %2343 = vmatprep.subr.mxu0 0.0
    %2344 = vmatpush2.msra.mxu0 0.0
    %2345 = vmatprep.subr.mxu0 0.0
    %2346 = vmatpush2.msra.mxu0 0.0
    %2347 = vmatprep.subr.mxu0 0.0
    %2348 = vmatpush2.msra.mxu0 0.0
    %2349 = vmatprep.subr.mxu0 0.0
    %2350 = vmatpush2.msra.mxu0 0.0
    %2351 = vmatprep.subr.mxu0 0.0
    %2352 = vmatpush2.msra.mxu0 0.0
    %2353 = vmatprep.subr.mxu0 0.0
    %2354 = vmatpush2.msra.mxu0 0.0
    %2355 = vmatprep.subr.mxu0 0.0
    %2356 = vmatpush2.msra.mxu0 0.0
    %2357 = vmatprep.subr.mxu0 0.0
    %2358 = vmatpush2.msra.mxu0 0.0
    %2359 = vmatprep.subr.mxu0 0.0
    %2360 = vmatpush2.msra.mxu0 0.0
    %2361 = vmatprep.subr.mxu0 0.0
    %2362 = vmatpush2.msra.mxu0 0.0
    %2363 = vmatprep.subr.mxu0 0.0
    %2364 = vmatpush2.msra.mxu0 0.0
    %2365 = vmatprep.mubr.f32.mxu0 0.0
    %2366 = vmatmul.mubr.f32.gmra.mxu0 %v2299
    %v2367 = vpop.f32.mrf.mxu0
    %v2368 = vadd.f32 0.0, %v2367
    %v2369 = vpop.f32.mrf.mxu0
    %2370 = vdwg.mxu0
    %v2371 = vadd.f32 %v540, %v2368
    %2372 = vmatprep.subr.mxu0 0.0
    %2373 = vmatpush1.msra.mxu0 0.0
    %2374 = vmatprep.subr.mxu0 0.0
    %2375 = vmatpush1.msra.mxu0 0.0
    %2376 = vmatprep.subr.mxu0 0.0
    %2377 = vmatpush1.msra.mxu0 0.0
    %2378 = vmatprep.subr.mxu0 0.0
    %2379 = vmatpush1.msra.mxu0 0.0
    %2380 = vmatprep.subr.mxu0 0.0
    %2381 = vmatpush1.msra.mxu0 0.0
    %2382 = vmatprep.subr.mxu0 0.0
    %2383 = vmatpush1.msra.mxu0 0.0
    %2384 = vmatprep.subr.mxu0 0.0
    %2385 = vmatpush1.msra.mxu0 0.0
    %2386 = vmatprep.subr.mxu0 0.0
    %2387 = vmatpush1.msra.mxu0 0.0
    %2388 = vmatprep.subr.mxu0 0.0
    %2389 = vmatpush1.msra.mxu0 0.0
    %2390 = vmatprep.subr.mxu0 0.0
    %2391 = vmatpush1.msra.mxu0 0.0
    %2392 = vmatprep.subr.mxu0 0.0
    %2393 = vmatpush1.msra.mxu0 0.0
    %2394 = vmatprep.subr.mxu0 0.0
    %2395 = vmatpush1.msra.mxu0 0.0
    %2396 = vmatprep.subr.mxu0 0.0
    %2397 = vmatpush1.msra.mxu0 %v601
    %2398 = vmatprep.subr.mxu0 0.0
    %2399 = vmatpush1.msra.mxu0 %v600
    %2400 = vmatprep.subr.mxu0 0.0
    %2401 = vmatpush1.msra.mxu0 %v599
    %2402 = vmatprep.subr.mxu0 0.0
    %2403 = vmatpush1.msra.mxu0 %v598
    %2404 = vmatprep.subr.mxu0 0.0
    %2405 = vmatpush2.msra.mxu0 0.0
    %2406 = vmatprep.subr.mxu0 0.0
    %2407 = vmatpush2.msra.mxu0 0.0
    %2408 = vmatprep.subr.mxu0 0.0
    %2409 = vmatpush2.msra.mxu0 0.0
    %2410 = vmatprep.subr.mxu0 0.0
    %2411 = vmatpush2.msra.mxu0 0.0
    %2412 = vmatprep.subr.mxu0 0.0
    %2413 = vmatpush2.msra.mxu0 0.0
    %2414 = vmatprep.subr.mxu0 0.0
    %2415 = vmatpush2.msra.mxu0 0.0
    %2416 = vmatprep.subr.mxu0 0.0
    %2417 = vmatpush2.msra.mxu0 0.0
    %2418 = vmatprep.subr.mxu0 0.0
    %2419 = vmatpush2.msra.mxu0 0.0
    %2420 = vmatprep.subr.mxu0 0.0
    %2421 = vmatpush2.msra.mxu0 0.0
    %2422 = vmatprep.subr.mxu0 0.0
    %2423 = vmatpush2.msra.mxu0 0.0
    %2424 = vmatprep.subr.mxu0 0.0
    %2425 = vmatpush2.msra.mxu0 0.0
    %2426 = vmatprep.subr.mxu0 0.0
    %2427 = vmatpush2.msra.mxu0 0.0
    %2428 = vmatprep.subr.mxu0 0.0
    %2429 = vmatpush2.msra.mxu0 0.0
    %2430 = vmatprep.subr.mxu0 0.0
    %2431 = vmatpush2.msra.mxu0 0.0
    %2432 = vmatprep.subr.mxu0 0.0
    %2433 = vmatpush2.msra.mxu0 0.0
    %2434 = vmatprep.subr.mxu0 0.0
    %2435 = vmatpush2.msra.mxu0 0.0
    %2436 = vmatprep.mubr.f32.mxu0 0.0
    %2437 = vmatmul.mubr.f32.gmra.mxu0 %v2299
    %v2438 = vpop.f32.mrf.mxu0
    %v2439 = vadd.f32 0.0, %v2438
    %v2440 = vpop.f32.mrf.mxu0
    %2441 = vdwg.mxu0
    %2443 = vrot.lane.b32.xlu0 %v2439, 32
    %v2444 = vpop.permute.xlu0 %2443
    %v2446 = vadd.f32 %v540, %v2444
    %2447 = vmatprep.subr.mxu0 0.0
    %2448 = vmatpush1.msra.mxu0 0.0
    %2449 = vmatprep.subr.mxu0 0.0
    %2450 = vmatpush1.msra.mxu0 0.0
    %2451 = vmatprep.subr.mxu0 0.0
    %2452 = vmatpush1.msra.mxu0 0.0
    %2453 = vmatprep.subr.mxu0 0.0
    %2454 = vmatpush1.msra.mxu0 0.0
    %2455 = vmatprep.subr.mxu0 0.0
    %2456 = vmatpush1.msra.mxu0 0.0
    %2457 = vmatprep.subr.mxu0 0.0
    %2458 = vmatpush1.msra.mxu0 0.0
    %2459 = vmatprep.subr.mxu0 0.0
    %2460 = vmatpush1.msra.mxu0 0.0
    %2461 = vmatprep.subr.mxu0 0.0
    %2462 = vmatpush1.msra.mxu0 0.0
    %2463 = vmatprep.subr.mxu0 0.0
    %2464 = vmatpush1.msra.mxu0 0.0
    %2465 = vmatprep.subr.mxu0 0.0
    %2466 = vmatpush1.msra.mxu0 0.0
    %2467 = vmatprep.subr.mxu0 0.0
    %2468 = vmatpush1.msra.mxu0 0.0
    %2469 = vmatprep.subr.mxu0 0.0
    %2470 = vmatpush1.msra.mxu0 0.0
    %2471 = vmatprep.subr.mxu0 0.0
    %2472 = vmatpush1.msra.mxu0 %v606
    %2473 = vmatprep.subr.mxu0 0.0
    %2474 = vmatpush1.msra.mxu0 %v605
    %2475 = vmatprep.subr.mxu0 0.0
    %2476 = vmatpush1.msra.mxu0 %v604
    %2477 = vmatprep.subr.mxu0 0.0
    %2478 = vmatpush1.msra.mxu0 %v603
    %2479 = vmatprep.subr.mxu0 0.0
    %2480 = vmatpush2.msra.mxu0 0.0
    %2481 = vmatprep.subr.mxu0 0.0
    %2482 = vmatpush2.msra.mxu0 0.0
    %2483 = vmatprep.subr.mxu0 0.0
    %2484 = vmatpush2.msra.mxu0 0.0
    %2485 = vmatprep.subr.mxu0 0.0
    %2486 = vmatpush2.msra.mxu0 0.0
    %2487 = vmatprep.subr.mxu0 0.0
    %2488 = vmatpush2.msra.mxu0 0.0
    %2489 = vmatprep.subr.mxu0 0.0
    %2490 = vmatpush2.msra.mxu0 0.0
    %2491 = vmatprep.subr.mxu0 0.0
    %2492 = vmatpush2.msra.mxu0 0.0
    %2493 = vmatprep.subr.mxu0 0.0
    %2494 = vmatpush2.msra.mxu0 0.0
    %2495 = vmatprep.subr.mxu0 0.0
    %2496 = vmatpush2.msra.mxu0 0.0
    %2497 = vmatprep.subr.mxu0 0.0
    %2498 = vmatpush2.msra.mxu0 0.0
    %2499 = vmatprep.subr.mxu0 0.0
    %2500 = vmatpush2.msra.mxu0 0.0
    %2501 = vmatprep.subr.mxu0 0.0
    %2502 = vmatpush2.msra.mxu0 0.0
    %2503 = vmatprep.subr.mxu0 0.0
    %2504 = vmatpush2.msra.mxu0 0.0
    %2505 = vmatprep.subr.mxu0 0.0
    %2506 = vmatpush2.msra.mxu0 0.0
    %2507 = vmatprep.subr.mxu0 0.0
    %2508 = vmatpush2.msra.mxu0 0.0
    %2509 = vmatprep.subr.mxu0 0.0
    %2510 = vmatpush2.msra.mxu0 0.0
    %2511 = vmatprep.mubr.f32.mxu0 0.0
    %2512 = vmatmul.mubr.f32.gmra.mxu0 %v2299
    %v2513 = vpop.f32.mrf.mxu0
    %v2514 = vadd.f32 0.0, %v2513
    %v2515 = vpop.f32.mrf.mxu0
    %2516 = vdwg.mxu0
    %2518 = vrot.lane.b32.xlu0 %v2514, 64
    %v2519 = vpop.permute.xlu0 %2518
    %v2521 = vadd.f32 %v540, %v2519
    %2522 = vmatprep.subr.mxu0 0.0
    %2523 = vmatpush1.msra.mxu0 0.0
    %2524 = vmatprep.subr.mxu0 0.0
    %2525 = vmatpush1.msra.mxu0 0.0
    %2526 = vmatprep.subr.mxu0 0.0
    %2527 = vmatpush1.msra.mxu0 0.0
    %2528 = vmatprep.subr.mxu0 0.0
    %2529 = vmatpush1.msra.mxu0 0.0
    %2530 = vmatprep.subr.mxu0 0.0
    %2531 = vmatpush1.msra.mxu0 0.0
    %2532 = vmatprep.subr.mxu0 0.0
    %2533 = vmatpush1.msra.mxu0 0.0
    %2534 = vmatprep.subr.mxu0 0.0
    %2535 = vmatpush1.msra.mxu0 0.0
    %2536 = vmatprep.subr.mxu0 0.0
    %2537 = vmatpush1.msra.mxu0 0.0
    %2538 = vmatprep.subr.mxu0 0.0
    %2539 = vmatpush1.msra.mxu0 0.0
    %2540 = vmatprep.subr.mxu0 0.0
    %2541 = vmatpush1.msra.mxu0 0.0
    %2542 = vmatprep.subr.mxu0 0.0
    %2543 = vmatpush1.msra.mxu0 0.0
    %2544 = vmatprep.subr.mxu0 0.0
    %2545 = vmatpush1.msra.mxu0 0.0
    %2546 = vmatprep.subr.mxu0 0.0
    %2547 = vmatpush1.msra.mxu0 %v611
    %2548 = vmatprep.subr.mxu0 0.0
    %2549 = vmatpush1.msra.mxu0 %v610
    %2550 = vmatprep.subr.mxu0 0.0
    %2551 = vmatpush1.msra.mxu0 %v609
    %2552 = vmatprep.subr.mxu0 0.0
    %2553 = vmatpush1.msra.mxu0 %v608
    %2554 = vmatprep.subr.mxu0 0.0
    %2555 = vmatpush2.msra.mxu0 0.0
    %2556 = vmatprep.subr.mxu0 0.0
    %2557 = vmatpush2.msra.mxu0 0.0
    %2558 = vmatprep.subr.mxu0 0.0
    %2559 = vmatpush2.msra.mxu0 0.0
    %2560 = vmatprep.subr.mxu0 0.0
    %2561 = vmatpush2.msra.mxu0 0.0
    %2562 = vmatprep.subr.mxu0 0.0
    %2563 = vmatpush2.msra.mxu0 0.0
    %2564 = vmatprep.subr.mxu0 0.0
    %2565 = vmatpush2.msra.mxu0 0.0
    %2566 = vmatprep.subr.mxu0 0.0
    %2567 = vmatpush2.msra.mxu0 0.0
    %2568 = vmatprep.subr.mxu0 0.0
    %2569 = vmatpush2.msra.mxu0 0.0
    %2570 = vmatprep.subr.mxu0 0.0
    %2571 = vmatpush2.msra.mxu0 0.0
    %2572 = vmatprep.subr.mxu0 0.0
    %2573 = vmatpush2.msra.mxu0 0.0
    %2574 = vmatprep.subr.mxu0 0.0
    %2575 = vmatpush2.msra.mxu0 0.0
    %2576 = vmatprep.subr.mxu0 0.0
    %2577 = vmatpush2.msra.mxu0 0.0
    %2578 = vmatprep.subr.mxu0 0.0
    %2579 = vmatpush2.msra.mxu0 0.0
    %2580 = vmatprep.subr.mxu0 0.0
    %2581 = vmatpush2.msra.mxu0 0.0
    %2582 = vmatprep.subr.mxu0 0.0
    %2583 = vmatpush2.msra.mxu0 0.0
    %2584 = vmatprep.subr.mxu0 0.0
    %2585 = vmatpush2.msra.mxu0 0.0
    %2586 = vmatprep.mubr.f32.mxu0 0.0
    %2587 = vmatmul.mubr.f32.gmra.mxu0 %v2299
    %v2588 = vpop.f32.mrf.mxu0
    %v2589 = vadd.f32 0.0, %v2588
    %v2590 = vpop.f32.mrf.mxu0
    %2591 = vdwg.mxu0
    %2593 = vrot.lane.b32.xlu0 %v2589, 96
    %v2594 = vpop.permute.xlu0 %2593
    %v2596 = vadd.f32 %v540, %v2594
    %v2597 = vxor.u32 %v2371, 2147483648
    %v2598 = vmul.f32 %v2597, 1.442695
    %v2599 = vpow.pop %v2598
    %v2600 = vadd.f32 %v2599, 1.0
    %v2601 = vrcp.pop %v2600
    %v2602 = vmul.f32 1.0, %v2601
    %v2603 = vxor.u32 %v2446, 2147483648
    %v2604 = vmul.f32 %v2603, 1.442695
    %v2605 = vpow.pop %v2604
    %v2606 = vadd.f32 %v2605, 1.0
    %v2607 = vrcp.pop %v2606
    %v2608 = vmul.f32 1.0, %v2607
    %v2609 = vtanh.pop %v2521
    %v2610 = vxor.u32 %v2596, 2147483648
    %v2611 = vmul.f32 %v2610, 1.442695
    %v2612 = vpow.pop %v2611
    %v2613 = vadd.f32 %v2612, 1.0
    %v2614 = vrcp.pop %v2613
    %v2615 = vmul.f32 1.0, %v2614
    %v2616 = vmul.f32 %v2608, %v2289
    %2618 = vrot.lane.b32.xlu0 %v2609, 64
    %v2619 = vpop.permute.xlu0 %2618
    %v2621 = vmul.f32 %v2602, %v2619
    %2623 = vrot.lane.b32.xlu0 %v2621, 32
    %v2624 = vpop.permute.xlu0 %2623
    %v2626 = vadd.f32 %v2616, %v2624
    %v2627 = vtanh.pop %v2626
    %2629 = vrot.lane.b32.xlu0 %v2627, 64
    %v2630 = vpop.permute.xlu0 %2629
    %v2632 = vmul.f32 %v2615, %v2630
    %2634 = vrot.lane.b32.xlu0 %v2632, 32
    %v2635 = vpop.permute.xlu0 %2634
    %v2636 = vsel %vm612, %v2635, 0
    %2638 = vmatprep.subr.mxu0 0.0
    %2639 = vmatpush1.msra.mxu0 0.0
    %2640 = vmatprep.subr.mxu0 0.0
    %2641 = vmatpush1.msra.mxu0 0.0
    %2642 = vmatprep.subr.mxu0 0.0
    %2643 = vmatpush1.msra.mxu0 0.0
    %2644 = vmatprep.subr.mxu0 0.0
    %2645 = vmatpush1.msra.mxu0 0.0
    %2646 = vmatprep.subr.mxu0 0.0
    %2647 = vmatpush1.msra.mxu0 0.0
    %2648 = vmatprep.subr.mxu0 0.0
    %2649 = vmatpush1.msra.mxu0 0.0
    %2650 = vmatprep.subr.mxu0 0.0
    %2651 = vmatpush1.msra.mxu0 0.0
    %2652 = vmatprep.subr.mxu0 0.0
    %2653 = vmatpush1.msra.mxu0 0.0
    %2654 = vmatprep.subr.mxu0 0.0
    %2655 = vmatpush1.msra.mxu0 0.0
    %2656 = vmatprep.subr.mxu0 0.0
    %2657 = vmatpush1.msra.mxu0 0.0
    %2658 = vmatprep.subr.mxu0 0.0
    %2659 = vmatpush1.msra.mxu0 0.0
    %2660 = vmatprep.subr.mxu0 0.0
    %2661 = vmatpush1.msra.mxu0 0.0
    %2662 = vmatprep.subr.mxu0 0.0
    %2663 = vmatpush1.msra.mxu0 %v596
    %2664 = vmatprep.subr.mxu0 0.0
    %2665 = vmatpush1.msra.mxu0 %v595
    %2666 = vmatprep.subr.mxu0 0.0
    %2667 = vmatpush1.msra.mxu0 %v594
    %2668 = vmatprep.subr.mxu0 0.0
    %2669 = vmatpush1.msra.mxu0 %v593
    %2670 = vmatprep.subr.mxu0 0.0
    %2671 = vmatpush2.msra.mxu0 0.0
    %2672 = vmatprep.subr.mxu0 0.0
    %2673 = vmatpush2.msra.mxu0 0.0
    %2674 = vmatprep.subr.mxu0 0.0
    %2675 = vmatpush2.msra.mxu0 0.0
    %2676 = vmatprep.subr.mxu0 0.0
    %2677 = vmatpush2.msra.mxu0 0.0
    %2678 = vmatprep.subr.mxu0 0.0
    %2679 = vmatpush2.msra.mxu0 0.0
    %2680 = vmatprep.subr.mxu0 0.0
    %2681 = vmatpush2.msra.mxu0 0.0
    %2682 = vmatprep.subr.mxu0 0.0
    %2683 = vmatpush2.msra.mxu0 0.0
    %2684 = vmatprep.subr.mxu0 0.0
    %2685 = vmatpush2.msra.mxu0 0.0
    %2686 = vmatprep.subr.mxu0 0.0
    %2687 = vmatpush2.msra.mxu0 0.0
    %2688 = vmatprep.subr.mxu0 0.0
    %2689 = vmatpush2.msra.mxu0 0.0
    %2690 = vmatprep.subr.mxu0 0.0
    %2691 = vmatpush2.msra.mxu0 0.0
    %2692 = vmatprep.subr.mxu0 0.0
    %2693 = vmatpush2.msra.mxu0 0.0
    %2694 = vmatprep.subr.mxu0 0.0
    %2695 = vmatpush2.msra.mxu0 0.0
    %2696 = vmatprep.subr.mxu0 0.0
    %2697 = vmatpush2.msra.mxu0 0.0
    %2698 = vmatprep.subr.mxu0 0.0
    %2699 = vmatpush2.msra.mxu0 0.0
    %2700 = vmatprep.subr.mxu0 0.0
    %2701 = vmatpush2.msra.mxu0 0.0
    %2702 = vmatprep.mubr.f32.mxu0 0.0
    %2703 = vmatmul.mubr.f32.gmra.mxu0 %v2636
    %v2704 = vpop.f32.mrf.mxu0
    %v2705 = vadd.f32 0.0, %v2704
    %v2706 = vpop.f32.mrf.mxu0
    %2707 = vdwg.mxu0
    %v2708 = vadd.f32 %v545, %v2705
    %2709 = vmatprep.subr.mxu0 0.0
    %2710 = vmatpush1.msra.mxu0 0.0
    %2711 = vmatprep.subr.mxu0 0.0
    %2712 = vmatpush1.msra.mxu0 0.0
    %2713 = vmatprep.subr.mxu0 0.0
    %2714 = vmatpush1.msra.mxu0 0.0
    %2715 = vmatprep.subr.mxu0 0.0
    %2716 = vmatpush1.msra.mxu0 0.0
    %2717 = vmatprep.subr.mxu0 0.0
    %2718 = vmatpush1.msra.mxu0 0.0
    %2719 = vmatprep.subr.mxu0 0.0
    %2720 = vmatpush1.msra.mxu0 0.0
    %2721 = vmatprep.subr.mxu0 0.0
    %2722 = vmatpush1.msra.mxu0 0.0
    %2723 = vmatprep.subr.mxu0 0.0
    %2724 = vmatpush1.msra.mxu0 0.0
    %2725 = vmatprep.subr.mxu0 0.0
    %2726 = vmatpush1.msra.mxu0 0.0
    %2727 = vmatprep.subr.mxu0 0.0
    %2728 = vmatpush1.msra.mxu0 0.0
    %2729 = vmatprep.subr.mxu0 0.0
    %2730 = vmatpush1.msra.mxu0 0.0
    %2731 = vmatprep.subr.mxu0 0.0
    %2732 = vmatpush1.msra.mxu0 0.0
    %2733 = vmatprep.subr.mxu0 0.0
    %2734 = vmatpush1.msra.mxu0 %v601
    %2735 = vmatprep.subr.mxu0 0.0
    %2736 = vmatpush1.msra.mxu0 %v600
    %2737 = vmatprep.subr.mxu0 0.0
    %2738 = vmatpush1.msra.mxu0 %v599
    %2739 = vmatprep.subr.mxu0 0.0
    %2740 = vmatpush1.msra.mxu0 %v598
    %2741 = vmatprep.subr.mxu0 0.0
    %2742 = vmatpush2.msra.mxu0 0.0
    %2743 = vmatprep.subr.mxu0 0.0
    %2744 = vmatpush2.msra.mxu0 0.0
    %2745 = vmatprep.subr.mxu0 0.0
    %2746 = vmatpush2.msra.mxu0 0.0
    %2747 = vmatprep.subr.mxu0 0.0
    %2748 = vmatpush2.msra.mxu0 0.0
    %2749 = vmatprep.subr.mxu0 0.0
    %2750 = vmatpush2.msra.mxu0 0.0
    %2751 = vmatprep.subr.mxu0 0.0
    %2752 = vmatpush2.msra.mxu0 0.0
    %2753 = vmatprep.subr.mxu0 0.0
    %2754 = vmatpush2.msra.mxu0 0.0
    %2755 = vmatprep.subr.mxu0 0.0
    %2756 = vmatpush2.msra.mxu0 0.0
    %2757 = vmatprep.subr.mxu0 0.0
    %2758 = vmatpush2.msra.mxu0 0.0
    %2759 = vmatprep.subr.mxu0 0.0
    %2760 = vmatpush2.msra.mxu0 0.0
    %2761 = vmatprep.subr.mxu0 0.0
    %2762 = vmatpush2.msra.mxu0 0.0
    %2763 = vmatprep.subr.mxu0 0.0
    %2764 = vmatpush2.msra.mxu0 0.0
    %2765 = vmatprep.subr.mxu0 0.0
    %2766 = vmatpush2.msra.mxu0 0.0
    %2767 = vmatprep.subr.mxu0 0.0
    %2768 = vmatpush2.msra.mxu0 0.0
    %2769 = vmatprep.subr.mxu0 0.0
    %2770 = vmatpush2.msra.mxu0 0.0
    %2771 = vmatprep.subr.mxu0 0.0
    %2772 = vmatpush2.msra.mxu0 0.0
    %2773 = vmatprep.mubr.f32.mxu0 0.0
    %2774 = vmatmul.mubr.f32.gmra.mxu0 %v2636
    %v2775 = vpop.f32.mrf.mxu0
    %v2776 = vadd.f32 0.0, %v2775
    %v2777 = vpop.f32.mrf.mxu0
    %2778 = vdwg.mxu0
    %2780 = vrot.lane.b32.xlu0 %v2776, 32
    %v2781 = vpop.permute.xlu0 %2780
    %v2783 = vadd.f32 %v545, %v2781
    %2784 = vmatprep.subr.mxu0 0.0
    %2785 = vmatpush1.msra.mxu0 0.0
    %2786 = vmatprep.subr.mxu0 0.0
    %2787 = vmatpush1.msra.mxu0 0.0
    %2788 = vmatprep.subr.mxu0 0.0
    %2789 = vmatpush1.msra.mxu0 0.0
    %2790 = vmatprep.subr.mxu0 0.0
    %2791 = vmatpush1.msra.mxu0 0.0
    %2792 = vmatprep.subr.mxu0 0.0
    %2793 = vmatpush1.msra.mxu0 0.0
    %2794 = vmatprep.subr.mxu0 0.0
    %2795 = vmatpush1.msra.mxu0 0.0
    %2796 = vmatprep.subr.mxu0 0.0
    %2797 = vmatpush1.msra.mxu0 0.0
    %2798 = vmatprep.subr.mxu0 0.0
    %2799 = vmatpush1.msra.mxu0 0.0
    %2800 = vmatprep.subr.mxu0 0.0
    %2801 = vmatpush1.msra.mxu0 0.0
    %2802 = vmatprep.subr.mxu0 0.0
    %2803 = vmatpush1.msra.mxu0 0.0
    %2804 = vmatprep.subr.mxu0 0.0
    %2805 = vmatpush1.msra.mxu0 0.0
    %2806 = vmatprep.subr.mxu0 0.0
    %2807 = vmatpush1.msra.mxu0 0.0
    %2808 = vmatprep.subr.mxu0 0.0
    %2809 = vmatpush1.msra.mxu0 %v606
    %2810 = vmatprep.subr.mxu0 0.0
    %2811 = vmatpush1.msra.mxu0 %v605
    %2812 = vmatprep.subr.mxu0 0.0
    %2813 = vmatpush1.msra.mxu0 %v604
    %2814 = vmatprep.subr.mxu0 0.0
    %2815 = vmatpush1.msra.mxu0 %v603
    %2816 = vmatprep.subr.mxu0 0.0
    %2817 = vmatpush2.msra.mxu0 0.0
    %2818 = vmatprep.subr.mxu0 0.0
    %2819 = vmatpush2.msra.mxu0 0.0
    %2820 = vmatprep.subr.mxu0 0.0
    %2821 = vmatpush2.msra.mxu0 0.0
    %2822 = vmatprep.subr.mxu0 0.0
    %2823 = vmatpush2.msra.mxu0 0.0
    %2824 = vmatprep.subr.mxu0 0.0
    %2825 = vmatpush2.msra.mxu0 0.0
    %2826 = vmatprep.subr.mxu0 0.0
    %2827 = vmatpush2.msra.mxu0 0.0
    %2828 = vmatprep.subr.mxu0 0.0
    %2829 = vmatpush2.msra.mxu0 0.0
    %2830 = vmatprep.subr.mxu0 0.0
    %2831 = vmatpush2.msra.mxu0 0.0
    %2832 = vmatprep.subr.mxu0 0.0
    %2833 = vmatpush2.msra.mxu0 0.0
    %2834 = vmatprep.subr.mxu0 0.0
    %2835 = vmatpush2.msra.mxu0 0.0
    %2836 = vmatprep.subr.mxu0 0.0
    %2837 = vmatpush2.msra.mxu0 0.0
    %2838 = vmatprep.subr.mxu0 0.0
    %2839 = vmatpush2.msra.mxu0 0.0
    %2840 = vmatprep.subr.mxu0 0.0
    %2841 = vmatpush2.msra.mxu0 0.0
    %2842 = vmatprep.subr.mxu0 0.0
    %2843 = vmatpush2.msra.mxu0 0.0
    %2844 = vmatprep.subr.mxu0 0.0
    %2845 = vmatpush2.msra.mxu0 0.0
    %2846 = vmatprep.subr.mxu0 0.0
    %2847 = vmatpush2.msra.mxu0 0.0
    %2848 = vmatprep.mubr.f32.mxu0 0.0
    %2849 = vmatmul.mubr.f32.gmra.mxu0 %v2636
    %v2850 = vpop.f32.mrf.mxu0
    %v2851 = vadd.f32 0.0, %v2850
    %v2852 = vpop.f32.mrf.mxu0
    %2853 = vdwg.mxu0
    %2855 = vrot.lane.b32.xlu0 %v2851, 64
    %v2856 = vpop.permute.xlu0 %2855
    %v2858 = vadd.f32 %v545, %v2856
    %2859 = vmatprep.subr.mxu0 0.0
    %2860 = vmatpush1.msra.mxu0 0.0
    %2861 = vmatprep.subr.mxu0 0.0
    %2862 = vmatpush1.msra.mxu0 0.0
    %2863 = vmatprep.subr.mxu0 0.0
    %2864 = vmatpush1.msra.mxu0 0.0
    %2865 = vmatprep.subr.mxu0 0.0
    %2866 = vmatpush1.msra.mxu0 0.0
    %2867 = vmatprep.subr.mxu0 0.0
    %2868 = vmatpush1.msra.mxu0 0.0
    %2869 = vmatprep.subr.mxu0 0.0
    %2870 = vmatpush1.msra.mxu0 0.0
    %2871 = vmatprep.subr.mxu0 0.0
    %2872 = vmatpush1.msra.mxu0 0.0
    %2873 = vmatprep.subr.mxu0 0.0
    %2874 = vmatpush1.msra.mxu0 0.0
    %2875 = vmatprep.subr.mxu0 0.0
    %2876 = vmatpush1.msra.mxu0 0.0
    %2877 = vmatprep.subr.mxu0 0.0
    %2878 = vmatpush1.msra.mxu0 0.0
    %2879 = vmatprep.subr.mxu0 0.0
    %2880 = vmatpush1.msra.mxu0 0.0
    %2881 = vmatprep.subr.mxu0 0.0
    %2882 = vmatpush1.msra.mxu0 0.0
    %2883 = vmatprep.subr.mxu0 0.0
    %2884 = vmatpush1.msra.mxu0 %v611
    %2885 = vmatprep.subr.mxu0 0.0
    %2886 = vmatpush1.msra.mxu0 %v610
    %2887 = vmatprep.subr.mxu0 0.0
    %2888 = vmatpush1.msra.mxu0 %v609
    %2889 = vmatprep.subr.mxu0 0.0
    %2890 = vmatpush1.msra.mxu0 %v608
    %2891 = vmatprep.subr.mxu0 0.0
    %2892 = vmatpush2.msra.mxu0 0.0
    %2893 = vmatprep.subr.mxu0 0.0
    %2894 = vmatpush2.msra.mxu0 0.0
    %2895 = vmatprep.subr.mxu0 0.0
    %2896 = vmatpush2.msra.mxu0 0.0
    %2897 = vmatprep.subr.mxu0 0.0
    %2898 = vmatpush2.msra.mxu0 0.0
    %2899 = vmatprep.subr.mxu0 0.0
    %2900 = vmatpush2.msra.mxu0 0.0
    %2901 = vmatprep.subr.mxu0 0.0
    %2902 = vmatpush2.msra.mxu0 0.0
    %2903 = vmatprep.subr.mxu0 0.0
    %2904 = vmatpush2.msra.mxu0 0.0
    %2905 = vmatprep.subr.mxu0 0.0
    %2906 = vmatpush2.msra.mxu0 0.0
    %2907 = vmatprep.subr.mxu0 0.0
    %2908 = vmatpush2.msra.mxu0 0.0
    %2909 = vmatprep.subr.mxu0 0.0
    %2910 = vmatpush2.msra.mxu0 0.0
    %2911 = vmatprep.subr.mxu0 0.0
    %2912 = vmatpush2.msra.mxu0 0.0
    %2913 = vmatprep.subr.mxu0 0.0
    %2914 = vmatpush2.msra.mxu0 0.0
    %2915 = vmatprep.subr.mxu0 0.0
    %2916 = vmatpush2.msra.mxu0 0.0
    %2917 = vmatprep.subr.mxu0 0.0
    %2918 = vmatpush2.msra.mxu0 0.0
    %2919 = vmatprep.subr.mxu0 0.0
    %2920 = vmatpush2.msra.mxu0 0.0
    %2921 = vmatprep.subr.mxu0 0.0
    %2922 = vmatpush2.msra.mxu0 0.0
    %2923 = vmatprep.mubr.f32.mxu0 0.0
    %2924 = vmatmul.mubr.f32.gmra.mxu0 %v2636
    %v2925 = vpop.f32.mrf.mxu0
    %v2926 = vadd.f32 0.0, %v2925
    %v2927 = vpop.f32.mrf.mxu0
    %2928 = vdwg.mxu0
    %2930 = vrot.lane.b32.xlu0 %v2926, 96
    %v2931 = vpop.permute.xlu0 %2930
    %v2933 = vadd.f32 %v545, %v2931
    %v2934 = vxor.u32 %v2708, 2147483648
    %v2935 = vmul.f32 %v2934, 1.442695
    %v2936 = vpow.pop %v2935
    %v2937 = vadd.f32 %v2936, 1.0
    %v2938 = vrcp.pop %v2937
    %v2939 = vmul.f32 1.0, %v2938
    %v2940 = vxor.u32 %v2783, 2147483648
    %v2941 = vmul.f32 %v2940, 1.442695
    %v2942 = vpow.pop %v2941
    %v2943 = vadd.f32 %v2942, 1.0
    %v2944 = vrcp.pop %v2943
    %v2945 = vmul.f32 1.0, %v2944
    %v2946 = vtanh.pop %v2858
    %v2947 = vxor.u32 %v2933, 2147483648
    %v2948 = vmul.f32 %v2947, 1.442695
    %v2949 = vpow.pop %v2948
    %v2950 = vadd.f32 %v2949, 1.0
    %v2951 = vrcp.pop %v2950
    %v2952 = vmul.f32 1.0, %v2951
    %v2953 = vmul.f32 %v2945, %v2626
    %2955 = vrot.lane.b32.xlu0 %v2946, 64
    %v2956 = vpop.permute.xlu0 %2955
    %v2958 = vmul.f32 %v2939, %v2956
    %2960 = vrot.lane.b32.xlu0 %v2958, 32
    %v2961 = vpop.permute.xlu0 %2960
    %v2963 = vadd.f32 %v2953, %v2961
    %v2964 = vtanh.pop %v2963
    %2966 = vrot.lane.b32.xlu0 %v2964, 64
    %v2967 = vpop.permute.xlu0 %2966
    %v2969 = vmul.f32 %v2952, %v2967
    %2971 = vrot.lane.b32.xlu0 %v2969, 32
    %v2972 = vpop.permute.xlu0 %2971
    %v2973 = vsel %vm612, %v2972, 0
    %2975 = vmatprep.subr.mxu0 0.0
    %2976 = vmatpush1.msra.mxu0 0.0
    %2977 = vmatprep.subr.mxu0 0.0
    %2978 = vmatpush1.msra.mxu0 0.0
    %2979 = vmatprep.subr.mxu0 0.0
    %2980 = vmatpush1.msra.mxu0 0.0
    %2981 = vmatprep.subr.mxu0 0.0
    %2982 = vmatpush1.msra.mxu0 0.0
    %2983 = vmatprep.subr.mxu0 0.0
    %2984 = vmatpush1.msra.mxu0 0.0
    %2985 = vmatprep.subr.mxu0 0.0
    %2986 = vmatpush1.msra.mxu0 0.0
    %2987 = vmatprep.subr.mxu0 0.0
    %2988 = vmatpush1.msra.mxu0 0.0
    %2989 = vmatprep.subr.mxu0 0.0
    %2990 = vmatpush1.msra.mxu0 0.0
    %2991 = vmatprep.subr.mxu0 0.0
    %2992 = vmatpush1.msra.mxu0 0.0
    %2993 = vmatprep.subr.mxu0 0.0
    %2994 = vmatpush1.msra.mxu0 0.0
    %2995 = vmatprep.subr.mxu0 0.0
    %2996 = vmatpush1.msra.mxu0 0.0
    %2997 = vmatprep.subr.mxu0 0.0
    %2998 = vmatpush1.msra.mxu0 0.0
    %2999 = vmatprep.subr.mxu0 0.0
    %3000 = vmatpush1.msra.mxu0 %v596
    %3001 = vmatprep.subr.mxu0 0.0
    %3002 = vmatpush1.msra.mxu0 %v595
    %3003 = vmatprep.subr.mxu0 0.0
    %3004 = vmatpush1.msra.mxu0 %v594
    %3005 = vmatprep.subr.mxu0 0.0
    %3006 = vmatpush1.msra.mxu0 %v593
    %3007 = vmatprep.subr.mxu0 0.0
    %3008 = vmatpush2.msra.mxu0 0.0
    %3009 = vmatprep.subr.mxu0 0.0
    %3010 = vmatpush2.msra.mxu0 0.0
    %3011 = vmatprep.subr.mxu0 0.0
    %3012 = vmatpush2.msra.mxu0 0.0
    %3013 = vmatprep.subr.mxu0 0.0
    %3014 = vmatpush2.msra.mxu0 0.0
    %3015 = vmatprep.subr.mxu0 0.0
    %3016 = vmatpush2.msra.mxu0 0.0
    %3017 = vmatprep.subr.mxu0 0.0
    %3018 = vmatpush2.msra.mxu0 0.0
    %3019 = vmatprep.subr.mxu0 0.0
    %3020 = vmatpush2.msra.mxu0 0.0
    %3021 = vmatprep.subr.mxu0 0.0
    %3022 = vmatpush2.msra.mxu0 0.0
    %3023 = vmatprep.subr.mxu0 0.0
    %3024 = vmatpush2.msra.mxu0 0.0
    %3025 = vmatprep.subr.mxu0 0.0
    %3026 = vmatpush2.msra.mxu0 0.0
    %3027 = vmatprep.subr.mxu0 0.0
    %3028 = vmatpush2.msra.mxu0 0.0
    %3029 = vmatprep.subr.mxu0 0.0
    %3030 = vmatpush2.msra.mxu0 0.0
    %3031 = vmatprep.subr.mxu0 0.0
    %3032 = vmatpush2.msra.mxu0 0.0
    %3033 = vmatprep.subr.mxu0 0.0
    %3034 = vmatpush2.msra.mxu0 0.0
    %3035 = vmatprep.subr.mxu0 0.0
    %3036 = vmatpush2.msra.mxu0 0.0
    %3037 = vmatprep.subr.mxu0 0.0
    %3038 = vmatpush2.msra.mxu0 0.0
    %3039 = vmatprep.mubr.f32.mxu0 0.0
    %3040 = vmatmul.mubr.f32.gmra.mxu0 %v2973
    %v3041 = vpop.f32.mrf.mxu0
    %v3042 = vadd.f32 0.0, %v3041
    %v3043 = vpop.f32.mrf.mxu0
    %3044 = vdwg.mxu0
    %v3045 = vadd.f32 %v550, %v3042
    %3046 = vmatprep.subr.mxu0 0.0
    %3047 = vmatpush1.msra.mxu0 0.0
    %3048 = vmatprep.subr.mxu0 0.0
    %3049 = vmatpush1.msra.mxu0 0.0
    %3050 = vmatprep.subr.mxu0 0.0
    %3051 = vmatpush1.msra.mxu0 0.0
    %3052 = vmatprep.subr.mxu0 0.0
    %3053 = vmatpush1.msra.mxu0 0.0
    %3054 = vmatprep.subr.mxu0 0.0
    %3055 = vmatpush1.msra.mxu0 0.0
    %3056 = vmatprep.subr.mxu0 0.0
    %3057 = vmatpush1.msra.mxu0 0.0
    %3058 = vmatprep.subr.mxu0 0.0
    %3059 = vmatpush1.msra.mxu0 0.0
    %3060 = vmatprep.subr.mxu0 0.0
    %3061 = vmatpush1.msra.mxu0 0.0
    %3062 = vmatprep.subr.mxu0 0.0
    %3063 = vmatpush1.msra.mxu0 0.0
    %3064 = vmatprep.subr.mxu0 0.0
    %3065 = vmatpush1.msra.mxu0 0.0
    %3066 = vmatprep.subr.mxu0 0.0
    %3067 = vmatpush1.msra.mxu0 0.0
    %3068 = vmatprep.subr.mxu0 0.0
    %3069 = vmatpush1.msra.mxu0 0.0
    %3070 = vmatprep.subr.mxu0 0.0
    %3071 = vmatpush1.msra.mxu0 %v601
    %3072 = vmatprep.subr.mxu0 0.0
    %3073 = vmatpush1.msra.mxu0 %v600
    %3074 = vmatprep.subr.mxu0 0.0
    %3075 = vmatpush1.msra.mxu0 %v599
    %3076 = vmatprep.subr.mxu0 0.0
    %3077 = vmatpush1.msra.mxu0 %v598
    %3078 = vmatprep.subr.mxu0 0.0
    %3079 = vmatpush2.msra.mxu0 0.0
    %3080 = vmatprep.subr.mxu0 0.0
    %3081 = vmatpush2.msra.mxu0 0.0
    %3082 = vmatprep.subr.mxu0 0.0
    %3083 = vmatpush2.msra.mxu0 0.0
    %3084 = vmatprep.subr.mxu0 0.0
    %3085 = vmatpush2.msra.mxu0 0.0
    %3086 = vmatprep.subr.mxu0 0.0
    %3087 = vmatpush2.msra.mxu0 0.0
    %3088 = vmatprep.subr.mxu0 0.0
    %3089 = vmatpush2.msra.mxu0 0.0
    %3090 = vmatprep.subr.mxu0 0.0
    %3091 = vmatpush2.msra.mxu0 0.0
    %3092 = vmatprep.subr.mxu0 0.0
    %3093 = vmatpush2.msra.mxu0 0.0
    %3094 = vmatprep.subr.mxu0 0.0
    %3095 = vmatpush2.msra.mxu0 0.0
    %3096 = vmatprep.subr.mxu0 0.0
    %3097 = vmatpush2.msra.mxu0 0.0
    %3098 = vmatprep.subr.mxu0 0.0
    %3099 = vmatpush2.msra.mxu0 0.0
    %3100 = vmatprep.subr.mxu0 0.0
    %3101 = vmatpush2.msra.mxu0 0.0
    %3102 = vmatprep.subr.mxu0 0.0
    %3103 = vmatpush2.msra.mxu0 0.0
    %3104 = vmatprep.subr.mxu0 0.0
    %3105 = vmatpush2.msra.mxu0 0.0
    %3106 = vmatprep.subr.mxu0 0.0
    %3107 = vmatpush2.msra.mxu0 0.0
    %3108 = vmatprep.subr.mxu0 0.0
    %3109 = vmatpush2.msra.mxu0 0.0
    %3110 = vmatprep.mubr.f32.mxu0 0.0
    %3111 = vmatmul.mubr.f32.gmra.mxu0 %v2973
    %v3112 = vpop.f32.mrf.mxu0
    %v3113 = vadd.f32 0.0, %v3112
    %v3114 = vpop.f32.mrf.mxu0
    %3115 = vdwg.mxu0
    %3117 = vrot.lane.b32.xlu0 %v3113, 32
    %v3118 = vpop.permute.xlu0 %3117
    %v3120 = vadd.f32 %v550, %v3118
    %3121 = vmatprep.subr.mxu0 0.0
    %3122 = vmatpush1.msra.mxu0 0.0
    %3123 = vmatprep.subr.mxu0 0.0
    %3124 = vmatpush1.msra.mxu0 0.0
    %3125 = vmatprep.subr.mxu0 0.0
    %3126 = vmatpush1.msra.mxu0 0.0
    %3127 = vmatprep.subr.mxu0 0.0
    %3128 = vmatpush1.msra.mxu0 0.0
    %3129 = vmatprep.subr.mxu0 0.0
    %3130 = vmatpush1.msra.mxu0 0.0
    %3131 = vmatprep.subr.mxu0 0.0
    %3132 = vmatpush1.msra.mxu0 0.0
    %3133 = vmatprep.subr.mxu0 0.0
    %3134 = vmatpush1.msra.mxu0 0.0
    %3135 = vmatprep.subr.mxu0 0.0
    %3136 = vmatpush1.msra.mxu0 0.0
    %3137 = vmatprep.subr.mxu0 0.0
    %3138 = vmatpush1.msra.mxu0 0.0
    %3139 = vmatprep.subr.mxu0 0.0
    %3140 = vmatpush1.msra.mxu0 0.0
    %3141 = vmatprep.subr.mxu0 0.0
    %3142 = vmatpush1.msra.mxu0 0.0
    %3143 = vmatprep.subr.mxu0 0.0
    %3144 = vmatpush1.msra.mxu0 0.0
    %3145 = vmatprep.subr.mxu0 0.0
    %3146 = vmatpush1.msra.mxu0 %v606
    %3147 = vmatprep.subr.mxu0 0.0
    %3148 = vmatpush1.msra.mxu0 %v605
    %3149 = vmatprep.subr.mxu0 0.0
    %3150 = vmatpush1.msra.mxu0 %v604
    %3151 = vmatprep.subr.mxu0 0.0
    %3152 = vmatpush1.msra.mxu0 %v603
    %3153 = vmatprep.subr.mxu0 0.0
    %3154 = vmatpush2.msra.mxu0 0.0
    %3155 = vmatprep.subr.mxu0 0.0
    %3156 = vmatpush2.msra.mxu0 0.0
    %3157 = vmatprep.subr.mxu0 0.0
    %3158 = vmatpush2.msra.mxu0 0.0
    %3159 = vmatprep.subr.mxu0 0.0
    %3160 = vmatpush2.msra.mxu0 0.0
    %3161 = vmatprep.subr.mxu0 0.0
    %3162 = vmatpush2.msra.mxu0 0.0
    %3163 = vmatprep.subr.mxu0 0.0
    %3164 = vmatpush2.msra.mxu0 0.0
    %3165 = vmatprep.subr.mxu0 0.0
    %3166 = vmatpush2.msra.mxu0 0.0
    %3167 = vmatprep.subr.mxu0 0.0
    %3168 = vmatpush2.msra.mxu0 0.0
    %3169 = vmatprep.subr.mxu0 0.0
    %3170 = vmatpush2.msra.mxu0 0.0
    %3171 = vmatprep.subr.mxu0 0.0
    %3172 = vmatpush2.msra.mxu0 0.0
    %3173 = vmatprep.subr.mxu0 0.0
    %3174 = vmatpush2.msra.mxu0 0.0
    %3175 = vmatprep.subr.mxu0 0.0
    %3176 = vmatpush2.msra.mxu0 0.0
    %3177 = vmatprep.subr.mxu0 0.0
    %3178 = vmatpush2.msra.mxu0 0.0
    %3179 = vmatprep.subr.mxu0 0.0
    %3180 = vmatpush2.msra.mxu0 0.0
    %3181 = vmatprep.subr.mxu0 0.0
    %3182 = vmatpush2.msra.mxu0 0.0
    %3183 = vmatprep.subr.mxu0 0.0
    %3184 = vmatpush2.msra.mxu0 0.0
    %3185 = vmatprep.mubr.f32.mxu0 0.0
    %3186 = vmatmul.mubr.f32.gmra.mxu0 %v2973
    %v3187 = vpop.f32.mrf.mxu0
    %v3188 = vadd.f32 0.0, %v3187
    %v3189 = vpop.f32.mrf.mxu0
    %3190 = vdwg.mxu0
    %3192 = vrot.lane.b32.xlu0 %v3188, 64
    %v3193 = vpop.permute.xlu0 %3192
    %v3195 = vadd.f32 %v550, %v3193
    %3196 = vmatprep.subr.mxu0 0.0
    %3197 = vmatpush1.msra.mxu0 0.0
    %3198 = vmatprep.subr.mxu0 0.0
    %3199 = vmatpush1.msra.mxu0 0.0
    %3200 = vmatprep.subr.mxu0 0.0
    %3201 = vmatpush1.msra.mxu0 0.0
    %3202 = vmatprep.subr.mxu0 0.0
    %3203 = vmatpush1.msra.mxu0 0.0
    %3204 = vmatprep.subr.mxu0 0.0
    %3205 = vmatpush1.msra.mxu0 0.0
    %3206 = vmatprep.subr.mxu0 0.0
    %3207 = vmatpush1.msra.mxu0 0.0
    %3208 = vmatprep.subr.mxu0 0.0
    %3209 = vmatpush1.msra.mxu0 0.0
    %3210 = vmatprep.subr.mxu0 0.0
    %3211 = vmatpush1.msra.mxu0 0.0
    %3212 = vmatprep.subr.mxu0 0.0
    %3213 = vmatpush1.msra.mxu0 0.0
    %3214 = vmatprep.subr.mxu0 0.0
    %3215 = vmatpush1.msra.mxu0 0.0
    %3216 = vmatprep.subr.mxu0 0.0
    %3217 = vmatpush1.msra.mxu0 0.0
    %3218 = vmatprep.subr.mxu0 0.0
    %3219 = vmatpush1.msra.mxu0 0.0
    %3220 = vmatprep.subr.mxu0 0.0
    %3221 = vmatpush1.msra.mxu0 %v611
    %3222 = vmatprep.subr.mxu0 0.0
    %3223 = vmatpush1.msra.mxu0 %v610
    %3224 = vmatprep.subr.mxu0 0.0
    %3225 = vmatpush1.msra.mxu0 %v609
    %3226 = vmatprep.subr.mxu0 0.0
    %3227 = vmatpush1.msra.mxu0 %v608
    %3228 = vmatprep.subr.mxu0 0.0
    %3229 = vmatpush2.msra.mxu0 0.0
    %3230 = vmatprep.subr.mxu0 0.0
    %3231 = vmatpush2.msra.mxu0 0.0
    %3232 = vmatprep.subr.mxu0 0.0
    %3233 = vmatpush2.msra.mxu0 0.0
    %3234 = vmatprep.subr.mxu0 0.0
    %3235 = vmatpush2.msra.mxu0 0.0
    %3236 = vmatprep.subr.mxu0 0.0
    %3237 = vmatpush2.msra.mxu0 0.0
    %3238 = vmatprep.subr.mxu0 0.0
    %3239 = vmatpush2.msra.mxu0 0.0
    %3240 = vmatprep.subr.mxu0 0.0
    %3241 = vmatpush2.msra.mxu0 0.0
    %3242 = vmatprep.subr.mxu0 0.0
    %3243 = vmatpush2.msra.mxu0 0.0
    %3244 = vmatprep.subr.mxu0 0.0
    %3245 = vmatpush2.msra.mxu0 0.0
    %3246 = vmatprep.subr.mxu0 0.0
    %3247 = vmatpush2.msra.mxu0 0.0
    %3248 = vmatprep.subr.mxu0 0.0
    %3249 = vmatpush2.msra.mxu0 0.0
    %3250 = vmatprep.subr.mxu0 0.0
    %3251 = vmatpush2.msra.mxu0 0.0
    %3252 = vmatprep.subr.mxu0 0.0
    %3253 = vmatpush2.msra.mxu0 0.0
    %3254 = vmatprep.subr.mxu0 0.0
    %3255 = vmatpush2.msra.mxu0 0.0
    %3256 = vmatprep.subr.mxu0 0.0
    %3257 = vmatpush2.msra.mxu0 0.0
    %3258 = vmatprep.subr.mxu0 0.0
    %3259 = vmatpush2.msra.mxu0 0.0
    %3260 = vmatprep.mubr.f32.mxu0 0.0
    %3261 = vmatmul.mubr.f32.gmra.mxu0 %v2973
    %v3262 = vpop.f32.mrf.mxu0
    %v3263 = vadd.f32 0.0, %v3262
    %v3264 = vpop.f32.mrf.mxu0
    %3265 = vdwg.mxu0
    %3267 = vrot.lane.b32.xlu0 %v3263, 96
    %v3268 = vpop.permute.xlu0 %3267
    %v3270 = vadd.f32 %v550, %v3268
    %v3271 = vxor.u32 %v3045, 2147483648
    %v3272 = vmul.f32 %v3271, 1.442695
    %v3273 = vpow.pop %v3272
    %v3274 = vadd.f32 %v3273, 1.0
    %v3275 = vrcp.pop %v3274
    %v3276 = vmul.f32 1.0, %v3275
    %v3277 = vxor.u32 %v3120, 2147483648
    %v3278 = vmul.f32 %v3277, 1.442695
    %v3279 = vpow.pop %v3278
    %v3280 = vadd.f32 %v3279, 1.0
    %v3281 = vrcp.pop %v3280
    %v3282 = vmul.f32 1.0, %v3281
    %v3283 = vtanh.pop %v3195
    %v3284 = vxor.u32 %v3270, 2147483648
    %v3285 = vmul.f32 %v3284, 1.442695
    %v3286 = vpow.pop %v3285
    %v3287 = vadd.f32 %v3286, 1.0
    %v3288 = vrcp.pop %v3287
    %v3289 = vmul.f32 1.0, %v3288
    %v3290 = vmul.f32 %v3282, %v2963
    %3292 = vrot.lane.b32.xlu0 %v3283, 64
    %v3293 = vpop.permute.xlu0 %3292
    %v3295 = vmul.f32 %v3276, %v3293
    %3297 = vrot.lane.b32.xlu0 %v3295, 32
    %v3298 = vpop.permute.xlu0 %3297
    %v3300 = vadd.f32 %v3290, %v3298
    %v3301 = vtanh.pop %v3300
    %3303 = vrot.lane.b32.xlu0 %v3301, 64
    %v3304 = vpop.permute.xlu0 %3303
    %v3306 = vmul.f32 %v3289, %v3304
    %3308 = vrot.lane.b32.xlu0 %v3306, 32
    %v3309 = vpop.permute.xlu0 %3308
    %v3310 = vsel %vm612, %v3309, 0
    %3312 = vmatprep.subr.mxu0 0.0
    %3313 = vmatpush1.msra.mxu0 0.0
    %3314 = vmatprep.subr.mxu0 0.0
    %3315 = vmatpush1.msra.mxu0 0.0
    %3316 = vmatprep.subr.mxu0 0.0
    %3317 = vmatpush1.msra.mxu0 0.0
    %3318 = vmatprep.subr.mxu0 0.0
    %3319 = vmatpush1.msra.mxu0 0.0
    %3320 = vmatprep.subr.mxu0 0.0
    %3321 = vmatpush1.msra.mxu0 0.0
    %3322 = vmatprep.subr.mxu0 0.0
    %3323 = vmatpush1.msra.mxu0 0.0
    %3324 = vmatprep.subr.mxu0 0.0
    %3325 = vmatpush1.msra.mxu0 0.0
    %3326 = vmatprep.subr.mxu0 0.0
    %3327 = vmatpush1.msra.mxu0 0.0
    %3328 = vmatprep.subr.mxu0 0.0
    %3329 = vmatpush1.msra.mxu0 0.0
    %3330 = vmatprep.subr.mxu0 0.0
    %3331 = vmatpush1.msra.mxu0 0.0
    %3332 = vmatprep.subr.mxu0 0.0
    %3333 = vmatpush1.msra.mxu0 0.0
    %3334 = vmatprep.subr.mxu0 0.0
    %3335 = vmatpush1.msra.mxu0 0.0
    %3336 = vmatprep.subr.mxu0 0.0
    %3337 = vmatpush1.msra.mxu0 %v596
    %3338 = vmatprep.subr.mxu0 0.0
    %3339 = vmatpush1.msra.mxu0 %v595
    %3340 = vmatprep.subr.mxu0 0.0
    %3341 = vmatpush1.msra.mxu0 %v594
    %3342 = vmatprep.subr.mxu0 0.0
    %3343 = vmatpush1.msra.mxu0 %v593
    %3344 = vmatprep.subr.mxu0 0.0
    %3345 = vmatpush2.msra.mxu0 0.0
    %3346 = vmatprep.subr.mxu0 0.0
    %3347 = vmatpush2.msra.mxu0 0.0
    %3348 = vmatprep.subr.mxu0 0.0
    %3349 = vmatpush2.msra.mxu0 0.0
    %3350 = vmatprep.subr.mxu0 0.0
    %3351 = vmatpush2.msra.mxu0 0.0
    %3352 = vmatprep.subr.mxu0 0.0
    %3353 = vmatpush2.msra.mxu0 0.0
    %3354 = vmatprep.subr.mxu0 0.0
    %3355 = vmatpush2.msra.mxu0 0.0
    %3356 = vmatprep.subr.mxu0 0.0
    %3357 = vmatpush2.msra.mxu0 0.0
    %3358 = vmatprep.subr.mxu0 0.0
    %3359 = vmatpush2.msra.mxu0 0.0
    %3360 = vmatprep.subr.mxu0 0.0
    %3361 = vmatpush2.msra.mxu0 0.0
    %3362 = vmatprep.subr.mxu0 0.0
    %3363 = vmatpush2.msra.mxu0 0.0
    %3364 = vmatprep.subr.mxu0 0.0
    %3365 = vmatpush2.msra.mxu0 0.0
    %3366 = vmatprep.subr.mxu0 0.0
    %3367 = vmatpush2.msra.mxu0 0.0
    %3368 = vmatprep.subr.mxu0 0.0
    %3369 = vmatpush2.msra.mxu0 0.0
    %3370 = vmatprep.subr.mxu0 0.0
    %3371 = vmatpush2.msra.mxu0 0.0
    %3372 = vmatprep.subr.mxu0 0.0
    %3373 = vmatpush2.msra.mxu0 0.0
    %3374 = vmatprep.subr.mxu0 0.0
    %3375 = vmatpush2.msra.mxu0 0.0
    %3376 = vmatprep.mubr.f32.mxu0 0.0
    %3377 = vmatmul.mubr.f32.gmra.mxu0 %v3310
    %v3378 = vpop.f32.mrf.mxu0
    %v3379 = vadd.f32 0.0, %v3378
    %v3380 = vpop.f32.mrf.mxu0
    %3381 = vdwg.mxu0
    %v3382 = vadd.f32 %v555, %v3379
    %3383 = vmatprep.subr.mxu0 0.0
    %3384 = vmatpush1.msra.mxu0 0.0
    %3385 = vmatprep.subr.mxu0 0.0
    %3386 = vmatpush1.msra.mxu0 0.0
    %3387 = vmatprep.subr.mxu0 0.0
    %3388 = vmatpush1.msra.mxu0 0.0
    %3389 = vmatprep.subr.mxu0 0.0
    %3390 = vmatpush1.msra.mxu0 0.0
    %3391 = vmatprep.subr.mxu0 0.0
    %3392 = vmatpush1.msra.mxu0 0.0
    %3393 = vmatprep.subr.mxu0 0.0
    %3394 = vmatpush1.msra.mxu0 0.0
    %3395 = vmatprep.subr.mxu0 0.0
    %3396 = vmatpush1.msra.mxu0 0.0
    %3397 = vmatprep.subr.mxu0 0.0
    %3398 = vmatpush1.msra.mxu0 0.0
    %3399 = vmatprep.subr.mxu0 0.0
    %3400 = vmatpush1.msra.mxu0 0.0
    %3401 = vmatprep.subr.mxu0 0.0
    %3402 = vmatpush1.msra.mxu0 0.0
    %3403 = vmatprep.subr.mxu0 0.0
    %3404 = vmatpush1.msra.mxu0 0.0
    %3405 = vmatprep.subr.mxu0 0.0
    %3406 = vmatpush1.msra.mxu0 0.0
    %3407 = vmatprep.subr.mxu0 0.0
    %3408 = vmatpush1.msra.mxu0 %v601
    %3409 = vmatprep.subr.mxu0 0.0
    %3410 = vmatpush1.msra.mxu0 %v600
    %3411 = vmatprep.subr.mxu0 0.0
    %3412 = vmatpush1.msra.mxu0 %v599
    %3413 = vmatprep.subr.mxu0 0.0
    %3414 = vmatpush1.msra.mxu0 %v598
    %3415 = vmatprep.subr.mxu0 0.0
    %3416 = vmatpush2.msra.mxu0 0.0
    %3417 = vmatprep.subr.mxu0 0.0
    %3418 = vmatpush2.msra.mxu0 0.0
    %3419 = vmatprep.subr.mxu0 0.0
    %3420 = vmatpush2.msra.mxu0 0.0
    %3421 = vmatprep.subr.mxu0 0.0
    %3422 = vmatpush2.msra.mxu0 0.0
    %3423 = vmatprep.subr.mxu0 0.0
    %3424 = vmatpush2.msra.mxu0 0.0
    %3425 = vmatprep.subr.mxu0 0.0
    %3426 = vmatpush2.msra.mxu0 0.0
    %3427 = vmatprep.subr.mxu0 0.0
    %3428 = vmatpush2.msra.mxu0 0.0
    %3429 = vmatprep.subr.mxu0 0.0
    %3430 = vmatpush2.msra.mxu0 0.0
    %3431 = vmatprep.subr.mxu0 0.0
    %3432 = vmatpush2.msra.mxu0 0.0
    %3433 = vmatprep.subr.mxu0 0.0
    %3434 = vmatpush2.msra.mxu0 0.0
    %3435 = vmatprep.subr.mxu0 0.0
    %3436 = vmatpush2.msra.mxu0 0.0
    %3437 = vmatprep.subr.mxu0 0.0
    %3438 = vmatpush2.msra.mxu0 0.0
    %3439 = vmatprep.subr.mxu0 0.0
    %3440 = vmatpush2.msra.mxu0 0.0
    %3441 = vmatprep.subr.mxu0 0.0
    %3442 = vmatpush2.msra.mxu0 0.0
    %3443 = vmatprep.subr.mxu0 0.0
    %3444 = vmatpush2.msra.mxu0 0.0
    %3445 = vmatprep.subr.mxu0 0.0
    %3446 = vmatpush2.msra.mxu0 0.0
    %3447 = vmatprep.mubr.f32.mxu0 0.0
    %3448 = vmatmul.mubr.f32.gmra.mxu0 %v3310
    %v3449 = vpop.f32.mrf.mxu0
    %v3450 = vadd.f32 0.0, %v3449
    %v3451 = vpop.f32.mrf.mxu0
    %3452 = vdwg.mxu0
    %3454 = vrot.lane.b32.xlu0 %v3450, 32
    %v3455 = vpop.permute.xlu0 %3454
    %v3457 = vadd.f32 %v555, %v3455
    %3458 = vmatprep.subr.mxu0 0.0
    %3459 = vmatpush1.msra.mxu0 0.0
    %3460 = vmatprep.subr.mxu0 0.0
    %3461 = vmatpush1.msra.mxu0 0.0
    %3462 = vmatprep.subr.mxu0 0.0
    %3463 = vmatpush1.msra.mxu0 0.0
    %3464 = vmatprep.subr.mxu0 0.0
    %3465 = vmatpush1.msra.mxu0 0.0
    %3466 = vmatprep.subr.mxu0 0.0
    %3467 = vmatpush1.msra.mxu0 0.0
    %3468 = vmatprep.subr.mxu0 0.0
    %3469 = vmatpush1.msra.mxu0 0.0
    %3470 = vmatprep.subr.mxu0 0.0
    %3471 = vmatpush1.msra.mxu0 0.0
    %3472 = vmatprep.subr.mxu0 0.0
    %3473 = vmatpush1.msra.mxu0 0.0
    %3474 = vmatprep.subr.mxu0 0.0
    %3475 = vmatpush1.msra.mxu0 0.0
    %3476 = vmatprep.subr.mxu0 0.0
    %3477 = vmatpush1.msra.mxu0 0.0
    %3478 = vmatprep.subr.mxu0 0.0
    %3479 = vmatpush1.msra.mxu0 0.0
    %3480 = vmatprep.subr.mxu0 0.0
    %3481 = vmatpush1.msra.mxu0 0.0
    %3482 = vmatprep.subr.mxu0 0.0
    %3483 = vmatpush1.msra.mxu0 %v606
    %3484 = vmatprep.subr.mxu0 0.0
    %3485 = vmatpush1.msra.mxu0 %v605
    %3486 = vmatprep.subr.mxu0 0.0
    %3487 = vmatpush1.msra.mxu0 %v604
    %3488 = vmatprep.subr.mxu0 0.0
    %3489 = vmatpush1.msra.mxu0 %v603
    %3490 = vmatprep.subr.mxu0 0.0
    %3491 = vmatpush2.msra.mxu0 0.0
    %3492 = vmatprep.subr.mxu0 0.0
    %3493 = vmatpush2.msra.mxu0 0.0
    %3494 = vmatprep.subr.mxu0 0.0
    %3495 = vmatpush2.msra.mxu0 0.0
    %3496 = vmatprep.subr.mxu0 0.0
    %3497 = vmatpush2.msra.mxu0 0.0
    %3498 = vmatprep.subr.mxu0 0.0
    %3499 = vmatpush2.msra.mxu0 0.0
    %3500 = vmatprep.subr.mxu0 0.0
    %3501 = vmatpush2.msra.mxu0 0.0
    %3502 = vmatprep.subr.mxu0 0.0
    %3503 = vmatpush2.msra.mxu0 0.0
    %3504 = vmatprep.subr.mxu0 0.0
    %3505 = vmatpush2.msra.mxu0 0.0
    %3506 = vmatprep.subr.mxu0 0.0
    %3507 = vmatpush2.msra.mxu0 0.0
    %3508 = vmatprep.subr.mxu0 0.0
    %3509 = vmatpush2.msra.mxu0 0.0
    %3510 = vmatprep.subr.mxu0 0.0
    %3511 = vmatpush2.msra.mxu0 0.0
    %3512 = vmatprep.subr.mxu0 0.0
    %3513 = vmatpush2.msra.mxu0 0.0
    %3514 = vmatprep.subr.mxu0 0.0
    %3515 = vmatpush2.msra.mxu0 0.0
    %3516 = vmatprep.subr.mxu0 0.0
    %3517 = vmatpush2.msra.mxu0 0.0
    %3518 = vmatprep.subr.mxu0 0.0
    %3519 = vmatpush2.msra.mxu0 0.0
    %3520 = vmatprep.subr.mxu0 0.0
    %3521 = vmatpush2.msra.mxu0 0.0
    %3522 = vmatprep.mubr.f32.mxu0 0.0
    %3523 = vmatmul.mubr.f32.gmra.mxu0 %v3310
    %v3524 = vpop.f32.mrf.mxu0
    %v3525 = vadd.f32 0.0, %v3524
    %v3526 = vpop.f32.mrf.mxu0
    %3527 = vdwg.mxu0
    %3529 = vrot.lane.b32.xlu0 %v3525, 64
    %v3530 = vpop.permute.xlu0 %3529
    %v3532 = vadd.f32 %v555, %v3530
    %3533 = vmatprep.subr.mxu0 0.0
    %3534 = vmatpush1.msra.mxu0 0.0
    %3535 = vmatprep.subr.mxu0 0.0
    %3536 = vmatpush1.msra.mxu0 0.0
    %3537 = vmatprep.subr.mxu0 0.0
    %3538 = vmatpush1.msra.mxu0 0.0
    %3539 = vmatprep.subr.mxu0 0.0
    %3540 = vmatpush1.msra.mxu0 0.0
    %3541 = vmatprep.subr.mxu0 0.0
    %3542 = vmatpush1.msra.mxu0 0.0
    %3543 = vmatprep.subr.mxu0 0.0
    %3544 = vmatpush1.msra.mxu0 0.0
    %3545 = vmatprep.subr.mxu0 0.0
    %3546 = vmatpush1.msra.mxu0 0.0
    %3547 = vmatprep.subr.mxu0 0.0
    %3548 = vmatpush1.msra.mxu0 0.0
    %3549 = vmatprep.subr.mxu0 0.0
    %3550 = vmatpush1.msra.mxu0 0.0
    %3551 = vmatprep.subr.mxu0 0.0
    %3552 = vmatpush1.msra.mxu0 0.0
    %3553 = vmatprep.subr.mxu0 0.0
    %3554 = vmatpush1.msra.mxu0 0.0
    %3555 = vmatprep.subr.mxu0 0.0
    %3556 = vmatpush1.msra.mxu0 0.0
    %3557 = vmatprep.subr.mxu0 0.0
    %3558 = vmatpush1.msra.mxu0 %v611
    %3559 = vmatprep.subr.mxu0 0.0
    %3560 = vmatpush1.msra.mxu0 %v610
    %3561 = vmatprep.subr.mxu0 0.0
    %3562 = vmatpush1.msra.mxu0 %v609
    %3563 = vmatprep.subr.mxu0 0.0
    %3564 = vmatpush1.msra.mxu0 %v608
    %3565 = vmatprep.subr.mxu0 0.0
    %3566 = vmatpush2.msra.mxu0 0.0
    %3567 = vmatprep.subr.mxu0 0.0
    %3568 = vmatpush2.msra.mxu0 0.0
    %3569 = vmatprep.subr.mxu0 0.0
    %3570 = vmatpush2.msra.mxu0 0.0
    %3571 = vmatprep.subr.mxu0 0.0
    %3572 = vmatpush2.msra.mxu0 0.0
    %3573 = vmatprep.subr.mxu0 0.0
    %3574 = vmatpush2.msra.mxu0 0.0
    %3575 = vmatprep.subr.mxu0 0.0
    %3576 = vmatpush2.msra.mxu0 0.0
    %3577 = vmatprep.subr.mxu0 0.0
    %3578 = vmatpush2.msra.mxu0 0.0
    %3579 = vmatprep.subr.mxu0 0.0
    %3580 = vmatpush2.msra.mxu0 0.0
    %3581 = vmatprep.subr.mxu0 0.0
    %3582 = vmatpush2.msra.mxu0 0.0
    %3583 = vmatprep.subr.mxu0 0.0
    %3584 = vmatpush2.msra.mxu0 0.0
    %3585 = vmatprep.subr.mxu0 0.0
    %3586 = vmatpush2.msra.mxu0 0.0
    %3587 = vmatprep.subr.mxu0 0.0
    %3588 = vmatpush2.msra.mxu0 0.0
    %3589 = vmatprep.subr.mxu0 0.0
    %3590 = vmatpush2.msra.mxu0 0.0
    %3591 = vmatprep.subr.mxu0 0.0
    %3592 = vmatpush2.msra.mxu0 0.0
    %3593 = vmatprep.subr.mxu0 0.0
    %3594 = vmatpush2.msra.mxu0 0.0
    %3595 = vmatprep.subr.mxu0 0.0
    %3596 = vmatpush2.msra.mxu0 0.0
    %3597 = vmatprep.mubr.f32.mxu0 0.0
    %3598 = vmatmul.mubr.f32.gmra.mxu0 %v3310
    %v3599 = vpop.f32.mrf.mxu0
    %v3600 = vadd.f32 0.0, %v3599
    %v3601 = vpop.f32.mrf.mxu0
    %3602 = vdwg.mxu0
    %3604 = vrot.lane.b32.xlu0 %v3600, 96
    %v3605 = vpop.permute.xlu0 %3604
    %v3607 = vadd.f32 %v555, %v3605
    %v3608 = vxor.u32 %v3382, 2147483648
    %v3609 = vmul.f32 %v3608, 1.442695
    %v3610 = vpow.pop %v3609
    %v3611 = vadd.f32 %v3610, 1.0
    %v3612 = vrcp.pop %v3611
    %v3613 = vmul.f32 1.0, %v3612
    %v3614 = vxor.u32 %v3457, 2147483648
    %v3615 = vmul.f32 %v3614, 1.442695
    %v3616 = vpow.pop %v3615
    %v3617 = vadd.f32 %v3616, 1.0
    %v3618 = vrcp.pop %v3617
    %v3619 = vmul.f32 1.0, %v3618
    %v3620 = vtanh.pop %v3532
    %v3621 = vxor.u32 %v3607, 2147483648
    %v3622 = vmul.f32 %v3621, 1.442695
    %v3623 = vpow.pop %v3622
    %v3624 = vadd.f32 %v3623, 1.0
    %v3625 = vrcp.pop %v3624
    %v3626 = vmul.f32 1.0, %v3625
    %v3627 = vmul.f32 %v3619, %v3300
    %3629 = vrot.lane.b32.xlu0 %v3620, 64
    %v3630 = vpop.permute.xlu0 %3629
    %v3632 = vmul.f32 %v3613, %v3630
    %3634 = vrot.lane.b32.xlu0 %v3632, 32
    %v3635 = vpop.permute.xlu0 %3634
    %v3637 = vadd.f32 %v3627, %v3635
    %v3638 = vtanh.pop %v3637
    %3640 = vrot.lane.b32.xlu0 %v3638, 64
    %v3641 = vpop.permute.xlu0 %3640
    %v3643 = vmul.f32 %v3626, %v3641
    %3645 = vrot.lane.b32.xlu0 %v3643, 32
    %v3646 = vpop.permute.xlu0 %3645
    %v3647 = vsel %vm612, %v3646, 0
    %3649 = vmatprep.subr.mxu0 0.0
    %3650 = vmatpush1.msra.mxu0 0.0
    %3651 = vmatprep.subr.mxu0 0.0
    %3652 = vmatpush1.msra.mxu0 0.0
    %3653 = vmatprep.subr.mxu0 0.0
    %3654 = vmatpush1.msra.mxu0 0.0
    %3655 = vmatprep.subr.mxu0 0.0
    %3656 = vmatpush1.msra.mxu0 0.0
    %3657 = vmatprep.subr.mxu0 0.0
    %3658 = vmatpush1.msra.mxu0 0.0
    %3659 = vmatprep.subr.mxu0 0.0
    %3660 = vmatpush1.msra.mxu0 0.0
    %3661 = vmatprep.subr.mxu0 0.0
    %3662 = vmatpush1.msra.mxu0 0.0
    %3663 = vmatprep.subr.mxu0 0.0
    %3664 = vmatpush1.msra.mxu0 0.0
    %3665 = vmatprep.subr.mxu0 0.0
    %3666 = vmatpush1.msra.mxu0 0.0
    %3667 = vmatprep.subr.mxu0 0.0
    %3668 = vmatpush1.msra.mxu0 0.0
    %3669 = vmatprep.subr.mxu0 0.0
    %3670 = vmatpush1.msra.mxu0 0.0
    %3671 = vmatprep.subr.mxu0 0.0
    %3672 = vmatpush1.msra.mxu0 0.0
    %3673 = vmatprep.subr.mxu0 0.0
    %3674 = vmatpush1.msra.mxu0 %v596
    %3675 = vmatprep.subr.mxu0 0.0
    %3676 = vmatpush1.msra.mxu0 %v595
    %3677 = vmatprep.subr.mxu0 0.0
    %3678 = vmatpush1.msra.mxu0 %v594
    %3679 = vmatprep.subr.mxu0 0.0
    %3680 = vmatpush1.msra.mxu0 %v593
    %3681 = vmatprep.subr.mxu0 0.0
    %3682 = vmatpush2.msra.mxu0 0.0
    %3683 = vmatprep.subr.mxu0 0.0
    %3684 = vmatpush2.msra.mxu0 0.0
    %3685 = vmatprep.subr.mxu0 0.0
    %3686 = vmatpush2.msra.mxu0 0.0
    %3687 = vmatprep.subr.mxu0 0.0
    %3688 = vmatpush2.msra.mxu0 0.0
    %3689 = vmatprep.subr.mxu0 0.0
    %3690 = vmatpush2.msra.mxu0 0.0
    %3691 = vmatprep.subr.mxu0 0.0
    %3692 = vmatpush2.msra.mxu0 0.0
    %3693 = vmatprep.subr.mxu0 0.0
    %3694 = vmatpush2.msra.mxu0 0.0
    %3695 = vmatprep.subr.mxu0 0.0
    %3696 = vmatpush2.msra.mxu0 0.0
    %3697 = vmatprep.subr.mxu0 0.0
    %3698 = vmatpush2.msra.mxu0 0.0
    %3699 = vmatprep.subr.mxu0 0.0
    %3700 = vmatpush2.msra.mxu0 0.0
    %3701 = vmatprep.subr.mxu0 0.0
    %3702 = vmatpush2.msra.mxu0 0.0
    %3703 = vmatprep.subr.mxu0 0.0
    %3704 = vmatpush2.msra.mxu0 0.0
    %3705 = vmatprep.subr.mxu0 0.0
    %3706 = vmatpush2.msra.mxu0 0.0
    %3707 = vmatprep.subr.mxu0 0.0
    %3708 = vmatpush2.msra.mxu0 0.0
    %3709 = vmatprep.subr.mxu0 0.0
    %3710 = vmatpush2.msra.mxu0 0.0
    %3711 = vmatprep.subr.mxu0 0.0
    %3712 = vmatpush2.msra.mxu0 0.0
    %3713 = vmatprep.mubr.f32.mxu0 0.0
    %3714 = vmatmul.mubr.f32.gmra.mxu0 %v3647
    %v3715 = vpop.f32.mrf.mxu0
    %v3716 = vadd.f32 0.0, %v3715
    %v3717 = vpop.f32.mrf.mxu0
    %3718 = vdwg.mxu0
    %v3719 = vadd.f32 %v560, %v3716
    %3720 = vmatprep.subr.mxu0 0.0
    %3721 = vmatpush1.msra.mxu0 0.0
    %3722 = vmatprep.subr.mxu0 0.0
    %3723 = vmatpush1.msra.mxu0 0.0
    %3724 = vmatprep.subr.mxu0 0.0
    %3725 = vmatpush1.msra.mxu0 0.0
    %3726 = vmatprep.subr.mxu0 0.0
    %3727 = vmatpush1.msra.mxu0 0.0
    %3728 = vmatprep.subr.mxu0 0.0
    %3729 = vmatpush1.msra.mxu0 0.0
    %3730 = vmatprep.subr.mxu0 0.0
    %3731 = vmatpush1.msra.mxu0 0.0
    %3732 = vmatprep.subr.mxu0 0.0
    %3733 = vmatpush1.msra.mxu0 0.0
    %3734 = vmatprep.subr.mxu0 0.0
    %3735 = vmatpush1.msra.mxu0 0.0
    %3736 = vmatprep.subr.mxu0 0.0
    %3737 = vmatpush1.msra.mxu0 0.0
    %3738 = vmatprep.subr.mxu0 0.0
    %3739 = vmatpush1.msra.mxu0 0.0
    %3740 = vmatprep.subr.mxu0 0.0
    %3741 = vmatpush1.msra.mxu0 0.0
    %3742 = vmatprep.subr.mxu0 0.0
    %3743 = vmatpush1.msra.mxu0 0.0
    %3744 = vmatprep.subr.mxu0 0.0
    %3745 = vmatpush1.msra.mxu0 %v601
    %3746 = vmatprep.subr.mxu0 0.0
    %3747 = vmatpush1.msra.mxu0 %v600
    %3748 = vmatprep.subr.mxu0 0.0
    %3749 = vmatpush1.msra.mxu0 %v599
    %3750 = vmatprep.subr.mxu0 0.0
    %3751 = vmatpush1.msra.mxu0 %v598
    %3752 = vmatprep.subr.mxu0 0.0
    %3753 = vmatpush2.msra.mxu0 0.0
    %3754 = vmatprep.subr.mxu0 0.0
    %3755 = vmatpush2.msra.mxu0 0.0
    %3756 = vmatprep.subr.mxu0 0.0
    %3757 = vmatpush2.msra.mxu0 0.0
    %3758 = vmatprep.subr.mxu0 0.0
    %3759 = vmatpush2.msra.mxu0 0.0
    %3760 = vmatprep.subr.mxu0 0.0
    %3761 = vmatpush2.msra.mxu0 0.0
    %3762 = vmatprep.subr.mxu0 0.0
    %3763 = vmatpush2.msra.mxu0 0.0
    %3764 = vmatprep.subr.mxu0 0.0
    %3765 = vmatpush2.msra.mxu0 0.0
    %3766 = vmatprep.subr.mxu0 0.0
    %3767 = vmatpush2.msra.mxu0 0.0
    %3768 = vmatprep.subr.mxu0 0.0
    %3769 = vmatpush2.msra.mxu0 0.0
    %3770 = vmatprep.subr.mxu0 0.0
    %3771 = vmatpush2.msra.mxu0 0.0
    %3772 = vmatprep.subr.mxu0 0.0
    %3773 = vmatpush2.msra.mxu0 0.0
    %3774 = vmatprep.subr.mxu0 0.0
    %3775 = vmatpush2.msra.mxu0 0.0
    %3776 = vmatprep.subr.mxu0 0.0
    %3777 = vmatpush2.msra.mxu0 0.0
    %3778 = vmatprep.subr.mxu0 0.0
    %3779 = vmatpush2.msra.mxu0 0.0
    %3780 = vmatprep.subr.mxu0 0.0
    %3781 = vmatpush2.msra.mxu0 0.0
    %3782 = vmatprep.subr.mxu0 0.0
    %3783 = vmatpush2.msra.mxu0 0.0
    %3784 = vmatprep.mubr.f32.mxu0 0.0
    %3785 = vmatmul.mubr.f32.gmra.mxu0 %v3647
    %v3786 = vpop.f32.mrf.mxu0
    %v3787 = vadd.f32 0.0, %v3786
    %v3788 = vpop.f32.mrf.mxu0
    %3789 = vdwg.mxu0
    %3791 = vrot.lane.b32.xlu0 %v3787, 32
    %v3792 = vpop.permute.xlu0 %3791
    %v3794 = vadd.f32 %v560, %v3792
    %3795 = vmatprep.subr.mxu0 0.0
    %3796 = vmatpush1.msra.mxu0 0.0
    %3797 = vmatprep.subr.mxu0 0.0
    %3798 = vmatpush1.msra.mxu0 0.0
    %3799 = vmatprep.subr.mxu0 0.0
    %3800 = vmatpush1.msra.mxu0 0.0
    %3801 = vmatprep.subr.mxu0 0.0
    %3802 = vmatpush1.msra.mxu0 0.0
    %3803 = vmatprep.subr.mxu0 0.0
    %3804 = vmatpush1.msra.mxu0 0.0
    %3805 = vmatprep.subr.mxu0 0.0
    %3806 = vmatpush1.msra.mxu0 0.0
    %3807 = vmatprep.subr.mxu0 0.0
    %3808 = vmatpush1.msra.mxu0 0.0
    %3809 = vmatprep.subr.mxu0 0.0
    %3810 = vmatpush1.msra.mxu0 0.0
    %3811 = vmatprep.subr.mxu0 0.0
    %3812 = vmatpush1.msra.mxu0 0.0
    %3813 = vmatprep.subr.mxu0 0.0
    %3814 = vmatpush1.msra.mxu0 0.0
    %3815 = vmatprep.subr.mxu0 0.0
    %3816 = vmatpush1.msra.mxu0 0.0
    %3817 = vmatprep.subr.mxu0 0.0
    %3818 = vmatpush1.msra.mxu0 0.0
    %3819 = vmatprep.subr.mxu0 0.0
    %3820 = vmatpush1.msra.mxu0 %v606
    %3821 = vmatprep.subr.mxu0 0.0
    %3822 = vmatpush1.msra.mxu0 %v605
    %3823 = vmatprep.subr.mxu0 0.0
    %3824 = vmatpush1.msra.mxu0 %v604
    %3825 = vmatprep.subr.mxu0 0.0
    %3826 = vmatpush1.msra.mxu0 %v603
    %3827 = vmatprep.subr.mxu0 0.0
    %3828 = vmatpush2.msra.mxu0 0.0
    %3829 = vmatprep.subr.mxu0 0.0
    %3830 = vmatpush2.msra.mxu0 0.0
    %3831 = vmatprep.subr.mxu0 0.0
    %3832 = vmatpush2.msra.mxu0 0.0
    %3833 = vmatprep.subr.mxu0 0.0
    %3834 = vmatpush2.msra.mxu0 0.0
    %3835 = vmatprep.subr.mxu0 0.0
    %3836 = vmatpush2.msra.mxu0 0.0
    %3837 = vmatprep.subr.mxu0 0.0
    %3838 = vmatpush2.msra.mxu0 0.0
    %3839 = vmatprep.subr.mxu0 0.0
    %3840 = vmatpush2.msra.mxu0 0.0
    %3841 = vmatprep.subr.mxu0 0.0
    %3842 = vmatpush2.msra.mxu0 0.0
    %3843 = vmatprep.subr.mxu0 0.0
    %3844 = vmatpush2.msra.mxu0 0.0
    %3845 = vmatprep.subr.mxu0 0.0
    %3846 = vmatpush2.msra.mxu0 0.0
    %3847 = vmatprep.subr.mxu0 0.0
    %3848 = vmatpush2.msra.mxu0 0.0
    %3849 = vmatprep.subr.mxu0 0.0
    %3850 = vmatpush2.msra.mxu0 0.0
    %3851 = vmatprep.subr.mxu0 0.0
    %3852 = vmatpush2.msra.mxu0 0.0
    %3853 = vmatprep.subr.mxu0 0.0
    %3854 = vmatpush2.msra.mxu0 0.0
    %3855 = vmatprep.subr.mxu0 0.0
    %3856 = vmatpush2.msra.mxu0 0.0
    %3857 = vmatprep.subr.mxu0 0.0
    %3858 = vmatpush2.msra.mxu0 0.0
    %3859 = vmatprep.mubr.f32.mxu0 0.0
    %3860 = vmatmul.mubr.f32.gmra.mxu0 %v3647
    %v3861 = vpop.f32.mrf.mxu0
    %v3862 = vadd.f32 0.0, %v3861
    %v3863 = vpop.f32.mrf.mxu0
    %3864 = vdwg.mxu0
    %3866 = vrot.lane.b32.xlu0 %v3862, 64
    %v3867 = vpop.permute.xlu0 %3866
    %v3869 = vadd.f32 %v560, %v3867
    %3870 = vmatprep.subr.mxu0 0.0
    %3871 = vmatpush1.msra.mxu0 0.0
    %3872 = vmatprep.subr.mxu0 0.0
    %3873 = vmatpush1.msra.mxu0 0.0
    %3874 = vmatprep.subr.mxu0 0.0
    %3875 = vmatpush1.msra.mxu0 0.0
    %3876 = vmatprep.subr.mxu0 0.0
    %3877 = vmatpush1.msra.mxu0 0.0
    %3878 = vmatprep.subr.mxu0 0.0
    %3879 = vmatpush1.msra.mxu0 0.0
    %3880 = vmatprep.subr.mxu0 0.0
    %3881 = vmatpush1.msra.mxu0 0.0
    %3882 = vmatprep.subr.mxu0 0.0
    %3883 = vmatpush1.msra.mxu0 0.0
    %3884 = vmatprep.subr.mxu0 0.0
    %3885 = vmatpush1.msra.mxu0 0.0
    %3886 = vmatprep.subr.mxu0 0.0
    %3887 = vmatpush1.msra.mxu0 0.0
    %3888 = vmatprep.subr.mxu0 0.0
    %3889 = vmatpush1.msra.mxu0 0.0
    %3890 = vmatprep.subr.mxu0 0.0
    %3891 = vmatpush1.msra.mxu0 0.0
    %3892 = vmatprep.subr.mxu0 0.0
    %3893 = vmatpush1.msra.mxu0 0.0
    %3894 = vmatprep.subr.mxu0 0.0
    %3895 = vmatpush1.msra.mxu0 %v611
    %3896 = vmatprep.subr.mxu0 0.0
    %3897 = vmatpush1.msra.mxu0 %v610
    %3898 = vmatprep.subr.mxu0 0.0
    %3899 = vmatpush1.msra.mxu0 %v609
    %3900 = vmatprep.subr.mxu0 0.0
    %3901 = vmatpush1.msra.mxu0 %v608
    %3902 = vmatprep.subr.mxu0 0.0
    %3903 = vmatpush2.msra.mxu0 0.0
    %3904 = vmatprep.subr.mxu0 0.0
    %3905 = vmatpush2.msra.mxu0 0.0
    %3906 = vmatprep.subr.mxu0 0.0
    %3907 = vmatpush2.msra.mxu0 0.0
    %3908 = vmatprep.subr.mxu0 0.0
    %3909 = vmatpush2.msra.mxu0 0.0
    %3910 = vmatprep.subr.mxu0 0.0
    %3911 = vmatpush2.msra.mxu0 0.0
    %3912 = vmatprep.subr.mxu0 0.0
    %3913 = vmatpush2.msra.mxu0 0.0
    %3914 = vmatprep.subr.mxu0 0.0
    %3915 = vmatpush2.msra.mxu0 0.0
    %3916 = vmatprep.subr.mxu0 0.0
    %3917 = vmatpush2.msra.mxu0 0.0
    %3918 = vmatprep.subr.mxu0 0.0
    %3919 = vmatpush2.msra.mxu0 0.0
    %3920 = vmatprep.subr.mxu0 0.0
    %3921 = vmatpush2.msra.mxu0 0.0
    %3922 = vmatprep.subr.mxu0 0.0
    %3923 = vmatpush2.msra.mxu0 0.0
    %3924 = vmatprep.subr.mxu0 0.0
    %3925 = vmatpush2.msra.mxu0 0.0
    %3926 = vmatprep.subr.mxu0 0.0
    %3927 = vmatpush2.msra.mxu0 0.0
    %3928 = vmatprep.subr.mxu0 0.0
    %3929 = vmatpush2.msra.mxu0 0.0
    %3930 = vmatprep.subr.mxu0 0.0
    %3931 = vmatpush2.msra.mxu0 0.0
    %3932 = vmatprep.subr.mxu0 0.0
    %3933 = vmatpush2.msra.mxu0 0.0
    %3934 = vmatprep.mubr.f32.mxu0 0.0
    %3935 = vmatmul.mubr.f32.gmra.mxu0 %v3647
    %v3936 = vpop.f32.mrf.mxu0
    %v3937 = vadd.f32 0.0, %v3936
    %v3938 = vpop.f32.mrf.mxu0
    %3939 = vdwg.mxu0
    %3941 = vrot.lane.b32.xlu0 %v3937, 96
    %v3942 = vpop.permute.xlu0 %3941
    %v3944 = vadd.f32 %v560, %v3942
    %v3945 = vxor.u32 %v3719, 2147483648
    %v3946 = vmul.f32 %v3945, 1.442695
    %v3947 = vpow.pop %v3946
    %v3948 = vadd.f32 %v3947, 1.0
    %v3949 = vrcp.pop %v3948
    %v3950 = vmul.f32 1.0, %v3949
    %v3951 = vxor.u32 %v3794, 2147483648
    %v3952 = vmul.f32 %v3951, 1.442695
    %v3953 = vpow.pop %v3952
    %v3954 = vadd.f32 %v3953, 1.0
    %v3955 = vrcp.pop %v3954
    %v3956 = vmul.f32 1.0, %v3955
    %v3957 = vtanh.pop %v3869
    %v3958 = vxor.u32 %v3944, 2147483648
    %v3959 = vmul.f32 %v3958, 1.442695
    %v3960 = vpow.pop %v3959
    %v3961 = vadd.f32 %v3960, 1.0
    %v3962 = vrcp.pop %v3961
    %v3963 = vmul.f32 1.0, %v3962
    %v3964 = vmul.f32 %v3956, %v3637
    %3966 = vrot.lane.b32.xlu0 %v3957, 64
    %v3967 = vpop.permute.xlu0 %3966
    %v3969 = vmul.f32 %v3950, %v3967
    %3971 = vrot.lane.b32.xlu0 %v3969, 32
    %v3972 = vpop.permute.xlu0 %3971
    %v3974 = vadd.f32 %v3964, %v3972
    %v3975 = vtanh.pop %v3974
    %3977 = vrot.lane.b32.xlu0 %v3975, 64
    %v3978 = vpop.permute.xlu0 %3977
    %v3980 = vmul.f32 %v3963, %v3978
    %3982 = vrot.lane.b32.xlu0 %v3980, 32
    %v3983 = vpop.permute.xlu0 %3982
    %v3984 = vsel %vm612, %v3983, 0
    %3986 = vmatprep.subr.mxu0 0.0
    %3987 = vmatpush1.msra.mxu0 0.0
    %3988 = vmatprep.subr.mxu0 0.0
    %3989 = vmatpush1.msra.mxu0 0.0
    %3990 = vmatprep.subr.mxu0 0.0
    %3991 = vmatpush1.msra.mxu0 0.0
    %3992 = vmatprep.subr.mxu0 0.0
    %3993 = vmatpush1.msra.mxu0 0.0
    %3994 = vmatprep.subr.mxu0 0.0
    %3995 = vmatpush1.msra.mxu0 0.0
    %3996 = vmatprep.subr.mxu0 0.0
    %3997 = vmatpush1.msra.mxu0 0.0
    %3998 = vmatprep.subr.mxu0 0.0
    %3999 = vmatpush1.msra.mxu0 0.0
    %4000 = vmatprep.subr.mxu0 0.0
    %4001 = vmatpush1.msra.mxu0 0.0
    %4002 = vmatprep.subr.mxu0 0.0
    %4003 = vmatpush1.msra.mxu0 0.0
    %4004 = vmatprep.subr.mxu0 0.0
    %4005 = vmatpush1.msra.mxu0 0.0
    %4006 = vmatprep.subr.mxu0 0.0
    %4007 = vmatpush1.msra.mxu0 0.0
    %4008 = vmatprep.subr.mxu0 0.0
    %4009 = vmatpush1.msra.mxu0 0.0
    %4010 = vmatprep.subr.mxu0 0.0
    %4011 = vmatpush1.msra.mxu0 %v596
    %4012 = vmatprep.subr.mxu0 0.0
    %4013 = vmatpush1.msra.mxu0 %v595
    %4014 = vmatprep.subr.mxu0 0.0
    %4015 = vmatpush1.msra.mxu0 %v594
    %4016 = vmatprep.subr.mxu0 0.0
    %4017 = vmatpush1.msra.mxu0 %v593
    %4018 = vmatprep.subr.mxu0 0.0
    %4019 = vmatpush2.msra.mxu0 0.0
    %4020 = vmatprep.subr.mxu0 0.0
    %4021 = vmatpush2.msra.mxu0 0.0
    %4022 = vmatprep.subr.mxu0 0.0
    %4023 = vmatpush2.msra.mxu0 0.0
    %4024 = vmatprep.subr.mxu0 0.0
    %4025 = vmatpush2.msra.mxu0 0.0
    %4026 = vmatprep.subr.mxu0 0.0
    %4027 = vmatpush2.msra.mxu0 0.0
    %4028 = vmatprep.subr.mxu0 0.0
    %4029 = vmatpush2.msra.mxu0 0.0
    %4030 = vmatprep.subr.mxu0 0.0
    %4031 = vmatpush2.msra.mxu0 0.0
    %4032 = vmatprep.subr.mxu0 0.0
    %4033 = vmatpush2.msra.mxu0 0.0
    %4034 = vmatprep.subr.mxu0 0.0
    %4035 = vmatpush2.msra.mxu0 0.0
    %4036 = vmatprep.subr.mxu0 0.0
    %4037 = vmatpush2.msra.mxu0 0.0
    %4038 = vmatprep.subr.mxu0 0.0
    %4039 = vmatpush2.msra.mxu0 0.0
    %4040 = vmatprep.subr.mxu0 0.0
    %4041 = vmatpush2.msra.mxu0 0.0
    %4042 = vmatprep.subr.mxu0 0.0
    %4043 = vmatpush2.msra.mxu0 0.0
    %4044 = vmatprep.subr.mxu0 0.0
    %4045 = vmatpush2.msra.mxu0 0.0
    %4046 = vmatprep.subr.mxu0 0.0
    %4047 = vmatpush2.msra.mxu0 0.0
    %4048 = vmatprep.subr.mxu0 0.0
    %4049 = vmatpush2.msra.mxu0 0.0
    %4050 = vmatprep.mubr.f32.mxu0 0.0
    %4051 = vmatmul.mubr.f32.gmra.mxu0 %v3984
    %v4052 = vpop.f32.mrf.mxu0
    %v4053 = vadd.f32 0.0, %v4052
    %v4054 = vpop.f32.mrf.mxu0
    %4055 = vdwg.mxu0
    %v4056 = vadd.f32 %v565, %v4053
    %4057 = vmatprep.subr.mxu0 0.0
    %4058 = vmatpush1.msra.mxu0 0.0
    %4059 = vmatprep.subr.mxu0 0.0
    %4060 = vmatpush1.msra.mxu0 0.0
    %4061 = vmatprep.subr.mxu0 0.0
    %4062 = vmatpush1.msra.mxu0 0.0
    %4063 = vmatprep.subr.mxu0 0.0
    %4064 = vmatpush1.msra.mxu0 0.0
    %4065 = vmatprep.subr.mxu0 0.0
    %4066 = vmatpush1.msra.mxu0 0.0
    %4067 = vmatprep.subr.mxu0 0.0
    %4068 = vmatpush1.msra.mxu0 0.0
    %4069 = vmatprep.subr.mxu0 0.0
    %4070 = vmatpush1.msra.mxu0 0.0
    %4071 = vmatprep.subr.mxu0 0.0
    %4072 = vmatpush1.msra.mxu0 0.0
    %4073 = vmatprep.subr.mxu0 0.0
    %4074 = vmatpush1.msra.mxu0 0.0
    %4075 = vmatprep.subr.mxu0 0.0
    %4076 = vmatpush1.msra.mxu0 0.0
    %4077 = vmatprep.subr.mxu0 0.0
    %4078 = vmatpush1.msra.mxu0 0.0
    %4079 = vmatprep.subr.mxu0 0.0
    %4080 = vmatpush1.msra.mxu0 0.0
    %4081 = vmatprep.subr.mxu0 0.0
    %4082 = vmatpush1.msra.mxu0 %v601
    %4083 = vmatprep.subr.mxu0 0.0
    %4084 = vmatpush1.msra.mxu0 %v600
    %4085 = vmatprep.subr.mxu0 0.0
    %4086 = vmatpush1.msra.mxu0 %v599
    %4087 = vmatprep.subr.mxu0 0.0
    %4088 = vmatpush1.msra.mxu0 %v598
    %4089 = vmatprep.subr.mxu0 0.0
    %4090 = vmatpush2.msra.mxu0 0.0
    %4091 = vmatprep.subr.mxu0 0.0
    %4092 = vmatpush2.msra.mxu0 0.0
    %4093 = vmatprep.subr.mxu0 0.0
    %4094 = vmatpush2.msra.mxu0 0.0
    %4095 = vmatprep.subr.mxu0 0.0
    %4096 = vmatpush2.msra.mxu0 0.0
    %4097 = vmatprep.subr.mxu0 0.0
    %4098 = vmatpush2.msra.mxu0 0.0
    %4099 = vmatprep.subr.mxu0 0.0
    %4100 = vmatpush2.msra.mxu0 0.0
    %4101 = vmatprep.subr.mxu0 0.0
    %4102 = vmatpush2.msra.mxu0 0.0
    %4103 = vmatprep.subr.mxu0 0.0
    %4104 = vmatpush2.msra.mxu0 0.0
    %4105 = vmatprep.subr.mxu0 0.0
    %4106 = vmatpush2.msra.mxu0 0.0
    %4107 = vmatprep.subr.mxu0 0.0
    %4108 = vmatpush2.msra.mxu0 0.0
    %4109 = vmatprep.subr.mxu0 0.0
    %4110 = vmatpush2.msra.mxu0 0.0
    %4111 = vmatprep.subr.mxu0 0.0
    %4112 = vmatpush2.msra.mxu0 0.0
    %4113 = vmatprep.subr.mxu0 0.0
    %4114 = vmatpush2.msra.mxu0 0.0
    %4115 = vmatprep.subr.mxu0 0.0
    %4116 = vmatpush2.msra.mxu0 0.0
    %4117 = vmatprep.subr.mxu0 0.0
    %4118 = vmatpush2.msra.mxu0 0.0
    %4119 = vmatprep.subr.mxu0 0.0
    %4120 = vmatpush2.msra.mxu0 0.0
    %4121 = vmatprep.mubr.f32.mxu0 0.0
    %4122 = vmatmul.mubr.f32.gmra.mxu0 %v3984
    %v4123 = vpop.f32.mrf.mxu0
    %v4124 = vadd.f32 0.0, %v4123
    %v4125 = vpop.f32.mrf.mxu0
    %4126 = vdwg.mxu0
    %4128 = vrot.lane.b32.xlu0 %v4124, 32
    %v4129 = vpop.permute.xlu0 %4128
    %v4131 = vadd.f32 %v565, %v4129
    %4132 = vmatprep.subr.mxu0 0.0
    %4133 = vmatpush1.msra.mxu0 0.0
    %4134 = vmatprep.subr.mxu0 0.0
    %4135 = vmatpush1.msra.mxu0 0.0
    %4136 = vmatprep.subr.mxu0 0.0
    %4137 = vmatpush1.msra.mxu0 0.0
    %4138 = vmatprep.subr.mxu0 0.0
    %4139 = vmatpush1.msra.mxu0 0.0
    %4140 = vmatprep.subr.mxu0 0.0
    %4141 = vmatpush1.msra.mxu0 0.0
    %4142 = vmatprep.subr.mxu0 0.0
    %4143 = vmatpush1.msra.mxu0 0.0
    %4144 = vmatprep.subr.mxu0 0.0
    %4145 = vmatpush1.msra.mxu0 0.0
    %4146 = vmatprep.subr.mxu0 0.0
    %4147 = vmatpush1.msra.mxu0 0.0
    %4148 = vmatprep.subr.mxu0 0.0
    %4149 = vmatpush1.msra.mxu0 0.0
    %4150 = vmatprep.subr.mxu0 0.0
    %4151 = vmatpush1.msra.mxu0 0.0
    %4152 = vmatprep.subr.mxu0 0.0
    %4153 = vmatpush1.msra.mxu0 0.0
    %4154 = vmatprep.subr.mxu0 0.0
    %4155 = vmatpush1.msra.mxu0 0.0
    %4156 = vmatprep.subr.mxu0 0.0
    %4157 = vmatpush1.msra.mxu0 %v606
    %4158 = vmatprep.subr.mxu0 0.0
    %4159 = vmatpush1.msra.mxu0 %v605
    %4160 = vmatprep.subr.mxu0 0.0
    %4161 = vmatpush1.msra.mxu0 %v604
    %4162 = vmatprep.subr.mxu0 0.0
    %4163 = vmatpush1.msra.mxu0 %v603
    %4164 = vmatprep.subr.mxu0 0.0
    %4165 = vmatpush2.msra.mxu0 0.0
    %4166 = vmatprep.subr.mxu0 0.0
    %4167 = vmatpush2.msra.mxu0 0.0
    %4168 = vmatprep.subr.mxu0 0.0
    %4169 = vmatpush2.msra.mxu0 0.0
    %4170 = vmatprep.subr.mxu0 0.0
    %4171 = vmatpush2.msra.mxu0 0.0
    %4172 = vmatprep.subr.mxu0 0.0
    %4173 = vmatpush2.msra.mxu0 0.0
    %4174 = vmatprep.subr.mxu0 0.0
    %4175 = vmatpush2.msra.mxu0 0.0
    %4176 = vmatprep.subr.mxu0 0.0
    %4177 = vmatpush2.msra.mxu0 0.0
    %4178 = vmatprep.subr.mxu0 0.0
    %4179 = vmatpush2.msra.mxu0 0.0
    %4180 = vmatprep.subr.mxu0 0.0
    %4181 = vmatpush2.msra.mxu0 0.0
    %4182 = vmatprep.subr.mxu0 0.0
    %4183 = vmatpush2.msra.mxu0 0.0
    %4184 = vmatprep.subr.mxu0 0.0
    %4185 = vmatpush2.msra.mxu0 0.0
    %4186 = vmatprep.subr.mxu0 0.0
    %4187 = vmatpush2.msra.mxu0 0.0
    %4188 = vmatprep.subr.mxu0 0.0
    %4189 = vmatpush2.msra.mxu0 0.0
    %4190 = vmatprep.subr.mxu0 0.0
    %4191 = vmatpush2.msra.mxu0 0.0
    %4192 = vmatprep.subr.mxu0 0.0
    %4193 = vmatpush2.msra.mxu0 0.0
    %4194 = vmatprep.subr.mxu0 0.0
    %4195 = vmatpush2.msra.mxu0 0.0
    %4196 = vmatprep.mubr.f32.mxu0 0.0
    %4197 = vmatmul.mubr.f32.gmra.mxu0 %v3984
    %v4198 = vpop.f32.mrf.mxu0
    %v4199 = vadd.f32 0.0, %v4198
    %v4200 = vpop.f32.mrf.mxu0
    %4201 = vdwg.mxu0
    %4203 = vrot.lane.b32.xlu0 %v4199, 64
    %v4204 = vpop.permute.xlu0 %4203
    %v4206 = vadd.f32 %v565, %v4204
    %4207 = vmatprep.subr.mxu0 0.0
    %4208 = vmatpush1.msra.mxu0 0.0
    %4209 = vmatprep.subr.mxu0 0.0
    %4210 = vmatpush1.msra.mxu0 0.0
    %4211 = vmatprep.subr.mxu0 0.0
    %4212 = vmatpush1.msra.mxu0 0.0
    %4213 = vmatprep.subr.mxu0 0.0
    %4214 = vmatpush1.msra.mxu0 0.0
    %4215 = vmatprep.subr.mxu0 0.0
    %4216 = vmatpush1.msra.mxu0 0.0
    %4217 = vmatprep.subr.mxu0 0.0
    %4218 = vmatpush1.msra.mxu0 0.0
    %4219 = vmatprep.subr.mxu0 0.0
    %4220 = vmatpush1.msra.mxu0 0.0
    %4221 = vmatprep.subr.mxu0 0.0
    %4222 = vmatpush1.msra.mxu0 0.0
    %4223 = vmatprep.subr.mxu0 0.0
    %4224 = vmatpush1.msra.mxu0 0.0
    %4225 = vmatprep.subr.mxu0 0.0
    %4226 = vmatpush1.msra.mxu0 0.0
    %4227 = vmatprep.subr.mxu0 0.0
    %4228 = vmatpush1.msra.mxu0 0.0
    %4229 = vmatprep.subr.mxu0 0.0
    %4230 = vmatpush1.msra.mxu0 0.0
    %4231 = vmatprep.subr.mxu0 0.0
    %4232 = vmatpush1.msra.mxu0 %v611
    %4233 = vmatprep.subr.mxu0 0.0
    %4234 = vmatpush1.msra.mxu0 %v610
    %4235 = vmatprep.subr.mxu0 0.0
    %4236 = vmatpush1.msra.mxu0 %v609
    %4237 = vmatprep.subr.mxu0 0.0
    %4238 = vmatpush1.msra.mxu0 %v608
    %4239 = vmatprep.subr.mxu0 0.0
    %4240 = vmatpush2.msra.mxu0 0.0
    %4241 = vmatprep.subr.mxu0 0.0
    %4242 = vmatpush2.msra.mxu0 0.0
    %4243 = vmatprep.subr.mxu0 0.0
    %4244 = vmatpush2.msra.mxu0 0.0
    %4245 = vmatprep.subr.mxu0 0.0
    %4246 = vmatpush2.msra.mxu0 0.0
    %4247 = vmatprep.subr.mxu0 0.0
    %4248 = vmatpush2.msra.mxu0 0.0
    %4249 = vmatprep.subr.mxu0 0.0
    %4250 = vmatpush2.msra.mxu0 0.0
    %4251 = vmatprep.subr.mxu0 0.0
    %4252 = vmatpush2.msra.mxu0 0.0
    %4253 = vmatprep.subr.mxu0 0.0
    %4254 = vmatpush2.msra.mxu0 0.0
    %4255 = vmatprep.subr.mxu0 0.0
    %4256 = vmatpush2.msra.mxu0 0.0
    %4257 = vmatprep.subr.mxu0 0.0
    %4258 = vmatpush2.msra.mxu0 0.0
    %4259 = vmatprep.subr.mxu0 0.0
    %4260 = vmatpush2.msra.mxu0 0.0
    %4261 = vmatprep.subr.mxu0 0.0
    %4262 = vmatpush2.msra.mxu0 0.0
    %4263 = vmatprep.subr.mxu0 0.0
    %4264 = vmatpush2.msra.mxu0 0.0
    %4265 = vmatprep.subr.mxu0 0.0
    %4266 = vmatpush2.msra.mxu0 0.0
    %4267 = vmatprep.subr.mxu0 0.0
    %4268 = vmatpush2.msra.mxu0 0.0
    %4269 = vmatprep.subr.mxu0 0.0
    %4270 = vmatpush2.msra.mxu0 0.0
    %4271 = vmatprep.mubr.f32.mxu0 0.0
    %4272 = vmatmul.mubr.f32.gmra.mxu0 %v3984
    %v4273 = vpop.f32.mrf.mxu0
    %v4274 = vadd.f32 0.0, %v4273
    %v4275 = vpop.f32.mrf.mxu0
    %4276 = vdwg.mxu0
    %4278 = vrot.lane.b32.xlu0 %v4274, 96
    %v4279 = vpop.permute.xlu0 %4278
    %v4281 = vadd.f32 %v565, %v4279
    %v4282 = vxor.u32 %v4056, 2147483648
    %v4283 = vmul.f32 %v4282, 1.442695
    %v4284 = vpow.pop %v4283
    %v4285 = vadd.f32 %v4284, 1.0
    %v4286 = vrcp.pop %v4285
    %v4287 = vmul.f32 1.0, %v4286
    %v4288 = vxor.u32 %v4131, 2147483648
    %v4289 = vmul.f32 %v4288, 1.442695
    %v4290 = vpow.pop %v4289
    %v4291 = vadd.f32 %v4290, 1.0
    %v4292 = vrcp.pop %v4291
    %v4293 = vmul.f32 1.0, %v4292
    %v4294 = vtanh.pop %v4206
    %v4295 = vxor.u32 %v4281, 2147483648
    %v4296 = vmul.f32 %v4295, 1.442695
    %v4297 = vpow.pop %v4296
    %v4298 = vadd.f32 %v4297, 1.0
    %v4299 = vrcp.pop %v4298
    %v4300 = vmul.f32 1.0, %v4299
    %v4301 = vmul.f32 %v4293, %v3974
    %4303 = vrot.lane.b32.xlu0 %v4294, 64
    %v4304 = vpop.permute.xlu0 %4303
    %v4306 = vmul.f32 %v4287, %v4304
    %4308 = vrot.lane.b32.xlu0 %v4306, 32
    %v4309 = vpop.permute.xlu0 %4308
    %v4311 = vadd.f32 %v4301, %v4309
    %v4312 = vtanh.pop %v4311
    %4314 = vrot.lane.b32.xlu0 %v4312, 64
    %v4315 = vpop.permute.xlu0 %4314
    %v4317 = vmul.f32 %v4300, %v4315
    %4319 = vrot.lane.b32.xlu0 %v4317, 32
    %v4320 = vpop.permute.xlu0 %4319
    %v4321 = vsel %vm612, %v4320, 0
    %4323 = vmatprep.subr.mxu0 0.0
    %4324 = vmatpush1.msra.mxu0 0.0
    %4325 = vmatprep.subr.mxu0 0.0
    %4326 = vmatpush1.msra.mxu0 0.0
    %4327 = vmatprep.subr.mxu0 0.0
    %4328 = vmatpush1.msra.mxu0 0.0
    %4329 = vmatprep.subr.mxu0 0.0
    %4330 = vmatpush1.msra.mxu0 0.0
    %4331 = vmatprep.subr.mxu0 0.0
    %4332 = vmatpush1.msra.mxu0 0.0
    %4333 = vmatprep.subr.mxu0 0.0
    %4334 = vmatpush1.msra.mxu0 0.0
    %4335 = vmatprep.subr.mxu0 0.0
    %4336 = vmatpush1.msra.mxu0 0.0
    %4337 = vmatprep.subr.mxu0 0.0
    %4338 = vmatpush1.msra.mxu0 0.0
    %4339 = vmatprep.subr.mxu0 0.0
    %4340 = vmatpush1.msra.mxu0 0.0
    %4341 = vmatprep.subr.mxu0 0.0
    %4342 = vmatpush1.msra.mxu0 0.0
    %4343 = vmatprep.subr.mxu0 0.0
    %4344 = vmatpush1.msra.mxu0 0.0
    %4345 = vmatprep.subr.mxu0 0.0
    %4346 = vmatpush1.msra.mxu0 0.0
    %4347 = vmatprep.subr.mxu0 0.0
    %4348 = vmatpush1.msra.mxu0 %v596
    %4349 = vmatprep.subr.mxu0 0.0
    %4350 = vmatpush1.msra.mxu0 %v595
    %4351 = vmatprep.subr.mxu0 0.0
    %4352 = vmatpush1.msra.mxu0 %v594
    %4353 = vmatprep.subr.mxu0 0.0
    %4354 = vmatpush1.msra.mxu0 %v593
    %4355 = vmatprep.subr.mxu0 0.0
    %4356 = vmatpush2.msra.mxu0 0.0
    %4357 = vmatprep.subr.mxu0 0.0
    %4358 = vmatpush2.msra.mxu0 0.0
    %4359 = vmatprep.subr.mxu0 0.0
    %4360 = vmatpush2.msra.mxu0 0.0
    %4361 = vmatprep.subr.mxu0 0.0
    %4362 = vmatpush2.msra.mxu0 0.0
    %4363 = vmatprep.subr.mxu0 0.0
    %4364 = vmatpush2.msra.mxu0 0.0
    %4365 = vmatprep.subr.mxu0 0.0
    %4366 = vmatpush2.msra.mxu0 0.0
    %4367 = vmatprep.subr.mxu0 0.0
    %4368 = vmatpush2.msra.mxu0 0.0
    %4369 = vmatprep.subr.mxu0 0.0
    %4370 = vmatpush2.msra.mxu0 0.0
    %4371 = vmatprep.subr.mxu0 0.0
    %4372 = vmatpush2.msra.mxu0 0.0
    %4373 = vmatprep.subr.mxu0 0.0
    %4374 = vmatpush2.msra.mxu0 0.0
    %4375 = vmatprep.subr.mxu0 0.0
    %4376 = vmatpush2.msra.mxu0 0.0
    %4377 = vmatprep.subr.mxu0 0.0
    %4378 = vmatpush2.msra.mxu0 0.0
    %4379 = vmatprep.subr.mxu0 0.0
    %4380 = vmatpush2.msra.mxu0 0.0
    %4381 = vmatprep.subr.mxu0 0.0
    %4382 = vmatpush2.msra.mxu0 0.0
    %4383 = vmatprep.subr.mxu0 0.0
    %4384 = vmatpush2.msra.mxu0 0.0
    %4385 = vmatprep.subr.mxu0 0.0
    %4386 = vmatpush2.msra.mxu0 0.0
    %4387 = vmatprep.mubr.f32.mxu0 0.0
    %4388 = vmatmul.mubr.f32.gmra.mxu0 %v4321
    %v4389 = vpop.f32.mrf.mxu0
    %v4390 = vadd.f32 0.0, %v4389
    %v4391 = vpop.f32.mrf.mxu0
    %4392 = vdwg.mxu0
    %v4393 = vadd.f32 %v570, %v4390
    %4394 = vmatprep.subr.mxu0 0.0
    %4395 = vmatpush1.msra.mxu0 0.0
    %4396 = vmatprep.subr.mxu0 0.0
    %4397 = vmatpush1.msra.mxu0 0.0
    %4398 = vmatprep.subr.mxu0 0.0
    %4399 = vmatpush1.msra.mxu0 0.0
    %4400 = vmatprep.subr.mxu0 0.0
    %4401 = vmatpush1.msra.mxu0 0.0
    %4402 = vmatprep.subr.mxu0 0.0
    %4403 = vmatpush1.msra.mxu0 0.0
    %4404 = vmatprep.subr.mxu0 0.0
    %4405 = vmatpush1.msra.mxu0 0.0
    %4406 = vmatprep.subr.mxu0 0.0
    %4407 = vmatpush1.msra.mxu0 0.0
    %4408 = vmatprep.subr.mxu0 0.0
    %4409 = vmatpush1.msra.mxu0 0.0
    %4410 = vmatprep.subr.mxu0 0.0
    %4411 = vmatpush1.msra.mxu0 0.0
    %4412 = vmatprep.subr.mxu0 0.0
    %4413 = vmatpush1.msra.mxu0 0.0
    %4414 = vmatprep.subr.mxu0 0.0
    %4415 = vmatpush1.msra.mxu0 0.0
    %4416 = vmatprep.subr.mxu0 0.0
    %4417 = vmatpush1.msra.mxu0 0.0
    %4418 = vmatprep.subr.mxu0 0.0
    %4419 = vmatpush1.msra.mxu0 %v601
    %4420 = vmatprep.subr.mxu0 0.0
    %4421 = vmatpush1.msra.mxu0 %v600
    %4422 = vmatprep.subr.mxu0 0.0
    %4423 = vmatpush1.msra.mxu0 %v599
    %4424 = vmatprep.subr.mxu0 0.0
    %4425 = vmatpush1.msra.mxu0 %v598
    %4426 = vmatprep.subr.mxu0 0.0
    %4427 = vmatpush2.msra.mxu0 0.0
    %4428 = vmatprep.subr.mxu0 0.0
    %4429 = vmatpush2.msra.mxu0 0.0
    %4430 = vmatprep.subr.mxu0 0.0
    %4431 = vmatpush2.msra.mxu0 0.0
    %4432 = vmatprep.subr.mxu0 0.0
    %4433 = vmatpush2.msra.mxu0 0.0
    %4434 = vmatprep.subr.mxu0 0.0
    %4435 = vmatpush2.msra.mxu0 0.0
    %4436 = vmatprep.subr.mxu0 0.0
    %4437 = vmatpush2.msra.mxu0 0.0
    %4438 = vmatprep.subr.mxu0 0.0
    %4439 = vmatpush2.msra.mxu0 0.0
    %4440 = vmatprep.subr.mxu0 0.0
    %4441 = vmatpush2.msra.mxu0 0.0
    %4442 = vmatprep.subr.mxu0 0.0
    %4443 = vmatpush2.msra.mxu0 0.0
    %4444 = vmatprep.subr.mxu0 0.0
    %4445 = vmatpush2.msra.mxu0 0.0
    %4446 = vmatprep.subr.mxu0 0.0
    %4447 = vmatpush2.msra.mxu0 0.0
    %4448 = vmatprep.subr.mxu0 0.0
    %4449 = vmatpush2.msra.mxu0 0.0
    %4450 = vmatprep.subr.mxu0 0.0
    %4451 = vmatpush2.msra.mxu0 0.0
    %4452 = vmatprep.subr.mxu0 0.0
    %4453 = vmatpush2.msra.mxu0 0.0
    %4454 = vmatprep.subr.mxu0 0.0
    %4455 = vmatpush2.msra.mxu0 0.0
    %4456 = vmatprep.subr.mxu0 0.0
    %4457 = vmatpush2.msra.mxu0 0.0
    %4458 = vmatprep.mubr.f32.mxu0 0.0
    %4459 = vmatmul.mubr.f32.gmra.mxu0 %v4321
    %v4460 = vpop.f32.mrf.mxu0
    %v4461 = vadd.f32 0.0, %v4460
    %v4462 = vpop.f32.mrf.mxu0
    %4463 = vdwg.mxu0
    %4465 = vrot.lane.b32.xlu0 %v4461, 32
    %v4466 = vpop.permute.xlu0 %4465
    %v4468 = vadd.f32 %v570, %v4466
    %4469 = vmatprep.subr.mxu0 0.0
    %4470 = vmatpush1.msra.mxu0 0.0
    %4471 = vmatprep.subr.mxu0 0.0
    %4472 = vmatpush1.msra.mxu0 0.0
    %4473 = vmatprep.subr.mxu0 0.0
    %4474 = vmatpush1.msra.mxu0 0.0
    %4475 = vmatprep.subr.mxu0 0.0
    %4476 = vmatpush1.msra.mxu0 0.0
    %4477 = vmatprep.subr.mxu0 0.0
    %4478 = vmatpush1.msra.mxu0 0.0
    %4479 = vmatprep.subr.mxu0 0.0
    %4480 = vmatpush1.msra.mxu0 0.0
    %4481 = vmatprep.subr.mxu0 0.0
    %4482 = vmatpush1.msra.mxu0 0.0
    %4483 = vmatprep.subr.mxu0 0.0
    %4484 = vmatpush1.msra.mxu0 0.0
    %4485 = vmatprep.subr.mxu0 0.0
    %4486 = vmatpush1.msra.mxu0 0.0
    %4487 = vmatprep.subr.mxu0 0.0
    %4488 = vmatpush1.msra.mxu0 0.0
    %4489 = vmatprep.subr.mxu0 0.0
    %4490 = vmatpush1.msra.mxu0 0.0
    %4491 = vmatprep.subr.mxu0 0.0
    %4492 = vmatpush1.msra.mxu0 0.0
    %4493 = vmatprep.subr.mxu0 0.0
    %4494 = vmatpush1.msra.mxu0 %v606
    %4495 = vmatprep.subr.mxu0 0.0
    %4496 = vmatpush1.msra.mxu0 %v605
    %4497 = vmatprep.subr.mxu0 0.0
    %4498 = vmatpush1.msra.mxu0 %v604
    %4499 = vmatprep.subr.mxu0 0.0
    %4500 = vmatpush1.msra.mxu0 %v603
    %4501 = vmatprep.subr.mxu0 0.0
    %4502 = vmatpush2.msra.mxu0 0.0
    %4503 = vmatprep.subr.mxu0 0.0
    %4504 = vmatpush2.msra.mxu0 0.0
    %4505 = vmatprep.subr.mxu0 0.0
    %4506 = vmatpush2.msra.mxu0 0.0
    %4507 = vmatprep.subr.mxu0 0.0
    %4508 = vmatpush2.msra.mxu0 0.0
    %4509 = vmatprep.subr.mxu0 0.0
    %4510 = vmatpush2.msra.mxu0 0.0
    %4511 = vmatprep.subr.mxu0 0.0
    %4512 = vmatpush2.msra.mxu0 0.0
    %4513 = vmatprep.subr.mxu0 0.0
    %4514 = vmatpush2.msra.mxu0 0.0
    %4515 = vmatprep.subr.mxu0 0.0
    %4516 = vmatpush2.msra.mxu0 0.0
    %4517 = vmatprep.subr.mxu0 0.0
    %4518 = vmatpush2.msra.mxu0 0.0
    %4519 = vmatprep.subr.mxu0 0.0
    %4520 = vmatpush2.msra.mxu0 0.0
    %4521 = vmatprep.subr.mxu0 0.0
    %4522 = vmatpush2.msra.mxu0 0.0
    %4523 = vmatprep.subr.mxu0 0.0
    %4524 = vmatpush2.msra.mxu0 0.0
    %4525 = vmatprep.subr.mxu0 0.0
    %4526 = vmatpush2.msra.mxu0 0.0
    %4527 = vmatprep.subr.mxu0 0.0
    %4528 = vmatpush2.msra.mxu0 0.0
    %4529 = vmatprep.subr.mxu0 0.0
    %4530 = vmatpush2.msra.mxu0 0.0
    %4531 = vmatprep.subr.mxu0 0.0
    %4532 = vmatpush2.msra.mxu0 0.0
    %4533 = vmatprep.mubr.f32.mxu0 0.0
    %4534 = vmatmul.mubr.f32.gmra.mxu0 %v4321
    %v4535 = vpop.f32.mrf.mxu0
    %v4536 = vadd.f32 0.0, %v4535
    %v4537 = vpop.f32.mrf.mxu0
    %4538 = vdwg.mxu0
    %4540 = vrot.lane.b32.xlu0 %v4536, 64
    %v4541 = vpop.permute.xlu0 %4540
    %v4543 = vadd.f32 %v570, %v4541
    %4544 = vmatprep.subr.mxu0 0.0
    %4545 = vmatpush1.msra.mxu0 0.0
    %4546 = vmatprep.subr.mxu0 0.0
    %4547 = vmatpush1.msra.mxu0 0.0
    %4548 = vmatprep.subr.mxu0 0.0
    %4549 = vmatpush1.msra.mxu0 0.0
    %4550 = vmatprep.subr.mxu0 0.0
    %4551 = vmatpush1.msra.mxu0 0.0
    %4552 = vmatprep.subr.mxu0 0.0
    %4553 = vmatpush1.msra.mxu0 0.0
    %4554 = vmatprep.subr.mxu0 0.0
    %4555 = vmatpush1.msra.mxu0 0.0
    %4556 = vmatprep.subr.mxu0 0.0
    %4557 = vmatpush1.msra.mxu0 0.0
    %4558 = vmatprep.subr.mxu0 0.0
    %4559 = vmatpush1.msra.mxu0 0.0
    %4560 = vmatprep.subr.mxu0 0.0
    %4561 = vmatpush1.msra.mxu0 0.0
    %4562 = vmatprep.subr.mxu0 0.0
    %4563 = vmatpush1.msra.mxu0 0.0
    %4564 = vmatprep.subr.mxu0 0.0
    %4565 = vmatpush1.msra.mxu0 0.0
    %4566 = vmatprep.subr.mxu0 0.0
    %4567 = vmatpush1.msra.mxu0 0.0
    %4568 = vmatprep.subr.mxu0 0.0
    %4569 = vmatpush1.msra.mxu0 %v611
    %4570 = vmatprep.subr.mxu0 0.0
    %4571 = vmatpush1.msra.mxu0 %v610
    %4572 = vmatprep.subr.mxu0 0.0
    %4573 = vmatpush1.msra.mxu0 %v609
    %4574 = vmatprep.subr.mxu0 0.0
    %4575 = vmatpush1.msra.mxu0 %v608
    %4576 = vmatprep.subr.mxu0 0.0
    %4577 = vmatpush2.msra.mxu0 0.0
    %4578 = vmatprep.subr.mxu0 0.0
    %4579 = vmatpush2.msra.mxu0 0.0
    %4580 = vmatprep.subr.mxu0 0.0
    %4581 = vmatpush2.msra.mxu0 0.0
    %4582 = vmatprep.subr.mxu0 0.0
    %4583 = vmatpush2.msra.mxu0 0.0
    %4584 = vmatprep.subr.mxu0 0.0
    %4585 = vmatpush2.msra.mxu0 0.0
    %4586 = vmatprep.subr.mxu0 0.0
    %4587 = vmatpush2.msra.mxu0 0.0
    %4588 = vmatprep.subr.mxu0 0.0
    %4589 = vmatpush2.msra.mxu0 0.0
    %4590 = vmatprep.subr.mxu0 0.0
    %4591 = vmatpush2.msra.mxu0 0.0
    %4592 = vmatprep.subr.mxu0 0.0
    %4593 = vmatpush2.msra.mxu0 0.0
    %4594 = vmatprep.subr.mxu0 0.0
    %4595 = vmatpush2.msra.mxu0 0.0
    %4596 = vmatprep.subr.mxu0 0.0
    %4597 = vmatpush2.msra.mxu0 0.0
    %4598 = vmatprep.subr.mxu0 0.0
    %4599 = vmatpush2.msra.mxu0 0.0
    %4600 = vmatprep.subr.mxu0 0.0
    %4601 = vmatpush2.msra.mxu0 0.0
    %4602 = vmatprep.subr.mxu0 0.0
    %4603 = vmatpush2.msra.mxu0 0.0
    %4604 = vmatprep.subr.mxu0 0.0
    %4605 = vmatpush2.msra.mxu0 0.0
    %4606 = vmatprep.subr.mxu0 0.0
    %4607 = vmatpush2.msra.mxu0 0.0
    %4608 = vmatprep.mubr.f32.mxu0 0.0
    %4609 = vmatmul.mubr.f32.gmra.mxu0 %v4321
    %v4610 = vpop.f32.mrf.mxu0
    %v4611 = vadd.f32 0.0, %v4610
    %v4612 = vpop.f32.mrf.mxu0
    %4613 = vdwg.mxu0
    %4615 = vrot.lane.b32.xlu0 %v4611, 96
    %v4616 = vpop.permute.xlu0 %4615
    %v4618 = vadd.f32 %v570, %v4616
    %v4619 = vxor.u32 %v4393, 2147483648
    %v4620 = vmul.f32 %v4619, 1.442695
    %v4621 = vpow.pop %v4620
    %v4622 = vadd.f32 %v4621, 1.0
    %v4623 = vrcp.pop %v4622
    %v4624 = vmul.f32 1.0, %v4623
    %v4625 = vxor.u32 %v4468, 2147483648
    %v4626 = vmul.f32 %v4625, 1.442695
    %v4627 = vpow.pop %v4626
    %v4628 = vadd.f32 %v4627, 1.0
    %v4629 = vrcp.pop %v4628
    %v4630 = vmul.f32 1.0, %v4629
    %v4631 = vtanh.pop %v4543
    %v4632 = vxor.u32 %v4618, 2147483648
    %v4633 = vmul.f32 %v4632, 1.442695
    %v4634 = vpow.pop %v4633
    %v4635 = vadd.f32 %v4634, 1.0
    %v4636 = vrcp.pop %v4635
    %v4637 = vmul.f32 1.0, %v4636
    %v4638 = vmul.f32 %v4630, %v4311
    %4640 = vrot.lane.b32.xlu0 %v4631, 64
    %v4641 = vpop.permute.xlu0 %4640
    %v4643 = vmul.f32 %v4624, %v4641
    %4645 = vrot.lane.b32.xlu0 %v4643, 32
    %v4646 = vpop.permute.xlu0 %4645
    %v4648 = vadd.f32 %v4638, %v4646
    %v4649 = vtanh.pop %v4648
    %4651 = vrot.lane.b32.xlu0 %v4649, 64
    %v4652 = vpop.permute.xlu0 %4651
    %v4654 = vmul.f32 %v4637, %v4652
    %4656 = vrot.lane.b32.xlu0 %v4654, 32
    %v4657 = vpop.permute.xlu0 %4656
    %v4658 = vsel %vm612, %v4657, 0
    %4660 = vmatprep.subr.mxu0 0.0
    %4661 = vmatpush1.msra.mxu0 0.0
    %4662 = vmatprep.subr.mxu0 0.0
    %4663 = vmatpush1.msra.mxu0 0.0
    %4664 = vmatprep.subr.mxu0 0.0
    %4665 = vmatpush1.msra.mxu0 0.0
    %4666 = vmatprep.subr.mxu0 0.0
    %4667 = vmatpush1.msra.mxu0 0.0
    %4668 = vmatprep.subr.mxu0 0.0
    %4669 = vmatpush1.msra.mxu0 0.0
    %4670 = vmatprep.subr.mxu0 0.0
    %4671 = vmatpush1.msra.mxu0 0.0
    %4672 = vmatprep.subr.mxu0 0.0
    %4673 = vmatpush1.msra.mxu0 0.0
    %4674 = vmatprep.subr.mxu0 0.0
    %4675 = vmatpush1.msra.mxu0 0.0
    %4676 = vmatprep.subr.mxu0 0.0
    %4677 = vmatpush1.msra.mxu0 0.0
    %4678 = vmatprep.subr.mxu0 0.0
    %4679 = vmatpush1.msra.mxu0 0.0
    %4680 = vmatprep.subr.mxu0 0.0
    %4681 = vmatpush1.msra.mxu0 0.0
    %4682 = vmatprep.subr.mxu0 0.0
    %4683 = vmatpush1.msra.mxu0 0.0
    %4684 = vmatprep.subr.mxu0 0.0
    %4685 = vmatpush1.msra.mxu0 %v596
    %4686 = vmatprep.subr.mxu0 0.0
    %4687 = vmatpush1.msra.mxu0 %v595
    %4688 = vmatprep.subr.mxu0 0.0
    %4689 = vmatpush1.msra.mxu0 %v594
    %4690 = vmatprep.subr.mxu0 0.0
    %4691 = vmatpush1.msra.mxu0 %v593
    %4692 = vmatprep.subr.mxu0 0.0
    %4693 = vmatpush2.msra.mxu0 0.0
    %4694 = vmatprep.subr.mxu0 0.0
    %4695 = vmatpush2.msra.mxu0 0.0
    %4696 = vmatprep.subr.mxu0 0.0
    %4697 = vmatpush2.msra.mxu0 0.0
    %4698 = vmatprep.subr.mxu0 0.0
    %4699 = vmatpush2.msra.mxu0 0.0
    %4700 = vmatprep.subr.mxu0 0.0
    %4701 = vmatpush2.msra.mxu0 0.0
    %4702 = vmatprep.subr.mxu0 0.0
    %4703 = vmatpush2.msra.mxu0 0.0
    %4704 = vmatprep.subr.mxu0 0.0
    %4705 = vmatpush2.msra.mxu0 0.0
    %4706 = vmatprep.subr.mxu0 0.0
    %4707 = vmatpush2.msra.mxu0 0.0
    %4708 = vmatprep.subr.mxu0 0.0
    %4709 = vmatpush2.msra.mxu0 0.0
    %4710 = vmatprep.subr.mxu0 0.0
    %4711 = vmatpush2.msra.mxu0 0.0
    %4712 = vmatprep.subr.mxu0 0.0
    %4713 = vmatpush2.msra.mxu0 0.0
    %4714 = vmatprep.subr.mxu0 0.0
    %4715 = vmatpush2.msra.mxu0 0.0
    %4716 = vmatprep.subr.mxu0 0.0
    %4717 = vmatpush2.msra.mxu0 0.0
    %4718 = vmatprep.subr.mxu0 0.0
    %4719 = vmatpush2.msra.mxu0 0.0
    %4720 = vmatprep.subr.mxu0 0.0
    %4721 = vmatpush2.msra.mxu0 0.0
    %4722 = vmatprep.subr.mxu0 0.0
    %4723 = vmatpush2.msra.mxu0 0.0
    %4724 = vmatprep.mubr.f32.mxu0 0.0
    %4725 = vmatmul.mubr.f32.gmra.mxu0 %v4658
    %v4726 = vpop.f32.mrf.mxu0
    %v4727 = vadd.f32 0.0, %v4726
    %v4728 = vpop.f32.mrf.mxu0
    %4729 = vdwg.mxu0
    %v4730 = vadd.f32 %v575, %v4727
    %4731 = vmatprep.subr.mxu0 0.0
    %4732 = vmatpush1.msra.mxu0 0.0
    %4733 = vmatprep.subr.mxu0 0.0
    %4734 = vmatpush1.msra.mxu0 0.0
    %4735 = vmatprep.subr.mxu0 0.0
    %4736 = vmatpush1.msra.mxu0 0.0
    %4737 = vmatprep.subr.mxu0 0.0
    %4738 = vmatpush1.msra.mxu0 0.0
    %4739 = vmatprep.subr.mxu0 0.0
    %4740 = vmatpush1.msra.mxu0 0.0
    %4741 = vmatprep.subr.mxu0 0.0
    %4742 = vmatpush1.msra.mxu0 0.0
    %4743 = vmatprep.subr.mxu0 0.0
    %4744 = vmatpush1.msra.mxu0 0.0
    %4745 = vmatprep.subr.mxu0 0.0
    %4746 = vmatpush1.msra.mxu0 0.0
    %4747 = vmatprep.subr.mxu0 0.0
    %4748 = vmatpush1.msra.mxu0 0.0
    %4749 = vmatprep.subr.mxu0 0.0
    %4750 = vmatpush1.msra.mxu0 0.0
    %4751 = vmatprep.subr.mxu0 0.0
    %4752 = vmatpush1.msra.mxu0 0.0
    %4753 = vmatprep.subr.mxu0 0.0
    %4754 = vmatpush1.msra.mxu0 0.0
    %4755 = vmatprep.subr.mxu0 0.0
    %4756 = vmatpush1.msra.mxu0 %v601
    %4757 = vmatprep.subr.mxu0 0.0
    %4758 = vmatpush1.msra.mxu0 %v600
    %4759 = vmatprep.subr.mxu0 0.0
    %4760 = vmatpush1.msra.mxu0 %v599
    %4761 = vmatprep.subr.mxu0 0.0
    %4762 = vmatpush1.msra.mxu0 %v598
    %4763 = vmatprep.subr.mxu0 0.0
    %4764 = vmatpush2.msra.mxu0 0.0
    %4765 = vmatprep.subr.mxu0 0.0
    %4766 = vmatpush2.msra.mxu0 0.0
    %4767 = vmatprep.subr.mxu0 0.0
    %4768 = vmatpush2.msra.mxu0 0.0
    %4769 = vmatprep.subr.mxu0 0.0
    %4770 = vmatpush2.msra.mxu0 0.0
    %4771 = vmatprep.subr.mxu0 0.0
    %4772 = vmatpush2.msra.mxu0 0.0
    %4773 = vmatprep.subr.mxu0 0.0
    %4774 = vmatpush2.msra.mxu0 0.0
    %4775 = vmatprep.subr.mxu0 0.0
    %4776 = vmatpush2.msra.mxu0 0.0
    %4777 = vmatprep.subr.mxu0 0.0
    %4778 = vmatpush2.msra.mxu0 0.0
    %4779 = vmatprep.subr.mxu0 0.0
    %4780 = vmatpush2.msra.mxu0 0.0
    %4781 = vmatprep.subr.mxu0 0.0
    %4782 = vmatpush2.msra.mxu0 0.0
    %4783 = vmatprep.subr.mxu0 0.0
    %4784 = vmatpush2.msra.mxu0 0.0
    %4785 = vmatprep.subr.mxu0 0.0
    %4786 = vmatpush2.msra.mxu0 0.0
    %4787 = vmatprep.subr.mxu0 0.0
    %4788 = vmatpush2.msra.mxu0 0.0
    %4789 = vmatprep.subr.mxu0 0.0
    %4790 = vmatpush2.msra.mxu0 0.0
    %4791 = vmatprep.subr.mxu0 0.0
    %4792 = vmatpush2.msra.mxu0 0.0
    %4793 = vmatprep.subr.mxu0 0.0
    %4794 = vmatpush2.msra.mxu0 0.0
    %4795 = vmatprep.mubr.f32.mxu0 0.0
    %4796 = vmatmul.mubr.f32.gmra.mxu0 %v4658
    %v4797 = vpop.f32.mrf.mxu0
    %v4798 = vadd.f32 0.0, %v4797
    %v4799 = vpop.f32.mrf.mxu0
    %4800 = vdwg.mxu0
    %4802 = vrot.lane.b32.xlu0 %v4798, 32
    %v4803 = vpop.permute.xlu0 %4802
    %v4805 = vadd.f32 %v575, %v4803
    %4806 = vmatprep.subr.mxu0 0.0
    %4807 = vmatpush1.msra.mxu0 0.0
    %4808 = vmatprep.subr.mxu0 0.0
    %4809 = vmatpush1.msra.mxu0 0.0
    %4810 = vmatprep.subr.mxu0 0.0
    %4811 = vmatpush1.msra.mxu0 0.0
    %4812 = vmatprep.subr.mxu0 0.0
    %4813 = vmatpush1.msra.mxu0 0.0
    %4814 = vmatprep.subr.mxu0 0.0
    %4815 = vmatpush1.msra.mxu0 0.0
    %4816 = vmatprep.subr.mxu0 0.0
    %4817 = vmatpush1.msra.mxu0 0.0
    %4818 = vmatprep.subr.mxu0 0.0
    %4819 = vmatpush1.msra.mxu0 0.0
    %4820 = vmatprep.subr.mxu0 0.0
    %4821 = vmatpush1.msra.mxu0 0.0
    %4822 = vmatprep.subr.mxu0 0.0
    %4823 = vmatpush1.msra.mxu0 0.0
    %4824 = vmatprep.subr.mxu0 0.0
    %4825 = vmatpush1.msra.mxu0 0.0
    %4826 = vmatprep.subr.mxu0 0.0
    %4827 = vmatpush1.msra.mxu0 0.0
    %4828 = vmatprep.subr.mxu0 0.0
    %4829 = vmatpush1.msra.mxu0 0.0
    %4830 = vmatprep.subr.mxu0 0.0
    %4831 = vmatpush1.msra.mxu0 %v606
    %4832 = vmatprep.subr.mxu0 0.0
    %4833 = vmatpush1.msra.mxu0 %v605
    %4834 = vmatprep.subr.mxu0 0.0
    %4835 = vmatpush1.msra.mxu0 %v604
    %4836 = vmatprep.subr.mxu0 0.0
    %4837 = vmatpush1.msra.mxu0 %v603
    %4838 = vmatprep.subr.mxu0 0.0
    %4839 = vmatpush2.msra.mxu0 0.0
    %4840 = vmatprep.subr.mxu0 0.0
    %4841 = vmatpush2.msra.mxu0 0.0
    %4842 = vmatprep.subr.mxu0 0.0
    %4843 = vmatpush2.msra.mxu0 0.0
    %4844 = vmatprep.subr.mxu0 0.0
    %4845 = vmatpush2.msra.mxu0 0.0
    %4846 = vmatprep.subr.mxu0 0.0
    %4847 = vmatpush2.msra.mxu0 0.0
    %4848 = vmatprep.subr.mxu0 0.0
    %4849 = vmatpush2.msra.mxu0 0.0
    %4850 = vmatprep.subr.mxu0 0.0
    %4851 = vmatpush2.msra.mxu0 0.0
    %4852 = vmatprep.subr.mxu0 0.0
    %4853 = vmatpush2.msra.mxu0 0.0
    %4854 = vmatprep.subr.mxu0 0.0
    %4855 = vmatpush2.msra.mxu0 0.0
    %4856 = vmatprep.subr.mxu0 0.0
    %4857 = vmatpush2.msra.mxu0 0.0
    %4858 = vmatprep.subr.mxu0 0.0
    %4859 = vmatpush2.msra.mxu0 0.0
    %4860 = vmatprep.subr.mxu0 0.0
    %4861 = vmatpush2.msra.mxu0 0.0
    %4862 = vmatprep.subr.mxu0 0.0
    %4863 = vmatpush2.msra.mxu0 0.0
    %4864 = vmatprep.subr.mxu0 0.0
    %4865 = vmatpush2.msra.mxu0 0.0
    %4866 = vmatprep.subr.mxu0 0.0
    %4867 = vmatpush2.msra.mxu0 0.0
    %4868 = vmatprep.subr.mxu0 0.0
    %4869 = vmatpush2.msra.mxu0 0.0
    %4870 = vmatprep.mubr.f32.mxu0 0.0
    %4871 = vmatmul.mubr.f32.gmra.mxu0 %v4658
    %v4872 = vpop.f32.mrf.mxu0
    %v4873 = vadd.f32 0.0, %v4872
    %v4874 = vpop.f32.mrf.mxu0
    %4875 = vdwg.mxu0
    %4877 = vrot.lane.b32.xlu0 %v4873, 64
    %v4878 = vpop.permute.xlu0 %4877
    %v4880 = vadd.f32 %v575, %v4878
    %4881 = vmatprep.subr.mxu0 0.0
    %4882 = vmatpush1.msra.mxu0 0.0
    %4883 = vmatprep.subr.mxu0 0.0
    %4884 = vmatpush1.msra.mxu0 0.0
    %4885 = vmatprep.subr.mxu0 0.0
    %4886 = vmatpush1.msra.mxu0 0.0
    %4887 = vmatprep.subr.mxu0 0.0
    %4888 = vmatpush1.msra.mxu0 0.0
    %4889 = vmatprep.subr.mxu0 0.0
    %4890 = vmatpush1.msra.mxu0 0.0
    %4891 = vmatprep.subr.mxu0 0.0
    %4892 = vmatpush1.msra.mxu0 0.0
    %4893 = vmatprep.subr.mxu0 0.0
    %4894 = vmatpush1.msra.mxu0 0.0
    %4895 = vmatprep.subr.mxu0 0.0
    %4896 = vmatpush1.msra.mxu0 0.0
    %4897 = vmatprep.subr.mxu0 0.0
    %4898 = vmatpush1.msra.mxu0 0.0
    %4899 = vmatprep.subr.mxu0 0.0
    %4900 = vmatpush1.msra.mxu0 0.0
    %4901 = vmatprep.subr.mxu0 0.0
    %4902 = vmatpush1.msra.mxu0 0.0
    %4903 = vmatprep.subr.mxu0 0.0
    %4904 = vmatpush1.msra.mxu0 0.0
    %4905 = vmatprep.subr.mxu0 0.0
    %4906 = vmatpush1.msra.mxu0 %v611
    %4907 = vmatprep.subr.mxu0 0.0
    %4908 = vmatpush1.msra.mxu0 %v610
    %4909 = vmatprep.subr.mxu0 0.0
    %4910 = vmatpush1.msra.mxu0 %v609
    %4911 = vmatprep.subr.mxu0 0.0
    %4912 = vmatpush1.msra.mxu0 %v608
    %4913 = vmatprep.subr.mxu0 0.0
    %4914 = vmatpush2.msra.mxu0 0.0
    %4915 = vmatprep.subr.mxu0 0.0
    %4916 = vmatpush2.msra.mxu0 0.0
    %4917 = vmatprep.subr.mxu0 0.0
    %4918 = vmatpush2.msra.mxu0 0.0
    %4919 = vmatprep.subr.mxu0 0.0
    %4920 = vmatpush2.msra.mxu0 0.0
    %4921 = vmatprep.subr.mxu0 0.0
    %4922 = vmatpush2.msra.mxu0 0.0
    %4923 = vmatprep.subr.mxu0 0.0
    %4924 = vmatpush2.msra.mxu0 0.0
    %4925 = vmatprep.subr.mxu0 0.0
    %4926 = vmatpush2.msra.mxu0 0.0
    %4927 = vmatprep.subr.mxu0 0.0
    %4928 = vmatpush2.msra.mxu0 0.0
    %4929 = vmatprep.subr.mxu0 0.0
    %4930 = vmatpush2.msra.mxu0 0.0
    %4931 = vmatprep.subr.mxu0 0.0
    %4932 = vmatpush2.msra.mxu0 0.0
    %4933 = vmatprep.subr.mxu0 0.0
    %4934 = vmatpush2.msra.mxu0 0.0
    %4935 = vmatprep.subr.mxu0 0.0
    %4936 = vmatpush2.msra.mxu0 0.0
    %4937 = vmatprep.subr.mxu0 0.0
    %4938 = vmatpush2.msra.mxu0 0.0
    %4939 = vmatprep.subr.mxu0 0.0
    %4940 = vmatpush2.msra.mxu0 0.0
    %4941 = vmatprep.subr.mxu0 0.0
    %4942 = vmatpush2.msra.mxu0 0.0
    %4943 = vmatprep.subr.mxu0 0.0
    %4944 = vmatpush2.msra.mxu0 0.0
    %4945 = vmatprep.mubr.f32.mxu0 0.0
    %4946 = vmatmul.mubr.f32.gmra.mxu0 %v4658
    %v4947 = vpop.f32.mrf.mxu0
    %v4948 = vadd.f32 0.0, %v4947
    %v4949 = vpop.f32.mrf.mxu0
    %4950 = vdwg.mxu0
    %4952 = vrot.lane.b32.xlu0 %v4948, 96
    %v4953 = vpop.permute.xlu0 %4952
    %v4955 = vadd.f32 %v575, %v4953
    %v4956 = vxor.u32 %v4730, 2147483648
    %v4957 = vmul.f32 %v4956, 1.442695
    %v4958 = vpow.pop %v4957
    %v4959 = vadd.f32 %v4958, 1.0
    %v4960 = vrcp.pop %v4959
    %v4961 = vmul.f32 1.0, %v4960
    %v4962 = vxor.u32 %v4805, 2147483648
    %v4963 = vmul.f32 %v4962, 1.442695
    %v4964 = vpow.pop %v4963
    %v4965 = vadd.f32 %v4964, 1.0
    %v4966 = vrcp.pop %v4965
    %v4967 = vmul.f32 1.0, %v4966
    %v4968 = vtanh.pop %v4880
    %v4969 = vxor.u32 %v4955, 2147483648
    %v4970 = vmul.f32 %v4969, 1.442695
    %v4971 = vpow.pop %v4970
    %v4972 = vadd.f32 %v4971, 1.0
    %v4973 = vrcp.pop %v4972
    %v4974 = vmul.f32 1.0, %v4973
    %v4975 = vmul.f32 %v4967, %v4648
    %4977 = vrot.lane.b32.xlu0 %v4968, 64
    %v4978 = vpop.permute.xlu0 %4977
    %v4980 = vmul.f32 %v4961, %v4978
    %4982 = vrot.lane.b32.xlu0 %v4980, 32
    %v4983 = vpop.permute.xlu0 %4982
    %v4985 = vadd.f32 %v4975, %v4983
    %v4986 = vtanh.pop %v4985
    %4988 = vrot.lane.b32.xlu0 %v4986, 64
    %v4989 = vpop.permute.xlu0 %4988
    %v4991 = vmul.f32 %v4974, %v4989
    %4993 = vrot.lane.b32.xlu0 %v4991, 32
    %v4994 = vpop.permute.xlu0 %4993
    %v4995 = vsel %vm612, %v4994, 0
    %4997 = vmatprep.subr.mxu0 0.0
    %4998 = vmatpush1.msra.mxu0 0.0
    %4999 = vmatprep.subr.mxu0 0.0
    %5000 = vmatpush1.msra.mxu0 0.0
    %5001 = vmatprep.subr.mxu0 0.0
    %5002 = vmatpush1.msra.mxu0 0.0
    %5003 = vmatprep.subr.mxu0 0.0
    %5004 = vmatpush1.msra.mxu0 0.0
    %5005 = vmatprep.subr.mxu0 0.0
    %5006 = vmatpush1.msra.mxu0 0.0
    %5007 = vmatprep.subr.mxu0 0.0
    %5008 = vmatpush1.msra.mxu0 0.0
    %5009 = vmatprep.subr.mxu0 0.0
    %5010 = vmatpush1.msra.mxu0 0.0
    %5011 = vmatprep.subr.mxu0 0.0
    %5012 = vmatpush1.msra.mxu0 0.0
    %5013 = vmatprep.subr.mxu0 0.0
    %5014 = vmatpush1.msra.mxu0 0.0
    %5015 = vmatprep.subr.mxu0 0.0
    %5016 = vmatpush1.msra.mxu0 0.0
    %5017 = vmatprep.subr.mxu0 0.0
    %5018 = vmatpush1.msra.mxu0 0.0
    %5019 = vmatprep.subr.mxu0 0.0
    %5020 = vmatpush1.msra.mxu0 0.0
    %5021 = vmatprep.subr.mxu0 0.0
    %5022 = vmatpush1.msra.mxu0 %v596
    %5023 = vmatprep.subr.mxu0 0.0
    %5024 = vmatpush1.msra.mxu0 %v595
    %5025 = vmatprep.subr.mxu0 0.0
    %5026 = vmatpush1.msra.mxu0 %v594
    %5027 = vmatprep.subr.mxu0 0.0
    %5028 = vmatpush1.msra.mxu0 %v593
    %5029 = vmatprep.subr.mxu0 0.0
    %5030 = vmatpush2.msra.mxu0 0.0
    %5031 = vmatprep.subr.mxu0 0.0
    %5032 = vmatpush2.msra.mxu0 0.0
    %5033 = vmatprep.subr.mxu0 0.0
    %5034 = vmatpush2.msra.mxu0 0.0
    %5035 = vmatprep.subr.mxu0 0.0
    %5036 = vmatpush2.msra.mxu0 0.0
    %5037 = vmatprep.subr.mxu0 0.0
    %5038 = vmatpush2.msra.mxu0 0.0
    %5039 = vmatprep.subr.mxu0 0.0
    %5040 = vmatpush2.msra.mxu0 0.0
    %5041 = vmatprep.subr.mxu0 0.0
    %5042 = vmatpush2.msra.mxu0 0.0
    %5043 = vmatprep.subr.mxu0 0.0
    %5044 = vmatpush2.msra.mxu0 0.0
    %5045 = vmatprep.subr.mxu0 0.0
    %5046 = vmatpush2.msra.mxu0 0.0
    %5047 = vmatprep.subr.mxu0 0.0
    %5048 = vmatpush2.msra.mxu0 0.0
    %5049 = vmatprep.subr.mxu0 0.0
    %5050 = vmatpush2.msra.mxu0 0.0
    %5051 = vmatprep.subr.mxu0 0.0
    %5052 = vmatpush2.msra.mxu0 0.0
    %5053 = vmatprep.subr.mxu0 0.0
    %5054 = vmatpush2.msra.mxu0 0.0
    %5055 = vmatprep.subr.mxu0 0.0
    %5056 = vmatpush2.msra.mxu0 0.0
    %5057 = vmatprep.subr.mxu0 0.0
    %5058 = vmatpush2.msra.mxu0 0.0
    %5059 = vmatprep.subr.mxu0 0.0
    %5060 = vmatpush2.msra.mxu0 0.0
    %5061 = vmatprep.mubr.f32.mxu0 0.0
    %5062 = vmatmul.mubr.f32.gmra.mxu0 %v4995
    %v5063 = vpop.f32.mrf.mxu0
    %v5064 = vadd.f32 0.0, %v5063
    %v5065 = vpop.f32.mrf.mxu0
    %5066 = vdwg.mxu0
    %v5067 = vadd.f32 %v580, %v5064
    %5068 = vmatprep.subr.mxu0 0.0
    %5069 = vmatpush1.msra.mxu0 0.0
    %5070 = vmatprep.subr.mxu0 0.0
    %5071 = vmatpush1.msra.mxu0 0.0
    %5072 = vmatprep.subr.mxu0 0.0
    %5073 = vmatpush1.msra.mxu0 0.0
    %5074 = vmatprep.subr.mxu0 0.0
    %5075 = vmatpush1.msra.mxu0 0.0
    %5076 = vmatprep.subr.mxu0 0.0
    %5077 = vmatpush1.msra.mxu0 0.0
    %5078 = vmatprep.subr.mxu0 0.0
    %5079 = vmatpush1.msra.mxu0 0.0
    %5080 = vmatprep.subr.mxu0 0.0
    %5081 = vmatpush1.msra.mxu0 0.0
    %5082 = vmatprep.subr.mxu0 0.0
    %5083 = vmatpush1.msra.mxu0 0.0
    %5084 = vmatprep.subr.mxu0 0.0
    %5085 = vmatpush1.msra.mxu0 0.0
    %5086 = vmatprep.subr.mxu0 0.0
    %5087 = vmatpush1.msra.mxu0 0.0
    %5088 = vmatprep.subr.mxu0 0.0
    %5089 = vmatpush1.msra.mxu0 0.0
    %5090 = vmatprep.subr.mxu0 0.0
    %5091 = vmatpush1.msra.mxu0 0.0
    %5092 = vmatprep.subr.mxu0 0.0
    %5093 = vmatpush1.msra.mxu0 %v601
    %5094 = vmatprep.subr.mxu0 0.0
    %5095 = vmatpush1.msra.mxu0 %v600
    %5096 = vmatprep.subr.mxu0 0.0
    %5097 = vmatpush1.msra.mxu0 %v599
    %5098 = vmatprep.subr.mxu0 0.0
    %5099 = vmatpush1.msra.mxu0 %v598
    %5100 = vmatprep.subr.mxu0 0.0
    %5101 = vmatpush2.msra.mxu0 0.0
    %5102 = vmatprep.subr.mxu0 0.0
    %5103 = vmatpush2.msra.mxu0 0.0
    %5104 = vmatprep.subr.mxu0 0.0
    %5105 = vmatpush2.msra.mxu0 0.0
    %5106 = vmatprep.subr.mxu0 0.0
    %5107 = vmatpush2.msra.mxu0 0.0
    %5108 = vmatprep.subr.mxu0 0.0
    %5109 = vmatpush2.msra.mxu0 0.0
    %5110 = vmatprep.subr.mxu0 0.0
    %5111 = vmatpush2.msra.mxu0 0.0
    %5112 = vmatprep.subr.mxu0 0.0
    %5113 = vmatpush2.msra.mxu0 0.0
    %5114 = vmatprep.subr.mxu0 0.0
    %5115 = vmatpush2.msra.mxu0 0.0
    %5116 = vmatprep.subr.mxu0 0.0
    %5117 = vmatpush2.msra.mxu0 0.0
    %5118 = vmatprep.subr.mxu0 0.0
    %5119 = vmatpush2.msra.mxu0 0.0
    %5120 = vmatprep.subr.mxu0 0.0
    %5121 = vmatpush2.msra.mxu0 0.0
    %5122 = vmatprep.subr.mxu0 0.0
    %5123 = vmatpush2.msra.mxu0 0.0
    %5124 = vmatprep.subr.mxu0 0.0
    %5125 = vmatpush2.msra.mxu0 0.0
    %5126 = vmatprep.subr.mxu0 0.0
    %5127 = vmatpush2.msra.mxu0 0.0
    %5128 = vmatprep.subr.mxu0 0.0
    %5129 = vmatpush2.msra.mxu0 0.0
    %5130 = vmatprep.subr.mxu0 0.0
    %5131 = vmatpush2.msra.mxu0 0.0
    %5132 = vmatprep.mubr.f32.mxu0 0.0
    %5133 = vmatmul.mubr.f32.gmra.mxu0 %v4995
    %v5134 = vpop.f32.mrf.mxu0
    %v5135 = vadd.f32 0.0, %v5134
    %v5136 = vpop.f32.mrf.mxu0
    %5137 = vdwg.mxu0
    %5139 = vrot.lane.b32.xlu0 %v5135, 32
    %v5140 = vpop.permute.xlu0 %5139
    %v5142 = vadd.f32 %v580, %v5140
    %5143 = vmatprep.subr.mxu0 0.0
    %5144 = vmatpush1.msra.mxu0 0.0
    %5145 = vmatprep.subr.mxu0 0.0
    %5146 = vmatpush1.msra.mxu0 0.0
    %5147 = vmatprep.subr.mxu0 0.0
    %5148 = vmatpush1.msra.mxu0 0.0
    %5149 = vmatprep.subr.mxu0 0.0
    %5150 = vmatpush1.msra.mxu0 0.0
    %5151 = vmatprep.subr.mxu0 0.0
    %5152 = vmatpush1.msra.mxu0 0.0
    %5153 = vmatprep.subr.mxu0 0.0
    %5154 = vmatpush1.msra.mxu0 0.0
    %5155 = vmatprep.subr.mxu0 0.0
    %5156 = vmatpush1.msra.mxu0 0.0
    %5157 = vmatprep.subr.mxu0 0.0
    %5158 = vmatpush1.msra.mxu0 0.0
    %5159 = vmatprep.subr.mxu0 0.0
    %5160 = vmatpush1.msra.mxu0 0.0
    %5161 = vmatprep.subr.mxu0 0.0
    %5162 = vmatpush1.msra.mxu0 0.0
    %5163 = vmatprep.subr.mxu0 0.0
    %5164 = vmatpush1.msra.mxu0 0.0
    %5165 = vmatprep.subr.mxu0 0.0
    %5166 = vmatpush1.msra.mxu0 0.0
    %5167 = vmatprep.subr.mxu0 0.0
    %5168 = vmatpush1.msra.mxu0 %v606
    %5169 = vmatprep.subr.mxu0 0.0
    %5170 = vmatpush1.msra.mxu0 %v605
    %5171 = vmatprep.subr.mxu0 0.0
    %5172 = vmatpush1.msra.mxu0 %v604
    %5173 = vmatprep.subr.mxu0 0.0
    %5174 = vmatpush1.msra.mxu0 %v603
    %5175 = vmatprep.subr.mxu0 0.0
    %5176 = vmatpush2.msra.mxu0 0.0
    %5177 = vmatprep.subr.mxu0 0.0
    %5178 = vmatpush2.msra.mxu0 0.0
    %5179 = vmatprep.subr.mxu0 0.0
    %5180 = vmatpush2.msra.mxu0 0.0
    %5181 = vmatprep.subr.mxu0 0.0
    %5182 = vmatpush2.msra.mxu0 0.0
    %5183 = vmatprep.subr.mxu0 0.0
    %5184 = vmatpush2.msra.mxu0 0.0
    %5185 = vmatprep.subr.mxu0 0.0
    %5186 = vmatpush2.msra.mxu0 0.0
    %5187 = vmatprep.subr.mxu0 0.0
    %5188 = vmatpush2.msra.mxu0 0.0
    %5189 = vmatprep.subr.mxu0 0.0
    %5190 = vmatpush2.msra.mxu0 0.0
    %5191 = vmatprep.subr.mxu0 0.0
    %5192 = vmatpush2.msra.mxu0 0.0
    %5193 = vmatprep.subr.mxu0 0.0
    %5194 = vmatpush2.msra.mxu0 0.0
    %5195 = vmatprep.subr.mxu0 0.0
    %5196 = vmatpush2.msra.mxu0 0.0
    %5197 = vmatprep.subr.mxu0 0.0
    %5198 = vmatpush2.msra.mxu0 0.0
    %5199 = vmatprep.subr.mxu0 0.0
    %5200 = vmatpush2.msra.mxu0 0.0
    %5201 = vmatprep.subr.mxu0 0.0
    %5202 = vmatpush2.msra.mxu0 0.0
    %5203 = vmatprep.subr.mxu0 0.0
    %5204 = vmatpush2.msra.mxu0 0.0
    %5205 = vmatprep.subr.mxu0 0.0
    %5206 = vmatpush2.msra.mxu0 0.0
    %5207 = vmatprep.mubr.f32.mxu0 0.0
    %5208 = vmatmul.mubr.f32.gmra.mxu0 %v4995
    %v5209 = vpop.f32.mrf.mxu0
    %v5210 = vadd.f32 0.0, %v5209
    %v5211 = vpop.f32.mrf.mxu0
    %5212 = vdwg.mxu0
    %5214 = vrot.lane.b32.xlu0 %v5210, 64
    %v5215 = vpop.permute.xlu0 %5214
    %v5217 = vadd.f32 %v580, %v5215
    %5218 = vmatprep.subr.mxu0 0.0
    %5219 = vmatpush1.msra.mxu0 0.0
    %5220 = vmatprep.subr.mxu0 0.0
    %5221 = vmatpush1.msra.mxu0 0.0
    %5222 = vmatprep.subr.mxu0 0.0
    %5223 = vmatpush1.msra.mxu0 0.0
    %5224 = vmatprep.subr.mxu0 0.0
    %5225 = vmatpush1.msra.mxu0 0.0
    %5226 = vmatprep.subr.mxu0 0.0
    %5227 = vmatpush1.msra.mxu0 0.0
    %5228 = vmatprep.subr.mxu0 0.0
    %5229 = vmatpush1.msra.mxu0 0.0
    %5230 = vmatprep.subr.mxu0 0.0
    %5231 = vmatpush1.msra.mxu0 0.0
    %5232 = vmatprep.subr.mxu0 0.0
    %5233 = vmatpush1.msra.mxu0 0.0
    %5234 = vmatprep.subr.mxu0 0.0
    %5235 = vmatpush1.msra.mxu0 0.0
    %5236 = vmatprep.subr.mxu0 0.0
    %5237 = vmatpush1.msra.mxu0 0.0
    %5238 = vmatprep.subr.mxu0 0.0
    %5239 = vmatpush1.msra.mxu0 0.0
    %5240 = vmatprep.subr.mxu0 0.0
    %5241 = vmatpush1.msra.mxu0 0.0
    %5242 = vmatprep.subr.mxu0 0.0
    %5243 = vmatpush1.msra.mxu0 %v611
    %5244 = vmatprep.subr.mxu0 0.0
    %5245 = vmatpush1.msra.mxu0 %v610
    %5246 = vmatprep.subr.mxu0 0.0
    %5247 = vmatpush1.msra.mxu0 %v609
    %5248 = vmatprep.subr.mxu0 0.0
    %5249 = vmatpush1.msra.mxu0 %v608
    %5250 = vmatprep.subr.mxu0 0.0
    %5251 = vmatpush2.msra.mxu0 0.0
    %5252 = vmatprep.subr.mxu0 0.0
    %5253 = vmatpush2.msra.mxu0 0.0
    %5254 = vmatprep.subr.mxu0 0.0
    %5255 = vmatpush2.msra.mxu0 0.0
    %5256 = vmatprep.subr.mxu0 0.0
    %5257 = vmatpush2.msra.mxu0 0.0
    %5258 = vmatprep.subr.mxu0 0.0
    %5259 = vmatpush2.msra.mxu0 0.0
    %5260 = vmatprep.subr.mxu0 0.0
    %5261 = vmatpush2.msra.mxu0 0.0
    %5262 = vmatprep.subr.mxu0 0.0
    %5263 = vmatpush2.msra.mxu0 0.0
    %5264 = vmatprep.subr.mxu0 0.0
    %5265 = vmatpush2.msra.mxu0 0.0
    %5266 = vmatprep.subr.mxu0 0.0
    %5267 = vmatpush2.msra.mxu0 0.0
    %5268 = vmatprep.subr.mxu0 0.0
    %5269 = vmatpush2.msra.mxu0 0.0
    %5270 = vmatprep.subr.mxu0 0.0
    %5271 = vmatpush2.msra.mxu0 0.0
    %5272 = vmatprep.subr.mxu0 0.0
    %5273 = vmatpush2.msra.mxu0 0.0
    %5274 = vmatprep.subr.mxu0 0.0
    %5275 = vmatpush2.msra.mxu0 0.0
    %5276 = vmatprep.subr.mxu0 0.0
    %5277 = vmatpush2.msra.mxu0 0.0
    %5278 = vmatprep.subr.mxu0 0.0
    %5279 = vmatpush2.msra.mxu0 0.0
    %5280 = vmatprep.subr.mxu0 0.0
    %5281 = vmatpush2.msra.mxu0 0.0
    %5282 = vmatprep.mubr.f32.mxu0 0.0
    %5283 = vmatmul.mubr.f32.gmra.mxu0 %v4995
    %v5284 = vpop.f32.mrf.mxu0
    %v5285 = vadd.f32 0.0, %v5284
    %v5286 = vpop.f32.mrf.mxu0
    %5287 = vdwg.mxu0
    %5289 = vrot.lane.b32.xlu0 %v5285, 96
    %v5290 = vpop.permute.xlu0 %5289
    %v5292 = vadd.f32 %v580, %v5290
    %v5293 = vxor.u32 %v5067, 2147483648
    %v5294 = vmul.f32 %v5293, 1.442695
    %v5295 = vpow.pop %v5294
    %v5296 = vadd.f32 %v5295, 1.0
    %v5297 = vrcp.pop %v5296
    %v5298 = vmul.f32 1.0, %v5297
    %v5299 = vxor.u32 %v5142, 2147483648
    %v5300 = vmul.f32 %v5299, 1.442695
    %v5301 = vpow.pop %v5300
    %v5302 = vadd.f32 %v5301, 1.0
    %v5303 = vrcp.pop %v5302
    %v5304 = vmul.f32 1.0, %v5303
    %v5305 = vtanh.pop %v5217
    %v5306 = vxor.u32 %v5292, 2147483648
    %v5307 = vmul.f32 %v5306, 1.442695
    %v5308 = vpow.pop %v5307
    %v5309 = vadd.f32 %v5308, 1.0
    %v5310 = vrcp.pop %v5309
    %v5311 = vmul.f32 1.0, %v5310
    %v5312 = vmul.f32 %v5304, %v4985
    %5314 = vrot.lane.b32.xlu0 %v5305, 64
    %v5315 = vpop.permute.xlu0 %5314
    %v5317 = vmul.f32 %v5298, %v5315
    %5319 = vrot.lane.b32.xlu0 %v5317, 32
    %v5320 = vpop.permute.xlu0 %5319
    %v5322 = vadd.f32 %v5312, %v5320
    %v5323 = vtanh.pop %v5322
    %5325 = vrot.lane.b32.xlu0 %v5323, 64
    %v5326 = vpop.permute.xlu0 %5325
    %v5328 = vmul.f32 %v5311, %v5326
    %5330 = vrot.lane.b32.xlu0 %v5328, 32
    %v5331 = vpop.permute.xlu0 %5330
    %v5332 = vsel %vm612, %v5331, 0
    %5334 = vmatprep.subr.mxu0 0.0
    %5335 = vmatpush1.msra.mxu0 0.0
    %5336 = vmatprep.subr.mxu0 0.0
    %5337 = vmatpush1.msra.mxu0 0.0
    %5338 = vmatprep.subr.mxu0 0.0
    %5339 = vmatpush1.msra.mxu0 0.0
    %5340 = vmatprep.subr.mxu0 0.0
    %5341 = vmatpush1.msra.mxu0 0.0
    %5342 = vmatprep.subr.mxu0 0.0
    %5343 = vmatpush1.msra.mxu0 0.0
    %5344 = vmatprep.subr.mxu0 0.0
    %5345 = vmatpush1.msra.mxu0 0.0
    %5346 = vmatprep.subr.mxu0 0.0
    %5347 = vmatpush1.msra.mxu0 0.0
    %5348 = vmatprep.subr.mxu0 0.0
    %5349 = vmatpush1.msra.mxu0 0.0
    %5350 = vmatprep.subr.mxu0 0.0
    %5351 = vmatpush1.msra.mxu0 0.0
    %5352 = vmatprep.subr.mxu0 0.0
    %5353 = vmatpush1.msra.mxu0 0.0
    %5354 = vmatprep.subr.mxu0 0.0
    %5355 = vmatpush1.msra.mxu0 0.0
    %5356 = vmatprep.subr.mxu0 0.0
    %5357 = vmatpush1.msra.mxu0 0.0
    %5358 = vmatprep.subr.mxu0 0.0
    %5359 = vmatpush1.msra.mxu0 %v596
    %5360 = vmatprep.subr.mxu0 0.0
    %5361 = vmatpush1.msra.mxu0 %v595
    %5362 = vmatprep.subr.mxu0 0.0
    %5363 = vmatpush1.msra.mxu0 %v594
    %5364 = vmatprep.subr.mxu0 0.0
    %5365 = vmatpush1.msra.mxu0 %v593
    %5366 = vmatprep.subr.mxu0 0.0
    %5367 = vmatpush2.msra.mxu0 0.0
    %5368 = vmatprep.subr.mxu0 0.0
    %5369 = vmatpush2.msra.mxu0 0.0
    %5370 = vmatprep.subr.mxu0 0.0
    %5371 = vmatpush2.msra.mxu0 0.0
    %5372 = vmatprep.subr.mxu0 0.0
    %5373 = vmatpush2.msra.mxu0 0.0
    %5374 = vmatprep.subr.mxu0 0.0
    %5375 = vmatpush2.msra.mxu0 0.0
    %5376 = vmatprep.subr.mxu0 0.0
    %5377 = vmatpush2.msra.mxu0 0.0
    %5378 = vmatprep.subr.mxu0 0.0
    %5379 = vmatpush2.msra.mxu0 0.0
    %5380 = vmatprep.subr.mxu0 0.0
    %5381 = vmatpush2.msra.mxu0 0.0
    %5382 = vmatprep.subr.mxu0 0.0
    %5383 = vmatpush2.msra.mxu0 0.0
    %5384 = vmatprep.subr.mxu0 0.0
    %5385 = vmatpush2.msra.mxu0 0.0
    %5386 = vmatprep.subr.mxu0 0.0
    %5387 = vmatpush2.msra.mxu0 0.0
    %5388 = vmatprep.subr.mxu0 0.0
    %5389 = vmatpush2.msra.mxu0 0.0
    %5390 = vmatprep.subr.mxu0 0.0
    %5391 = vmatpush2.msra.mxu0 0.0
    %5392 = vmatprep.subr.mxu0 0.0
    %5393 = vmatpush2.msra.mxu0 0.0
    %5394 = vmatprep.subr.mxu0 0.0
    %5395 = vmatpush2.msra.mxu0 0.0
    %5396 = vmatprep.subr.mxu0 0.0
    %5397 = vmatpush2.msra.mxu0 0.0
    %5398 = vmatprep.mubr.f32.mxu0 0.0
    %5399 = vmatmul.mubr.f32.gmra.mxu0 %v5332
    %v5400 = vpop.f32.mrf.mxu0
    %v5401 = vadd.f32 0.0, %v5400
    %v5402 = vpop.f32.mrf.mxu0
    %5403 = vdwg.mxu0
    %v5404 = vadd.f32 %v585, %v5401
    %5405 = vmatprep.subr.mxu0 0.0
    %5406 = vmatpush1.msra.mxu0 0.0
    %5407 = vmatprep.subr.mxu0 0.0
    %5408 = vmatpush1.msra.mxu0 0.0
    %5409 = vmatprep.subr.mxu0 0.0
    %5410 = vmatpush1.msra.mxu0 0.0
    %5411 = vmatprep.subr.mxu0 0.0
    %5412 = vmatpush1.msra.mxu0 0.0
    %5413 = vmatprep.subr.mxu0 0.0
    %5414 = vmatpush1.msra.mxu0 0.0
    %5415 = vmatprep.subr.mxu0 0.0
    %5416 = vmatpush1.msra.mxu0 0.0
    %5417 = vmatprep.subr.mxu0 0.0
    %5418 = vmatpush1.msra.mxu0 0.0
    %5419 = vmatprep.subr.mxu0 0.0
    %5420 = vmatpush1.msra.mxu0 0.0
    %5421 = vmatprep.subr.mxu0 0.0
    %5422 = vmatpush1.msra.mxu0 0.0
    %5423 = vmatprep.subr.mxu0 0.0
    %5424 = vmatpush1.msra.mxu0 0.0
    %5425 = vmatprep.subr.mxu0 0.0
    %5426 = vmatpush1.msra.mxu0 0.0
    %5427 = vmatprep.subr.mxu0 0.0
    %5428 = vmatpush1.msra.mxu0 0.0
    %5429 = vmatprep.subr.mxu0 0.0
    %5430 = vmatpush1.msra.mxu0 %v601
    %5431 = vmatprep.subr.mxu0 0.0
    %5432 = vmatpush1.msra.mxu0 %v600
    %5433 = vmatprep.subr.mxu0 0.0
    %5434 = vmatpush1.msra.mxu0 %v599
    %5435 = vmatprep.subr.mxu0 0.0
    %5436 = vmatpush1.msra.mxu0 %v598
    %5437 = vmatprep.subr.mxu0 0.0
    %5438 = vmatpush2.msra.mxu0 0.0
    %5439 = vmatprep.subr.mxu0 0.0
    %5440 = vmatpush2.msra.mxu0 0.0
    %5441 = vmatprep.subr.mxu0 0.0
    %5442 = vmatpush2.msra.mxu0 0.0
    %5443 = vmatprep.subr.mxu0 0.0
    %5444 = vmatpush2.msra.mxu0 0.0
    %5445 = vmatprep.subr.mxu0 0.0
    %5446 = vmatpush2.msra.mxu0 0.0
    %5447 = vmatprep.subr.mxu0 0.0
    %5448 = vmatpush2.msra.mxu0 0.0
    %5449 = vmatprep.subr.mxu0 0.0
    %5450 = vmatpush2.msra.mxu0 0.0
    %5451 = vmatprep.subr.mxu0 0.0
    %5452 = vmatpush2.msra.mxu0 0.0
    %5453 = vmatprep.subr.mxu0 0.0
    %5454 = vmatpush2.msra.mxu0 0.0
    %5455 = vmatprep.subr.mxu0 0.0
    %5456 = vmatpush2.msra.mxu0 0.0
    %5457 = vmatprep.subr.mxu0 0.0
    %5458 = vmatpush2.msra.mxu0 0.0
    %5459 = vmatprep.subr.mxu0 0.0
    %5460 = vmatpush2.msra.mxu0 0.0
    %5461 = vmatprep.subr.mxu0 0.0
    %5462 = vmatpush2.msra.mxu0 0.0
    %5463 = vmatprep.subr.mxu0 0.0
    %5464 = vmatpush2.msra.mxu0 0.0
    %5465 = vmatprep.subr.mxu0 0.0
    %5466 = vmatpush2.msra.mxu0 0.0
    %5467 = vmatprep.subr.mxu0 0.0
    %5468 = vmatpush2.msra.mxu0 0.0
    %5469 = vmatprep.mubr.f32.mxu0 0.0
    %5470 = vmatmul.mubr.f32.gmra.mxu0 %v5332
    %v5471 = vpop.f32.mrf.mxu0
    %v5472 = vadd.f32 0.0, %v5471
    %v5473 = vpop.f32.mrf.mxu0
    %5474 = vdwg.mxu0
    %5476 = vrot.lane.b32.xlu0 %v5472, 32
    %v5477 = vpop.permute.xlu0 %5476
    %v5479 = vadd.f32 %v585, %v5477
    %5480 = vmatprep.subr.mxu0 0.0
    %5481 = vmatpush1.msra.mxu0 0.0
    %5482 = vmatprep.subr.mxu0 0.0
    %5483 = vmatpush1.msra.mxu0 0.0
    %5484 = vmatprep.subr.mxu0 0.0
    %5485 = vmatpush1.msra.mxu0 0.0
    %5486 = vmatprep.subr.mxu0 0.0
    %5487 = vmatpush1.msra.mxu0 0.0
    %5488 = vmatprep.subr.mxu0 0.0
    %5489 = vmatpush1.msra.mxu0 0.0
    %5490 = vmatprep.subr.mxu0 0.0
    %5491 = vmatpush1.msra.mxu0 0.0
    %5492 = vmatprep.subr.mxu0 0.0
    %5493 = vmatpush1.msra.mxu0 0.0
    %5494 = vmatprep.subr.mxu0 0.0
    %5495 = vmatpush1.msra.mxu0 0.0
    %5496 = vmatprep.subr.mxu0 0.0
    %5497 = vmatpush1.msra.mxu0 0.0
    %5498 = vmatprep.subr.mxu0 0.0
    %5499 = vmatpush1.msra.mxu0 0.0
    %5500 = vmatprep.subr.mxu0 0.0
    %5501 = vmatpush1.msra.mxu0 0.0
    %5502 = vmatprep.subr.mxu0 0.0
    %5503 = vmatpush1.msra.mxu0 0.0
    %5504 = vmatprep.subr.mxu0 0.0
    %5505 = vmatpush1.msra.mxu0 %v606
    %5506 = vmatprep.subr.mxu0 0.0
    %5507 = vmatpush1.msra.mxu0 %v605
    %5508 = vmatprep.subr.mxu0 0.0
    %5509 = vmatpush1.msra.mxu0 %v604
    %5510 = vmatprep.subr.mxu0 0.0
    %5511 = vmatpush1.msra.mxu0 %v603
    %5512 = vmatprep.subr.mxu0 0.0
    %5513 = vmatpush2.msra.mxu0 0.0
    %5514 = vmatprep.subr.mxu0 0.0
    %5515 = vmatpush2.msra.mxu0 0.0
    %5516 = vmatprep.subr.mxu0 0.0
    %5517 = vmatpush2.msra.mxu0 0.0
    %5518 = vmatprep.subr.mxu0 0.0
    %5519 = vmatpush2.msra.mxu0 0.0
    %5520 = vmatprep.subr.mxu0 0.0
    %5521 = vmatpush2.msra.mxu0 0.0
    %5522 = vmatprep.subr.mxu0 0.0
    %5523 = vmatpush2.msra.mxu0 0.0
    %5524 = vmatprep.subr.mxu0 0.0
    %5525 = vmatpush2.msra.mxu0 0.0
    %5526 = vmatprep.subr.mxu0 0.0
    %5527 = vmatpush2.msra.mxu0 0.0
    %5528 = vmatprep.subr.mxu0 0.0
    %5529 = vmatpush2.msra.mxu0 0.0
    %5530 = vmatprep.subr.mxu0 0.0
    %5531 = vmatpush2.msra.mxu0 0.0
    %5532 = vmatprep.subr.mxu0 0.0
    %5533 = vmatpush2.msra.mxu0 0.0
    %5534 = vmatprep.subr.mxu0 0.0
    %5535 = vmatpush2.msra.mxu0 0.0
    %5536 = vmatprep.subr.mxu0 0.0
    %5537 = vmatpush2.msra.mxu0 0.0
    %5538 = vmatprep.subr.mxu0 0.0
    %5539 = vmatpush2.msra.mxu0 0.0
    %5540 = vmatprep.subr.mxu0 0.0
    %5541 = vmatpush2.msra.mxu0 0.0
    %5542 = vmatprep.subr.mxu0 0.0
    %5543 = vmatpush2.msra.mxu0 0.0
    %5544 = vmatprep.mubr.f32.mxu0 0.0
    %5545 = vmatmul.mubr.f32.gmra.mxu0 %v5332
    %v5546 = vpop.f32.mrf.mxu0
    %v5547 = vadd.f32 0.0, %v5546
    %v5548 = vpop.f32.mrf.mxu0
    %5549 = vdwg.mxu0
    %5551 = vrot.lane.b32.xlu0 %v5547, 64
    %v5552 = vpop.permute.xlu0 %5551
    %v5554 = vadd.f32 %v585, %v5552
    %5555 = vmatprep.subr.mxu0 0.0
    %5556 = vmatpush1.msra.mxu0 0.0
    %5557 = vmatprep.subr.mxu0 0.0
    %5558 = vmatpush1.msra.mxu0 0.0
    %5559 = vmatprep.subr.mxu0 0.0
    %5560 = vmatpush1.msra.mxu0 0.0
    %5561 = vmatprep.subr.mxu0 0.0
    %5562 = vmatpush1.msra.mxu0 0.0
    %5563 = vmatprep.subr.mxu0 0.0
    %5564 = vmatpush1.msra.mxu0 0.0
    %5565 = vmatprep.subr.mxu0 0.0
    %5566 = vmatpush1.msra.mxu0 0.0
    %5567 = vmatprep.subr.mxu0 0.0
    %5568 = vmatpush1.msra.mxu0 0.0
    %5569 = vmatprep.subr.mxu0 0.0
    %5570 = vmatpush1.msra.mxu0 0.0
    %5571 = vmatprep.subr.mxu0 0.0
    %5572 = vmatpush1.msra.mxu0 0.0
    %5573 = vmatprep.subr.mxu0 0.0
    %5574 = vmatpush1.msra.mxu0 0.0
    %5575 = vmatprep.subr.mxu0 0.0
    %5576 = vmatpush1.msra.mxu0 0.0
    %5577 = vmatprep.subr.mxu0 0.0
    %5578 = vmatpush1.msra.mxu0 0.0
    %5579 = vmatprep.subr.mxu0 0.0
    %5580 = vmatpush1.msra.mxu0 %v611
    %5581 = vmatprep.subr.mxu0 0.0
    %5582 = vmatpush1.msra.mxu0 %v610
    %5583 = vmatprep.subr.mxu0 0.0
    %5584 = vmatpush1.msra.mxu0 %v609
    %5585 = vmatprep.subr.mxu0 0.0
    %5586 = vmatpush1.msra.mxu0 %v608
    %5587 = vmatprep.subr.mxu0 0.0
    %5588 = vmatpush2.msra.mxu0 0.0
    %5589 = vmatprep.subr.mxu0 0.0
    %5590 = vmatpush2.msra.mxu0 0.0
    %5591 = vmatprep.subr.mxu0 0.0
    %5592 = vmatpush2.msra.mxu0 0.0
    %5593 = vmatprep.subr.mxu0 0.0
    %5594 = vmatpush2.msra.mxu0 0.0
    %5595 = vmatprep.subr.mxu0 0.0
    %5596 = vmatpush2.msra.mxu0 0.0
    %5597 = vmatprep.subr.mxu0 0.0
    %5598 = vmatpush2.msra.mxu0 0.0
    %5599 = vmatprep.subr.mxu0 0.0
    %5600 = vmatpush2.msra.mxu0 0.0
    %5601 = vmatprep.subr.mxu0 0.0
    %5602 = vmatpush2.msra.mxu0 0.0
    %5603 = vmatprep.subr.mxu0 0.0
    %5604 = vmatpush2.msra.mxu0 0.0
    %5605 = vmatprep.subr.mxu0 0.0
    %5606 = vmatpush2.msra.mxu0 0.0
    %5607 = vmatprep.subr.mxu0 0.0
    %5608 = vmatpush2.msra.mxu0 0.0
    %5609 = vmatprep.subr.mxu0 0.0
    %5610 = vmatpush2.msra.mxu0 0.0
    %5611 = vmatprep.subr.mxu0 0.0
    %5612 = vmatpush2.msra.mxu0 0.0
    %5613 = vmatprep.subr.mxu0 0.0
    %5614 = vmatpush2.msra.mxu0 0.0
    %5615 = vmatprep.subr.mxu0 0.0
    %5616 = vmatpush2.msra.mxu0 0.0
    %5617 = vmatprep.subr.mxu0 0.0
    %5618 = vmatpush2.msra.mxu0 0.0
    %5619 = vmatprep.mubr.f32.mxu0 0.0
    %5620 = vmatmul.mubr.f32.gmra.mxu0 %v5332
    %v5621 = vpop.f32.mrf.mxu0
    %v5622 = vadd.f32 0.0, %v5621
    %v5623 = vpop.f32.mrf.mxu0
    %5624 = vdwg.mxu0
    %5626 = vrot.lane.b32.xlu0 %v5622, 96
    %v5627 = vpop.permute.xlu0 %5626
    %v5629 = vadd.f32 %v585, %v5627
    %v5630 = vxor.u32 %v5404, 2147483648
    %v5631 = vmul.f32 %v5630, 1.442695
    %v5632 = vpow.pop %v5631
    %v5633 = vadd.f32 %v5632, 1.0
    %v5634 = vrcp.pop %v5633
    %v5635 = vmul.f32 1.0, %v5634
    %v5636 = vxor.u32 %v5479, 2147483648
    %v5637 = vmul.f32 %v5636, 1.442695
    %v5638 = vpow.pop %v5637
    %v5639 = vadd.f32 %v5638, 1.0
    %v5640 = vrcp.pop %v5639
    %v5641 = vmul.f32 1.0, %v5640
    %v5642 = vtanh.pop %v5554
    %v5643 = vxor.u32 %v5629, 2147483648
    %v5644 = vmul.f32 %v5643, 1.442695
    %v5645 = vpow.pop %v5644
    %v5646 = vadd.f32 %v5645, 1.0
    %v5647 = vrcp.pop %v5646
    %v5648 = vmul.f32 1.0, %v5647
    %v5649 = vmul.f32 %v5641, %v5322
    %5651 = vrot.lane.b32.xlu0 %v5642, 64
    %v5652 = vpop.permute.xlu0 %5651
    %v5654 = vmul.f32 %v5635, %v5652
    %5656 = vrot.lane.b32.xlu0 %v5654, 32
    %v5657 = vpop.permute.xlu0 %5656
    %v5659 = vadd.f32 %v5649, %v5657
    %v5660 = vtanh.pop %v5659
    %5662 = vrot.lane.b32.xlu0 %v5660, 64
    %v5663 = vpop.permute.xlu0 %5662
    %v5665 = vmul.f32 %v5648, %v5663
    %5667 = vrot.lane.b32.xlu0 %v5665, 32
    %v5668 = vpop.permute.xlu0 %5667
    %v5669 = vsel %vm612, %v5668, 0
    %5671 = vmatprep.subr.mxu0 0.0
    %5672 = vmatpush1.msra.mxu0 0.0
    %5673 = vmatprep.subr.mxu0 0.0
    %5674 = vmatpush1.msra.mxu0 0.0
    %5675 = vmatprep.subr.mxu0 0.0
    %5676 = vmatpush1.msra.mxu0 0.0
    %5677 = vmatprep.subr.mxu0 0.0
    %5678 = vmatpush1.msra.mxu0 0.0
    %5679 = vmatprep.subr.mxu0 0.0
    %5680 = vmatpush1.msra.mxu0 0.0
    %5681 = vmatprep.subr.mxu0 0.0
    %5682 = vmatpush1.msra.mxu0 0.0
    %5683 = vmatprep.subr.mxu0 0.0
    %5684 = vmatpush1.msra.mxu0 0.0
    %5685 = vmatprep.subr.mxu0 0.0
    %5686 = vmatpush1.msra.mxu0 0.0
    %5687 = vmatprep.subr.mxu0 0.0
    %5688 = vmatpush1.msra.mxu0 0.0
    %5689 = vmatprep.subr.mxu0 0.0
    %5690 = vmatpush1.msra.mxu0 0.0
    %5691 = vmatprep.subr.mxu0 0.0
    %5692 = vmatpush1.msra.mxu0 0.0
    %5693 = vmatprep.subr.mxu0 0.0
    %5694 = vmatpush1.msra.mxu0 0.0
    %5695 = vmatprep.subr.mxu0 0.0
    %5696 = vmatpush1.msra.mxu0 %v596
    %5697 = vmatprep.subr.mxu0 0.0
    %5698 = vmatpush1.msra.mxu0 %v595
    %5699 = vmatprep.subr.mxu0 0.0
    %5700 = vmatpush1.msra.mxu0 %v594
    %5701 = vmatprep.subr.mxu0 0.0
    %5702 = vmatpush1.msra.mxu0 %v593
    %5703 = vmatprep.subr.mxu0 0.0
    %5704 = vmatpush2.msra.mxu0 0.0
    %5705 = vmatprep.subr.mxu0 0.0
    %5706 = vmatpush2.msra.mxu0 0.0
    %5707 = vmatprep.subr.mxu0 0.0
    %5708 = vmatpush2.msra.mxu0 0.0
    %5709 = vmatprep.subr.mxu0 0.0
    %5710 = vmatpush2.msra.mxu0 0.0
    %5711 = vmatprep.subr.mxu0 0.0
    %5712 = vmatpush2.msra.mxu0 0.0
    %5713 = vmatprep.subr.mxu0 0.0
    %5714 = vmatpush2.msra.mxu0 0.0
    %5715 = vmatprep.subr.mxu0 0.0
    %5716 = vmatpush2.msra.mxu0 0.0
    %5717 = vmatprep.subr.mxu0 0.0
    %5718 = vmatpush2.msra.mxu0 0.0
    %5719 = vmatprep.subr.mxu0 0.0
    %5720 = vmatpush2.msra.mxu0 0.0
    %5721 = vmatprep.subr.mxu0 0.0
    %5722 = vmatpush2.msra.mxu0 0.0
    %5723 = vmatprep.subr.mxu0 0.0
    %5724 = vmatpush2.msra.mxu0 0.0
    %5725 = vmatprep.subr.mxu0 0.0
    %5726 = vmatpush2.msra.mxu0 0.0
    %5727 = vmatprep.subr.mxu0 0.0
    %5728 = vmatpush2.msra.mxu0 0.0
    %5729 = vmatprep.subr.mxu0 0.0
    %5730 = vmatpush2.msra.mxu0 0.0
    %5731 = vmatprep.subr.mxu0 0.0
    %5732 = vmatpush2.msra.mxu0 0.0
    %5733 = vmatprep.subr.mxu0 0.0
    %5734 = vmatpush2.msra.mxu0 0.0
    %5735 = vmatprep.mubr.f32.mxu0 0.0
    %5736 = vmatmul.mubr.f32.gmra.mxu0 %v5669
    %v5737 = vpop.f32.mrf.mxu0
    %v5738 = vadd.f32 0.0, %v5737
    %v5739 = vpop.f32.mrf.mxu0
    %5740 = vdwg.mxu0
    %v5741 = vadd.f32 %v590, %v5738
    %5742 = vmatprep.subr.mxu0 0.0
    %5743 = vmatpush1.msra.mxu0 0.0
    %5744 = vmatprep.subr.mxu0 0.0
    %5745 = vmatpush1.msra.mxu0 0.0
    %5746 = vmatprep.subr.mxu0 0.0
    %5747 = vmatpush1.msra.mxu0 0.0
    %5748 = vmatprep.subr.mxu0 0.0
    %5749 = vmatpush1.msra.mxu0 0.0
    %5750 = vmatprep.subr.mxu0 0.0
    %5751 = vmatpush1.msra.mxu0 0.0
    %5752 = vmatprep.subr.mxu0 0.0
    %5753 = vmatpush1.msra.mxu0 0.0
    %5754 = vmatprep.subr.mxu0 0.0
    %5755 = vmatpush1.msra.mxu0 0.0
    %5756 = vmatprep.subr.mxu0 0.0
    %5757 = vmatpush1.msra.mxu0 0.0
    %5758 = vmatprep.subr.mxu0 0.0
    %5759 = vmatpush1.msra.mxu0 0.0
    %5760 = vmatprep.subr.mxu0 0.0
    %5761 = vmatpush1.msra.mxu0 0.0
    %5762 = vmatprep.subr.mxu0 0.0
    %5763 = vmatpush1.msra.mxu0 0.0
    %5764 = vmatprep.subr.mxu0 0.0
    %5765 = vmatpush1.msra.mxu0 0.0
    %5766 = vmatprep.subr.mxu0 0.0
    %5767 = vmatpush1.msra.mxu0 %v601
    %5768 = vmatprep.subr.mxu0 0.0
    %5769 = vmatpush1.msra.mxu0 %v600
    %5770 = vmatprep.subr.mxu0 0.0
    %5771 = vmatpush1.msra.mxu0 %v599
    %5772 = vmatprep.subr.mxu0 0.0
    %5773 = vmatpush1.msra.mxu0 %v598
    %5774 = vmatprep.subr.mxu0 0.0
    %5775 = vmatpush2.msra.mxu0 0.0
    %5776 = vmatprep.subr.mxu0 0.0
    %5777 = vmatpush2.msra.mxu0 0.0
    %5778 = vmatprep.subr.mxu0 0.0
    %5779 = vmatpush2.msra.mxu0 0.0
    %5780 = vmatprep.subr.mxu0 0.0
    %5781 = vmatpush2.msra.mxu0 0.0
    %5782 = vmatprep.subr.mxu0 0.0
    %5783 = vmatpush2.msra.mxu0 0.0
    %5784 = vmatprep.subr.mxu0 0.0
    %5785 = vmatpush2.msra.mxu0 0.0
    %5786 = vmatprep.subr.mxu0 0.0
    %5787 = vmatpush2.msra.mxu0 0.0
    %5788 = vmatprep.subr.mxu0 0.0
    %5789 = vmatpush2.msra.mxu0 0.0
    %5790 = vmatprep.subr.mxu0 0.0
    %5791 = vmatpush2.msra.mxu0 0.0
    %5792 = vmatprep.subr.mxu0 0.0
    %5793 = vmatpush2.msra.mxu0 0.0
    %5794 = vmatprep.subr.mxu0 0.0
    %5795 = vmatpush2.msra.mxu0 0.0
    %5796 = vmatprep.subr.mxu0 0.0
    %5797 = vmatpush2.msra.mxu0 0.0
    %5798 = vmatprep.subr.mxu0 0.0
    %5799 = vmatpush2.msra.mxu0 0.0
    %5800 = vmatprep.subr.mxu0 0.0
    %5801 = vmatpush2.msra.mxu0 0.0
    %5802 = vmatprep.subr.mxu0 0.0
    %5803 = vmatpush2.msra.mxu0 0.0
    %5804 = vmatprep.subr.mxu0 0.0
    %5805 = vmatpush2.msra.mxu0 0.0
    %5806 = vmatprep.mubr.f32.mxu0 0.0
    %5807 = vmatmul.mubr.f32.gmra.mxu0 %v5669
    %v5808 = vpop.f32.mrf.mxu0
    %v5809 = vadd.f32 0.0, %v5808
    %v5810 = vpop.f32.mrf.mxu0
    %5811 = vdwg.mxu0
    %5813 = vrot.lane.b32.xlu0 %v5809, 32
    %v5814 = vpop.permute.xlu0 %5813
    %v5816 = vadd.f32 %v590, %v5814
    %5817 = vmatprep.subr.mxu0 0.0
    %5818 = vmatpush1.msra.mxu0 0.0
    %5819 = vmatprep.subr.mxu0 0.0
    %5820 = vmatpush1.msra.mxu0 0.0
    %5821 = vmatprep.subr.mxu0 0.0
    %5822 = vmatpush1.msra.mxu0 0.0
    %5823 = vmatprep.subr.mxu0 0.0
    %5824 = vmatpush1.msra.mxu0 0.0
    %5825 = vmatprep.subr.mxu0 0.0
    %5826 = vmatpush1.msra.mxu0 0.0
    %5827 = vmatprep.subr.mxu0 0.0
    %5828 = vmatpush1.msra.mxu0 0.0
    %5829 = vmatprep.subr.mxu0 0.0
    %5830 = vmatpush1.msra.mxu0 0.0
    %5831 = vmatprep.subr.mxu0 0.0
    %5832 = vmatpush1.msra.mxu0 0.0
    %5833 = vmatprep.subr.mxu0 0.0
    %5834 = vmatpush1.msra.mxu0 0.0
    %5835 = vmatprep.subr.mxu0 0.0
    %5836 = vmatpush1.msra.mxu0 0.0
    %5837 = vmatprep.subr.mxu0 0.0
    %5838 = vmatpush1.msra.mxu0 0.0
    %5839 = vmatprep.subr.mxu0 0.0
    %5840 = vmatpush1.msra.mxu0 0.0
    %5841 = vmatprep.subr.mxu0 0.0
    %5842 = vmatpush1.msra.mxu0 %v606
    %5843 = vmatprep.subr.mxu0 0.0
    %5844 = vmatpush1.msra.mxu0 %v605
    %5845 = vmatprep.subr.mxu0 0.0
    %5846 = vmatpush1.msra.mxu0 %v604
    %5847 = vmatprep.subr.mxu0 0.0
    %5848 = vmatpush1.msra.mxu0 %v603
    %5849 = vmatprep.subr.mxu0 0.0
    %5850 = vmatpush2.msra.mxu0 0.0
    %5851 = vmatprep.subr.mxu0 0.0
    %5852 = vmatpush2.msra.mxu0 0.0
    %5853 = vmatprep.subr.mxu0 0.0
    %5854 = vmatpush2.msra.mxu0 0.0
    %5855 = vmatprep.subr.mxu0 0.0
    %5856 = vmatpush2.msra.mxu0 0.0
    %5857 = vmatprep.subr.mxu0 0.0
    %5858 = vmatpush2.msra.mxu0 0.0
    %5859 = vmatprep.subr.mxu0 0.0
    %5860 = vmatpush2.msra.mxu0 0.0
    %5861 = vmatprep.subr.mxu0 0.0
    %5862 = vmatpush2.msra.mxu0 0.0
    %5863 = vmatprep.subr.mxu0 0.0
    %5864 = vmatpush2.msra.mxu0 0.0
    %5865 = vmatprep.subr.mxu0 0.0
    %5866 = vmatpush2.msra.mxu0 0.0
    %5867 = vmatprep.subr.mxu0 0.0
    %5868 = vmatpush2.msra.mxu0 0.0
    %5869 = vmatprep.subr.mxu0 0.0
    %5870 = vmatpush2.msra.mxu0 0.0
    %5871 = vmatprep.subr.mxu0 0.0
    %5872 = vmatpush2.msra.mxu0 0.0
    %5873 = vmatprep.subr.mxu0 0.0
    %5874 = vmatpush2.msra.mxu0 0.0
    %5875 = vmatprep.subr.mxu0 0.0
    %5876 = vmatpush2.msra.mxu0 0.0
    %5877 = vmatprep.subr.mxu0 0.0
    %5878 = vmatpush2.msra.mxu0 0.0
    %5879 = vmatprep.subr.mxu0 0.0
    %5880 = vmatpush2.msra.mxu0 0.0
    %5881 = vmatprep.mubr.f32.mxu0 0.0
    %5882 = vmatmul.mubr.f32.gmra.mxu0 %v5669
    %v5883 = vpop.f32.mrf.mxu0
    %v5884 = vadd.f32 0.0, %v5883
    %v5885 = vpop.f32.mrf.mxu0
    %5886 = vdwg.mxu0
    %5888 = vrot.lane.b32.xlu0 %v5884, 64
    %v5889 = vpop.permute.xlu0 %5888
    %v5891 = vadd.f32 %v590, %v5889
    %5892 = vmatprep.subr.mxu0 0.0
    %5893 = vmatpush1.msra.mxu0 0.0
    %5894 = vmatprep.subr.mxu0 0.0
    %5895 = vmatpush1.msra.mxu0 0.0
    %5896 = vmatprep.subr.mxu0 0.0
    %5897 = vmatpush1.msra.mxu0 0.0
    %5898 = vmatprep.subr.mxu0 0.0
    %5899 = vmatpush1.msra.mxu0 0.0
    %5900 = vmatprep.subr.mxu0 0.0
    %5901 = vmatpush1.msra.mxu0 0.0
    %5902 = vmatprep.subr.mxu0 0.0
    %5903 = vmatpush1.msra.mxu0 0.0
    %5904 = vmatprep.subr.mxu0 0.0
    %5905 = vmatpush1.msra.mxu0 0.0
    %5906 = vmatprep.subr.mxu0 0.0
    %5907 = vmatpush1.msra.mxu0 0.0
    %5908 = vmatprep.subr.mxu0 0.0
    %5909 = vmatpush1.msra.mxu0 0.0
    %5910 = vmatprep.subr.mxu0 0.0
    %5911 = vmatpush1.msra.mxu0 0.0
    %5912 = vmatprep.subr.mxu0 0.0
    %5913 = vmatpush1.msra.mxu0 0.0
    %5914 = vmatprep.subr.mxu0 0.0
    %5915 = vmatpush1.msra.mxu0 0.0
    %5916 = vmatprep.subr.mxu0 0.0
    %5917 = vmatpush1.msra.mxu0 %v611
    %5918 = vmatprep.subr.mxu0 0.0
    %5919 = vmatpush1.msra.mxu0 %v610
    %5920 = vmatprep.subr.mxu0 0.0
    %5921 = vmatpush1.msra.mxu0 %v609
    %5922 = vmatprep.subr.mxu0 0.0
    %5923 = vmatpush1.msra.mxu0 %v608
    %5924 = vmatprep.subr.mxu0 0.0
    %5925 = vmatpush2.msra.mxu0 0.0
    %5926 = vmatprep.subr.mxu0 0.0
    %5927 = vmatpush2.msra.mxu0 0.0
    %5928 = vmatprep.subr.mxu0 0.0
    %5929 = vmatpush2.msra.mxu0 0.0
    %5930 = vmatprep.subr.mxu0 0.0
    %5931 = vmatpush2.msra.mxu0 0.0
    %5932 = vmatprep.subr.mxu0 0.0
    %5933 = vmatpush2.msra.mxu0 0.0
    %5934 = vmatprep.subr.mxu0 0.0
    %5935 = vmatpush2.msra.mxu0 0.0
    %5936 = vmatprep.subr.mxu0 0.0
    %5937 = vmatpush2.msra.mxu0 0.0
    %5938 = vmatprep.subr.mxu0 0.0
    %5939 = vmatpush2.msra.mxu0 0.0
    %5940 = vmatprep.subr.mxu0 0.0
    %5941 = vmatpush2.msra.mxu0 0.0
    %5942 = vmatprep.subr.mxu0 0.0
    %5943 = vmatpush2.msra.mxu0 0.0
    %5944 = vmatprep.subr.mxu0 0.0
    %5945 = vmatpush2.msra.mxu0 0.0
    %5946 = vmatprep.subr.mxu0 0.0
    %5947 = vmatpush2.msra.mxu0 0.0
    %5948 = vmatprep.subr.mxu0 0.0
    %5949 = vmatpush2.msra.mxu0 0.0
    %5950 = vmatprep.subr.mxu0 0.0
    %5951 = vmatpush2.msra.mxu0 0.0
    %5952 = vmatprep.subr.mxu0 0.0
    %5953 = vmatpush2.msra.mxu0 0.0
    %5954 = vmatprep.subr.mxu0 0.0
    %5955 = vmatpush2.msra.mxu0 0.0
    %5956 = vmatprep.mubr.f32.mxu0 0.0
    %5957 = vmatmul.mubr.f32.gmra.mxu0 %v5669
    %v5958 = vpop.f32.mrf.mxu0
    %v5959 = vadd.f32 0.0, %v5958
    %v5960 = vpop.f32.mrf.mxu0
    %5961 = vdwg.mxu0
    %5963 = vrot.lane.b32.xlu0 %v5959, 96
    %v5964 = vpop.permute.xlu0 %5963
    %v5966 = vadd.f32 %v590, %v5964
    %v5967 = vxor.u32 %v5741, 2147483648
    %v5968 = vmul.f32 %v5967, 1.442695
    %v5969 = vpow.pop %v5968
    %v5970 = vadd.f32 %v5969, 1.0
    %v5971 = vrcp.pop %v5970
    %v5972 = vmul.f32 1.0, %v5971
    %v5973 = vxor.u32 %v5816, 2147483648
    %v5974 = vmul.f32 %v5973, 1.442695
    %v5975 = vpow.pop %v5974
    %v5976 = vadd.f32 %v5975, 1.0
    %v5977 = vrcp.pop %v5976
    %v5978 = vmul.f32 1.0, %v5977
    %v5979 = vtanh.pop %v5891
    %v5980 = vxor.u32 %v5966, 2147483648
    %v5981 = vmul.f32 %v5980, 1.442695
    %v5982 = vpow.pop %v5981
    %v5983 = vadd.f32 %v5982, 1.0
    %v5984 = vrcp.pop %v5983
    %v5985 = vmul.f32 1.0, %v5984
    %v5986 = vmul.f32 %v5978, %v5659
    %5988 = vrot.lane.b32.xlu0 %v5979, 64
    %v5989 = vpop.permute.xlu0 %5988
    %v5991 = vmul.f32 %v5972, %v5989
    %5993 = vrot.lane.b32.xlu0 %v5991, 32
    %v5994 = vpop.permute.xlu0 %5993
    %v5996 = vadd.f32 %v5986, %v5994
    %v5997 = vtanh.pop %v5996
    %5999 = vrot.lane.b32.xlu0 %v5997, 64
    %v6000 = vpop.permute.xlu0 %5999
    %v6002 = vmul.f32 %v5985, %v6000
    %6004 = vrot.lane.b32.xlu0 %v6002, 32
    %v6005 = vpop.permute.xlu0 %6004
    %vm6007 = vcmask 254976
    %6008 = vst.msk [vmem:[#allocation3] sm:$0x3] %vm6007, %v6005
    // Predicated region
    $region38: #{header_decoder_forward.1} parent=1 // pred_check
      _
    $region39: #{header_decoder_forward.1} parent=1 // pred_check_branch
      %6010 = sbr.rel (0) target = $region41
    $region40: #{header_decoder_forward.1} parent=1 // pred_region
      %s6012 = ssub.s32 32, 32
      %6013 = vsyncadd [#allocation4], %s6012
      %s6015 = sshll.u32 [#allocation3], 4
      %s6016 = int_to_ptr.vmem [resolvable:$true] %s6015
      %6018 = dma.vmem_to_hbm [thread:$0]  %s6016, 32, %s9, [#allocation4]
    $region41: #{header_decoder_forward.1} parent=1 // pred_fallthru
      _
    // Predicated region
    $region42: #{header_decoder_forward.1} parent=1 // pred_check
      _
    $region43: #{header_decoder_forward.1} parent=1 // pred_check_branch
      %6020 = sbr.rel (0) target = $region45
    $region44: #{header_decoder_forward.1} parent=1 // pred_region
      %6021 = dma.done [#allocation4], 32
    $region45: #{header_decoder_forward.1} parent=1 // pred_fallthru
      _
    %6022 = vsyncpa [#allocation4], 1

</llo_original>
